<compile_context>
chip_gen: v7x
topology: tpu7x:2x2x1
jax: 0.10.0
libtpu: 0.0.40
codegen_flags: <defaults>
</compile_context>

<pallas_src>
import math

import jax
import jax.numpy as jnp
from jax.experimental import pallas as pl
from jax.experimental.pallas import tpu as pltpu


# ------------------------------ fused kernel -------------------------------

def _lenet_fused_kernel(x_ref, a1_ref, b1_ref, sel1_ref, a2_ref, b2_ref,
                        sel2_ref, w3_ref, b3_ref, w4_ref, b4_ref, o_ref):
    f32, bf16 = jnp.float32, jnp.bfloat16
    Bt = o_ref.shape[0]              # images per grid step
    m1 = Bt * 28 - 4                 # conv1 rows: pitch 28/image, 24 real
    m2 = Bt * 12 - 4                 # conv2 rows: pitch 12/image, 8 real

    x = x_ref[...]                                       # (Bt*28, 28) f32

    # ---- conv1 (5x5, 1->20): 5 row-shifted MXU matmuls, f32 accumulation ---
    acc1 = jnp.dot(x[0:m1, :].astype(bf16), a1_ref[0],
                   preferred_element_type=f32)
    for ki in range(1, 5):
        acc1 = acc1 + jnp.dot(x[ki:ki + m1, :].astype(bf16), a1_ref[ki],
                              preferred_element_type=f32)
    h1 = jnp.maximum(acc1 + b1_ref[...], 0.0)            # (m1, 480) f32

    # ---- 2x2/2 max-pool #1: column pairs are the two 240-lane halves
    #      (interleaved weight layout); row pairs via shifted max; even-row
    #      compaction via a constant 0/1 block-diagonal selector on the MXU.
    mw1 = jnp.maximum(h1[:, :240], h1[:, 240:])          # (m1, 240)
    mp1 = jnp.maximum(mw1[:-1, :], mw1[1:, :]).astype(bf16)      # (m1-1, 240)
    pool1 = jnp.dot(sel1_ref[...], mp1,
                    preferred_element_type=f32)          # (Bt*12, 240) f32

    # ---- conv2 (5x5, 20->50): same structure, pitch 12 rows per image ------
    acc2 = jnp.dot(pool1[0:m2, :].astype(bf16), a2_ref[0],
                   preferred_element_type=f32)
    for ki in range(1, 5):
        acc2 = acc2 + jnp.dot(pool1[ki:ki + m2, :].astype(bf16), a2_ref[ki],
                              preferred_element_type=f32)
    h2 = jnp.maximum(acc2 + b2_ref[...], 0.0)            # (m2, 400) f32

    # ---- 2x2/2 max-pool #2 + flatten: the selector emits rows in
    #      (pooled-row, image) order so its four Bt-row groups line up with
    #      fc1's four 200-wide K blocks.
    mw2 = jnp.maximum(h2[:, :200], h2[:, 200:])          # (m2, 200)
    mp2 = jnp.maximum(mw2[:-1, :], mw2[1:, :]).astype(bf16)      # (m2-1, 200)
    p2 = jnp.dot(sel2_ref[...], mp2,
                 preferred_element_type=f32)             # (4*Bt, 200) f32

    # ---- fc1 (800 -> 500): 4 K-blocks (one per pooled row), batched M=Bt ---
    acc3 = jnp.dot(p2[0:Bt, :].astype(bf16), w3_ref[0],
                   preferred_element_type=f32)
    for q in range(1, 4):
        acc3 = acc3 + jnp.dot(p2[q * Bt:(q + 1) * Bt, :].astype(bf16),
                              w3_ref[q], preferred_element_type=f32)
    f1 = jnp.maximum(acc3 + b3_ref[...], 0.0)            # (Bt, 500) f32

    # ---- fc2 (500 -> 10), N zero-padded to a lane-dense 128 ----------------
    out = jnp.dot(f1.astype(bf16), w4_ref[...],
                  preferred_element_type=f32) + b4_ref[...]      # (Bt, 128)
    o_ref[...] = out.astype(o_ref.dtype)


# ------------------- one-time weight preparation (hoisted) ------------------

def prepare_params(params, block_batch=8):
    """PyTorch-layout params -> MXU-ready bf16 slabs + pooling selectors."""
    f32, bf16 = jnp.float32, jnp.bfloat16
    Bt = block_batch
    w1, b1 = params["conv1_w"], params["conv1_b"]        # (20,1,5,5), (20,)
    w2, b2 = params["conv2_w"], params["conv2_b"]        # (50,20,5,5), (50,)
    w3, b3 = params["fc1_w"], params["fc1_b"]            # (500,800), (500,)
    w4, b4 = params["fc2_w"], params["fc2_b"]            # (10,500), (10,)

    # Output-column interleave (even cols first, then odd) so 2x2 column
    # pooling is a max of two contiguous lane halves.
    perm24 = jnp.concatenate([jnp.arange(0, 24, 2), jnp.arange(1, 24, 2)])
    perm8 = jnp.concatenate([jnp.arange(0, 8, 2), jnp.arange(1, 8, 2)])

    # conv1 Toeplitz slabs a1[ki]: (28, 480); out lane = 240*(j%2)+20*(j//2)+c
    w1_t = jnp.transpose(w1, (2, 3, 0, 1))[:, :, :, 0]   # (ki, kj, cout)
    wi = jnp.arange(28)[:, None]
    jj = jnp.arange(24)[None, :]
    kj = wi - jj                                         # (28, 24)
    a1 = w1_t[jnp.arange(5)[:, None, None], jnp.clip(kj, 0, 4)[None]]
    a1 = jnp.where(((kj >= 0) & (kj < 5))[None, :, :, None], a1, 0.0)
    a1 = a1[:, :, perm24, :].reshape(5, 28, 480).astype(bf16)

    # conv2 Toeplitz slabs a2[ki]: (240, 400); in lane = 20*jp + cin (compact
    # pooled columns), out lane = 200*(v%2) + 50*(v//2) + d
    w2_t = jnp.transpose(w2, (2, 3, 1, 0))               # (ki, kj, cin, cout)
    jp = jnp.arange(12)[:, None]
    vv = jnp.arange(8)[None, :]
    kj2 = jp - vv                                        # (12, 8)
    a2 = w2_t[jnp.arange(5)[:, None, None], jnp.clip(kj2, 0, 4)[None]]
    a2 = jnp.where(((kj2 >= 0) & (kj2 < 5))[None, :, :, None, None], a2, 0.0)
    a2 = jnp.transpose(a2, (0, 1, 3, 2, 4))              # (ki, jp, cin, v, d)
    a2 = a2[:, :, :, perm8, :].reshape(5, 240, 400).astype(bf16)

    # fc1 in PyTorch view(-1, 4*4*50) (C,H,W) order, regrouped by pooled row:
    # w3p[up][50*vp + d, n] = fc1_w[n, d*16 + up*4 + vp]
    w3r = jnp.transpose(w3.reshape(500, 50, 4, 4), (2, 3, 1, 0))  # (up,vp,d,n)
    w3p = w3r.reshape(4, 200, 500).astype(bf16)

    # fc2 padded to a lane-dense 128-wide output.
    w4p = jnp.zeros((500, 128), f32).at[:, :10].set(jnp.transpose(w4))
    b4p = jnp.zeros((1, 128), f32).at[0, :10].set(b4)

    # 0/1 block-diagonal row selectors (shapes depend on the batch tile Bt).
    # sel1: pooled row p of image b  <- conv1-row-pair max at flat row 28b+2p
    bb = jnp.arange(Bt)[:, None]
    pp = jnp.arange(12)[None, :]
    sel1 = jnp.zeros((Bt * 12, Bt * 28 - 5), f32).at[
        (12 * bb + pp).ravel(), (28 * bb + 2 * pp).ravel()].set(1.0)
    # sel2: output row q*Bt + b  <- conv2-row-pair max at flat row 12b+2q
    qq = jnp.arange(4)[:, None]
    bb2 = jnp.arange(Bt)[None, :]
    sel2 = jnp.zeros((4 * Bt, Bt * 12 - 5), f32).at[
        (Bt * qq + bb2).ravel(), (12 * bb2 + 2 * qq).ravel()].set(1.0)

    return {
        "a1": a1, "b1": jnp.tile(b1, 24).reshape(1, 480).astype(f32),
        "a2": a2, "b2": jnp.tile(b2, 8).reshape(1, 400).astype(f32),
        "w3": w3p, "b3": b3.reshape(1, 500).astype(f32),
        "w4": w4p.astype(bf16), "b4": b4p,
        "sel1": sel1.astype(bf16), "sel2": sel2.astype(bf16),
    }


# ------------------------------ forward wrapper -----------------------------

def net_forward(x_nchw, prep):
    """Fused forward pass.  x_nchw: (B, 1, 28, 28) f32 -> logits (B, 10)."""
    Bt = prep["sel2"].shape[0] // 4          # batch tile baked into selectors
    B = x_nchw.shape[0]
    Bpad = ((B + Bt - 1) // Bt) * Bt

    x = x_nchw.reshape(B, 28 * 28).astype(jnp.float32)
    if Bpad != B:
        x = jnp.pad(x, ((0, Bpad - B), (0, 0)))
    x = x.reshape(Bpad * 28, 28)             # images stacked along sublanes

    const2 = lambda b: (0, 0)
    const3 = lambda b: (0, 0, 0)
    out = pl.pallas_call(
        _lenet_fused_kernel,
        out_shape=jax.ShapeDtypeStruct((Bpad, 128), jnp.float32),
        grid=(Bpad // Bt,),
        in_specs=[
            pl.BlockSpec((Bt * 28, 28), lambda b: (b, 0)),  # Bt images / step
            pl.BlockSpec((5, 28, 480), const3),             # conv1 slabs
            pl.BlockSpec((1, 480), const2),                 # conv1 bias (tiled)
            pl.BlockSpec(prep["sel1"].shape, const2),       # pool1 row selector
            pl.BlockSpec((5, 240, 400), const3),            # conv2 slabs
            pl.BlockSpec((1, 400), const2),                 # conv2 bias (tiled)
            pl.BlockSpec(prep["sel2"].shape, const2),       # pool2 row selector
            pl.BlockSpec((4, 200, 500), const3),            # fc1 K-blocks
            pl.BlockSpec((1, 500), const2),                 # fc1 bias
            pl.BlockSpec((500, 128), const2),               # fc2 weight (padded)
            pl.BlockSpec((1, 128), const2),                 # fc2 bias (padded)
        ],
        out_specs=pl.BlockSpec((Bt, 128), lambda b: (b, 0)),
        compiler_params=pltpu.CompilerParams(
            dimension_semantics=("parallel",),              # v7x: 2 TCs split batch
            vmem_limit_bytes=32 * 1024 * 1024),
    )(x, prep["a1"], prep["b1"], prep["sel1"], prep["a2"], prep["b2"],
      prep["sel2"], prep["w3"], prep["b3"], prep["w4"], prep["b4"])
    return out[:B, :10]


# ----------------------- deterministic params + reference -------------------

def init_params(key):
    """PyTorch-default uniform(-1/sqrt(fan_in), 1/sqrt(fan_in)) init."""
    def u(k, shape, fan_in):
        bound = 1.0 / math.sqrt(fan_in)
        return jax.random.uniform(k, shape, jnp.float32, -bound, bound)
    ks = jax.random.split(key, 8)
    return {
        "conv1_w": u(ks[0], (20, 1, 5, 5), 25),
        "conv1_b": u(ks[1], (20,), 25),
        "conv2_w": u(ks[2], (50, 20, 5, 5), 500),
        "conv2_b": u(ks[3], (50,), 500),
        "fc1_w": u(ks[4], (500, 800), 800),
        "fc1_b": u(ks[5], (500,), 800),
        "fc2_w": u(ks[6], (10, 500), 500),
        "fc2_b": u(ks[7], (10,), 500),
    }


def reference_forward(x_nchw, params):
    """Plain-JAX f32 reference mirroring the PyTorch module exactly."""
    def pool(y):  # 2x2 / stride 2 max pool, NCHW
        return jnp.maximum(
            jnp.maximum(y[:, :, 0::2, 0::2], y[:, :, 0::2, 1::2]),
            jnp.maximum(y[:, :, 1::2, 0::2], y[:, :, 1::2, 1::2]))
    dn = ("NCHW", "OIHW", "NCHW")
    y = jax.lax.conv_general_dilated(x_nchw, params["conv1_w"], (1, 1), "VALID",
                                     dimension_numbers=dn)
    y = jax.nn.relu(y + params["conv1_b"][None, :, None, None])
    y = pool(y)
    y = jax.lax.conv_general_dilated(y, params["conv2_w"], (1, 1), "VALID",
                                     dimension_numbers=dn)
    y = jax.nn.relu(y + params["conv2_b"][None, :, None, None])
    y = pool(y)
    y = y.reshape(y.shape[0], 800)           # NCHW flatten == view(-1, 800)
    y = jax.nn.relu(y @ params["fc1_w"].T + params["fc1_b"])
    return y @ params["fc2_w"].T + params["fc2_b"]


# ---------------------------------- main -------------------------------------

if __name__ == "__main__":
    key = jax.random.PRNGKey(0)
    k_x, k_p = jax.random.split(key)

    # Spatial size 28x28x1 is dictated by fc1's 4*4*50 input; small batch.
    B, Bt = 16, 8                                         # 2 grid steps
    x = jax.random.normal(k_x, (B, 1, 28, 28), dtype=jnp.float32)  # NCHW
    params = init_params(k_p)
    prep = prepare_params(params, block_batch=Bt)  # one-time, hoisted

    fwd = jax.jit(net_forward)
    out = jax.block_until_ready(fwd(x, prep))
    assert out.shape == (B, 10) and out.dtype == jnp.float32

    # Validate against the f32 reference (bf16 MXU operands -> loose tolerance).
    ref = jax.block_until_ready(reference_forward(x, params))
    err = float(jnp.max(jnp.abs(out - ref)))
    assert err < 5e-2, f"max abs err vs reference: {err}"

    print("KERNEL_OK")
</pallas_src>

<mosaic_0001>
module attributes {stable_mosaic.version = 11 : i64} {
  func.func @_lenet_fused_kernel(%arg0: i32, %arg1: memref<224x28xf32, #tpu.memory_space<vmem>>, %arg2: memref<5x28x480xbf16, #tpu.memory_space<vmem>>, %arg3: memref<1x480xf32, #tpu.memory_space<vmem>>, %arg4: memref<96x219xbf16, #tpu.memory_space<vmem>>, %arg5: memref<5x240x400xbf16, #tpu.memory_space<vmem>>, %arg6: memref<1x400xf32, #tpu.memory_space<vmem>>, %arg7: memref<32x91xbf16, #tpu.memory_space<vmem>>, %arg8: memref<4x200x500xbf16, #tpu.memory_space<vmem>>, %arg9: memref<1x500xf32, #tpu.memory_space<vmem>>, %arg10: memref<500x128xbf16, #tpu.memory_space<vmem>>, %arg11: memref<1x128xf32, #tpu.memory_space<vmem>>, %arg12: memref<8x128xf32, #tpu.memory_space<vmem>>) attributes {dimension_semantics = [#tpu.dimension_semantics<parallel>], iteration_bounds = array<i64: 2>, scalar_prefetch = 0 : i64, scratch_operands = 0 : i64, tpu.core_type = #tpu.core_type<tc>, window_params = [{transform_indices = @transform_0, window_bounds = array<i64: 224, 28>}, {pipeline_mode = #tpu.pipeline_mode<synchronous>, transform_indices = @transform_1, window_bounds = array<i64: 5, 28, 480>}, {pipeline_mode = #tpu.pipeline_mode<synchronous>, transform_indices = @transform_2, window_bounds = array<i64: 1, 480>}, {pipeline_mode = #tpu.pipeline_mode<synchronous>, transform_indices = @transform_3, window_bounds = array<i64: 96, 219>}, {pipeline_mode = #tpu.pipeline_mode<synchronous>, transform_indices = @transform_4, window_bounds = array<i64: 5, 240, 400>}, {pipeline_mode = #tpu.pipeline_mode<synchronous>, transform_indices = @transform_5, window_bounds = array<i64: 1, 400>}, {pipeline_mode = #tpu.pipeline_mode<synchronous>, transform_indices = @transform_6, window_bounds = array<i64: 32, 91>}, {pipeline_mode = #tpu.pipeline_mode<synchronous>, transform_indices = @transform_7, window_bounds = array<i64: 4, 200, 500>}, {pipeline_mode = #tpu.pipeline_mode<synchronous>, transform_indices = @transform_8, window_bounds = array<i64: 1, 500>}, {pipeline_mode = #tpu.pipeline_mode<synchronous>, transform_indices = @transform_9, window_bounds = array<i64: 500, 128>}, {pipeline_mode = #tpu.pipeline_mode<synchronous>, transform_indices = @transform_10, window_bounds = array<i64: 1, 128>}, {transform_indices = @transform_11, window_bounds = array<i64: 8, 128>}]} {
    %c0 = arith.constant 0 : index
    %c0_0 = arith.constant 0 : index
    %0 = vector.load %arg1[%c0, %c0_0] : memref<224x28xf32, #tpu.memory_space<vmem>>, vector<224x28xf32>
    %1 = vector.extract_strided_slice %0 {offsets = [0, 0], sizes = [220, 28], strides = [1, 1]} : vector<224x28xf32> to vector<220x28xf32>
    %2 = arith.truncf %1 : vector<220x28xf32> to vector<220x28xbf16>
    %c0_1 = arith.constant 0 : index
    %c0_2 = arith.constant 0 : index
    %c0_3 = arith.constant 0 : index
    %3 = vector.load %arg2[%c0_1, %c0_2, %c0_3] : memref<5x28x480xbf16, #tpu.memory_space<vmem>>, vector<1x28x480xbf16>
    %4 = vector.shape_cast %3 : vector<1x28x480xbf16> to vector<28x480xbf16>
    %cst = arith.constant dense<0.000000e+00> : vector<220x480xf32>
    %5 = tpu.matmul %2, %4, %cst {dimension_numbers = #tpu.dot_dimension_numbers<[1], [0], [0], [1], [0, 0, 1, 1], [], []>} : vector<220x28xbf16>, vector<28x480xbf16>, vector<220x480xf32> -> vector<220x480xf32>
    %6 = vector.extract_strided_slice %0 {offsets = [1, 0], sizes = [220, 28], strides = [1, 1]} : vector<224x28xf32> to vector<220x28xf32>
    %7 = arith.truncf %6 : vector<220x28xf32> to vector<220x28xbf16>
    %c1 = arith.constant 1 : index
    %c0_4 = arith.constant 0 : index
    %c0_5 = arith.constant 0 : index
    %8 = vector.load %arg2[%c1, %c0_4, %c0_5] : memref<5x28x480xbf16, #tpu.memory_space<vmem>>, vector<1x28x480xbf16>
    %9 = vector.shape_cast %8 : vector<1x28x480xbf16> to vector<28x480xbf16>
    %cst_6 = arith.constant dense<0.000000e+00> : vector<220x480xf32>
    %10 = tpu.matmul %7, %9, %cst_6 {dimension_numbers = #tpu.dot_dimension_numbers<[1], [0], [0], [1], [0, 0, 1, 1], [], []>} : vector<220x28xbf16>, vector<28x480xbf16>, vector<220x480xf32> -> vector<220x480xf32>
    %11 = arith.addf %5, %10 : vector<220x480xf32>
    %12 = vector.extract_strided_slice %0 {offsets = [2, 0], sizes = [220, 28], strides = [1, 1]} : vector<224x28xf32> to vector<220x28xf32>
    %13 = arith.truncf %12 : vector<220x28xf32> to vector<220x28xbf16>
    %c2 = arith.constant 2 : index
    %c0_7 = arith.constant 0 : index
    %c0_8 = arith.constant 0 : index
    %14 = vector.load %arg2[%c2, %c0_7, %c0_8] : memref<5x28x480xbf16, #tpu.memory_space<vmem>>, vector<1x28x480xbf16>
    %15 = vector.shape_cast %14 : vector<1x28x480xbf16> to vector<28x480xbf16>
    %cst_9 = arith.constant dense<0.000000e+00> : vector<220x480xf32>
    %16 = tpu.matmul %13, %15, %cst_9 {dimension_numbers = #tpu.dot_dimension_numbers<[1], [0], [0], [1], [0, 0, 1, 1], [], []>} : vector<220x28xbf16>, vector<28x480xbf16>, vector<220x480xf32> -> vector<220x480xf32>
    %17 = arith.addf %11, %16 : vector<220x480xf32>
    %18 = vector.extract_strided_slice %0 {offsets = [3, 0], sizes = [220, 28], strides = [1, 1]} : vector<224x28xf32> to vector<220x28xf32>
    %19 = arith.truncf %18 : vector<220x28xf32> to vector<220x28xbf16>
    %c3 = arith.constant 3 : index
    %c0_10 = arith.constant 0 : index
    %c0_11 = arith.constant 0 : index
    %20 = vector.load %arg2[%c3, %c0_10, %c0_11] : memref<5x28x480xbf16, #tpu.memory_space<vmem>>, vector<1x28x480xbf16>
    %21 = vector.shape_cast %20 : vector<1x28x480xbf16> to vector<28x480xbf16>
    %cst_12 = arith.constant dense<0.000000e+00> : vector<220x480xf32>
    %22 = tpu.matmul %19, %21, %cst_12 {dimension_numbers = #tpu.dot_dimension_numbers<[1], [0], [0], [1], [0, 0, 1, 1], [], []>} : vector<220x28xbf16>, vector<28x480xbf16>, vector<220x480xf32> -> vector<220x480xf32>
    %23 = arith.addf %17, %22 : vector<220x480xf32>
    %24 = vector.extract_strided_slice %0 {offsets = [4, 0], sizes = [220, 28], strides = [1, 1]} : vector<224x28xf32> to vector<220x28xf32>
    %25 = arith.truncf %24 : vector<220x28xf32> to vector<220x28xbf16>
    %c4 = arith.constant 4 : index
    %c0_13 = arith.constant 0 : index
    %c0_14 = arith.constant 0 : index
    %26 = vector.load %arg2[%c4, %c0_13, %c0_14] : memref<5x28x480xbf16, #tpu.memory_space<vmem>>, vector<1x28x480xbf16>
    %27 = vector.shape_cast %26 : vector<1x28x480xbf16> to vector<28x480xbf16>
    %cst_15 = arith.constant dense<0.000000e+00> : vector<220x480xf32>
    %28 = tpu.matmul %25, %27, %cst_15 {dimension_numbers = #tpu.dot_dimension_numbers<[1], [0], [0], [1], [0, 0, 1, 1], [], []>} : vector<220x28xbf16>, vector<28x480xbf16>, vector<220x480xf32> -> vector<220x480xf32>
    %29 = arith.addf %23, %28 : vector<220x480xf32>
    %c0_16 = arith.constant 0 : index
    %c0_17 = arith.constant 0 : index
    %30 = vector.load %arg3[%c0_16, %c0_17] : memref<1x480xf32, #tpu.memory_space<vmem>>, vector<1x480xf32>
    %31 = vector.broadcast %30 : vector<1x480xf32> to vector<220x480xf32>
    %32 = arith.addf %29, %31 : vector<220x480xf32>
    %cst_18 = arith.constant 0.000000e+00 : f32
    %33 = vector.broadcast %cst_18 : f32 to vector<220x480xf32>
    %34 = arith.maximumf %32, %33 : vector<220x480xf32>
    %35 = vector.extract_strided_slice %34 {offsets = [0, 0], sizes = [220, 240], strides = [1, 1]} : vector<220x480xf32> to vector<220x240xf32>
    %36 = vector.extract_strided_slice %34 {offsets = [0, 240], sizes = [220, 240], strides = [1, 1]} : vector<220x480xf32> to vector<220x240xf32>
    %37 = arith.maximumf %35, %36 : vector<220x240xf32>
    %38 = vector.extract_strided_slice %37 {offsets = [0, 0], sizes = [219, 240], strides = [1, 1]} : vector<220x240xf32> to vector<219x240xf32>
    %39 = vector.extract_strided_slice %37 {offsets = [1, 0], sizes = [219, 240], strides = [1, 1]} : vector<220x240xf32> to vector<219x240xf32>
    %40 = arith.maximumf %38, %39 : vector<219x240xf32>
    %41 = arith.truncf %40 : vector<219x240xf32> to vector<219x240xbf16>
    %c0_19 = arith.constant 0 : index
    %c0_20 = arith.constant 0 : index
    %42 = vector.load %arg4[%c0_19, %c0_20] : memref<96x219xbf16, #tpu.memory_space<vmem>>, vector<96x219xbf16>
    %cst_21 = arith.constant dense<0.000000e+00> : vector<96x240xf32>
    %43 = tpu.matmul %42, %41, %cst_21 {dimension_numbers = #tpu.dot_dimension_numbers<[1], [0], [0], [1], [0, 0, 1, 1], [], []>} : vector<96x219xbf16>, vector<219x240xbf16>, vector<96x240xf32> -> vector<96x240xf32>
    %44 = vector.extract_strided_slice %43 {offsets = [0, 0], sizes = [92, 240], strides = [1, 1]} : vector<96x240xf32> to vector<92x240xf32>
    %45 = arith.truncf %44 : vector<92x240xf32> to vector<92x240xbf16>
    %c0_22 = arith.constant 0 : index
    %c0_23 = arith.constant 0 : index
    %c0_24 = arith.constant 0 : index
    %46 = vector.load %arg5[%c0_22, %c0_23, %c0_24] : memref<5x240x400xbf16, #tpu.memory_space<vmem>>, vector<1x240x400xbf16>
    %47 = vector.shape_cast %46 : vector<1x240x400xbf16> to vector<240x400xbf16>
    %cst_25 = arith.constant dense<0.000000e+00> : vector<92x400xf32>
    %48 = tpu.matmul %45, %47, %cst_25 {dimension_numbers = #tpu.dot_dimension_numbers<[1], [0], [0], [1], [0, 0, 1, 1], [], []>} : vector<92x240xbf16>, vector<240x400xbf16>, vector<92x400xf32> -> vector<92x400xf32>
    %49 = vector.extract_strided_slice %43 {offsets = [1, 0], sizes = [92, 240], strides = [1, 1]} : vector<96x240xf32> to vector<92x240xf32>
    %50 = arith.truncf %49 : vector<92x240xf32> to vector<92x240xbf16>
    %c1_26 = arith.constant 1 : index
    %c0_27 = arith.constant 0 : index
    %c0_28 = arith.constant 0 : index
    %51 = vector.load %arg5[%c1_26, %c0_27, %c0_28] : memref<5x240x400xbf16, #tpu.memory_space<vmem>>, vector<1x240x400xbf16>
    %52 = vector.shape_cast %51 : vector<1x240x400xbf16> to vector<240x400xbf16>
    %cst_29 = arith.constant dense<0.000000e+00> : vector<92x400xf32>
    %53 = tpu.matmul %50, %52, %cst_29 {dimension_numbers = #tpu.dot_dimension_numbers<[1], [0], [0], [1], [0, 0, 1, 1], [], []>} : vector<92x240xbf16>, vector<240x400xbf16>, vector<92x400xf32> -> vector<92x400xf32>
    %54 = arith.addf %48, %53 : vector<92x400xf32>
    %55 = vector.extract_strided_slice %43 {offsets = [2, 0], sizes = [92, 240], strides = [1, 1]} : vector<96x240xf32> to vector<92x240xf32>
    %56 = arith.truncf %55 : vector<92x240xf32> to vector<92x240xbf16>
    %c2_30 = arith.constant 2 : index
    %c0_31 = arith.constant 0 : index
    %c0_32 = arith.constant 0 : index
    %57 = vector.load %arg5[%c2_30, %c0_31, %c0_32] : memref<5x240x400xbf16, #tpu.memory_space<vmem>>, vector<1x240x400xbf16>
    %58 = vector.shape_cast %57 : vector<1x240x400xbf16> to vector<240x400xbf16>
    %cst_33 = arith.constant dense<0.000000e+00> : vector<92x400xf32>
    %59 = tpu.matmul %56, %58, %cst_33 {dimension_numbers = #tpu.dot_dimension_numbers<[1], [0], [0], [1], [0, 0, 1, 1], [], []>} : vector<92x240xbf16>, vector<240x400xbf16>, vector<92x400xf32> -> vector<92x400xf32>
    %60 = arith.addf %54, %59 : vector<92x400xf32>
    %61 = vector.extract_strided_slice %43 {offsets = [3, 0], sizes = [92, 240], strides = [1, 1]} : vector<96x240xf32> to vector<92x240xf32>
    %62 = arith.truncf %61 : vector<92x240xf32> to vector<92x240xbf16>
    %c3_34 = arith.constant 3 : index
    %c0_35 = arith.constant 0 : index
    %c0_36 = arith.constant 0 : index
    %63 = vector.load %arg5[%c3_34, %c0_35, %c0_36] : memref<5x240x400xbf16, #tpu.memory_space<vmem>>, vector<1x240x400xbf16>
    %64 = vector.shape_cast %63 : vector<1x240x400xbf16> to vector<240x400xbf16>
    %cst_37 = arith.constant dense<0.000000e+00> : vector<92x400xf32>
    %65 = tpu.matmul %62, %64, %cst_37 {dimension_numbers = #tpu.dot_dimension_numbers<[1], [0], [0], [1], [0, 0, 1, 1], [], []>} : vector<92x240xbf16>, vector<240x400xbf16>, vector<92x400xf32> -> vector<92x400xf32>
    %66 = arith.addf %60, %65 : vector<92x400xf32>
    %67 = vector.extract_strided_slice %43 {offsets = [4, 0], sizes = [92, 240], strides = [1, 1]} : vector<96x240xf32> to vector<92x240xf32>
    %68 = arith.truncf %67 : vector<92x240xf32> to vector<92x240xbf16>
    %c4_38 = arith.constant 4 : index
    %c0_39 = arith.constant 0 : index
    %c0_40 = arith.constant 0 : index
    %69 = vector.load %arg5[%c4_38, %c0_39, %c0_40] : memref<5x240x400xbf16, #tpu.memory_space<vmem>>, vector<1x240x400xbf16>
    %70 = vector.shape_cast %69 : vector<1x240x400xbf16> to vector<240x400xbf16>
    %cst_41 = arith.constant dense<0.000000e+00> : vector<92x400xf32>
    %71 = tpu.matmul %68, %70, %cst_41 {dimension_numbers = #tpu.dot_dimension_numbers<[1], [0], [0], [1], [0, 0, 1, 1], [], []>} : vector<92x240xbf16>, vector<240x400xbf16>, vector<92x400xf32> -> vector<92x400xf32>
    %72 = arith.addf %66, %71 : vector<92x400xf32>
    %c0_42 = arith.constant 0 : index
    %c0_43 = arith.constant 0 : index
    %73 = vector.load %arg6[%c0_42, %c0_43] : memref<1x400xf32, #tpu.memory_space<vmem>>, vector<1x400xf32>
    %74 = vector.broadcast %73 : vector<1x400xf32> to vector<92x400xf32>
    %75 = arith.addf %72, %74 : vector<92x400xf32>
    %cst_44 = arith.constant 0.000000e+00 : f32
    %76 = vector.broadcast %cst_44 : f32 to vector<92x400xf32>
    %77 = arith.maximumf %75, %76 : vector<92x400xf32>
    %78 = vector.extract_strided_slice %77 {offsets = [0, 0], sizes = [92, 200], strides = [1, 1]} : vector<92x400xf32> to vector<92x200xf32>
    %79 = vector.extract_strided_slice %77 {offsets = [0, 200], sizes = [92, 200], strides = [1, 1]} : vector<92x400xf32> to vector<92x200xf32>
    %80 = arith.maximumf %78, %79 : vector<92x200xf32>
    %81 = vector.extract_strided_slice %80 {offsets = [0, 0], sizes = [91, 200], strides = [1, 1]} : vector<92x200xf32> to vector<91x200xf32>
    %82 = vector.extract_strided_slice %80 {offsets = [1, 0], sizes = [91, 200], strides = [1, 1]} : vector<92x200xf32> to vector<91x200xf32>
    %83 = arith.maximumf %81, %82 : vector<91x200xf32>
    %84 = arith.truncf %83 : vector<91x200xf32> to vector<91x200xbf16>
    %c0_45 = arith.constant 0 : index
    %c0_46 = arith.constant 0 : index
    %85 = vector.load %arg7[%c0_45, %c0_46] : memref<32x91xbf16, #tpu.memory_space<vmem>>, vector<32x91xbf16>
    %cst_47 = arith.constant dense<0.000000e+00> : vector<32x200xf32>
    %86 = tpu.matmul %85, %84, %cst_47 {dimension_numbers = #tpu.dot_dimension_numbers<[1], [0], [0], [1], [0, 0, 1, 1], [], []>} : vector<32x91xbf16>, vector<91x200xbf16>, vector<32x200xf32> -> vector<32x200xf32>
    %87 = vector.extract_strided_slice %86 {offsets = [0, 0], sizes = [8, 200], strides = [1, 1]} : vector<32x200xf32> to vector<8x200xf32>
    %88 = arith.truncf %87 : vector<8x200xf32> to vector<8x200xbf16>
    %c0_48 = arith.constant 0 : index
    %c0_49 = arith.constant 0 : index
    %c0_50 = arith.constant 0 : index
    %89 = vector.load %arg8[%c0_48, %c0_49, %c0_50] : memref<4x200x500xbf16, #tpu.memory_space<vmem>>, vector<1x200x500xbf16>
    %90 = vector.shape_cast %89 : vector<1x200x500xbf16> to vector<200x500xbf16>
    %cst_51 = arith.constant dense<0.000000e+00> : vector<8x500xf32>
    %91 = tpu.matmul %88, %90, %cst_51 {dimension_numbers = #tpu.dot_dimension_numbers<[1], [0], [0], [1], [0, 0, 1, 1], [], []>} : vector<8x200xbf16>, vector<200x500xbf16>, vector<8x500xf32> -> vector<8x500xf32>
    %92 = vector.extract_strided_slice %86 {offsets = [8, 0], sizes = [8, 200], strides = [1, 1]} : vector<32x200xf32> to vector<8x200xf32>
    %93 = arith.truncf %92 : vector<8x200xf32> to vector<8x200xbf16>
    %c1_52 = arith.constant 1 : index
    %c0_53 = arith.constant 0 : index
    %c0_54 = arith.constant 0 : index
    %94 = vector.load %arg8[%c1_52, %c0_53, %c0_54] : memref<4x200x500xbf16, #tpu.memory_space<vmem>>, vector<1x200x500xbf16>
    %95 = vector.shape_cast %94 : vector<1x200x500xbf16> to vector<200x500xbf16>
    %cst_55 = arith.constant dense<0.000000e+00> : vector<8x500xf32>
    %96 = tpu.matmul %93, %95, %cst_55 {dimension_numbers = #tpu.dot_dimension_numbers<[1], [0], [0], [1], [0, 0, 1, 1], [], []>} : vector<8x200xbf16>, vector<200x500xbf16>, vector<8x500xf32> -> vector<8x500xf32>
    %97 = arith.addf %91, %96 : vector<8x500xf32>
    %98 = vector.extract_strided_slice %86 {offsets = [16, 0], sizes = [8, 200], strides = [1, 1]} : vector<32x200xf32> to vector<8x200xf32>
    %99 = arith.truncf %98 : vector<8x200xf32> to vector<8x200xbf16>
    %c2_56 = arith.constant 2 : index
    %c0_57 = arith.constant 0 : index
    %c0_58 = arith.constant 0 : index
    %100 = vector.load %arg8[%c2_56, %c0_57, %c0_58] : memref<4x200x500xbf16, #tpu.memory_space<vmem>>, vector<1x200x500xbf16>
    %101 = vector.shape_cast %100 : vector<1x200x500xbf16> to vector<200x500xbf16>
    %cst_59 = arith.constant dense<0.000000e+00> : vector<8x500xf32>
    %102 = tpu.matmul %99, %101, %cst_59 {dimension_numbers = #tpu.dot_dimension_numbers<[1], [0], [0], [1], [0, 0, 1, 1], [], []>} : vector<8x200xbf16>, vector<200x500xbf16>, vector<8x500xf32> -> vector<8x500xf32>
    %103 = arith.addf %97, %102 : vector<8x500xf32>
    %104 = vector.extract_strided_slice %86 {offsets = [24, 0], sizes = [8, 200], strides = [1, 1]} : vector<32x200xf32> to vector<8x200xf32>
    %105 = arith.truncf %104 : vector<8x200xf32> to vector<8x200xbf16>
    %c3_60 = arith.constant 3 : index
    %c0_61 = arith.constant 0 : index
    %c0_62 = arith.constant 0 : index
    %106 = vector.load %arg8[%c3_60, %c0_61, %c0_62] : memref<4x200x500xbf16, #tpu.memory_space<vmem>>, vector<1x200x500xbf16>
    %107 = vector.shape_cast %106 : vector<1x200x500xbf16> to vector<200x500xbf16>
    %cst_63 = arith.constant dense<0.000000e+00> : vector<8x500xf32>
    %108 = tpu.matmul %105, %107, %cst_63 {dimension_numbers = #tpu.dot_dimension_numbers<[1], [0], [0], [1], [0, 0, 1, 1], [], []>} : vector<8x200xbf16>, vector<200x500xbf16>, vector<8x500xf32> -> vector<8x500xf32>
    %109 = arith.addf %103, %108 : vector<8x500xf32>
    %c0_64 = arith.constant 0 : index
    %c0_65 = arith.constant 0 : index
    %110 = vector.load %arg9[%c0_64, %c0_65] : memref<1x500xf32, #tpu.memory_space<vmem>>, vector<1x500xf32>
    %111 = vector.broadcast %110 : vector<1x500xf32> to vector<8x500xf32>
    %112 = arith.addf %109, %111 : vector<8x500xf32>
    %cst_66 = arith.constant 0.000000e+00 : f32
    %113 = vector.broadcast %cst_66 : f32 to vector<8x500xf32>
    %114 = arith.maximumf %112, %113 : vector<8x500xf32>
    %115 = arith.truncf %114 : vector<8x500xf32> to vector<8x500xbf16>
    %c0_67 = arith.constant 0 : index
    %c0_68 = arith.constant 0 : index
    %116 = vector.load %arg10[%c0_67, %c0_68] : memref<500x128xbf16, #tpu.memory_space<vmem>>, vector<500x128xbf16>
    %cst_69 = arith.constant dense<0.000000e+00> : vector<8x128xf32>
    %117 = tpu.matmul %115, %116, %cst_69 {dimension_numbers = #tpu.dot_dimension_numbers<[1], [0], [0], [1], [0, 0, 1, 1], [], []>} : vector<8x500xbf16>, vector<500x128xbf16>, vector<8x128xf32> -> vector<8x128xf32>
    %c0_70 = arith.constant 0 : index
    %c0_71 = arith.constant 0 : index
    %118 = vector.load %arg11[%c0_70, %c0_71] : memref<1x128xf32, #tpu.memory_space<vmem>>, vector<1x128xf32>
    %119 = vector.broadcast %118 : vector<1x128xf32> to vector<8x128xf32>
    %120 = arith.addf %117, %119 : vector<8x128xf32>
    %c0_72 = arith.constant 0 : index
    %c0_73 = arith.constant 0 : index
    %121 = vector.load %arg12[%c0_72, %c0_73] : memref<8x128xf32, #tpu.memory_space<vmem>>, vector<8x128xf32>
    tpu.vector_store %arg12[%c0_72, %c0_73], %120 {strides = array<i32>} : memref<8x128xf32, #tpu.memory_space<vmem>>, vector<8x128xf32>,
    return
  }
  func.func @transform_0(%arg0: i32) -> (i32, i32) {
    %c0_i32 = arith.constant 0 : i32
    %c0_i32_0 = arith.constant 0 : i32
    return %arg0, %c0_i32 : i32, i32
  }
  func.func @transform_1(%arg0: i32) -> (i32, i32, i32) {
    %c0_i32 = arith.constant 0 : i32
    %c0_i32_0 = arith.constant 0 : i32
    %c0_i32_1 = arith.constant 0 : i32
    %c0_i32_2 = arith.constant 0 : i32
    return %c0_i32, %c0_i32_0, %c0_i32_1 : i32, i32, i32
  }
  func.func @transform_2(%arg0: i32) -> (i32, i32) {
    %c0_i32 = arith.constant 0 : i32
    %c0_i32_0 = arith.constant 0 : i32
    %c0_i32_1 = arith.constant 0 : i32
    return %c0_i32, %c0_i32_0 : i32, i32
  }
  func.func @transform_3(%arg0: i32) -> (i32, i32) {
    %c0_i32 = arith.constant 0 : i32
    %c0_i32_0 = arith.constant 0 : i32
    %c0_i32_1 = arith.constant 0 : i32
    return %c0_i32, %c0_i32_0 : i32, i32
  }
  func.func @transform_4(%arg0: i32) -> (i32, i32, i32) {
    %c0_i32 = arith.constant 0 : i32
    %c0_i32_0 = arith.constant 0 : i32
    %c0_i32_1 = arith.constant 0 : i32
    %c0_i32_2 = arith.constant 0 : i32
    return %c0_i32, %c0_i32_0, %c0_i32_1 : i32, i32, i32
  }
  func.func @transform_5(%arg0: i32) -> (i32, i32) {
    %c0_i32 = arith.constant 0 : i32
    %c0_i32_0 = arith.constant 0 : i32
    %c0_i32_1 = arith.constant 0 : i32
    return %c0_i32, %c0_i32_0 : i32, i32
  }
  func.func @transform_6(%arg0: i32) -> (i32, i32) {
    %c0_i32 = arith.constant 0 : i32
    %c0_i32_0 = arith.constant 0 : i32
    %c0_i32_1 = arith.constant 0 : i32
    return %c0_i32, %c0_i32_0 : i32, i32
  }
  func.func @transform_7(%arg0: i32) -> (i32, i32, i32) {
    %c0_i32 = arith.constant 0 : i32
    %c0_i32_0 = arith.constant 0 : i32
    %c0_i32_1 = arith.constant 0 : i32
    %c0_i32_2 = arith.constant 0 : i32
    return %c0_i32, %c0_i32_0, %c0_i32_1 : i32, i32, i32
  }
  func.func @transform_8(%arg0: i32) -> (i32, i32) {
    %c0_i32 = arith.constant 0 : i32
    %c0_i32_0 = arith.constant 0 : i32
    %c0_i32_1 = arith.constant 0 : i32
    return %c0_i32, %c0_i32_0 : i32, i32
  }
  func.func @transform_9(%arg0: i32) -> (i32, i32) {
    %c0_i32 = arith.constant 0 : i32
    %c0_i32_0 = arith.constant 0 : i32
    %c0_i32_1 = arith.constant 0 : i32
    return %c0_i32, %c0_i32_0 : i32, i32
  }
  func.func @transform_10(%arg0: i32) -> (i32, i32) {
    %c0_i32 = arith.constant 0 : i32
    %c0_i32_0 = arith.constant 0 : i32
    %c0_i32_1 = arith.constant 0 : i32
    return %c0_i32, %c0_i32_0 : i32, i32
  }
  func.func @transform_11(%arg0: i32) -> (i32, i32) {
    %c0_i32 = arith.constant 0 : i32
    %c0_i32_0 = arith.constant 0 : i32
    return %arg0, %c0_i32 : i32, i32
  }
}

</mosaic_0001>

<llo_original>
// kernel: net_forward.1
$region0: #{net_forward.1}
  #allocation0 [shape = 'u32[]', space=smem, size = 0x4, offset = 0x4, fixed_abs, tag = 'smem constant byte address 0x4 - core index']
  #allocation1 [shape = 'u32[144,128]{1,0:T(1,128)}', space=vmem, size = 0x12000, scoped, tag = 'internal scratch']
  %s0 = inlined_call_operand.vmem [shape: f32[448,28], index: 0, kind: input, shape index: {}]
  %s1 = inlined_call_operand.vmem [shape: bf16[5,28,480], index: 1, kind: input, shape index: {}]
  %s2 = inlined_call_operand.vmem [shape: f32[1,480], index: 2, kind: input, shape index: {}]
  %s3 = inlined_call_operand.vmem [shape: bf16[96,219], index: 3, kind: input, shape index: {}]
  %s4 = inlined_call_operand.vmem [shape: bf16[5,240,400], index: 4, kind: input, shape index: {}]
  %s5 = inlined_call_operand.vmem [shape: f32[1,400], index: 5, kind: input, shape index: {}]
  %s6 = inlined_call_operand.vmem [shape: bf16[32,91], index: 6, kind: input, shape index: {}]
  %s7 = inlined_call_operand.vmem [shape: bf16[4,200,500], index: 7, kind: input, shape index: {}]
  %s8 = inlined_call_operand.vmem [shape: f32[1,500], index: 8, kind: input, shape index: {}]
  %s9 = inlined_call_operand.vmem [shape: bf16[500,128], index: 9, kind: input, shape index: {}]
  %s10 = inlined_call_operand.vmem [shape: f32[1,128], index: 10, kind: input, shape index: {}]
  %s11 = inlined_call_operand.hbm [shape: f32[16,128], index: 11, kind: output, shape index: {}]
  %s12 = sld [smem:[#allocation0]]
  $region77: #{net_forward.1} parent=0
    _
  %s14 = ssub.s32 1, %s12
  %s15 = scalar_select 0, %s14, %s12
  $region1: #{net_forward.1} parent=0
    #allocation2 [shape = 'u8[8192]{0}', space=vmem, size = 0x2000, scoped, tag = 'output window, operand 0']
    #allocation3 [shape = 's32[2]{0}', space=sflag, size = 0x8, scoped, tag = 'scoped memory for net_forward.1']
    %16 = vsyncpa [#allocation3], 0
    %s17 = scalar_lea.sflag [#allocation3], 1
    %18 = vsyncpa %s17, 0
    loop: start=0, step=1, limit=4
    $region2: #{net_forward.1} parent=1 // loop_pre_header
      _
    $region3: #{net_forward.1} parent=1 // loop_header
      %s20 = sphi 0, %s24
      %p21 = scmp.ge.s32.totalorder %s20, 4
      %s30 = sphi 0, %s32
      %s33 = sphi 0, %s30
      %s34 = sphi 0, %s33
      %s50 = sphi 0, %s34
      %s54 = sphi 0, %s54
      %s56 = sphi 0, %s54
      %s57 = sphi 0, %s56
      %s71 = sphi 0, %s57
      %s75 = sphi 0, %s75
      %s77 = sphi 0, %s75
      %s78 = sphi 0, %s77
      %s92 = sphi 0, %s78
      %s96 = sphi 0, %s96
      %s98 = sphi 0, %s96
      %s99 = sphi 0, %s98
      %s113 = sphi 0, %s99
      %s117 = sphi 0, %s117
      %s119 = sphi 0, %s117
      %s120 = sphi 0, %s119
      %s134 = sphi 0, %s120
      %s138 = sphi 0, %s138
      %s140 = sphi 0, %s138
      %s141 = sphi 0, %s140
      %s155 = sphi 0, %s141
      %s159 = sphi 0, %s159
      %s161 = sphi 0, %s159
      %s162 = sphi 0, %s161
      %s176 = sphi 0, %s162
      %s180 = sphi 0, %s180
      %s182 = sphi 0, %s180
      %s183 = sphi 0, %s182
      %s197 = sphi 0, %s183
      %s201 = sphi 0, %s201
      %s203 = sphi 0, %s201
      %s204 = sphi 0, %s203
      %s218 = sphi 0, %s204
      %s222 = sphi 0, %s222
      %s224 = sphi 0, %s222
      %s225 = sphi 0, %s224
      %s239 = sphi 0, %s225
      %s243 = sphi 0, %s243
      %s245 = sphi 0, %s243
      %s246 = sphi 0, %s245
      %s260 = sphi 0, %s246
      %s266 = sphi 0, %s268
      %s269 = sphi 0, %s266
      %s270 = sphi 0, %s269
      %s286 = sphi 0, %s270
    $region4: #{net_forward.1} parent=1 // loop_header_branch
      %23 = sbr.rel (%p21) target = $region8
    $region5: #{net_forward.1} parent=1 // loop_body
      %s25 = ssub.s32 %s20, 1
      %s26 = ssub.s32 %s20, 2
      %s27 = sadd.s32 %s20, 1
      %s28 = ssub.s32 %s20, %s27
      %p29 = scmp.eq.s32.totalorder %s28, 0
      %s31 = sadd.s32 %s30, 1
      %s32 = scalar_select %p29, %s30, %s31
      %p35 = pneg %p29
      %p36 = scmp.eq.s32.totalorder %s20, 1
      %p37 = por %p35, %p36
      %p38 = scmp.ne.s32.totalorder %s30, %s33
      %p39 = scmp.eq.s32.totalorder %s20, 0
      %p40 = por %p38, %p39
      %p41 = scmp.ne.s32.totalorder %s30, %s33
      %p42 = scmp.eq.s32.totalorder %s25, 1
      %p43 = por %p41, %p42
      %p44 = scmp.ne.s32.totalorder %s33, %s34
      %p45 = scmp.eq.s32.totalorder %s25, 0
      %p46 = por %p44, %p45
      %p47 = scmp.ne.s32.totalorder %s33, %s34
      %p48 = scmp.eq.s32.totalorder %s26, 1
      %p49 = por %p47, %p48
      %p51 = scmp.ne.s32.totalorder %s34, %s50
      %p52 = scmp.eq.s32.totalorder %s26, 0
      %p53 = por %p51, %p52
      %s55 = sadd.s32 %s54, 1
      %p58 = scmp.eq.s32.totalorder %s20, 1
      %p59 = scmp.ne.s32.totalorder %s54, %s56
      %p60 = scmp.eq.s32.totalorder %s20, 0
      %p61 = por %p59, %p60
      %p62 = scmp.ne.s32.totalorder %s54, %s56
      %p63 = scmp.eq.s32.totalorder %s25, 1
      %p64 = por %p62, %p63
      %p65 = scmp.ne.s32.totalorder %s56, %s57
      %p66 = scmp.eq.s32.totalorder %s25, 0
      %p67 = por %p65, %p66
      %p68 = scmp.ne.s32.totalorder %s56, %s57
      %p69 = scmp.eq.s32.totalorder %s26, 1
      %p70 = por %p68, %p69
      %p72 = scmp.ne.s32.totalorder %s57, %s71
      %p73 = scmp.eq.s32.totalorder %s26, 0
      %p74 = por %p72, %p73
      %s76 = sadd.s32 %s75, 1
      %p79 = scmp.eq.s32.totalorder %s20, 1
      %p80 = scmp.ne.s32.totalorder %s75, %s77
      %p81 = scmp.eq.s32.totalorder %s20, 0
      %p82 = por %p80, %p81
      %p83 = scmp.ne.s32.totalorder %s75, %s77
      %p84 = scmp.eq.s32.totalorder %s25, 1
      %p85 = por %p83, %p84
      %p86 = scmp.ne.s32.totalorder %s77, %s78
      %p87 = scmp.eq.s32.totalorder %s25, 0
      %p88 = por %p86, %p87
      %p89 = scmp.ne.s32.totalorder %s77, %s78
      %p90 = scmp.eq.s32.totalorder %s26, 1
      %p91 = por %p89, %p90
      %p93 = scmp.ne.s32.totalorder %s78, %s92
      %p94 = scmp.eq.s32.totalorder %s26, 0
      %p95 = por %p93, %p94
      %s97 = sadd.s32 %s96, 1
      %p100 = scmp.eq.s32.totalorder %s20, 1
      %p101 = scmp.ne.s32.totalorder %s96, %s98
      %p102 = scmp.eq.s32.totalorder %s20, 0
      %p103 = por %p101, %p102
      %p104 = scmp.ne.s32.totalorder %s96, %s98
      %p105 = scmp.eq.s32.totalorder %s25, 1
      %p106 = por %p104, %p105
      %p107 = scmp.ne.s32.totalorder %s98, %s99
      %p108 = scmp.eq.s32.totalorder %s25, 0
      %p109 = por %p107, %p108
      %p110 = scmp.ne.s32.totalorder %s98, %s99
      %p111 = scmp.eq.s32.totalorder %s26, 1
      %p112 = por %p110, %p111
      %p114 = scmp.ne.s32.totalorder %s99, %s113
      %p115 = scmp.eq.s32.totalorder %s26, 0
      %p116 = por %p114, %p115
      %s118 = sadd.s32 %s117, 1
      %p121 = scmp.eq.s32.totalorder %s20, 1
      %p122 = scmp.ne.s32.totalorder %s117, %s119
      %p123 = scmp.eq.s32.totalorder %s20, 0
      %p124 = por %p122, %p123
      %p125 = scmp.ne.s32.totalorder %s117, %s119
      %p126 = scmp.eq.s32.totalorder %s25, 1
      %p127 = por %p125, %p126
      %p128 = scmp.ne.s32.totalorder %s119, %s120
      %p129 = scmp.eq.s32.totalorder %s25, 0
      %p130 = por %p128, %p129
      %p131 = scmp.ne.s32.totalorder %s119, %s120
      %p132 = scmp.eq.s32.totalorder %s26, 1
      %p133 = por %p131, %p132
      %p135 = scmp.ne.s32.totalorder %s120, %s134
      %p136 = scmp.eq.s32.totalorder %s26, 0
      %p137 = por %p135, %p136
      %s139 = sadd.s32 %s138, 1
      %p142 = scmp.eq.s32.totalorder %s20, 1
      %p143 = scmp.ne.s32.totalorder %s138, %s140
      %p144 = scmp.eq.s32.totalorder %s20, 0
      %p145 = por %p143, %p144
      %p146 = scmp.ne.s32.totalorder %s138, %s140
      %p147 = scmp.eq.s32.totalorder %s25, 1
      %p148 = por %p146, %p147
      %p149 = scmp.ne.s32.totalorder %s140, %s141
      %p150 = scmp.eq.s32.totalorder %s25, 0
      %p151 = por %p149, %p150
      %p152 = scmp.ne.s32.totalorder %s140, %s141
      %p153 = scmp.eq.s32.totalorder %s26, 1
      %p154 = por %p152, %p153
      %p156 = scmp.ne.s32.totalorder %s141, %s155
      %p157 = scmp.eq.s32.totalorder %s26, 0
      %p158 = por %p156, %p157
      %s160 = sadd.s32 %s159, 1
      %p163 = scmp.eq.s32.totalorder %s20, 1
      %p164 = scmp.ne.s32.totalorder %s159, %s161
      %p165 = scmp.eq.s32.totalorder %s20, 0
      %p166 = por %p164, %p165
      %p167 = scmp.ne.s32.totalorder %s159, %s161
      %p168 = scmp.eq.s32.totalorder %s25, 1
      %p169 = por %p167, %p168
      %p170 = scmp.ne.s32.totalorder %s161, %s162
      %p171 = scmp.eq.s32.totalorder %s25, 0
      %p172 = por %p170, %p171
      %p173 = scmp.ne.s32.totalorder %s161, %s162
      %p174 = scmp.eq.s32.totalorder %s26, 1
      %p175 = por %p173, %p174
      %p177 = scmp.ne.s32.totalorder %s162, %s176
      %p178 = scmp.eq.s32.totalorder %s26, 0
      %p179 = por %p177, %p178
      %s181 = sadd.s32 %s180, 1
      %p184 = scmp.eq.s32.totalorder %s20, 1
      %p185 = scmp.ne.s32.totalorder %s180, %s182
      %p186 = scmp.eq.s32.totalorder %s20, 0
      %p187 = por %p185, %p186
      %p188 = scmp.ne.s32.totalorder %s180, %s182
      %p189 = scmp.eq.s32.totalorder %s25, 1
      %p190 = por %p188, %p189
      %p191 = scmp.ne.s32.totalorder %s182, %s183
      %p192 = scmp.eq.s32.totalorder %s25, 0
      %p193 = por %p191, %p192
      %p194 = scmp.ne.s32.totalorder %s182, %s183
      %p195 = scmp.eq.s32.totalorder %s26, 1
      %p196 = por %p194, %p195
      %p198 = scmp.ne.s32.totalorder %s183, %s197
      %p199 = scmp.eq.s32.totalorder %s26, 0
      %p200 = por %p198, %p199
      %s202 = sadd.s32 %s201, 1
      %p205 = scmp.eq.s32.totalorder %s20, 1
      %p206 = scmp.ne.s32.totalorder %s201, %s203
      %p207 = scmp.eq.s32.totalorder %s20, 0
      %p208 = por %p206, %p207
      %p209 = scmp.ne.s32.totalorder %s201, %s203
      %p210 = scmp.eq.s32.totalorder %s25, 1
      %p211 = por %p209, %p210
      %p212 = scmp.ne.s32.totalorder %s203, %s204
      %p213 = scmp.eq.s32.totalorder %s25, 0
      %p214 = por %p212, %p213
      %p215 = scmp.ne.s32.totalorder %s203, %s204
      %p216 = scmp.eq.s32.totalorder %s26, 1
      %p217 = por %p215, %p216
      %p219 = scmp.ne.s32.totalorder %s204, %s218
      %p220 = scmp.eq.s32.totalorder %s26, 0
      %p221 = por %p219, %p220
      %s223 = sadd.s32 %s222, 1
      %p226 = scmp.eq.s32.totalorder %s20, 1
      %p227 = scmp.ne.s32.totalorder %s222, %s224
      %p228 = scmp.eq.s32.totalorder %s20, 0
      %p229 = por %p227, %p228
      %p230 = scmp.ne.s32.totalorder %s222, %s224
      %p231 = scmp.eq.s32.totalorder %s25, 1
      %p232 = por %p230, %p231
      %p233 = scmp.ne.s32.totalorder %s224, %s225
      %p234 = scmp.eq.s32.totalorder %s25, 0
      %p235 = por %p233, %p234
      %p236 = scmp.ne.s32.totalorder %s224, %s225
      %p237 = scmp.eq.s32.totalorder %s26, 1
      %p238 = por %p236, %p237
      %p240 = scmp.ne.s32.totalorder %s225, %s239
      %p241 = scmp.eq.s32.totalorder %s26, 0
      %p242 = por %p240, %p241
      %s244 = sadd.s32 %s243, 1
      %p247 = scmp.eq.s32.totalorder %s20, 1
      %p248 = scmp.ne.s32.totalorder %s243, %s245
      %p249 = scmp.eq.s32.totalorder %s20, 0
      %p250 = por %p248, %p249
      %p251 = scmp.ne.s32.totalorder %s243, %s245
      %p252 = scmp.eq.s32.totalorder %s25, 1
      %p253 = por %p251, %p252
      %p254 = scmp.ne.s32.totalorder %s245, %s246
      %p255 = scmp.eq.s32.totalorder %s25, 0
      %p256 = por %p254, %p255
      %p257 = scmp.ne.s32.totalorder %s245, %s246
      %p258 = scmp.eq.s32.totalorder %s26, 1
      %p259 = por %p257, %p258
      %p261 = scmp.ne.s32.totalorder %s246, %s260
      %p262 = scmp.eq.s32.totalorder %s26, 0
      %p263 = por %p261, %p262
      %s264 = ssub.s32 %s20, %s27
      %p265 = scmp.eq.s32.totalorder %s264, 0
      %s267 = sadd.s32 %s266, 1
      %s268 = scalar_select %p265, %s266, %s267
      %p271 = pneg %p265
      %p272 = scmp.eq.s32.totalorder %s20, 1
      %p273 = por %p271, %p272
      %p274 = scmp.ne.s32.totalorder %s266, %s269
      %p275 = scmp.eq.s32.totalorder %s20, 0
      %p276 = por %p274, %p275
      %p277 = scmp.ne.s32.totalorder %s266, %s269
      %p278 = scmp.eq.s32.totalorder %s25, 1
      %p279 = por %p277, %p278
      %p280 = scmp.ne.s32.totalorder %s269, %s270
      %p281 = scmp.eq.s32.totalorder %s25, 0
      %p282 = por %p280, %p281
      %p283 = scmp.ne.s32.totalorder %s269, %s270
      %p284 = scmp.eq.s32.totalorder %s26, 1
      %p285 = por %p283, %p284
      %p287 = scmp.ne.s32.totalorder %s270, %s286
      %p288 = scmp.eq.s32.totalorder %s26, 0
      %p289 = por %p287, %p288
      %p290 = scmp.le.s32.totalorder 1, %s20
      %p291 = scmp.lt.s32.totalorder %s20, 3
      %p292 = pnand %p290, %p291
      %p293 = pneg %p292
      // Predicated region
      $region9: #{net_forward.1} parent=5 // pred_check
        _
      $region10: #{net_forward.1} parent=5 // pred_check_branch
        %295 = sbr.rel (%p292) target = $region12
      $region11: #{net_forward.1} parent=5 // pred_region
        %s296 = ssub.s32 %s20, 1
        // Predicated region
        $region13: #{net_forward.1} parent=11 // pred_check
          %p297 = pneg %p67
        $region14: #{net_forward.1} parent=11 // pred_check_branch
          %299 = sbr.rel (%p297) target = $region16
        $region15: #{net_forward.1} parent=11 // pred_region
          _
        $region16: #{net_forward.1} parent=11 // pred_fallthru
          _
        // Predicated region
        $region17: #{net_forward.1} parent=11 // pred_check
          %p300 = pneg %p88
        $region18: #{net_forward.1} parent=11 // pred_check_branch
          %302 = sbr.rel (%p300) target = $region20
        $region19: #{net_forward.1} parent=11 // pred_region
          _
        $region20: #{net_forward.1} parent=11 // pred_fallthru
          _
        // Predicated region
        $region21: #{net_forward.1} parent=11 // pred_check
          %p303 = pneg %p109
        $region22: #{net_forward.1} parent=11 // pred_check_branch
          %305 = sbr.rel (%p303) target = $region24
        $region23: #{net_forward.1} parent=11 // pred_region
          _
        $region24: #{net_forward.1} parent=11 // pred_fallthru
          _
        // Predicated region
        $region25: #{net_forward.1} parent=11 // pred_check
          %p306 = pneg %p130
        $region26: #{net_forward.1} parent=11 // pred_check_branch
          %308 = sbr.rel (%p306) target = $region28
        $region27: #{net_forward.1} parent=11 // pred_region
          _
        $region28: #{net_forward.1} parent=11 // pred_fallthru
          _
        // Predicated region
        $region29: #{net_forward.1} parent=11 // pred_check
          %p309 = pneg %p151
        $region30: #{net_forward.1} parent=11 // pred_check_branch
          %311 = sbr.rel (%p309) target = $region32
        $region31: #{net_forward.1} parent=11 // pred_region
          _
        $region32: #{net_forward.1} parent=11 // pred_fallthru
          _
        // Predicated region
        $region33: #{net_forward.1} parent=11 // pred_check
          %p312 = pneg %p172
        $region34: #{net_forward.1} parent=11 // pred_check_branch
          %314 = sbr.rel (%p312) target = $region36
        $region35: #{net_forward.1} parent=11 // pred_region
          _
        $region36: #{net_forward.1} parent=11 // pred_fallthru
          _
        // Predicated region
        $region37: #{net_forward.1} parent=11 // pred_check
          %p315 = pneg %p193
        $region38: #{net_forward.1} parent=11 // pred_check_branch
          %317 = sbr.rel (%p315) target = $region40
        $region39: #{net_forward.1} parent=11 // pred_region
          _
        $region40: #{net_forward.1} parent=11 // pred_fallthru
          _
        // Predicated region
        $region41: #{net_forward.1} parent=11 // pred_check
          %p318 = pneg %p214
        $region42: #{net_forward.1} parent=11 // pred_check_branch
          %320 = sbr.rel (%p318) target = $region44
        $region43: #{net_forward.1} parent=11 // pred_region
          _
        $region44: #{net_forward.1} parent=11 // pred_fallthru
          _
        // Predicated region
        $region45: #{net_forward.1} parent=11 // pred_check
          %p321 = pneg %p235
        $region46: #{net_forward.1} parent=11 // pred_check_branch
          %323 = sbr.rel (%p321) target = $region48
        $region47: #{net_forward.1} parent=11 // pred_region
          _
        $region48: #{net_forward.1} parent=11 // pred_fallthru
          _
        // Predicated region
        $region49: #{net_forward.1} parent=11 // pred_check
          %p324 = pneg %p256
        $region50: #{net_forward.1} parent=11 // pred_check_branch
          %326 = sbr.rel (%p324) target = $region52
        $region51: #{net_forward.1} parent=11 // pred_region
          _
        $region52: #{net_forward.1} parent=11 // pred_fallthru
          _
      $region12: #{net_forward.1} parent=5 // pred_fallthru
        _
      %p327 = scmp.lt.s32.totalorder %s20, 2
      // Predicated region
      $region53: #{net_forward.1} parent=5 // pred_check
        %p328 = pneg %p327
      $region54: #{net_forward.1} parent=5 // pred_check_branch
        %330 = sbr.rel (%p328) target = $region56
      $region55: #{net_forward.1} parent=5 // pred_region
        // Predicated region
        $region57: #{net_forward.1} parent=55 // pred_check
          %p331 = pneg %p40
        $region58: #{net_forward.1} parent=55 // pred_check_branch
          %333 = sbr.rel (%p331) target = $region60
        $region59: #{net_forward.1} parent=55 // pred_region
          %s334 = smul.u32 28, %s20
          %p335 = scmp.lt.s32.totalorder %s334, 55
          %s336 = scalar_select %p335, %s334, 55
          %s337 = smul.addr %s336, 8
          %s338 = scalar_lea.vmem %s0, %s337
          %s339 = smul.u32 28, %s20
        $region60: #{net_forward.1} parent=55 // pred_fallthru
          _
      $region56: #{net_forward.1} parent=5 // pred_fallthru
        _
      %p340 = scmp.le.s32.totalorder 1, %s20
      %p341 = scmp.lt.s32.totalorder %s20, 3
      %p342 = pnand %p340, %p341
      %p343 = pneg %p342
      // Predicated region
      $region61: #{net_forward.1} parent=5 // pred_check
        _
      $region62: #{net_forward.1} parent=5 // pred_check_branch
        %345 = sbr.rel (%p342) target = $region64
      $region63: #{net_forward.1} parent=5 // pred_region
        %s346 = ssub.s32 %s20, 1
        %s347 = smul.u32 28, %s25
        %p348 = scmp.lt.s32.totalorder %s347, 55
        %s349 = scalar_select %p348, %s347, 55
        %s350 = smul.addr %s349, 8
        %s351 = scalar_lea.vmem %s0, %s350
        %p352 = pneg %p46
        %p353 = pneg %p43
        %p354 = pneg %p67
        %p355 = pneg %p64
        %p356 = pneg %p88
        %p357 = pneg %p85
        %p358 = pneg %p109
        %p359 = pneg %p106
        %p360 = pneg %p130
        %p361 = pneg %p127
        %p362 = pneg %p151
        %p363 = pneg %p148
        %p364 = pneg %p172
        %p365 = pneg %p169
        %p366 = pneg %p193
        %p367 = pneg %p190
        %p368 = pneg %p214
        %p369 = pneg %p211
        %p370 = pneg %p235
        %p371 = pneg %p232
        %p372 = pneg %p256
        %p373 = pneg %p253
        %p374 = pneg %p282
        %p375 = pneg %p279
        %s376 = sand.u32 %s269, 1
        %s377 = scalar_lea.sflag [#allocation3], %s376
        %s378 = sand.u32 %s269, 1
        %s379 = smul.addr %s378, 8
        %s380 = scalar_lea.vmem [#allocation2], %s379
        %s381 = smul.u32 28, %s25
        %p382 = scmp.lt.s32.totalorder %s381, 55
        %s383 = scalar_select %p382, %s381, 55
        %s384 = smul.addr %s383, 8
        %s385 = scalar_lea.vmem %s0, %s384
        %s386 = smul.u32 28, %s25
        %v388 = vld [vmem:[%s385] sm:$0xff]
        %v389 = vld [vmem:[%s385 + $0x8] sm:$0xff]
        %v390 = vld [vmem:[%s385 + $0x10] sm:$0xff]
        %v391 = vld [vmem:[%s385 + $0x18] sm:$0xff]
        %v392 = vld [vmem:[%s385 + $0x20] sm:$0xff]
        %v393 = vld [vmem:[%s385 + $0x28] sm:$0xff]
        %v394 = vld [vmem:[%s385 + $0x30] sm:$0xff]
        %v395 = vld [vmem:[%s385 + $0x38] sm:$0xff]
        %v396 = vld [vmem:[%s385 + $0x40] sm:$0xff]
        %v397 = vld [vmem:[%s385 + $0x48] sm:$0xff]
        %v398 = vld [vmem:[%s385 + $0x50] sm:$0xff]
        %v399 = vld [vmem:[%s385 + $0x58] sm:$0xff]
        %v400 = vld [vmem:[%s385 + $0x60] sm:$0xff]
        %v401 = vld [vmem:[%s385 + $0x68] sm:$0xff]
        %v402 = vld [vmem:[%s385 + $0x70] sm:$0xff]
        %v403 = vld [vmem:[%s385 + $0x78] sm:$0xff]
        %v404 = vld [vmem:[%s385 + $0x80] sm:$0xff]
        %v405 = vld [vmem:[%s385 + $0x88] sm:$0xff]
        %v406 = vld [vmem:[%s385 + $0x90] sm:$0xff]
        %v407 = vld [vmem:[%s385 + $0x98] sm:$0xff]
        %v408 = vld [vmem:[%s385 + $0xa0] sm:$0xff]
        %v409 = vld [vmem:[%s385 + $0xa8] sm:$0xff]
        %v410 = vld [vmem:[%s385 + $0xb0] sm:$0xff]
        %v411 = vld [vmem:[%s385 + $0xb8] sm:$0xff]
        %v412 = vld [vmem:[%s385 + $0xc0] sm:$0xff]
        %v413 = vld [vmem:[%s385 + $0xc8] sm:$0xff]
        %v414 = vld [vmem:[%s385 + $0xd0] sm:$0xff]
        %v415 = vld [vmem:[%s385 + $0xd8] sm:$0xff]
        %v416 = vpack.c.bf16 %v389, %v388
        %v417 = vpack.c.bf16 %v391, %v390
        %v418 = vpack.c.bf16 %v393, %v392
        %v419 = vpack.c.bf16 %v395, %v394
        %v420 = vpack.c.bf16 %v397, %v396
        %v421 = vpack.c.bf16 %v399, %v398
        %v422 = vpack.c.bf16 %v401, %v400
        %v423 = vpack.c.bf16 %v403, %v402
        %v424 = vpack.c.bf16 %v405, %v404
        %v425 = vpack.c.bf16 %v407, %v406
        %v426 = vpack.c.bf16 %v409, %v408
        %v427 = vpack.c.bf16 %v411, %v410
        %v428 = vpack.c.bf16 %v413, %v412
        %v429 = vpack.c.bf16 %v415, %v414
        %v430 = vld [vmem:[%s1] sm:$0xff]
        %v431 = vld [vmem:[%s1 + $0x8] sm:$0xff]
        %v432 = vld [vmem:[%s1 + $0x10] sm:$0xff]
        %v433 = vld [vmem:[%s1 + $0x18] sm:$0xff]
        %v434 = vld [vmem:[%s1 + $0x20] sm:$0xff]
        %v435 = vld [vmem:[%s1 + $0x28] sm:$0xff]
        %v436 = vld [vmem:[%s1 + $0x30] sm:$0x33]
        %v437 = vld [vmem:[%s1 + $0x38] sm:$0x33]
        %s438 = scalar_lea.vmem %s1, 64
        %v439 = vld [vmem:[%s438] sm:$0xff]
        %v440 = vld [vmem:[%s438 + $0x8] sm:$0xff]
        %v441 = vld [vmem:[%s438 + $0x10] sm:$0xff]
        %v442 = vld [vmem:[%s438 + $0x18] sm:$0xff]
        %v443 = vld [vmem:[%s438 + $0x20] sm:$0xff]
        %v444 = vld [vmem:[%s438 + $0x28] sm:$0xff]
        %v445 = vld [vmem:[%s438 + $0x30] sm:$0x33]
        %v446 = vld [vmem:[%s438 + $0x38] sm:$0x33]
        %vm447 = vsmask.f32 7424
        %v449 = vshrl.u32 %v416, 16
        %v451 = vshll.u32 %v416, 16
        %v453 = vrot.slane %v451, 1
        %v454 = vor.u32 %v449, %v453
        %v456 = vshll.u32 %v417, 16
        %v458 = vrot.slane %v456, 1
        %v459 = vsel %vm447, %v454, %v458
        %v460 = vshrl.u32 %v417, 16
        %v462 = vor.u32 %v460, %v458
        %v464 = vshll.u32 %v418, 16
        %v466 = vrot.slane %v464, 1
        %v467 = vsel %vm447, %v462, %v466
        %v468 = vshrl.u32 %v418, 16
        %v470 = vor.u32 %v468, %v466
        %v472 = vshll.u32 %v419, 16
        %v474 = vrot.slane %v472, 1
        %v475 = vsel %vm447, %v470, %v474
        %v476 = vshrl.u32 %v419, 16
        %v478 = vor.u32 %v476, %v474
        %v480 = vshll.u32 %v420, 16
        %v482 = vrot.slane %v480, 1
        %v483 = vsel %vm447, %v478, %v482
        %v484 = vshrl.u32 %v420, 16
        %v486 = vor.u32 %v484, %v482
        %v488 = vshll.u32 %v421, 16
        %v490 = vrot.slane %v488, 1
        %v491 = vsel %vm447, %v486, %v490
        %v492 = vshrl.u32 %v421, 16
        %v494 = vor.u32 %v492, %v490
        %v496 = vshll.u32 %v422, 16
        %v498 = vrot.slane %v496, 1
        %v499 = vsel %vm447, %v494, %v498
        %v500 = vshrl.u32 %v422, 16
        %v502 = vor.u32 %v500, %v498
        %v504 = vshll.u32 %v423, 16
        %v506 = vrot.slane %v504, 1
        %v507 = vsel %vm447, %v502, %v506
        %v508 = vshrl.u32 %v423, 16
        %v510 = vor.u32 %v508, %v506
        %v512 = vshll.u32 %v424, 16
        %v514 = vrot.slane %v512, 1
        %v515 = vsel %vm447, %v510, %v514
        %v516 = vshrl.u32 %v424, 16
        %v518 = vor.u32 %v516, %v514
        %v520 = vshll.u32 %v425, 16
        %v522 = vrot.slane %v520, 1
        %v523 = vsel %vm447, %v518, %v522
        %v524 = vshrl.u32 %v425, 16
        %v526 = vor.u32 %v524, %v522
        %v528 = vshll.u32 %v426, 16
        %v530 = vrot.slane %v528, 1
        %v531 = vsel %vm447, %v526, %v530
        %v532 = vshrl.u32 %v426, 16
        %v534 = vor.u32 %v532, %v530
        %v536 = vshll.u32 %v427, 16
        %v538 = vrot.slane %v536, 1
        %v539 = vsel %vm447, %v534, %v538
        %v540 = vshrl.u32 %v427, 16
        %v542 = vor.u32 %v540, %v538
        %v544 = vshll.u32 %v428, 16
        %v546 = vrot.slane %v544, 1
        %v547 = vsel %vm447, %v542, %v546
        %v548 = vshrl.u32 %v428, 16
        %v550 = vor.u32 %v548, %v546
        %v552 = vshll.u32 %v429, 16
        %v554 = vrot.slane %v552, 1
        %v555 = vsel %vm447, %v550, %v554
        %v556 = vshrl.u32 %v429, 16
        %v558 = vor.u32 %v556, %v554
        %v567 = vunpack.c.l.b16 %v439
        %v568 = vunpack.c.h.b16 %v439
        %v569 = vunpack.c.l.b16 %v440
        %v570 = vunpack.c.h.b16 %v440
        %v571 = vunpack.c.l.b16 %v441
        %v572 = vunpack.c.h.b16 %v441
        %v573 = vunpack.c.l.b16 %v442
        %v574 = vunpack.c.h.b16 %v442
        %v575 = vunpack.c.l.b16 %v443
        %v576 = vunpack.c.h.b16 %v443
        %v577 = vunpack.c.l.b16 %v444
        %v578 = vunpack.c.h.b16 %v444
        %v579 = vunpack.c.l.b16 %v445
        %v580 = vunpack.c.h.b16 %v445
        %v581 = vunpack.c.l.b16 %v446
        %v582 = vunpack.c.h.b16 %v446
        %v583 = vpack.c.b16 %v571, %v567
        %v584 = vpack.c.b16 %v572, %v568
        %v585 = vpack.c.b16 %v573, %v569
        %v586 = vpack.c.b16 %v574, %v570
        %v587 = vpack.c.b16 %v579, %v575
        %v588 = vpack.c.b16 %v580, %v576
        %v589 = vpack.c.b16 %v581, %v577
        %v590 = vpack.c.b16 %v582, %v578
        %vm595 = vcmask 228352
        %v597 = vsel %vm595, %v459, 0
        %v600 = vsel %vm595, %v467, 0
        %v603 = vsel %vm595, %v475, 0
        %v606 = vsel %vm595, %v483, 0
        %v609 = vsel %vm595, %v491, 0
        %v612 = vsel %vm595, %v499, 0
        %v615 = vsel %vm595, %v507, 0
        %v618 = vsel %vm595, %v515, 0
        %v621 = vsel %vm595, %v523, 0
        %v624 = vsel %vm595, %v531, 0
        %v627 = vsel %vm595, %v539, 0
        %v630 = vsel %vm595, %v547, 0
        %v633 = vsel %vm595, %v555, 0
        %v636 = vsel %vm595, %v558, 0
        %vm638 = vcmask 1045504
        %v640 = vsel %vm638, %v587, 0
        %v643 = vsel %vm638, %v588, 0
        %v646 = vsel %vm638, %v589, 0
        %v649 = vsel %vm638, %v590, 0
        %651 = vmatprep.subr.bf16.mxu0 %v584
        %652 = vmatpush1.bf16.msra.mxu0 %v583
        %653 = vmatprep.subr.bf16.mxu0 %v643
        %654 = vmatpush1.bf16.msra.mxu0 %v640
        %655 = vmatprep.subr.bf16.mxu0 0
        %656 = vmatpush1.bf16.msra.mxu0 0
        %657 = vmatprep.subr.bf16.mxu0 0
        %658 = vmatpush1.bf16.msra.mxu0 0
        %659 = vmatprep.subr.bf16.mxu0 0
        %660 = vmatpush1.bf16.msra.mxu0 0
        %661 = vmatprep.subr.bf16.mxu0 0
        %662 = vmatpush1.bf16.msra.mxu0 0
        %663 = vmatprep.subr.bf16.mxu0 0
        %664 = vmatpush1.bf16.msra.mxu0 0
        %665 = vmatprep.subr.bf16.mxu0 0
        %666 = vmatpush1.bf16.msra.mxu0 0
        %667 = vmatprep.subr.bf16.mxu0 0
        %668 = vmatpush1.bf16.msra.mxu0 0
        %669 = vmatprep.subr.bf16.mxu0 0
        %670 = vmatpush1.bf16.msra.mxu0 0
        %671 = vmatprep.subr.bf16.mxu0 0
        %672 = vmatpush1.bf16.msra.mxu0 0
        %673 = vmatprep.subr.bf16.mxu0 0
        %674 = vmatpush1.bf16.msra.mxu0 0
        %675 = vmatprep.subr.bf16.mxu0 0
        %676 = vmatpush1.bf16.msra.mxu0 0
        %677 = vmatprep.subr.bf16.mxu0 0
        %678 = vmatpush1.bf16.msra.mxu0 0
        %679 = vmatprep.subr.bf16.mxu0 0
        %680 = vmatpush1.bf16.msra.mxu0 0
        %681 = vmatprep.subr.bf16.mxu0 0
        %682 = vmatpush1.bf16.msra.mxu0 0
        %683 = vmatprep.mubr.bf16.mxu0 0
        %684 = vmatmul.mubr.bf16.gmra.mrb[0].mxu0 %v597
        %v685 = vpop.f32.mrb[0].mxu0
        %v686 = vadd.f32 0.0, %v685
        %v687 = vpop.f32.mrb[0].mxu0
        %v688 = vadd.f32 0.0, %v687
        %v689 = vpop.f32.mrb[0].mxu0
        %v690 = vadd.f32 0.0, %v689
        %v691 = vpop.f32.mrb[0].mxu0
        %v692 = vadd.f32 0.0, %v691
        %693 = vmatprep.mubr.bf16.mxu0 0
        %694 = vmatmul.mubr.bf16.gmra.mrb[0].mxu0 %v600
        %v695 = vpop.f32.mrb[0].mxu0
        %v696 = vadd.f32 0.0, %v695
        %v697 = vpop.f32.mrb[0].mxu0
        %v698 = vadd.f32 0.0, %v697
        %v699 = vpop.f32.mrb[0].mxu0
        %v700 = vadd.f32 0.0, %v699
        %v701 = vpop.f32.mrb[0].mxu0
        %v702 = vadd.f32 0.0, %v701
        %703 = vmatprep.mubr.bf16.mxu0 0
        %704 = vmatmul.mubr.bf16.gmra.mrb[0].mxu0 %v603
        %v705 = vpop.f32.mrb[0].mxu0
        %v706 = vadd.f32 0.0, %v705
        %v707 = vpop.f32.mrb[0].mxu0
        %v708 = vadd.f32 0.0, %v707
        %v709 = vpop.f32.mrb[0].mxu0
        %v710 = vadd.f32 0.0, %v709
        %v711 = vpop.f32.mrb[0].mxu0
        %v712 = vadd.f32 0.0, %v711
        %713 = vmatprep.mubr.bf16.mxu0 0
        %714 = vmatmul.mubr.bf16.gmra.mrb[0].mxu0 %v606
        %v715 = vpop.f32.mrb[0].mxu0
        %v716 = vadd.f32 0.0, %v715
        %v717 = vpop.f32.mrb[0].mxu0
        %v718 = vadd.f32 0.0, %v717
        %v719 = vpop.f32.mrb[0].mxu0
        %v720 = vadd.f32 0.0, %v719
        %v721 = vpop.f32.mrb[0].mxu0
        %v722 = vadd.f32 0.0, %v721
        %723 = vmatprep.mubr.bf16.mxu0 0
        %724 = vmatmul.mubr.bf16.gmra.mrb[0].mxu0 %v609
        %v725 = vpop.f32.mrb[0].mxu0
        %v726 = vadd.f32 0.0, %v725
        %v727 = vpop.f32.mrb[0].mxu0
        %v728 = vadd.f32 0.0, %v727
        %v729 = vpop.f32.mrb[0].mxu0
        %v730 = vadd.f32 0.0, %v729
        %v731 = vpop.f32.mrb[0].mxu0
        %v732 = vadd.f32 0.0, %v731
        %733 = vmatprep.mubr.bf16.mxu0 0
        %734 = vmatmul.mubr.bf16.gmra.mrb[0].mxu0 %v612
        %v735 = vpop.f32.mrb[0].mxu0
        %v736 = vadd.f32 0.0, %v735
        %v737 = vpop.f32.mrb[0].mxu0
        %v738 = vadd.f32 0.0, %v737
        %v739 = vpop.f32.mrb[0].mxu0
        %v740 = vadd.f32 0.0, %v739
        %v741 = vpop.f32.mrb[0].mxu0
        %v742 = vadd.f32 0.0, %v741
        %743 = vmatprep.mubr.bf16.mxu0 0
        %744 = vmatmul.mubr.bf16.gmra.mrb[0].mxu0 %v615
        %v745 = vpop.f32.mrb[0].mxu0
        %v746 = vadd.f32 0.0, %v745
        %v747 = vpop.f32.mrb[0].mxu0
        %v748 = vadd.f32 0.0, %v747
        %v749 = vpop.f32.mrb[0].mxu0
        %v750 = vadd.f32 0.0, %v749
        %v751 = vpop.f32.mrb[0].mxu0
        %v752 = vadd.f32 0.0, %v751
        %753 = vmatprep.mubr.bf16.mxu0 0
        %754 = vmatmul.mubr.bf16.gmra.mrb[0].mxu0 %v618
        %v755 = vpop.f32.mrb[0].mxu0
        %v756 = vadd.f32 0.0, %v755
        %v757 = vpop.f32.mrb[0].mxu0
        %v758 = vadd.f32 0.0, %v757
        %v759 = vpop.f32.mrb[0].mxu0
        %v760 = vadd.f32 0.0, %v759
        %v761 = vpop.f32.mrb[0].mxu0
        %v762 = vadd.f32 0.0, %v761
        %763 = vmatprep.mubr.bf16.mxu0 0
        %764 = vmatmul.mubr.bf16.gmra.mrb[0].mxu0 %v621
        %v765 = vpop.f32.mrb[0].mxu0
        %v766 = vadd.f32 0.0, %v765
        %v767 = vpop.f32.mrb[0].mxu0
        %v768 = vadd.f32 0.0, %v767
        %v769 = vpop.f32.mrb[0].mxu0
        %v770 = vadd.f32 0.0, %v769
        %v771 = vpop.f32.mrb[0].mxu0
        %v772 = vadd.f32 0.0, %v771
        %773 = vmatprep.mubr.bf16.mxu0 0
        %774 = vmatmul.mubr.bf16.gmra.mrb[0].mxu0 %v624
        %v775 = vpop.f32.mrb[0].mxu0
        %v776 = vadd.f32 0.0, %v775
        %v777 = vpop.f32.mrb[0].mxu0
        %v778 = vadd.f32 0.0, %v777
        %v779 = vpop.f32.mrb[0].mxu0
        %v780 = vadd.f32 0.0, %v779
        %v781 = vpop.f32.mrb[0].mxu0
        %v782 = vadd.f32 0.0, %v781
        %783 = vmatprep.mubr.bf16.mxu0 0
        %784 = vmatmul.mubr.bf16.gmra.mrb[0].mxu0 %v627
        %v785 = vpop.f32.mrb[0].mxu0
        %v786 = vadd.f32 0.0, %v785
        %v787 = vpop.f32.mrb[0].mxu0
        %v788 = vadd.f32 0.0, %v787
        %v789 = vpop.f32.mrb[0].mxu0
        %v790 = vadd.f32 0.0, %v789
        %v791 = vpop.f32.mrb[0].mxu0
        %v792 = vadd.f32 0.0, %v791
        %793 = vmatprep.mubr.bf16.mxu0 0
        %794 = vmatmul.mubr.bf16.gmra.mrb[0].mxu0 %v630
        %v795 = vpop.f32.mrb[0].mxu0
        %v796 = vadd.f32 0.0, %v795
        %v797 = vpop.f32.mrb[0].mxu0
        %v798 = vadd.f32 0.0, %v797
        %v799 = vpop.f32.mrb[0].mxu0
        %v800 = vadd.f32 0.0, %v799
        %v801 = vpop.f32.mrb[0].mxu0
        %v802 = vadd.f32 0.0, %v801
        %803 = vmatprep.mubr.bf16.mxu0 0
        %804 = vmatmul.mubr.bf16.gmra.mrb[0].mxu0 %v633
        %v805 = vpop.f32.mrb[0].mxu0
        %v806 = vadd.f32 0.0, %v805
        %v807 = vpop.f32.mrb[0].mxu0
        %v808 = vadd.f32 0.0, %v807
        %v809 = vpop.f32.mrb[0].mxu0
        %v810 = vadd.f32 0.0, %v809
        %v811 = vpop.f32.mrb[0].mxu0
        %v812 = vadd.f32 0.0, %v811
        %813 = vmatprep.mubr.bf16.mxu0 0
        %814 = vmatmul.mubr.bf16.gmra.mrb[0].mxu0 %v636
        %v815 = vpop.f32.mrb[0].mxu0
        %v816 = vadd.f32 0.0, %v815
        %v817 = vpop.f32.mrb[0].mxu0
        %v818 = vadd.f32 0.0, %v817
        %v819 = vpop.f32.mrb[0].mxu0
        %v820 = vadd.f32 0.0, %v819
        %v821 = vpop.f32.mrb[0].mxu0
        %v822 = vadd.f32 0.0, %v821
        %823 = vdwg.mxu0
        %824 = vmatprep.subr.bf16.mxu0 %v586
        %825 = vmatpush1.bf16.msra.mxu0 %v585
        %826 = vmatprep.subr.bf16.mxu0 %v649
        %827 = vmatpush1.bf16.msra.mxu0 %v646
        %828 = vmatprep.subr.bf16.mxu0 0
        %829 = vmatpush1.bf16.msra.mxu0 0
        %830 = vmatprep.subr.bf16.mxu0 0
        %831 = vmatpush1.bf16.msra.mxu0 0
        %832 = vmatprep.subr.bf16.mxu0 0
        %833 = vmatpush1.bf16.msra.mxu0 0
        %834 = vmatprep.subr.bf16.mxu0 0
        %835 = vmatpush1.bf16.msra.mxu0 0
        %836 = vmatprep.subr.bf16.mxu0 0
        %837 = vmatpush1.bf16.msra.mxu0 0
        %838 = vmatprep.subr.bf16.mxu0 0
        %839 = vmatpush1.bf16.msra.mxu0 0
        %840 = vmatprep.subr.bf16.mxu0 0
        %841 = vmatpush1.bf16.msra.mxu0 0
        %842 = vmatprep.subr.bf16.mxu0 0
        %843 = vmatpush1.bf16.msra.mxu0 0
        %844 = vmatprep.subr.bf16.mxu0 0
        %845 = vmatpush1.bf16.msra.mxu0 0
        %846 = vmatprep.subr.bf16.mxu0 0
        %847 = vmatpush1.bf16.msra.mxu0 0
        %848 = vmatprep.subr.bf16.mxu0 0
        %849 = vmatpush1.bf16.msra.mxu0 0
        %850 = vmatprep.subr.bf16.mxu0 0
        %851 = vmatpush1.bf16.msra.mxu0 0
        %852 = vmatprep.subr.bf16.mxu0 0
        %853 = vmatpush1.bf16.msra.mxu0 0
        %854 = vmatprep.subr.bf16.mxu0 0
        %855 = vmatpush1.bf16.msra.mxu0 0
        %856 = vmatprep.mubr.bf16.mxu0 0
        %857 = vmatmul.mubr.bf16.gmra.mrb[0].mxu0 %v597
        %v858 = vpop.f32.mrb[0].mxu0
        %v859 = vadd.f32 0.0, %v858
        %v860 = vpop.f32.mrb[0].mxu0
        %v861 = vadd.f32 0.0, %v860
        %v862 = vpop.f32.mrb[0].mxu0
        %v863 = vadd.f32 0.0, %v862
        %v864 = vpop.f32.mrb[0].mxu0
        %v865 = vadd.f32 0.0, %v864
        %866 = vmatprep.mubr.bf16.mxu0 0
        %867 = vmatmul.mubr.bf16.gmra.mrb[0].mxu0 %v600
        %v868 = vpop.f32.mrb[0].mxu0
        %v869 = vadd.f32 0.0, %v868
        %v870 = vpop.f32.mrb[0].mxu0
        %v871 = vadd.f32 0.0, %v870
        %v872 = vpop.f32.mrb[0].mxu0
        %v873 = vadd.f32 0.0, %v872
        %v874 = vpop.f32.mrb[0].mxu0
        %v875 = vadd.f32 0.0, %v874
        %876 = vmatprep.mubr.bf16.mxu0 0
        %877 = vmatmul.mubr.bf16.gmra.mrb[0].mxu0 %v603
        %v878 = vpop.f32.mrb[0].mxu0
        %v879 = vadd.f32 0.0, %v878
        %v880 = vpop.f32.mrb[0].mxu0
        %v881 = vadd.f32 0.0, %v880
        %v882 = vpop.f32.mrb[0].mxu0
        %v883 = vadd.f32 0.0, %v882
        %v884 = vpop.f32.mrb[0].mxu0
        %v885 = vadd.f32 0.0, %v884
        %886 = vmatprep.mubr.bf16.mxu0 0
        %887 = vmatmul.mubr.bf16.gmra.mrb[0].mxu0 %v606
        %v888 = vpop.f32.mrb[0].mxu0
        %v889 = vadd.f32 0.0, %v888
        %v890 = vpop.f32.mrb[0].mxu0
        %v891 = vadd.f32 0.0, %v890
        %v892 = vpop.f32.mrb[0].mxu0
        %v893 = vadd.f32 0.0, %v892
        %v894 = vpop.f32.mrb[0].mxu0
        %v895 = vadd.f32 0.0, %v894
        %896 = vmatprep.mubr.bf16.mxu0 0
        %897 = vmatmul.mubr.bf16.gmra.mrb[0].mxu0 %v609
        %v898 = vpop.f32.mrb[0].mxu0
        %v899 = vadd.f32 0.0, %v898
        %v900 = vpop.f32.mrb[0].mxu0
        %v901 = vadd.f32 0.0, %v900
        %v902 = vpop.f32.mrb[0].mxu0
        %v903 = vadd.f32 0.0, %v902
        %v904 = vpop.f32.mrb[0].mxu0
        %v905 = vadd.f32 0.0, %v904
        %906 = vmatprep.mubr.bf16.mxu0 0
        %907 = vmatmul.mubr.bf16.gmra.mrb[0].mxu0 %v612
        %v908 = vpop.f32.mrb[0].mxu0
        %v909 = vadd.f32 0.0, %v908
        %v910 = vpop.f32.mrb[0].mxu0
        %v911 = vadd.f32 0.0, %v910
        %v912 = vpop.f32.mrb[0].mxu0
        %v913 = vadd.f32 0.0, %v912
        %v914 = vpop.f32.mrb[0].mxu0
        %v915 = vadd.f32 0.0, %v914
        %916 = vmatprep.mubr.bf16.mxu0 0
        %917 = vmatmul.mubr.bf16.gmra.mrb[0].mxu0 %v615
        %v918 = vpop.f32.mrb[0].mxu0
        %v919 = vadd.f32 0.0, %v918
        %v920 = vpop.f32.mrb[0].mxu0
        %v921 = vadd.f32 0.0, %v920
        %v922 = vpop.f32.mrb[0].mxu0
        %v923 = vadd.f32 0.0, %v922
        %v924 = vpop.f32.mrb[0].mxu0
        %v925 = vadd.f32 0.0, %v924
        %926 = vmatprep.mubr.bf16.mxu0 0
        %927 = vmatmul.mubr.bf16.gmra.mrb[0].mxu0 %v618
        %v928 = vpop.f32.mrb[0].mxu0
        %v929 = vadd.f32 0.0, %v928
        %v930 = vpop.f32.mrb[0].mxu0
        %v931 = vadd.f32 0.0, %v930
        %v932 = vpop.f32.mrb[0].mxu0
        %v933 = vadd.f32 0.0, %v932
        %v934 = vpop.f32.mrb[0].mxu0
        %v935 = vadd.f32 0.0, %v934
        %936 = vmatprep.mubr.bf16.mxu0 0
        %937 = vmatmul.mubr.bf16.gmra.mrb[0].mxu0 %v621
        %v938 = vpop.f32.mrb[0].mxu0
        %v939 = vadd.f32 0.0, %v938
        %v940 = vpop.f32.mrb[0].mxu0
        %v941 = vadd.f32 0.0, %v940
        %v942 = vpop.f32.mrb[0].mxu0
        %v943 = vadd.f32 0.0, %v942
        %v944 = vpop.f32.mrb[0].mxu0
        %v945 = vadd.f32 0.0, %v944
        %946 = vmatprep.mubr.bf16.mxu0 0
        %947 = vmatmul.mubr.bf16.gmra.mrb[0].mxu0 %v624
        %v948 = vpop.f32.mrb[0].mxu0
        %v949 = vadd.f32 0.0, %v948
        %v950 = vpop.f32.mrb[0].mxu0
        %v951 = vadd.f32 0.0, %v950
        %v952 = vpop.f32.mrb[0].mxu0
        %v953 = vadd.f32 0.0, %v952
        %v954 = vpop.f32.mrb[0].mxu0
        %v955 = vadd.f32 0.0, %v954
        %956 = vmatprep.mubr.bf16.mxu0 0
        %957 = vmatmul.mubr.bf16.gmra.mrb[0].mxu0 %v627
        %v958 = vpop.f32.mrb[0].mxu0
        %v959 = vadd.f32 0.0, %v958
        %v960 = vpop.f32.mrb[0].mxu0
        %v961 = vadd.f32 0.0, %v960
        %v962 = vpop.f32.mrb[0].mxu0
        %v963 = vadd.f32 0.0, %v962
        %v964 = vpop.f32.mrb[0].mxu0
        %v965 = vadd.f32 0.0, %v964
        %966 = vmatprep.mubr.bf16.mxu0 0
        %967 = vmatmul.mubr.bf16.gmra.mrb[0].mxu0 %v630
        %v968 = vpop.f32.mrb[0].mxu0
        %v969 = vadd.f32 0.0, %v968
        %v970 = vpop.f32.mrb[0].mxu0
        %v971 = vadd.f32 0.0, %v970
        %v972 = vpop.f32.mrb[0].mxu0
        %v973 = vadd.f32 0.0, %v972
        %v974 = vpop.f32.mrb[0].mxu0
        %v975 = vadd.f32 0.0, %v974
        %976 = vmatprep.mubr.bf16.mxu0 0
        %977 = vmatmul.mubr.bf16.gmra.mrb[0].mxu0 %v633
        %v978 = vpop.f32.mrb[0].mxu0
        %v979 = vadd.f32 0.0, %v978
        %v980 = vpop.f32.mrb[0].mxu0
        %v981 = vadd.f32 0.0, %v980
        %v982 = vpop.f32.mrb[0].mxu0
        %v983 = vadd.f32 0.0, %v982
        %v984 = vpop.f32.mrb[0].mxu0
        %v985 = vadd.f32 0.0, %v984
        %986 = vmatprep.mubr.bf16.mxu0 0
        %987 = vmatmul.mubr.bf16.gmra.mrb[0].mxu0 %v636
        %v988 = vpop.f32.mrb[0].mxu0
        %v989 = vadd.f32 0.0, %v988
        %v990 = vpop.f32.mrb[0].mxu0
        %v991 = vadd.f32 0.0, %v990
        %v992 = vpop.f32.mrb[0].mxu0
        %v993 = vadd.f32 0.0, %v992
        %v994 = vpop.f32.mrb[0].mxu0
        %v995 = vadd.f32 0.0, %v994
        %996 = vdwg.mxu0
        %v1005 = vunpack.c.l.b16 %v430
        %v1006 = vunpack.c.h.b16 %v430
        %v1007 = vunpack.c.l.b16 %v431
        %v1008 = vunpack.c.h.b16 %v431
        %v1009 = vunpack.c.l.b16 %v432
        %v1010 = vunpack.c.h.b16 %v432
        %v1011 = vunpack.c.l.b16 %v433
        %v1012 = vunpack.c.h.b16 %v433
        %v1013 = vunpack.c.l.b16 %v434
        %v1014 = vunpack.c.h.b16 %v434
        %v1015 = vunpack.c.l.b16 %v435
        %v1016 = vunpack.c.h.b16 %v435
        %v1017 = vunpack.c.l.b16 %v436
        %v1018 = vunpack.c.h.b16 %v436
        %v1019 = vunpack.c.l.b16 %v437
        %v1020 = vunpack.c.h.b16 %v437
        %v1021 = vpack.c.b16 %v1009, %v1005
        %v1022 = vpack.c.b16 %v1010, %v1006
        %v1023 = vpack.c.b16 %v1011, %v1007
        %v1024 = vpack.c.b16 %v1012, %v1008
        %v1025 = vpack.c.b16 %v1017, %v1013
        %v1026 = vpack.c.b16 %v1018, %v1014
        %v1027 = vpack.c.b16 %v1019, %v1015
        %v1028 = vpack.c.b16 %v1020, %v1016
        %v1033 = vsel %vm595, %v416, 0
        %v1035 = vsel %vm595, %v417, 0
        %v1037 = vsel %vm595, %v418, 0
        %v1039 = vsel %vm595, %v419, 0
        %v1041 = vsel %vm595, %v420, 0
        %v1043 = vsel %vm595, %v421, 0
        %v1045 = vsel %vm595, %v422, 0
        %v1047 = vsel %vm595, %v423, 0
        %v1049 = vsel %vm595, %v424, 0
        %v1051 = vsel %vm595, %v425, 0
        %v1053 = vsel %vm595, %v426, 0
        %v1055 = vsel %vm595, %v427, 0
        %v1057 = vsel %vm595, %v428, 0
        %v1059 = vsel %vm595, %v429, 0
        %v1062 = vsel %vm638, %v1025, 0
        %v1065 = vsel %vm638, %v1026, 0
        %v1068 = vsel %vm638, %v1027, 0
        %v1071 = vsel %vm638, %v1028, 0
        %1073 = vmatprep.subr.bf16.mxu0 %v1022
        %1074 = vmatpush1.bf16.msra.mxu0 %v1021
        %1075 = vmatprep.subr.bf16.mxu0 %v1065
        %1076 = vmatpush1.bf16.msra.mxu0 %v1062
        %1077 = vmatprep.subr.bf16.mxu0 0
        %1078 = vmatpush1.bf16.msra.mxu0 0
        %1079 = vmatprep.subr.bf16.mxu0 0
        %1080 = vmatpush1.bf16.msra.mxu0 0
        %1081 = vmatprep.subr.bf16.mxu0 0
        %1082 = vmatpush1.bf16.msra.mxu0 0
        %1083 = vmatprep.subr.bf16.mxu0 0
        %1084 = vmatpush1.bf16.msra.mxu0 0
        %1085 = vmatprep.subr.bf16.mxu0 0
        %1086 = vmatpush1.bf16.msra.mxu0 0
        %1087 = vmatprep.subr.bf16.mxu0 0
        %1088 = vmatpush1.bf16.msra.mxu0 0
        %1089 = vmatprep.subr.bf16.mxu0 0
        %1090 = vmatpush1.bf16.msra.mxu0 0
        %1091 = vmatprep.subr.bf16.mxu0 0
        %1092 = vmatpush1.bf16.msra.mxu0 0
        %1093 = vmatprep.subr.bf16.mxu0 0
        %1094 = vmatpush1.bf16.msra.mxu0 0
        %1095 = vmatprep.subr.bf16.mxu0 0
        %1096 = vmatpush1.bf16.msra.mxu0 0
        %1097 = vmatprep.subr.bf16.mxu0 0
        %1098 = vmatpush1.bf16.msra.mxu0 0
        %1099 = vmatprep.subr.bf16.mxu0 0
        %1100 = vmatpush1.bf16.msra.mxu0 0
        %1101 = vmatprep.subr.bf16.mxu0 0
        %1102 = vmatpush1.bf16.msra.mxu0 0
        %1103 = vmatprep.subr.bf16.mxu0 0
        %1104 = vmatpush1.bf16.msra.mxu0 0
        %1105 = vmatprep.mubr.bf16.mxu0 0
        %1106 = vmatmul.mubr.bf16.gmra.mrb[0].mxu0 %v1033
        %v1107 = vpop.f32.mrb[0].mxu0
        %v1108 = vadd.f32 %v686, %v1107
        %v1109 = vpop.f32.mrb[0].mxu0
        %v1110 = vadd.f32 %v688, %v1109
        %v1111 = vpop.f32.mrb[0].mxu0
        %v1112 = vadd.f32 %v690, %v1111
        %v1113 = vpop.f32.mrb[0].mxu0
        %v1114 = vadd.f32 %v692, %v1113
        %1115 = vmatprep.mubr.bf16.mxu0 0
        %1116 = vmatmul.mubr.bf16.gmra.mrb[0].mxu0 %v1035
        %v1117 = vpop.f32.mrb[0].mxu0
        %v1118 = vadd.f32 %v696, %v1117
        %v1119 = vpop.f32.mrb[0].mxu0
        %v1120 = vadd.f32 %v698, %v1119
        %v1121 = vpop.f32.mrb[0].mxu0
        %v1122 = vadd.f32 %v700, %v1121
        %v1123 = vpop.f32.mrb[0].mxu0
        %v1124 = vadd.f32 %v702, %v1123
        %1125 = vmatprep.mubr.bf16.mxu0 0
        %1126 = vmatmul.mubr.bf16.gmra.mrb[0].mxu0 %v1037
        %v1127 = vpop.f32.mrb[0].mxu0
        %v1128 = vadd.f32 %v706, %v1127
        %v1129 = vpop.f32.mrb[0].mxu0
        %v1130 = vadd.f32 %v708, %v1129
        %v1131 = vpop.f32.mrb[0].mxu0
        %v1132 = vadd.f32 %v710, %v1131
        %v1133 = vpop.f32.mrb[0].mxu0
        %v1134 = vadd.f32 %v712, %v1133
        %1135 = vmatprep.mubr.bf16.mxu0 0
        %1136 = vmatmul.mubr.bf16.gmra.mrb[0].mxu0 %v1039
        %v1137 = vpop.f32.mrb[0].mxu0
        %v1138 = vadd.f32 %v716, %v1137
        %v1139 = vpop.f32.mrb[0].mxu0
        %v1140 = vadd.f32 %v718, %v1139
        %v1141 = vpop.f32.mrb[0].mxu0
        %v1142 = vadd.f32 %v720, %v1141
        %v1143 = vpop.f32.mrb[0].mxu0
        %v1144 = vadd.f32 %v722, %v1143
        %1145 = vmatprep.mubr.bf16.mxu0 0
        %1146 = vmatmul.mubr.bf16.gmra.mrb[0].mxu0 %v1041
        %v1147 = vpop.f32.mrb[0].mxu0
        %v1148 = vadd.f32 %v726, %v1147
        %v1149 = vpop.f32.mrb[0].mxu0
        %v1150 = vadd.f32 %v728, %v1149
        %v1151 = vpop.f32.mrb[0].mxu0
        %v1152 = vadd.f32 %v730, %v1151
        %v1153 = vpop.f32.mrb[0].mxu0
        %v1154 = vadd.f32 %v732, %v1153
        %1155 = vmatprep.mubr.bf16.mxu0 0
        %1156 = vmatmul.mubr.bf16.gmra.mrb[0].mxu0 %v1043
        %v1157 = vpop.f32.mrb[0].mxu0
        %v1158 = vadd.f32 %v736, %v1157
        %v1159 = vpop.f32.mrb[0].mxu0
        %v1160 = vadd.f32 %v738, %v1159
        %v1161 = vpop.f32.mrb[0].mxu0
        %v1162 = vadd.f32 %v740, %v1161
        %v1163 = vpop.f32.mrb[0].mxu0
        %v1164 = vadd.f32 %v742, %v1163
        %1165 = vmatprep.mubr.bf16.mxu0 0
        %1166 = vmatmul.mubr.bf16.gmra.mrb[0].mxu0 %v1045
        %v1167 = vpop.f32.mrb[0].mxu0
        %v1168 = vadd.f32 %v746, %v1167
        %v1169 = vpop.f32.mrb[0].mxu0
        %v1170 = vadd.f32 %v748, %v1169
        %v1171 = vpop.f32.mrb[0].mxu0
        %v1172 = vadd.f32 %v750, %v1171
        %v1173 = vpop.f32.mrb[0].mxu0
        %v1174 = vadd.f32 %v752, %v1173
        %1175 = vmatprep.mubr.bf16.mxu0 0
        %1176 = vmatmul.mubr.bf16.gmra.mrb[0].mxu0 %v1047
        %v1177 = vpop.f32.mrb[0].mxu0
        %v1178 = vadd.f32 %v756, %v1177
        %v1179 = vpop.f32.mrb[0].mxu0
        %v1180 = vadd.f32 %v758, %v1179
        %v1181 = vpop.f32.mrb[0].mxu0
        %v1182 = vadd.f32 %v760, %v1181
        %v1183 = vpop.f32.mrb[0].mxu0
        %v1184 = vadd.f32 %v762, %v1183
        %1185 = vmatprep.mubr.bf16.mxu0 0
        %1186 = vmatmul.mubr.bf16.gmra.mrb[0].mxu0 %v1049
        %v1187 = vpop.f32.mrb[0].mxu0
        %v1188 = vadd.f32 %v766, %v1187
        %v1189 = vpop.f32.mrb[0].mxu0
        %v1190 = vadd.f32 %v768, %v1189
        %v1191 = vpop.f32.mrb[0].mxu0
        %v1192 = vadd.f32 %v770, %v1191
        %v1193 = vpop.f32.mrb[0].mxu0
        %v1194 = vadd.f32 %v772, %v1193
        %1195 = vmatprep.mubr.bf16.mxu0 0
        %1196 = vmatmul.mubr.bf16.gmra.mrb[0].mxu0 %v1051
        %v1197 = vpop.f32.mrb[0].mxu0
        %v1198 = vadd.f32 %v776, %v1197
        %v1199 = vpop.f32.mrb[0].mxu0
        %v1200 = vadd.f32 %v778, %v1199
        %v1201 = vpop.f32.mrb[0].mxu0
        %v1202 = vadd.f32 %v780, %v1201
        %v1203 = vpop.f32.mrb[0].mxu0
        %v1204 = vadd.f32 %v782, %v1203
        %1205 = vmatprep.mubr.bf16.mxu0 0
        %1206 = vmatmul.mubr.bf16.gmra.mrb[0].mxu0 %v1053
        %v1207 = vpop.f32.mrb[0].mxu0
        %v1208 = vadd.f32 %v786, %v1207
        %v1209 = vpop.f32.mrb[0].mxu0
        %v1210 = vadd.f32 %v788, %v1209
        %v1211 = vpop.f32.mrb[0].mxu0
        %v1212 = vadd.f32 %v790, %v1211
        %v1213 = vpop.f32.mrb[0].mxu0
        %v1214 = vadd.f32 %v792, %v1213
        %1215 = vmatprep.mubr.bf16.mxu0 0
        %1216 = vmatmul.mubr.bf16.gmra.mrb[0].mxu0 %v1055
        %v1217 = vpop.f32.mrb[0].mxu0
        %v1218 = vadd.f32 %v796, %v1217
        %v1219 = vpop.f32.mrb[0].mxu0
        %v1220 = vadd.f32 %v798, %v1219
        %v1221 = vpop.f32.mrb[0].mxu0
        %v1222 = vadd.f32 %v800, %v1221
        %v1223 = vpop.f32.mrb[0].mxu0
        %v1224 = vadd.f32 %v802, %v1223
        %1225 = vmatprep.mubr.bf16.mxu0 0
        %1226 = vmatmul.mubr.bf16.gmra.mrb[0].mxu0 %v1057
        %v1227 = vpop.f32.mrb[0].mxu0
        %v1228 = vadd.f32 %v806, %v1227
        %v1229 = vpop.f32.mrb[0].mxu0
        %v1230 = vadd.f32 %v808, %v1229
        %v1231 = vpop.f32.mrb[0].mxu0
        %v1232 = vadd.f32 %v810, %v1231
        %v1233 = vpop.f32.mrb[0].mxu0
        %v1234 = vadd.f32 %v812, %v1233
        %1235 = vmatprep.mubr.bf16.mxu0 0
        %1236 = vmatmul.mubr.bf16.gmra.mrb[0].mxu0 %v1059
        %v1237 = vpop.f32.mrb[0].mxu0
        %v1238 = vadd.f32 %v816, %v1237
        %v1239 = vpop.f32.mrb[0].mxu0
        %v1240 = vadd.f32 %v818, %v1239
        %v1241 = vpop.f32.mrb[0].mxu0
        %v1242 = vadd.f32 %v820, %v1241
        %v1243 = vpop.f32.mrb[0].mxu0
        %v1244 = vadd.f32 %v822, %v1243
        %1245 = vdwg.mxu0
        %1246 = vmatprep.subr.bf16.mxu0 %v1024
        %1247 = vmatpush1.bf16.msra.mxu0 %v1023
        %1248 = vmatprep.subr.bf16.mxu0 %v1071
        %1249 = vmatpush1.bf16.msra.mxu0 %v1068
        %1250 = vmatprep.subr.bf16.mxu0 0
        %1251 = vmatpush1.bf16.msra.mxu0 0
        %1252 = vmatprep.subr.bf16.mxu0 0
        %1253 = vmatpush1.bf16.msra.mxu0 0
        %1254 = vmatprep.subr.bf16.mxu0 0
        %1255 = vmatpush1.bf16.msra.mxu0 0
        %1256 = vmatprep.subr.bf16.mxu0 0
        %1257 = vmatpush1.bf16.msra.mxu0 0
        %1258 = vmatprep.subr.bf16.mxu0 0
        %1259 = vmatpush1.bf16.msra.mxu0 0
        %1260 = vmatprep.subr.bf16.mxu0 0
        %1261 = vmatpush1.bf16.msra.mxu0 0
        %1262 = vmatprep.subr.bf16.mxu0 0
        %1263 = vmatpush1.bf16.msra.mxu0 0
        %1264 = vmatprep.subr.bf16.mxu0 0
        %1265 = vmatpush1.bf16.msra.mxu0 0
        %1266 = vmatprep.subr.bf16.mxu0 0
        %1267 = vmatpush1.bf16.msra.mxu0 0
        %1268 = vmatprep.subr.bf16.mxu0 0
        %1269 = vmatpush1.bf16.msra.mxu0 0
        %1270 = vmatprep.subr.bf16.mxu0 0
        %1271 = vmatpush1.bf16.msra.mxu0 0
        %1272 = vmatprep.subr.bf16.mxu0 0
        %1273 = vmatpush1.bf16.msra.mxu0 0
        %1274 = vmatprep.subr.bf16.mxu0 0
        %1275 = vmatpush1.bf16.msra.mxu0 0
        %1276 = vmatprep.subr.bf16.mxu0 0
        %1277 = vmatpush1.bf16.msra.mxu0 0
        %1278 = vmatprep.mubr.bf16.mxu0 0
        %1279 = vmatmul.mubr.bf16.gmra.mrb[0].mxu0 %v1033
        %v1280 = vpop.f32.mrb[0].mxu0
        %v1281 = vadd.f32 %v859, %v1280
        %v1282 = vpop.f32.mrb[0].mxu0
        %v1283 = vadd.f32 %v861, %v1282
        %v1284 = vpop.f32.mrb[0].mxu0
        %v1285 = vadd.f32 %v863, %v1284
        %v1286 = vpop.f32.mrb[0].mxu0
        %v1287 = vadd.f32 %v865, %v1286
        %1288 = vmatprep.mubr.bf16.mxu0 0
        %1289 = vmatmul.mubr.bf16.gmra.mrb[0].mxu0 %v1035
        %v1290 = vpop.f32.mrb[0].mxu0
        %v1291 = vadd.f32 %v869, %v1290
        %v1292 = vpop.f32.mrb[0].mxu0
        %v1293 = vadd.f32 %v871, %v1292
        %v1294 = vpop.f32.mrb[0].mxu0
        %v1295 = vadd.f32 %v873, %v1294
        %v1296 = vpop.f32.mrb[0].mxu0
        %v1297 = vadd.f32 %v875, %v1296
        %1298 = vmatprep.mubr.bf16.mxu0 0
        %1299 = vmatmul.mubr.bf16.gmra.mrb[0].mxu0 %v1037
        %v1300 = vpop.f32.mrb[0].mxu0
        %v1301 = vadd.f32 %v879, %v1300
        %v1302 = vpop.f32.mrb[0].mxu0
        %v1303 = vadd.f32 %v881, %v1302
        %v1304 = vpop.f32.mrb[0].mxu0
        %v1305 = vadd.f32 %v883, %v1304
        %v1306 = vpop.f32.mrb[0].mxu0
        %v1307 = vadd.f32 %v885, %v1306
        %1308 = vmatprep.mubr.bf16.mxu0 0
        %1309 = vmatmul.mubr.bf16.gmra.mrb[0].mxu0 %v1039
        %v1310 = vpop.f32.mrb[0].mxu0
        %v1311 = vadd.f32 %v889, %v1310
        %v1312 = vpop.f32.mrb[0].mxu0
        %v1313 = vadd.f32 %v891, %v1312
        %v1314 = vpop.f32.mrb[0].mxu0
        %v1315 = vadd.f32 %v893, %v1314
        %v1316 = vpop.f32.mrb[0].mxu0
        %v1317 = vadd.f32 %v895, %v1316
        %1318 = vmatprep.mubr.bf16.mxu0 0
        %1319 = vmatmul.mubr.bf16.gmra.mrb[0].mxu0 %v1041
        %v1320 = vpop.f32.mrb[0].mxu0
        %v1321 = vadd.f32 %v899, %v1320
        %v1322 = vpop.f32.mrb[0].mxu0
        %v1323 = vadd.f32 %v901, %v1322
        %v1324 = vpop.f32.mrb[0].mxu0
        %v1325 = vadd.f32 %v903, %v1324
        %v1326 = vpop.f32.mrb[0].mxu0
        %v1327 = vadd.f32 %v905, %v1326
        %1328 = vmatprep.mubr.bf16.mxu0 0
        %1329 = vmatmul.mubr.bf16.gmra.mrb[0].mxu0 %v1043
        %v1330 = vpop.f32.mrb[0].mxu0
        %v1331 = vadd.f32 %v909, %v1330
        %v1332 = vpop.f32.mrb[0].mxu0
        %v1333 = vadd.f32 %v911, %v1332
        %v1334 = vpop.f32.mrb[0].mxu0
        %v1335 = vadd.f32 %v913, %v1334
        %v1336 = vpop.f32.mrb[0].mxu0
        %v1337 = vadd.f32 %v915, %v1336
        %1338 = vmatprep.mubr.bf16.mxu0 0
        %1339 = vmatmul.mubr.bf16.gmra.mrb[0].mxu0 %v1045
        %v1340 = vpop.f32.mrb[0].mxu0
        %v1341 = vadd.f32 %v919, %v1340
        %v1342 = vpop.f32.mrb[0].mxu0
        %v1343 = vadd.f32 %v921, %v1342
        %v1344 = vpop.f32.mrb[0].mxu0
        %v1345 = vadd.f32 %v923, %v1344
        %v1346 = vpop.f32.mrb[0].mxu0
        %v1347 = vadd.f32 %v925, %v1346
        %1348 = vmatprep.mubr.bf16.mxu0 0
        %1349 = vmatmul.mubr.bf16.gmra.mrb[0].mxu0 %v1047
        %v1350 = vpop.f32.mrb[0].mxu0
        %v1351 = vadd.f32 %v929, %v1350
        %v1352 = vpop.f32.mrb[0].mxu0
        %v1353 = vadd.f32 %v931, %v1352
        %v1354 = vpop.f32.mrb[0].mxu0
        %v1355 = vadd.f32 %v933, %v1354
        %v1356 = vpop.f32.mrb[0].mxu0
        %v1357 = vadd.f32 %v935, %v1356
        %1358 = vmatprep.mubr.bf16.mxu0 0
        %1359 = vmatmul.mubr.bf16.gmra.mrb[0].mxu0 %v1049
        %v1360 = vpop.f32.mrb[0].mxu0
        %v1361 = vadd.f32 %v939, %v1360
        %v1362 = vpop.f32.mrb[0].mxu0
        %v1363 = vadd.f32 %v941, %v1362
        %v1364 = vpop.f32.mrb[0].mxu0
        %v1365 = vadd.f32 %v943, %v1364
        %v1366 = vpop.f32.mrb[0].mxu0
        %v1367 = vadd.f32 %v945, %v1366
        %1368 = vmatprep.mubr.bf16.mxu0 0
        %1369 = vmatmul.mubr.bf16.gmra.mrb[0].mxu0 %v1051
        %v1370 = vpop.f32.mrb[0].mxu0
        %v1371 = vadd.f32 %v949, %v1370
        %v1372 = vpop.f32.mrb[0].mxu0
        %v1373 = vadd.f32 %v951, %v1372
        %v1374 = vpop.f32.mrb[0].mxu0
        %v1375 = vadd.f32 %v953, %v1374
        %v1376 = vpop.f32.mrb[0].mxu0
        %v1377 = vadd.f32 %v955, %v1376
        %1378 = vmatprep.mubr.bf16.mxu0 0
        %1379 = vmatmul.mubr.bf16.gmra.mrb[0].mxu0 %v1053
        %v1380 = vpop.f32.mrb[0].mxu0
        %v1381 = vadd.f32 %v959, %v1380
        %v1382 = vpop.f32.mrb[0].mxu0
        %v1383 = vadd.f32 %v961, %v1382
        %v1384 = vpop.f32.mrb[0].mxu0
        %v1385 = vadd.f32 %v963, %v1384
        %v1386 = vpop.f32.mrb[0].mxu0
        %v1387 = vadd.f32 %v965, %v1386
        %1388 = vmatprep.mubr.bf16.mxu0 0
        %1389 = vmatmul.mubr.bf16.gmra.mrb[0].mxu0 %v1055
        %v1390 = vpop.f32.mrb[0].mxu0
        %v1391 = vadd.f32 %v969, %v1390
        %v1392 = vpop.f32.mrb[0].mxu0
        %v1393 = vadd.f32 %v971, %v1392
        %v1394 = vpop.f32.mrb[0].mxu0
        %v1395 = vadd.f32 %v973, %v1394
        %v1396 = vpop.f32.mrb[0].mxu0
        %v1397 = vadd.f32 %v975, %v1396
        %1398 = vmatprep.mubr.bf16.mxu0 0
        %1399 = vmatmul.mubr.bf16.gmra.mrb[0].mxu0 %v1057
        %v1400 = vpop.f32.mrb[0].mxu0
        %v1401 = vadd.f32 %v979, %v1400
        %v1402 = vpop.f32.mrb[0].mxu0
        %v1403 = vadd.f32 %v981, %v1402
        %v1404 = vpop.f32.mrb[0].mxu0
        %v1405 = vadd.f32 %v983, %v1404
        %v1406 = vpop.f32.mrb[0].mxu0
        %v1407 = vadd.f32 %v985, %v1406
        %1408 = vmatprep.mubr.bf16.mxu0 0
        %1409 = vmatmul.mubr.bf16.gmra.mrb[0].mxu0 %v1059
        %v1410 = vpop.f32.mrb[0].mxu0
        %v1411 = vadd.f32 %v989, %v1410
        %v1412 = vpop.f32.mrb[0].mxu0
        %v1413 = vadd.f32 %v991, %v1412
        %v1414 = vpop.f32.mrb[0].mxu0
        %v1415 = vadd.f32 %v993, %v1414
        %v1416 = vpop.f32.mrb[0].mxu0
        %v1417 = vadd.f32 %v995, %v1416
        %1418 = vdwg.mxu0
        %s1419 = scalar_lea.vmem %s1, 128
        %v1420 = vld [vmem:[%s1419] sm:$0xff]
        %v1421 = vld [vmem:[%s1419 + $0x8] sm:$0xff]
        %v1422 = vld [vmem:[%s1419 + $0x10] sm:$0xff]
        %v1423 = vld [vmem:[%s1419 + $0x18] sm:$0xff]
        %v1424 = vld [vmem:[%s1419 + $0x20] sm:$0xff]
        %v1425 = vld [vmem:[%s1419 + $0x28] sm:$0xff]
        %v1426 = vld [vmem:[%s1419 + $0x30] sm:$0x33]
        %v1427 = vld [vmem:[%s1419 + $0x38] sm:$0x33]
        %vm1442 = vcmask 1046528
        %v1443 = vrot.slane %v416, 1
        %v1444 = vrot.slane %v417, 1
        %v1445 = vsel %vm1442, %v1443, %v1444
        %v1446 = vrot.slane %v418, 1
        %v1447 = vsel %vm1442, %v1444, %v1446
        %v1448 = vrot.slane %v419, 1
        %v1449 = vsel %vm1442, %v1446, %v1448
        %v1450 = vrot.slane %v420, 1
        %v1451 = vsel %vm1442, %v1448, %v1450
        %v1452 = vrot.slane %v421, 1
        %v1453 = vsel %vm1442, %v1450, %v1452
        %v1454 = vrot.slane %v422, 1
        %v1455 = vsel %vm1442, %v1452, %v1454
        %v1456 = vrot.slane %v423, 1
        %v1457 = vsel %vm1442, %v1454, %v1456
        %v1458 = vrot.slane %v424, 1
        %v1459 = vsel %vm1442, %v1456, %v1458
        %v1460 = vrot.slane %v425, 1
        %v1461 = vsel %vm1442, %v1458, %v1460
        %v1462 = vrot.slane %v426, 1
        %v1463 = vsel %vm1442, %v1460, %v1462
        %v1464 = vrot.slane %v427, 1
        %v1465 = vsel %vm1442, %v1462, %v1464
        %v1466 = vrot.slane %v428, 1
        %v1467 = vsel %vm1442, %v1464, %v1466
        %v1468 = vrot.slane %v429, 1
        %v1469 = vsel %vm1442, %v1466, %v1468
        %v1478 = vunpack.c.l.b16 %v1420
        %v1479 = vunpack.c.h.b16 %v1420
        %v1480 = vunpack.c.l.b16 %v1421
        %v1481 = vunpack.c.h.b16 %v1421
        %v1482 = vunpack.c.l.b16 %v1422
        %v1483 = vunpack.c.h.b16 %v1422
        %v1484 = vunpack.c.l.b16 %v1423
        %v1485 = vunpack.c.h.b16 %v1423
        %v1486 = vunpack.c.l.b16 %v1424
        %v1487 = vunpack.c.h.b16 %v1424
        %v1488 = vunpack.c.l.b16 %v1425
        %v1489 = vunpack.c.h.b16 %v1425
        %v1490 = vunpack.c.l.b16 %v1426
        %v1491 = vunpack.c.h.b16 %v1426
        %v1492 = vunpack.c.l.b16 %v1427
        %v1493 = vunpack.c.h.b16 %v1427
        %v1494 = vpack.c.b16 %v1482, %v1478
        %v1495 = vpack.c.b16 %v1483, %v1479
        %v1496 = vpack.c.b16 %v1484, %v1480
        %v1497 = vpack.c.b16 %v1485, %v1481
        %v1498 = vpack.c.b16 %v1490, %v1486
        %v1499 = vpack.c.b16 %v1491, %v1487
        %v1500 = vpack.c.b16 %v1492, %v1488
        %v1501 = vpack.c.b16 %v1493, %v1489
        %v1507 = vsel %vm595, %v1445, 0
        %v1510 = vsel %vm595, %v1447, 0
        %v1513 = vsel %vm595, %v1449, 0
        %v1516 = vsel %vm595, %v1451, 0
        %v1519 = vsel %vm595, %v1453, 0
        %v1522 = vsel %vm595, %v1455, 0
        %v1525 = vsel %vm595, %v1457, 0
        %v1528 = vsel %vm595, %v1459, 0
        %v1531 = vsel %vm595, %v1461, 0
        %v1534 = vsel %vm595, %v1463, 0
        %v1537 = vsel %vm595, %v1465, 0
        %v1540 = vsel %vm595, %v1467, 0
        %v1543 = vsel %vm595, %v1469, 0
        %v1546 = vsel %vm595, %v1468, 0
        %v1549 = vsel %vm638, %v1498, 0
        %v1552 = vsel %vm638, %v1499, 0
        %v1555 = vsel %vm638, %v1500, 0
        %v1558 = vsel %vm638, %v1501, 0
        %1560 = vmatprep.subr.bf16.mxu0 %v1495
        %1561 = vmatpush1.bf16.msra.mxu0 %v1494
        %1562 = vmatprep.subr.bf16.mxu0 %v1552
        %1563 = vmatpush1.bf16.msra.mxu0 %v1549
        %1564 = vmatprep.subr.bf16.mxu0 0
        %1565 = vmatpush1.bf16.msra.mxu0 0
        %1566 = vmatprep.subr.bf16.mxu0 0
        %1567 = vmatpush1.bf16.msra.mxu0 0
        %1568 = vmatprep.subr.bf16.mxu0 0
        %1569 = vmatpush1.bf16.msra.mxu0 0
        %1570 = vmatprep.subr.bf16.mxu0 0
        %1571 = vmatpush1.bf16.msra.mxu0 0
        %1572 = vmatprep.subr.bf16.mxu0 0
        %1573 = vmatpush1.bf16.msra.mxu0 0
        %1574 = vmatprep.subr.bf16.mxu0 0
        %1575 = vmatpush1.bf16.msra.mxu0 0
        %1576 = vmatprep.subr.bf16.mxu0 0
        %1577 = vmatpush1.bf16.msra.mxu0 0
        %1578 = vmatprep.subr.bf16.mxu0 0
        %1579 = vmatpush1.bf16.msra.mxu0 0
        %1580 = vmatprep.subr.bf16.mxu0 0
        %1581 = vmatpush1.bf16.msra.mxu0 0
        %1582 = vmatprep.subr.bf16.mxu0 0
        %1583 = vmatpush1.bf16.msra.mxu0 0
        %1584 = vmatprep.subr.bf16.mxu0 0
        %1585 = vmatpush1.bf16.msra.mxu0 0
        %1586 = vmatprep.subr.bf16.mxu0 0
        %1587 = vmatpush1.bf16.msra.mxu0 0
        %1588 = vmatprep.subr.bf16.mxu0 0
        %1589 = vmatpush1.bf16.msra.mxu0 0
        %1590 = vmatprep.subr.bf16.mxu0 0
        %1591 = vmatpush1.bf16.msra.mxu0 0
        %1592 = vmatprep.mubr.bf16.mxu0 0
        %1593 = vmatmul.mubr.bf16.gmra.mrb[0].mxu0 %v1507
        %v1594 = vpop.f32.mrb[0].mxu0
        %v1595 = vadd.f32 0.0, %v1594
        %v1596 = vpop.f32.mrb[0].mxu0
        %v1597 = vadd.f32 0.0, %v1596
        %v1598 = vpop.f32.mrb[0].mxu0
        %v1599 = vadd.f32 0.0, %v1598
        %v1600 = vpop.f32.mrb[0].mxu0
        %v1601 = vadd.f32 0.0, %v1600
        %1602 = vmatprep.mubr.bf16.mxu0 0
        %1603 = vmatmul.mubr.bf16.gmra.mrb[0].mxu0 %v1510
        %v1604 = vpop.f32.mrb[0].mxu0
        %v1605 = vadd.f32 0.0, %v1604
        %v1606 = vpop.f32.mrb[0].mxu0
        %v1607 = vadd.f32 0.0, %v1606
        %v1608 = vpop.f32.mrb[0].mxu0
        %v1609 = vadd.f32 0.0, %v1608
        %v1610 = vpop.f32.mrb[0].mxu0
        %v1611 = vadd.f32 0.0, %v1610
        %1612 = vmatprep.mubr.bf16.mxu0 0
        %1613 = vmatmul.mubr.bf16.gmra.mrb[0].mxu0 %v1513
        %v1614 = vpop.f32.mrb[0].mxu0
        %v1615 = vadd.f32 0.0, %v1614
        %v1616 = vpop.f32.mrb[0].mxu0
        %v1617 = vadd.f32 0.0, %v1616
        %v1618 = vpop.f32.mrb[0].mxu0
        %v1619 = vadd.f32 0.0, %v1618
        %v1620 = vpop.f32.mrb[0].mxu0
        %v1621 = vadd.f32 0.0, %v1620
        %1622 = vmatprep.mubr.bf16.mxu0 0
        %1623 = vmatmul.mubr.bf16.gmra.mrb[0].mxu0 %v1516
        %v1624 = vpop.f32.mrb[0].mxu0
        %v1625 = vadd.f32 0.0, %v1624
        %v1626 = vpop.f32.mrb[0].mxu0
        %v1627 = vadd.f32 0.0, %v1626
        %v1628 = vpop.f32.mrb[0].mxu0
        %v1629 = vadd.f32 0.0, %v1628
        %v1630 = vpop.f32.mrb[0].mxu0
        %v1631 = vadd.f32 0.0, %v1630
        %1632 = vmatprep.mubr.bf16.mxu0 0
        %1633 = vmatmul.mubr.bf16.gmra.mrb[0].mxu0 %v1519
        %v1634 = vpop.f32.mrb[0].mxu0
        %v1635 = vadd.f32 0.0, %v1634
        %v1636 = vpop.f32.mrb[0].mxu0
        %v1637 = vadd.f32 0.0, %v1636
        %v1638 = vpop.f32.mrb[0].mxu0
        %v1639 = vadd.f32 0.0, %v1638
        %v1640 = vpop.f32.mrb[0].mxu0
        %v1641 = vadd.f32 0.0, %v1640
        %1642 = vmatprep.mubr.bf16.mxu0 0
        %1643 = vmatmul.mubr.bf16.gmra.mrb[0].mxu0 %v1522
        %v1644 = vpop.f32.mrb[0].mxu0
        %v1645 = vadd.f32 0.0, %v1644
        %v1646 = vpop.f32.mrb[0].mxu0
        %v1647 = vadd.f32 0.0, %v1646
        %v1648 = vpop.f32.mrb[0].mxu0
        %v1649 = vadd.f32 0.0, %v1648
        %v1650 = vpop.f32.mrb[0].mxu0
        %v1651 = vadd.f32 0.0, %v1650
        %1652 = vmatprep.mubr.bf16.mxu0 0
        %1653 = vmatmul.mubr.bf16.gmra.mrb[0].mxu0 %v1525
        %v1654 = vpop.f32.mrb[0].mxu0
        %v1655 = vadd.f32 0.0, %v1654
        %v1656 = vpop.f32.mrb[0].mxu0
        %v1657 = vadd.f32 0.0, %v1656
        %v1658 = vpop.f32.mrb[0].mxu0
        %v1659 = vadd.f32 0.0, %v1658
        %v1660 = vpop.f32.mrb[0].mxu0
        %v1661 = vadd.f32 0.0, %v1660
        %1662 = vmatprep.mubr.bf16.mxu0 0
        %1663 = vmatmul.mubr.bf16.gmra.mrb[0].mxu0 %v1528
        %v1664 = vpop.f32.mrb[0].mxu0
        %v1665 = vadd.f32 0.0, %v1664
        %v1666 = vpop.f32.mrb[0].mxu0
        %v1667 = vadd.f32 0.0, %v1666
        %v1668 = vpop.f32.mrb[0].mxu0
        %v1669 = vadd.f32 0.0, %v1668
        %v1670 = vpop.f32.mrb[0].mxu0
        %v1671 = vadd.f32 0.0, %v1670
        %1672 = vmatprep.mubr.bf16.mxu0 0
        %1673 = vmatmul.mubr.bf16.gmra.mrb[0].mxu0 %v1531
        %v1674 = vpop.f32.mrb[0].mxu0
        %v1675 = vadd.f32 0.0, %v1674
        %v1676 = vpop.f32.mrb[0].mxu0
        %v1677 = vadd.f32 0.0, %v1676
        %v1678 = vpop.f32.mrb[0].mxu0
        %v1679 = vadd.f32 0.0, %v1678
        %v1680 = vpop.f32.mrb[0].mxu0
        %v1681 = vadd.f32 0.0, %v1680
        %1682 = vmatprep.mubr.bf16.mxu0 0
        %1683 = vmatmul.mubr.bf16.gmra.mrb[0].mxu0 %v1534
        %v1684 = vpop.f32.mrb[0].mxu0
        %v1685 = vadd.f32 0.0, %v1684
        %v1686 = vpop.f32.mrb[0].mxu0
        %v1687 = vadd.f32 0.0, %v1686
        %v1688 = vpop.f32.mrb[0].mxu0
        %v1689 = vadd.f32 0.0, %v1688
        %v1690 = vpop.f32.mrb[0].mxu0
        %v1691 = vadd.f32 0.0, %v1690
        %1692 = vmatprep.mubr.bf16.mxu0 0
        %1693 = vmatmul.mubr.bf16.gmra.mrb[0].mxu0 %v1537
        %v1694 = vpop.f32.mrb[0].mxu0
        %v1695 = vadd.f32 0.0, %v1694
        %v1696 = vpop.f32.mrb[0].mxu0
        %v1697 = vadd.f32 0.0, %v1696
        %v1698 = vpop.f32.mrb[0].mxu0
        %v1699 = vadd.f32 0.0, %v1698
        %v1700 = vpop.f32.mrb[0].mxu0
        %v1701 = vadd.f32 0.0, %v1700
        %1702 = vmatprep.mubr.bf16.mxu0 0
        %1703 = vmatmul.mubr.bf16.gmra.mrb[0].mxu0 %v1540
        %v1704 = vpop.f32.mrb[0].mxu0
        %v1705 = vadd.f32 0.0, %v1704
        %v1706 = vpop.f32.mrb[0].mxu0
        %v1707 = vadd.f32 0.0, %v1706
        %v1708 = vpop.f32.mrb[0].mxu0
        %v1709 = vadd.f32 0.0, %v1708
        %v1710 = vpop.f32.mrb[0].mxu0
        %v1711 = vadd.f32 0.0, %v1710
        %1712 = vmatprep.mubr.bf16.mxu0 0
        %1713 = vmatmul.mubr.bf16.gmra.mrb[0].mxu0 %v1543
        %v1714 = vpop.f32.mrb[0].mxu0
        %v1715 = vadd.f32 0.0, %v1714
        %v1716 = vpop.f32.mrb[0].mxu0
        %v1717 = vadd.f32 0.0, %v1716
        %v1718 = vpop.f32.mrb[0].mxu0
        %v1719 = vadd.f32 0.0, %v1718
        %v1720 = vpop.f32.mrb[0].mxu0
        %v1721 = vadd.f32 0.0, %v1720
        %1722 = vmatprep.mubr.bf16.mxu0 0
        %1723 = vmatmul.mubr.bf16.gmra.mrb[0].mxu0 %v1546
        %v1724 = vpop.f32.mrb[0].mxu0
        %v1725 = vadd.f32 0.0, %v1724
        %v1726 = vpop.f32.mrb[0].mxu0
        %v1727 = vadd.f32 0.0, %v1726
        %v1728 = vpop.f32.mrb[0].mxu0
        %v1729 = vadd.f32 0.0, %v1728
        %v1730 = vpop.f32.mrb[0].mxu0
        %v1731 = vadd.f32 0.0, %v1730
        %1732 = vdwg.mxu0
        %1733 = vmatprep.subr.bf16.mxu0 %v1497
        %1734 = vmatpush1.bf16.msra.mxu0 %v1496
        %1735 = vmatprep.subr.bf16.mxu0 %v1558
        %1736 = vmatpush1.bf16.msra.mxu0 %v1555
        %1737 = vmatprep.subr.bf16.mxu0 0
        %1738 = vmatpush1.bf16.msra.mxu0 0
        %1739 = vmatprep.subr.bf16.mxu0 0
        %1740 = vmatpush1.bf16.msra.mxu0 0
        %1741 = vmatprep.subr.bf16.mxu0 0
        %1742 = vmatpush1.bf16.msra.mxu0 0
        %1743 = vmatprep.subr.bf16.mxu0 0
        %1744 = vmatpush1.bf16.msra.mxu0 0
        %1745 = vmatprep.subr.bf16.mxu0 0
        %1746 = vmatpush1.bf16.msra.mxu0 0
        %1747 = vmatprep.subr.bf16.mxu0 0
        %1748 = vmatpush1.bf16.msra.mxu0 0
        %1749 = vmatprep.subr.bf16.mxu0 0
        %1750 = vmatpush1.bf16.msra.mxu0 0
        %1751 = vmatprep.subr.bf16.mxu0 0
        %1752 = vmatpush1.bf16.msra.mxu0 0
        %1753 = vmatprep.subr.bf16.mxu0 0
        %1754 = vmatpush1.bf16.msra.mxu0 0
        %1755 = vmatprep.subr.bf16.mxu0 0
        %1756 = vmatpush1.bf16.msra.mxu0 0
        %1757 = vmatprep.subr.bf16.mxu0 0
        %1758 = vmatpush1.bf16.msra.mxu0 0
        %1759 = vmatprep.subr.bf16.mxu0 0
        %1760 = vmatpush1.bf16.msra.mxu0 0
        %1761 = vmatprep.subr.bf16.mxu0 0
        %1762 = vmatpush1.bf16.msra.mxu0 0
        %1763 = vmatprep.subr.bf16.mxu0 0
        %1764 = vmatpush1.bf16.msra.mxu0 0
        %1765 = vmatprep.mubr.bf16.mxu0 0
        %1766 = vmatmul.mubr.bf16.gmra.mrb[0].mxu0 %v1507
        %v1767 = vpop.f32.mrb[0].mxu0
        %v1768 = vadd.f32 0.0, %v1767
        %v1769 = vpop.f32.mrb[0].mxu0
        %v1770 = vadd.f32 0.0, %v1769
        %v1771 = vpop.f32.mrb[0].mxu0
        %v1772 = vadd.f32 0.0, %v1771
        %v1773 = vpop.f32.mrb[0].mxu0
        %v1774 = vadd.f32 0.0, %v1773
        %1775 = vmatprep.mubr.bf16.mxu0 0
        %1776 = vmatmul.mubr.bf16.gmra.mrb[0].mxu0 %v1510
        %v1777 = vpop.f32.mrb[0].mxu0
        %v1778 = vadd.f32 0.0, %v1777
        %v1779 = vpop.f32.mrb[0].mxu0
        %v1780 = vadd.f32 0.0, %v1779
        %v1781 = vpop.f32.mrb[0].mxu0
        %v1782 = vadd.f32 0.0, %v1781
        %v1783 = vpop.f32.mrb[0].mxu0
        %v1784 = vadd.f32 0.0, %v1783
        %1785 = vmatprep.mubr.bf16.mxu0 0
        %1786 = vmatmul.mubr.bf16.gmra.mrb[0].mxu0 %v1513
        %v1787 = vpop.f32.mrb[0].mxu0
        %v1788 = vadd.f32 0.0, %v1787
        %v1789 = vpop.f32.mrb[0].mxu0
        %v1790 = vadd.f32 0.0, %v1789
        %v1791 = vpop.f32.mrb[0].mxu0
        %v1792 = vadd.f32 0.0, %v1791
        %v1793 = vpop.f32.mrb[0].mxu0
        %v1794 = vadd.f32 0.0, %v1793
        %1795 = vmatprep.mubr.bf16.mxu0 0
        %1796 = vmatmul.mubr.bf16.gmra.mrb[0].mxu0 %v1516
        %v1797 = vpop.f32.mrb[0].mxu0
        %v1798 = vadd.f32 0.0, %v1797
        %v1799 = vpop.f32.mrb[0].mxu0
        %v1800 = vadd.f32 0.0, %v1799
        %v1801 = vpop.f32.mrb[0].mxu0
        %v1802 = vadd.f32 0.0, %v1801
        %v1803 = vpop.f32.mrb[0].mxu0
        %v1804 = vadd.f32 0.0, %v1803
        %1805 = vmatprep.mubr.bf16.mxu0 0
        %1806 = vmatmul.mubr.bf16.gmra.mrb[0].mxu0 %v1519
        %v1807 = vpop.f32.mrb[0].mxu0
        %v1808 = vadd.f32 0.0, %v1807
        %v1809 = vpop.f32.mrb[0].mxu0
        %v1810 = vadd.f32 0.0, %v1809
        %v1811 = vpop.f32.mrb[0].mxu0
        %v1812 = vadd.f32 0.0, %v1811
        %v1813 = vpop.f32.mrb[0].mxu0
        %v1814 = vadd.f32 0.0, %v1813
        %1815 = vmatprep.mubr.bf16.mxu0 0
        %1816 = vmatmul.mubr.bf16.gmra.mrb[0].mxu0 %v1522
        %v1817 = vpop.f32.mrb[0].mxu0
        %v1818 = vadd.f32 0.0, %v1817
        %v1819 = vpop.f32.mrb[0].mxu0
        %v1820 = vadd.f32 0.0, %v1819
        %v1821 = vpop.f32.mrb[0].mxu0
        %v1822 = vadd.f32 0.0, %v1821
        %v1823 = vpop.f32.mrb[0].mxu0
        %v1824 = vadd.f32 0.0, %v1823
        %1825 = vmatprep.mubr.bf16.mxu0 0
        %1826 = vmatmul.mubr.bf16.gmra.mrb[0].mxu0 %v1525
        %v1827 = vpop.f32.mrb[0].mxu0
        %v1828 = vadd.f32 0.0, %v1827
        %v1829 = vpop.f32.mrb[0].mxu0
        %v1830 = vadd.f32 0.0, %v1829
        %v1831 = vpop.f32.mrb[0].mxu0
        %v1832 = vadd.f32 0.0, %v1831
        %v1833 = vpop.f32.mrb[0].mxu0
        %v1834 = vadd.f32 0.0, %v1833
        %1835 = vmatprep.mubr.bf16.mxu0 0
        %1836 = vmatmul.mubr.bf16.gmra.mrb[0].mxu0 %v1528
        %v1837 = vpop.f32.mrb[0].mxu0
        %v1838 = vadd.f32 0.0, %v1837
        %v1839 = vpop.f32.mrb[0].mxu0
        %v1840 = vadd.f32 0.0, %v1839
        %v1841 = vpop.f32.mrb[0].mxu0
        %v1842 = vadd.f32 0.0, %v1841
        %v1843 = vpop.f32.mrb[0].mxu0
        %v1844 = vadd.f32 0.0, %v1843
        %1845 = vmatprep.mubr.bf16.mxu0 0
        %1846 = vmatmul.mubr.bf16.gmra.mrb[0].mxu0 %v1531
        %v1847 = vpop.f32.mrb[0].mxu0
        %v1848 = vadd.f32 0.0, %v1847
        %v1849 = vpop.f32.mrb[0].mxu0
        %v1850 = vadd.f32 0.0, %v1849
        %v1851 = vpop.f32.mrb[0].mxu0
        %v1852 = vadd.f32 0.0, %v1851
        %v1853 = vpop.f32.mrb[0].mxu0
        %v1854 = vadd.f32 0.0, %v1853
        %1855 = vmatprep.mubr.bf16.mxu0 0
        %1856 = vmatmul.mubr.bf16.gmra.mrb[0].mxu0 %v1534
        %v1857 = vpop.f32.mrb[0].mxu0
        %v1858 = vadd.f32 0.0, %v1857
        %v1859 = vpop.f32.mrb[0].mxu0
        %v1860 = vadd.f32 0.0, %v1859
        %v1861 = vpop.f32.mrb[0].mxu0
        %v1862 = vadd.f32 0.0, %v1861
        %v1863 = vpop.f32.mrb[0].mxu0
        %v1864 = vadd.f32 0.0, %v1863
        %1865 = vmatprep.mubr.bf16.mxu0 0
        %1866 = vmatmul.mubr.bf16.gmra.mrb[0].mxu0 %v1537
        %v1867 = vpop.f32.mrb[0].mxu0
        %v1868 = vadd.f32 0.0, %v1867
        %v1869 = vpop.f32.mrb[0].mxu0
        %v1870 = vadd.f32 0.0, %v1869
        %v1871 = vpop.f32.mrb[0].mxu0
        %v1872 = vadd.f32 0.0, %v1871
        %v1873 = vpop.f32.mrb[0].mxu0
        %v1874 = vadd.f32 0.0, %v1873
        %1875 = vmatprep.mubr.bf16.mxu0 0
        %1876 = vmatmul.mubr.bf16.gmra.mrb[0].mxu0 %v1540
        %v1877 = vpop.f32.mrb[0].mxu0
        %v1878 = vadd.f32 0.0, %v1877
        %v1879 = vpop.f32.mrb[0].mxu0
        %v1880 = vadd.f32 0.0, %v1879
        %v1881 = vpop.f32.mrb[0].mxu0
        %v1882 = vadd.f32 0.0, %v1881
        %v1883 = vpop.f32.mrb[0].mxu0
        %v1884 = vadd.f32 0.0, %v1883
        %1885 = vmatprep.mubr.bf16.mxu0 0
        %1886 = vmatmul.mubr.bf16.gmra.mrb[0].mxu0 %v1543
        %v1887 = vpop.f32.mrb[0].mxu0
        %v1888 = vadd.f32 0.0, %v1887
        %v1889 = vpop.f32.mrb[0].mxu0
        %v1890 = vadd.f32 0.0, %v1889
        %v1891 = vpop.f32.mrb[0].mxu0
        %v1892 = vadd.f32 0.0, %v1891
        %v1893 = vpop.f32.mrb[0].mxu0
        %v1894 = vadd.f32 0.0, %v1893
        %1895 = vmatprep.mubr.bf16.mxu0 0
        %1896 = vmatmul.mubr.bf16.gmra.mrb[0].mxu0 %v1546
        %v1897 = vpop.f32.mrb[0].mxu0
        %v1898 = vadd.f32 0.0, %v1897
        %v1899 = vpop.f32.mrb[0].mxu0
        %v1900 = vadd.f32 0.0, %v1899
        %v1901 = vpop.f32.mrb[0].mxu0
        %v1902 = vadd.f32 0.0, %v1901
        %v1903 = vpop.f32.mrb[0].mxu0
        %v1904 = vadd.f32 0.0, %v1903
        %1905 = vdwg.mxu0
        %v1906 = vadd.f32 %v1108, %v1595
        %v1907 = vadd.f32 %v1110, %v1597
        %v1908 = vadd.f32 %v1281, %v1768
        %v1909 = vadd.f32 %v1283, %v1770
        %v1910 = vadd.f32 %v1112, %v1599
        %v1911 = vadd.f32 %v1114, %v1601
        %v1912 = vadd.f32 %v1285, %v1772
        %v1913 = vadd.f32 %v1287, %v1774
        %v1914 = vadd.f32 %v1118, %v1605
        %v1915 = vadd.f32 %v1120, %v1607
        %v1916 = vadd.f32 %v1291, %v1778
        %v1917 = vadd.f32 %v1293, %v1780
        %v1918 = vadd.f32 %v1122, %v1609
        %v1919 = vadd.f32 %v1124, %v1611
        %v1920 = vadd.f32 %v1295, %v1782
        %v1921 = vadd.f32 %v1297, %v1784
        %v1922 = vadd.f32 %v1128, %v1615
        %v1923 = vadd.f32 %v1130, %v1617
        %v1924 = vadd.f32 %v1301, %v1788
        %v1925 = vadd.f32 %v1303, %v1790
        %v1926 = vadd.f32 %v1132, %v1619
        %v1927 = vadd.f32 %v1134, %v1621
        %v1928 = vadd.f32 %v1305, %v1792
        %v1929 = vadd.f32 %v1307, %v1794
        %v1930 = vadd.f32 %v1138, %v1625
        %v1931 = vadd.f32 %v1140, %v1627
        %v1932 = vadd.f32 %v1311, %v1798
        %v1933 = vadd.f32 %v1313, %v1800
        %v1934 = vadd.f32 %v1142, %v1629
        %v1935 = vadd.f32 %v1144, %v1631
        %v1936 = vadd.f32 %v1315, %v1802
        %v1937 = vadd.f32 %v1317, %v1804
        %v1938 = vadd.f32 %v1148, %v1635
        %v1939 = vadd.f32 %v1150, %v1637
        %v1940 = vadd.f32 %v1321, %v1808
        %v1941 = vadd.f32 %v1323, %v1810
        %v1942 = vadd.f32 %v1152, %v1639
        %v1943 = vadd.f32 %v1154, %v1641
        %v1944 = vadd.f32 %v1325, %v1812
        %v1945 = vadd.f32 %v1327, %v1814
        %v1946 = vadd.f32 %v1158, %v1645
        %v1947 = vadd.f32 %v1160, %v1647
        %v1948 = vadd.f32 %v1331, %v1818
        %v1949 = vadd.f32 %v1333, %v1820
        %v1950 = vadd.f32 %v1162, %v1649
        %v1951 = vadd.f32 %v1164, %v1651
        %v1952 = vadd.f32 %v1335, %v1822
        %v1953 = vadd.f32 %v1337, %v1824
        %v1954 = vadd.f32 %v1168, %v1655
        %v1955 = vadd.f32 %v1170, %v1657
        %v1956 = vadd.f32 %v1341, %v1828
        %v1957 = vadd.f32 %v1343, %v1830
        %v1958 = vadd.f32 %v1172, %v1659
        %v1959 = vadd.f32 %v1174, %v1661
        %v1960 = vadd.f32 %v1345, %v1832
        %v1961 = vadd.f32 %v1347, %v1834
        %v1962 = vadd.f32 %v1178, %v1665
        %v1963 = vadd.f32 %v1180, %v1667
        %v1964 = vadd.f32 %v1351, %v1838
        %v1965 = vadd.f32 %v1353, %v1840
        %v1966 = vadd.f32 %v1182, %v1669
        %v1967 = vadd.f32 %v1184, %v1671
        %v1968 = vadd.f32 %v1355, %v1842
        %v1969 = vadd.f32 %v1357, %v1844
        %v1970 = vadd.f32 %v1188, %v1675
        %v1971 = vadd.f32 %v1190, %v1677
        %v1972 = vadd.f32 %v1361, %v1848
        %v1973 = vadd.f32 %v1363, %v1850
        %v1974 = vadd.f32 %v1192, %v1679
        %v1975 = vadd.f32 %v1194, %v1681
        %v1976 = vadd.f32 %v1365, %v1852
        %v1977 = vadd.f32 %v1367, %v1854
        %v1978 = vadd.f32 %v1198, %v1685
        %v1979 = vadd.f32 %v1200, %v1687
        %v1980 = vadd.f32 %v1371, %v1858
        %v1981 = vadd.f32 %v1373, %v1860
        %v1982 = vadd.f32 %v1202, %v1689
        %v1983 = vadd.f32 %v1204, %v1691
        %v1984 = vadd.f32 %v1375, %v1862
        %v1985 = vadd.f32 %v1377, %v1864
        %v1986 = vadd.f32 %v1208, %v1695
        %v1987 = vadd.f32 %v1210, %v1697
        %v1988 = vadd.f32 %v1381, %v1868
        %v1989 = vadd.f32 %v1383, %v1870
        %v1990 = vadd.f32 %v1212, %v1699
        %v1991 = vadd.f32 %v1214, %v1701
        %v1992 = vadd.f32 %v1385, %v1872
        %v1993 = vadd.f32 %v1387, %v1874
        %v1994 = vadd.f32 %v1218, %v1705
        %v1995 = vadd.f32 %v1220, %v1707
        %v1996 = vadd.f32 %v1391, %v1878
        %v1997 = vadd.f32 %v1393, %v1880
        %v1998 = vadd.f32 %v1222, %v1709
        %v1999 = vadd.f32 %v1224, %v1711
        %v2000 = vadd.f32 %v1395, %v1882
        %v2001 = vadd.f32 %v1397, %v1884
        %v2002 = vadd.f32 %v1228, %v1715
        %v2003 = vadd.f32 %v1230, %v1717
        %v2004 = vadd.f32 %v1401, %v1888
        %v2005 = vadd.f32 %v1403, %v1890
        %v2006 = vadd.f32 %v1232, %v1719
        %v2007 = vadd.f32 %v1234, %v1721
        %v2008 = vadd.f32 %v1405, %v1892
        %v2009 = vadd.f32 %v1407, %v1894
        %v2010 = vadd.f32 %v1238, %v1725
        %v2011 = vadd.f32 %v1240, %v1727
        %v2012 = vadd.f32 %v1411, %v1898
        %v2013 = vadd.f32 %v1413, %v1900
        %v2014 = vadd.f32 %v1242, %v1729
        %v2015 = vadd.f32 %v1244, %v1731
        %v2016 = vadd.f32 %v1415, %v1902
        %v2017 = vadd.f32 %v1417, %v1904
        %s2018 = scalar_lea.vmem %s1, 192
        %v2019 = vld [vmem:[%s2018] sm:$0xff]
        %v2020 = vld [vmem:[%s2018 + $0x8] sm:$0xff]
        %v2021 = vld [vmem:[%s2018 + $0x10] sm:$0xff]
        %v2022 = vld [vmem:[%s2018 + $0x18] sm:$0xff]
        %v2023 = vld [vmem:[%s2018 + $0x20] sm:$0xff]
        %v2024 = vld [vmem:[%s2018 + $0x28] sm:$0xff]
        %v2025 = vld [vmem:[%s2018 + $0x30] sm:$0x33]
        %v2026 = vld [vmem:[%s2018 + $0x38] sm:$0x33]
        %vm2027 = vsmask.f32 6400
        %v2028 = vrot.slane %v449, 1
        %v2029 = vrot.slane %v451, 2
        %v2030 = vor.u32 %v2028, %v2029
        %v2031 = vrot.slane %v460, 1
        %v2032 = vrot.slane %v456, 2
        %v2033 = vor.u32 %v2031, %v2032
        %v2034 = vsel %vm2027, %v2030, %v2033
        %v2035 = vrot.slane %v468, 1
        %v2036 = vrot.slane %v464, 2
        %v2037 = vor.u32 %v2035, %v2036
        %v2038 = vsel %vm2027, %v2033, %v2037
        %v2039 = vrot.slane %v476, 1
        %v2040 = vrot.slane %v472, 2
        %v2041 = vor.u32 %v2039, %v2040
        %v2042 = vsel %vm2027, %v2037, %v2041
        %v2043 = vrot.slane %v484, 1
        %v2044 = vrot.slane %v480, 2
        %v2045 = vor.u32 %v2043, %v2044
        %v2046 = vsel %vm2027, %v2041, %v2045
        %v2047 = vrot.slane %v492, 1
        %v2048 = vrot.slane %v488, 2
        %v2049 = vor.u32 %v2047, %v2048
        %v2050 = vsel %vm2027, %v2045, %v2049
        %v2051 = vrot.slane %v500, 1
        %v2052 = vrot.slane %v496, 2
        %v2053 = vor.u32 %v2051, %v2052
        %v2054 = vsel %vm2027, %v2049, %v2053
        %v2055 = vrot.slane %v508, 1
        %v2056 = vrot.slane %v504, 2
        %v2057 = vor.u32 %v2055, %v2056
        %v2058 = vsel %vm2027, %v2053, %v2057
        %v2059 = vrot.slane %v516, 1
        %v2060 = vrot.slane %v512, 2
        %v2061 = vor.u32 %v2059, %v2060
        %v2062 = vsel %vm2027, %v2057, %v2061
        %v2063 = vrot.slane %v524, 1
        %v2064 = vrot.slane %v520, 2
        %v2065 = vor.u32 %v2063, %v2064
        %v2066 = vsel %vm2027, %v2061, %v2065
        %v2067 = vrot.slane %v532, 1
        %v2068 = vrot.slane %v528, 2
        %v2069 = vor.u32 %v2067, %v2068
        %v2070 = vsel %vm2027, %v2065, %v2069
        %v2071 = vrot.slane %v540, 1
        %v2072 = vrot.slane %v536, 2
        %v2073 = vor.u32 %v2071, %v2072
        %v2074 = vsel %vm2027, %v2069, %v2073
        %v2075 = vrot.slane %v548, 1
        %v2076 = vrot.slane %v544, 2
        %v2077 = vor.u32 %v2075, %v2076
        %v2078 = vsel %vm2027, %v2073, %v2077
        %v2079 = vrot.slane %v556, 1
        %v2080 = vrot.slane %v552, 2
        %v2081 = vor.u32 %v2079, %v2080
        %v2082 = vsel %vm2027, %v2077, %v2081
        %v2091 = vunpack.c.l.b16 %v2019
        %v2092 = vunpack.c.h.b16 %v2019
        %v2093 = vunpack.c.l.b16 %v2020
        %v2094 = vunpack.c.h.b16 %v2020
        %v2095 = vunpack.c.l.b16 %v2021
        %v2096 = vunpack.c.h.b16 %v2021
        %v2097 = vunpack.c.l.b16 %v2022
        %v2098 = vunpack.c.h.b16 %v2022
        %v2099 = vunpack.c.l.b16 %v2023
        %v2100 = vunpack.c.h.b16 %v2023
        %v2101 = vunpack.c.l.b16 %v2024
        %v2102 = vunpack.c.h.b16 %v2024
        %v2103 = vunpack.c.l.b16 %v2025
        %v2104 = vunpack.c.h.b16 %v2025
        %v2105 = vunpack.c.l.b16 %v2026
        %v2106 = vunpack.c.h.b16 %v2026
        %v2107 = vpack.c.b16 %v2095, %v2091
        %v2108 = vpack.c.b16 %v2096, %v2092
        %v2109 = vpack.c.b16 %v2097, %v2093
        %v2110 = vpack.c.b16 %v2098, %v2094
        %v2111 = vpack.c.b16 %v2103, %v2099
        %v2112 = vpack.c.b16 %v2104, %v2100
        %v2113 = vpack.c.b16 %v2105, %v2101
        %v2114 = vpack.c.b16 %v2106, %v2102
        %v2120 = vsel %vm595, %v2034, 0
        %v2123 = vsel %vm595, %v2038, 0
        %v2126 = vsel %vm595, %v2042, 0
        %v2129 = vsel %vm595, %v2046, 0
        %v2132 = vsel %vm595, %v2050, 0
        %v2135 = vsel %vm595, %v2054, 0
        %v2138 = vsel %vm595, %v2058, 0
        %v2141 = vsel %vm595, %v2062, 0
        %v2144 = vsel %vm595, %v2066, 0
        %v2147 = vsel %vm595, %v2070, 0
        %v2150 = vsel %vm595, %v2074, 0
        %v2153 = vsel %vm595, %v2078, 0
        %v2156 = vsel %vm595, %v2082, 0
        %v2159 = vsel %vm595, %v2081, 0
        %v2162 = vsel %vm638, %v2111, 0
        %v2165 = vsel %vm638, %v2112, 0
        %v2168 = vsel %vm638, %v2113, 0
        %v2171 = vsel %vm638, %v2114, 0
        %2173 = vmatprep.subr.bf16.mxu0 %v2108
        %2174 = vmatpush1.bf16.msra.mxu0 %v2107
        %2175 = vmatprep.subr.bf16.mxu0 %v2165
        %2176 = vmatpush1.bf16.msra.mxu0 %v2162
        %2177 = vmatprep.subr.bf16.mxu0 0
        %2178 = vmatpush1.bf16.msra.mxu0 0
        %2179 = vmatprep.subr.bf16.mxu0 0
        %2180 = vmatpush1.bf16.msra.mxu0 0
        %2181 = vmatprep.subr.bf16.mxu0 0
        %2182 = vmatpush1.bf16.msra.mxu0 0
        %2183 = vmatprep.subr.bf16.mxu0 0
        %2184 = vmatpush1.bf16.msra.mxu0 0
        %2185 = vmatprep.subr.bf16.mxu0 0
        %2186 = vmatpush1.bf16.msra.mxu0 0
        %2187 = vmatprep.subr.bf16.mxu0 0
        %2188 = vmatpush1.bf16.msra.mxu0 0
        %2189 = vmatprep.subr.bf16.mxu0 0
        %2190 = vmatpush1.bf16.msra.mxu0 0
        %2191 = vmatprep.subr.bf16.mxu0 0
        %2192 = vmatpush1.bf16.msra.mxu0 0
        %2193 = vmatprep.subr.bf16.mxu0 0
        %2194 = vmatpush1.bf16.msra.mxu0 0
        %2195 = vmatprep.subr.bf16.mxu0 0
        %2196 = vmatpush1.bf16.msra.mxu0 0
        %2197 = vmatprep.subr.bf16.mxu0 0
        %2198 = vmatpush1.bf16.msra.mxu0 0
        %2199 = vmatprep.subr.bf16.mxu0 0
        %2200 = vmatpush1.bf16.msra.mxu0 0
        %2201 = vmatprep.subr.bf16.mxu0 0
        %2202 = vmatpush1.bf16.msra.mxu0 0
        %2203 = vmatprep.subr.bf16.mxu0 0
        %2204 = vmatpush1.bf16.msra.mxu0 0
        %2205 = vmatprep.mubr.bf16.mxu0 0
        %2206 = vmatmul.mubr.bf16.gmra.mrb[0].mxu0 %v2120
        %v2207 = vpop.f32.mrb[0].mxu0
        %v2208 = vadd.f32 0.0, %v2207
        %v2209 = vpop.f32.mrb[0].mxu0
        %v2210 = vadd.f32 0.0, %v2209
        %v2211 = vpop.f32.mrb[0].mxu0
        %v2212 = vadd.f32 0.0, %v2211
        %v2213 = vpop.f32.mrb[0].mxu0
        %v2214 = vadd.f32 0.0, %v2213
        %2215 = vmatprep.mubr.bf16.mxu0 0
        %2216 = vmatmul.mubr.bf16.gmra.mrb[0].mxu0 %v2123
        %v2217 = vpop.f32.mrb[0].mxu0
        %v2218 = vadd.f32 0.0, %v2217
        %v2219 = vpop.f32.mrb[0].mxu0
        %v2220 = vadd.f32 0.0, %v2219
        %v2221 = vpop.f32.mrb[0].mxu0
        %v2222 = vadd.f32 0.0, %v2221
        %v2223 = vpop.f32.mrb[0].mxu0
        %v2224 = vadd.f32 0.0, %v2223
        %2225 = vmatprep.mubr.bf16.mxu0 0
        %2226 = vmatmul.mubr.bf16.gmra.mrb[0].mxu0 %v2126
        %v2227 = vpop.f32.mrb[0].mxu0
        %v2228 = vadd.f32 0.0, %v2227
        %v2229 = vpop.f32.mrb[0].mxu0
        %v2230 = vadd.f32 0.0, %v2229
        %v2231 = vpop.f32.mrb[0].mxu0
        %v2232 = vadd.f32 0.0, %v2231
        %v2233 = vpop.f32.mrb[0].mxu0
        %v2234 = vadd.f32 0.0, %v2233
        %2235 = vmatprep.mubr.bf16.mxu0 0
        %2236 = vmatmul.mubr.bf16.gmra.mrb[0].mxu0 %v2129
        %v2237 = vpop.f32.mrb[0].mxu0
        %v2238 = vadd.f32 0.0, %v2237
        %v2239 = vpop.f32.mrb[0].mxu0
        %v2240 = vadd.f32 0.0, %v2239
        %v2241 = vpop.f32.mrb[0].mxu0
        %v2242 = vadd.f32 0.0, %v2241
        %v2243 = vpop.f32.mrb[0].mxu0
        %v2244 = vadd.f32 0.0, %v2243
        %2245 = vmatprep.mubr.bf16.mxu0 0
        %2246 = vmatmul.mubr.bf16.gmra.mrb[0].mxu0 %v2132
        %v2247 = vpop.f32.mrb[0].mxu0
        %v2248 = vadd.f32 0.0, %v2247
        %v2249 = vpop.f32.mrb[0].mxu0
        %v2250 = vadd.f32 0.0, %v2249
        %v2251 = vpop.f32.mrb[0].mxu0
        %v2252 = vadd.f32 0.0, %v2251
        %v2253 = vpop.f32.mrb[0].mxu0
        %v2254 = vadd.f32 0.0, %v2253
        %2255 = vmatprep.mubr.bf16.mxu0 0
        %2256 = vmatmul.mubr.bf16.gmra.mrb[0].mxu0 %v2135
        %v2257 = vpop.f32.mrb[0].mxu0
        %v2258 = vadd.f32 0.0, %v2257
        %v2259 = vpop.f32.mrb[0].mxu0
        %v2260 = vadd.f32 0.0, %v2259
        %v2261 = vpop.f32.mrb[0].mxu0
        %v2262 = vadd.f32 0.0, %v2261
        %v2263 = vpop.f32.mrb[0].mxu0
        %v2264 = vadd.f32 0.0, %v2263
        %2265 = vmatprep.mubr.bf16.mxu0 0
        %2266 = vmatmul.mubr.bf16.gmra.mrb[0].mxu0 %v2138
        %v2267 = vpop.f32.mrb[0].mxu0
        %v2268 = vadd.f32 0.0, %v2267
        %v2269 = vpop.f32.mrb[0].mxu0
        %v2270 = vadd.f32 0.0, %v2269
        %v2271 = vpop.f32.mrb[0].mxu0
        %v2272 = vadd.f32 0.0, %v2271
        %v2273 = vpop.f32.mrb[0].mxu0
        %v2274 = vadd.f32 0.0, %v2273
        %2275 = vmatprep.mubr.bf16.mxu0 0
        %2276 = vmatmul.mubr.bf16.gmra.mrb[0].mxu0 %v2141
        %v2277 = vpop.f32.mrb[0].mxu0
        %v2278 = vadd.f32 0.0, %v2277
        %v2279 = vpop.f32.mrb[0].mxu0
        %v2280 = vadd.f32 0.0, %v2279
        %v2281 = vpop.f32.mrb[0].mxu0
        %v2282 = vadd.f32 0.0, %v2281
        %v2283 = vpop.f32.mrb[0].mxu0
        %v2284 = vadd.f32 0.0, %v2283
        %2285 = vmatprep.mubr.bf16.mxu0 0
        %2286 = vmatmul.mubr.bf16.gmra.mrb[0].mxu0 %v2144
        %v2287 = vpop.f32.mrb[0].mxu0
        %v2288 = vadd.f32 0.0, %v2287
        %v2289 = vpop.f32.mrb[0].mxu0
        %v2290 = vadd.f32 0.0, %v2289
        %v2291 = vpop.f32.mrb[0].mxu0
        %v2292 = vadd.f32 0.0, %v2291
        %v2293 = vpop.f32.mrb[0].mxu0
        %v2294 = vadd.f32 0.0, %v2293
        %2295 = vmatprep.mubr.bf16.mxu0 0
        %2296 = vmatmul.mubr.bf16.gmra.mrb[0].mxu0 %v2147
        %v2297 = vpop.f32.mrb[0].mxu0
        %v2298 = vadd.f32 0.0, %v2297
        %v2299 = vpop.f32.mrb[0].mxu0
        %v2300 = vadd.f32 0.0, %v2299
        %v2301 = vpop.f32.mrb[0].mxu0
        %v2302 = vadd.f32 0.0, %v2301
        %v2303 = vpop.f32.mrb[0].mxu0
        %v2304 = vadd.f32 0.0, %v2303
        %2305 = vmatprep.mubr.bf16.mxu0 0
        %2306 = vmatmul.mubr.bf16.gmra.mrb[0].mxu0 %v2150
        %v2307 = vpop.f32.mrb[0].mxu0
        %v2308 = vadd.f32 0.0, %v2307
        %v2309 = vpop.f32.mrb[0].mxu0
        %v2310 = vadd.f32 0.0, %v2309
        %v2311 = vpop.f32.mrb[0].mxu0
        %v2312 = vadd.f32 0.0, %v2311
        %v2313 = vpop.f32.mrb[0].mxu0
        %v2314 = vadd.f32 0.0, %v2313
        %2315 = vmatprep.mubr.bf16.mxu0 0
        %2316 = vmatmul.mubr.bf16.gmra.mrb[0].mxu0 %v2153
        %v2317 = vpop.f32.mrb[0].mxu0
        %v2318 = vadd.f32 0.0, %v2317
        %v2319 = vpop.f32.mrb[0].mxu0
        %v2320 = vadd.f32 0.0, %v2319
        %v2321 = vpop.f32.mrb[0].mxu0
        %v2322 = vadd.f32 0.0, %v2321
        %v2323 = vpop.f32.mrb[0].mxu0
        %v2324 = vadd.f32 0.0, %v2323
        %2325 = vmatprep.mubr.bf16.mxu0 0
        %2326 = vmatmul.mubr.bf16.gmra.mrb[0].mxu0 %v2156
        %v2327 = vpop.f32.mrb[0].mxu0
        %v2328 = vadd.f32 0.0, %v2327
        %v2329 = vpop.f32.mrb[0].mxu0
        %v2330 = vadd.f32 0.0, %v2329
        %v2331 = vpop.f32.mrb[0].mxu0
        %v2332 = vadd.f32 0.0, %v2331
        %v2333 = vpop.f32.mrb[0].mxu0
        %v2334 = vadd.f32 0.0, %v2333
        %2335 = vmatprep.mubr.bf16.mxu0 0
        %2336 = vmatmul.mubr.bf16.gmra.mrb[0].mxu0 %v2159
        %v2337 = vpop.f32.mrb[0].mxu0
        %v2338 = vadd.f32 0.0, %v2337
        %v2339 = vpop.f32.mrb[0].mxu0
        %v2340 = vadd.f32 0.0, %v2339
        %v2341 = vpop.f32.mrb[0].mxu0
        %v2342 = vadd.f32 0.0, %v2341
        %v2343 = vpop.f32.mrb[0].mxu0
        %v2344 = vadd.f32 0.0, %v2343
        %2345 = vdwg.mxu0
        %2346 = vmatprep.subr.bf16.mxu0 %v2110
        %2347 = vmatpush1.bf16.msra.mxu0 %v2109
        %2348 = vmatprep.subr.bf16.mxu0 %v2171
        %2349 = vmatpush1.bf16.msra.mxu0 %v2168
        %2350 = vmatprep.subr.bf16.mxu0 0
        %2351 = vmatpush1.bf16.msra.mxu0 0
        %2352 = vmatprep.subr.bf16.mxu0 0
        %2353 = vmatpush1.bf16.msra.mxu0 0
        %2354 = vmatprep.subr.bf16.mxu0 0
        %2355 = vmatpush1.bf16.msra.mxu0 0
        %2356 = vmatprep.subr.bf16.mxu0 0
        %2357 = vmatpush1.bf16.msra.mxu0 0
        %2358 = vmatprep.subr.bf16.mxu0 0
        %2359 = vmatpush1.bf16.msra.mxu0 0
        %2360 = vmatprep.subr.bf16.mxu0 0
        %2361 = vmatpush1.bf16.msra.mxu0 0
        %2362 = vmatprep.subr.bf16.mxu0 0
        %2363 = vmatpush1.bf16.msra.mxu0 0
        %2364 = vmatprep.subr.bf16.mxu0 0
        %2365 = vmatpush1.bf16.msra.mxu0 0
        %2366 = vmatprep.subr.bf16.mxu0 0
        %2367 = vmatpush1.bf16.msra.mxu0 0
        %2368 = vmatprep.subr.bf16.mxu0 0
        %2369 = vmatpush1.bf16.msra.mxu0 0
        %2370 = vmatprep.subr.bf16.mxu0 0
        %2371 = vmatpush1.bf16.msra.mxu0 0
        %2372 = vmatprep.subr.bf16.mxu0 0
        %2373 = vmatpush1.bf16.msra.mxu0 0
        %2374 = vmatprep.subr.bf16.mxu0 0
        %2375 = vmatpush1.bf16.msra.mxu0 0
        %2376 = vmatprep.subr.bf16.mxu0 0
        %2377 = vmatpush1.bf16.msra.mxu0 0
        %2378 = vmatprep.mubr.bf16.mxu0 0
        %2379 = vmatmul.mubr.bf16.gmra.mrb[0].mxu0 %v2120
        %v2380 = vpop.f32.mrb[0].mxu0
        %v2381 = vadd.f32 0.0, %v2380
        %v2382 = vpop.f32.mrb[0].mxu0
        %v2383 = vadd.f32 0.0, %v2382
        %v2384 = vpop.f32.mrb[0].mxu0
        %v2385 = vadd.f32 0.0, %v2384
        %v2386 = vpop.f32.mrb[0].mxu0
        %v2387 = vadd.f32 0.0, %v2386
        %2388 = vmatprep.mubr.bf16.mxu0 0
        %2389 = vmatmul.mubr.bf16.gmra.mrb[0].mxu0 %v2123
        %v2390 = vpop.f32.mrb[0].mxu0
        %v2391 = vadd.f32 0.0, %v2390
        %v2392 = vpop.f32.mrb[0].mxu0
        %v2393 = vadd.f32 0.0, %v2392
        %v2394 = vpop.f32.mrb[0].mxu0
        %v2395 = vadd.f32 0.0, %v2394
        %v2396 = vpop.f32.mrb[0].mxu0
        %v2397 = vadd.f32 0.0, %v2396
        %2398 = vmatprep.mubr.bf16.mxu0 0
        %2399 = vmatmul.mubr.bf16.gmra.mrb[0].mxu0 %v2126
        %v2400 = vpop.f32.mrb[0].mxu0
        %v2401 = vadd.f32 0.0, %v2400
        %v2402 = vpop.f32.mrb[0].mxu0
        %v2403 = vadd.f32 0.0, %v2402
        %v2404 = vpop.f32.mrb[0].mxu0
        %v2405 = vadd.f32 0.0, %v2404
        %v2406 = vpop.f32.mrb[0].mxu0
        %v2407 = vadd.f32 0.0, %v2406
        %2408 = vmatprep.mubr.bf16.mxu0 0
        %2409 = vmatmul.mubr.bf16.gmra.mrb[0].mxu0 %v2129
        %v2410 = vpop.f32.mrb[0].mxu0
        %v2411 = vadd.f32 0.0, %v2410
        %v2412 = vpop.f32.mrb[0].mxu0
        %v2413 = vadd.f32 0.0, %v2412
        %v2414 = vpop.f32.mrb[0].mxu0
        %v2415 = vadd.f32 0.0, %v2414
        %v2416 = vpop.f32.mrb[0].mxu0
        %v2417 = vadd.f32 0.0, %v2416
        %2418 = vmatprep.mubr.bf16.mxu0 0
        %2419 = vmatmul.mubr.bf16.gmra.mrb[0].mxu0 %v2132
        %v2420 = vpop.f32.mrb[0].mxu0
        %v2421 = vadd.f32 0.0, %v2420
        %v2422 = vpop.f32.mrb[0].mxu0
        %v2423 = vadd.f32 0.0, %v2422
        %v2424 = vpop.f32.mrb[0].mxu0
        %v2425 = vadd.f32 0.0, %v2424
        %v2426 = vpop.f32.mrb[0].mxu0
        %v2427 = vadd.f32 0.0, %v2426
        %2428 = vmatprep.mubr.bf16.mxu0 0
        %2429 = vmatmul.mubr.bf16.gmra.mrb[0].mxu0 %v2135
        %v2430 = vpop.f32.mrb[0].mxu0
        %v2431 = vadd.f32 0.0, %v2430
        %v2432 = vpop.f32.mrb[0].mxu0
        %v2433 = vadd.f32 0.0, %v2432
        %v2434 = vpop.f32.mrb[0].mxu0
        %v2435 = vadd.f32 0.0, %v2434
        %v2436 = vpop.f32.mrb[0].mxu0
        %v2437 = vadd.f32 0.0, %v2436
        %2438 = vmatprep.mubr.bf16.mxu0 0
        %2439 = vmatmul.mubr.bf16.gmra.mrb[0].mxu0 %v2138
        %v2440 = vpop.f32.mrb[0].mxu0
        %v2441 = vadd.f32 0.0, %v2440
        %v2442 = vpop.f32.mrb[0].mxu0
        %v2443 = vadd.f32 0.0, %v2442
        %v2444 = vpop.f32.mrb[0].mxu0
        %v2445 = vadd.f32 0.0, %v2444
        %v2446 = vpop.f32.mrb[0].mxu0
        %v2447 = vadd.f32 0.0, %v2446
        %2448 = vmatprep.mubr.bf16.mxu0 0
        %2449 = vmatmul.mubr.bf16.gmra.mrb[0].mxu0 %v2141
        %v2450 = vpop.f32.mrb[0].mxu0
        %v2451 = vadd.f32 0.0, %v2450
        %v2452 = vpop.f32.mrb[0].mxu0
        %v2453 = vadd.f32 0.0, %v2452
        %v2454 = vpop.f32.mrb[0].mxu0
        %v2455 = vadd.f32 0.0, %v2454
        %v2456 = vpop.f32.mrb[0].mxu0
        %v2457 = vadd.f32 0.0, %v2456
        %2458 = vmatprep.mubr.bf16.mxu0 0
        %2459 = vmatmul.mubr.bf16.gmra.mrb[0].mxu0 %v2144
        %v2460 = vpop.f32.mrb[0].mxu0
        %v2461 = vadd.f32 0.0, %v2460
        %v2462 = vpop.f32.mrb[0].mxu0
        %v2463 = vadd.f32 0.0, %v2462
        %v2464 = vpop.f32.mrb[0].mxu0
        %v2465 = vadd.f32 0.0, %v2464
        %v2466 = vpop.f32.mrb[0].mxu0
        %v2467 = vadd.f32 0.0, %v2466
        %2468 = vmatprep.mubr.bf16.mxu0 0
        %2469 = vmatmul.mubr.bf16.gmra.mrb[0].mxu0 %v2147
        %v2470 = vpop.f32.mrb[0].mxu0
        %v2471 = vadd.f32 0.0, %v2470
        %v2472 = vpop.f32.mrb[0].mxu0
        %v2473 = vadd.f32 0.0, %v2472
        %v2474 = vpop.f32.mrb[0].mxu0
        %v2475 = vadd.f32 0.0, %v2474
        %v2476 = vpop.f32.mrb[0].mxu0
        %v2477 = vadd.f32 0.0, %v2476
        %2478 = vmatprep.mubr.bf16.mxu0 0
        %2479 = vmatmul.mubr.bf16.gmra.mrb[0].mxu0 %v2150
        %v2480 = vpop.f32.mrb[0].mxu0
        %v2481 = vadd.f32 0.0, %v2480
        %v2482 = vpop.f32.mrb[0].mxu0
        %v2483 = vadd.f32 0.0, %v2482
        %v2484 = vpop.f32.mrb[0].mxu0
        %v2485 = vadd.f32 0.0, %v2484
        %v2486 = vpop.f32.mrb[0].mxu0
        %v2487 = vadd.f32 0.0, %v2486
        %2488 = vmatprep.mubr.bf16.mxu0 0
        %2489 = vmatmul.mubr.bf16.gmra.mrb[0].mxu0 %v2153
        %v2490 = vpop.f32.mrb[0].mxu0
        %v2491 = vadd.f32 0.0, %v2490
        %v2492 = vpop.f32.mrb[0].mxu0
        %v2493 = vadd.f32 0.0, %v2492
        %v2494 = vpop.f32.mrb[0].mxu0
        %v2495 = vadd.f32 0.0, %v2494
        %v2496 = vpop.f32.mrb[0].mxu0
        %v2497 = vadd.f32 0.0, %v2496
        %2498 = vmatprep.mubr.bf16.mxu0 0
        %2499 = vmatmul.mubr.bf16.gmra.mrb[0].mxu0 %v2156
        %v2500 = vpop.f32.mrb[0].mxu0
        %v2501 = vadd.f32 0.0, %v2500
        %v2502 = vpop.f32.mrb[0].mxu0
        %v2503 = vadd.f32 0.0, %v2502
        %v2504 = vpop.f32.mrb[0].mxu0
        %v2505 = vadd.f32 0.0, %v2504
        %v2506 = vpop.f32.mrb[0].mxu0
        %v2507 = vadd.f32 0.0, %v2506
        %2508 = vmatprep.mubr.bf16.mxu0 0
        %2509 = vmatmul.mubr.bf16.gmra.mrb[0].mxu0 %v2159
        %v2510 = vpop.f32.mrb[0].mxu0
        %v2511 = vadd.f32 0.0, %v2510
        %v2512 = vpop.f32.mrb[0].mxu0
        %v2513 = vadd.f32 0.0, %v2512
        %v2514 = vpop.f32.mrb[0].mxu0
        %v2515 = vadd.f32 0.0, %v2514
        %v2516 = vpop.f32.mrb[0].mxu0
        %v2517 = vadd.f32 0.0, %v2516
        %2518 = vdwg.mxu0
        %v2519 = vadd.f32 %v1906, %v2208
        %v2520 = vadd.f32 %v1907, %v2210
        %v2521 = vadd.f32 %v1908, %v2381
        %v2522 = vadd.f32 %v1909, %v2383
        %v2523 = vadd.f32 %v1910, %v2212
        %v2524 = vadd.f32 %v1911, %v2214
        %v2525 = vadd.f32 %v1912, %v2385
        %v2526 = vadd.f32 %v1913, %v2387
        %v2527 = vadd.f32 %v1914, %v2218
        %v2528 = vadd.f32 %v1915, %v2220
        %v2529 = vadd.f32 %v1916, %v2391
        %v2530 = vadd.f32 %v1917, %v2393
        %v2531 = vadd.f32 %v1918, %v2222
        %v2532 = vadd.f32 %v1919, %v2224
        %v2533 = vadd.f32 %v1920, %v2395
        %v2534 = vadd.f32 %v1921, %v2397
        %v2535 = vadd.f32 %v1922, %v2228
        %v2536 = vadd.f32 %v1923, %v2230
        %v2537 = vadd.f32 %v1924, %v2401
        %v2538 = vadd.f32 %v1925, %v2403
        %v2539 = vadd.f32 %v1926, %v2232
        %v2540 = vadd.f32 %v1927, %v2234
        %v2541 = vadd.f32 %v1928, %v2405
        %v2542 = vadd.f32 %v1929, %v2407
        %v2543 = vadd.f32 %v1930, %v2238
        %v2544 = vadd.f32 %v1931, %v2240
        %v2545 = vadd.f32 %v1932, %v2411
        %v2546 = vadd.f32 %v1933, %v2413
        %v2547 = vadd.f32 %v1934, %v2242
        %v2548 = vadd.f32 %v1935, %v2244
        %v2549 = vadd.f32 %v1936, %v2415
        %v2550 = vadd.f32 %v1937, %v2417
        %v2551 = vadd.f32 %v1938, %v2248
        %v2552 = vadd.f32 %v1939, %v2250
        %v2553 = vadd.f32 %v1940, %v2421
        %v2554 = vadd.f32 %v1941, %v2423
        %v2555 = vadd.f32 %v1942, %v2252
        %v2556 = vadd.f32 %v1943, %v2254
        %v2557 = vadd.f32 %v1944, %v2425
        %v2558 = vadd.f32 %v1945, %v2427
        %v2559 = vadd.f32 %v1946, %v2258
        %v2560 = vadd.f32 %v1947, %v2260
        %v2561 = vadd.f32 %v1948, %v2431
        %v2562 = vadd.f32 %v1949, %v2433
        %v2563 = vadd.f32 %v1950, %v2262
        %v2564 = vadd.f32 %v1951, %v2264
        %v2565 = vadd.f32 %v1952, %v2435
        %v2566 = vadd.f32 %v1953, %v2437
        %v2567 = vadd.f32 %v1954, %v2268
        %v2568 = vadd.f32 %v1955, %v2270
        %v2569 = vadd.f32 %v1956, %v2441
        %v2570 = vadd.f32 %v1957, %v2443
        %v2571 = vadd.f32 %v1958, %v2272
        %v2572 = vadd.f32 %v1959, %v2274
        %v2573 = vadd.f32 %v1960, %v2445
        %v2574 = vadd.f32 %v1961, %v2447
        %v2575 = vadd.f32 %v1962, %v2278
        %v2576 = vadd.f32 %v1963, %v2280
        %v2577 = vadd.f32 %v1964, %v2451
        %v2578 = vadd.f32 %v1965, %v2453
        %v2579 = vadd.f32 %v1966, %v2282
        %v2580 = vadd.f32 %v1967, %v2284
        %v2581 = vadd.f32 %v1968, %v2455
        %v2582 = vadd.f32 %v1969, %v2457
        %v2583 = vadd.f32 %v1970, %v2288
        %v2584 = vadd.f32 %v1971, %v2290
        %v2585 = vadd.f32 %v1972, %v2461
        %v2586 = vadd.f32 %v1973, %v2463
        %v2587 = vadd.f32 %v1974, %v2292
        %v2588 = vadd.f32 %v1975, %v2294
        %v2589 = vadd.f32 %v1976, %v2465
        %v2590 = vadd.f32 %v1977, %v2467
        %v2591 = vadd.f32 %v1978, %v2298
        %v2592 = vadd.f32 %v1979, %v2300
        %v2593 = vadd.f32 %v1980, %v2471
        %v2594 = vadd.f32 %v1981, %v2473
        %v2595 = vadd.f32 %v1982, %v2302
        %v2596 = vadd.f32 %v1983, %v2304
        %v2597 = vadd.f32 %v1984, %v2475
        %v2598 = vadd.f32 %v1985, %v2477
        %v2599 = vadd.f32 %v1986, %v2308
        %v2600 = vadd.f32 %v1987, %v2310
        %v2601 = vadd.f32 %v1988, %v2481
        %v2602 = vadd.f32 %v1989, %v2483
        %v2603 = vadd.f32 %v1990, %v2312
        %v2604 = vadd.f32 %v1991, %v2314
        %v2605 = vadd.f32 %v1992, %v2485
        %v2606 = vadd.f32 %v1993, %v2487
        %v2607 = vadd.f32 %v1994, %v2318
        %v2608 = vadd.f32 %v1995, %v2320
        %v2609 = vadd.f32 %v1996, %v2491
        %v2610 = vadd.f32 %v1997, %v2493
        %v2611 = vadd.f32 %v1998, %v2322
        %v2612 = vadd.f32 %v1999, %v2324
        %v2613 = vadd.f32 %v2000, %v2495
        %v2614 = vadd.f32 %v2001, %v2497
        %v2615 = vadd.f32 %v2002, %v2328
        %v2616 = vadd.f32 %v2003, %v2330
        %v2617 = vadd.f32 %v2004, %v2501
        %v2618 = vadd.f32 %v2005, %v2503
        %v2619 = vadd.f32 %v2006, %v2332
        %v2620 = vadd.f32 %v2007, %v2334
        %v2621 = vadd.f32 %v2008, %v2505
        %v2622 = vadd.f32 %v2009, %v2507
        %v2623 = vadd.f32 %v2010, %v2338
        %v2624 = vadd.f32 %v2011, %v2340
        %v2625 = vadd.f32 %v2012, %v2511
        %v2626 = vadd.f32 %v2013, %v2513
        %v2627 = vadd.f32 %v2014, %v2342
        %v2628 = vadd.f32 %v2015, %v2344
        %v2629 = vadd.f32 %v2016, %v2515
        %v2630 = vadd.f32 %v2017, %v2517
        %s2631 = scalar_lea.vmem %s1, 256
        %v2632 = vld [vmem:[%s2631] sm:$0xff]
        %v2633 = vld [vmem:[%s2631 + $0x8] sm:$0xff]
        %v2634 = vld [vmem:[%s2631 + $0x10] sm:$0xff]
        %v2635 = vld [vmem:[%s2631 + $0x18] sm:$0xff]
        %v2636 = vld [vmem:[%s2631 + $0x20] sm:$0xff]
        %v2637 = vld [vmem:[%s2631 + $0x28] sm:$0xff]
        %v2638 = vld [vmem:[%s2631 + $0x30] sm:$0x33]
        %v2639 = vld [vmem:[%s2631 + $0x38] sm:$0x33]
        %vm2640 = vcmask 1045504
        %v2641 = vrot.slane %v416, 2
        %v2642 = vrot.slane %v417, 2
        %v2643 = vsel %vm2640, %v2641, %v2642
        %v2644 = vrot.slane %v418, 2
        %v2645 = vsel %vm2640, %v2642, %v2644
        %v2646 = vrot.slane %v419, 2
        %v2647 = vsel %vm2640, %v2644, %v2646
        %v2648 = vrot.slane %v420, 2
        %v2649 = vsel %vm2640, %v2646, %v2648
        %v2650 = vrot.slane %v421, 2
        %v2651 = vsel %vm2640, %v2648, %v2650
        %v2652 = vrot.slane %v422, 2
        %v2653 = vsel %vm2640, %v2650, %v2652
        %v2654 = vrot.slane %v423, 2
        %v2655 = vsel %vm2640, %v2652, %v2654
        %v2656 = vrot.slane %v424, 2
        %v2657 = vsel %vm2640, %v2654, %v2656
        %v2658 = vrot.slane %v425, 2
        %v2659 = vsel %vm2640, %v2656, %v2658
        %v2660 = vrot.slane %v426, 2
        %v2661 = vsel %vm2640, %v2658, %v2660
        %v2662 = vrot.slane %v427, 2
        %v2663 = vsel %vm2640, %v2660, %v2662
        %v2664 = vrot.slane %v428, 2
        %v2665 = vsel %vm2640, %v2662, %v2664
        %v2666 = vrot.slane %v429, 2
        %v2667 = vsel %vm2640, %v2664, %v2666
        %v2676 = vunpack.c.l.b16 %v2632
        %v2677 = vunpack.c.h.b16 %v2632
        %v2678 = vunpack.c.l.b16 %v2633
        %v2679 = vunpack.c.h.b16 %v2633
        %v2680 = vunpack.c.l.b16 %v2634
        %v2681 = vunpack.c.h.b16 %v2634
        %v2682 = vunpack.c.l.b16 %v2635
        %v2683 = vunpack.c.h.b16 %v2635
        %v2684 = vunpack.c.l.b16 %v2636
        %v2685 = vunpack.c.h.b16 %v2636
        %v2686 = vunpack.c.l.b16 %v2637
        %v2687 = vunpack.c.h.b16 %v2637
        %v2688 = vunpack.c.l.b16 %v2638
        %v2689 = vunpack.c.h.b16 %v2638
        %v2690 = vunpack.c.l.b16 %v2639
        %v2691 = vunpack.c.h.b16 %v2639
        %v2692 = vpack.c.b16 %v2680, %v2676
        %v2693 = vpack.c.b16 %v2681, %v2677
        %v2694 = vpack.c.b16 %v2682, %v2678
        %v2695 = vpack.c.b16 %v2683, %v2679
        %v2696 = vpack.c.b16 %v2688, %v2684
        %v2697 = vpack.c.b16 %v2689, %v2685
        %v2698 = vpack.c.b16 %v2690, %v2686
        %v2699 = vpack.c.b16 %v2691, %v2687
        %v2705 = vsel %vm595, %v2643, 0
        %v2708 = vsel %vm595, %v2645, 0
        %v2711 = vsel %vm595, %v2647, 0
        %v2714 = vsel %vm595, %v2649, 0
        %v2717 = vsel %vm595, %v2651, 0
        %v2720 = vsel %vm595, %v2653, 0
        %v2723 = vsel %vm595, %v2655, 0
        %v2726 = vsel %vm595, %v2657, 0
        %v2729 = vsel %vm595, %v2659, 0
        %v2732 = vsel %vm595, %v2661, 0
        %v2735 = vsel %vm595, %v2663, 0
        %v2738 = vsel %vm595, %v2665, 0
        %v2741 = vsel %vm595, %v2667, 0
        %v2744 = vsel %vm595, %v2666, 0
        %v2747 = vsel %vm638, %v2696, 0
        %v2750 = vsel %vm638, %v2697, 0
        %v2753 = vsel %vm638, %v2698, 0
        %v2756 = vsel %vm638, %v2699, 0
        %2758 = vmatprep.subr.bf16.mxu0 %v2693
        %2759 = vmatpush1.bf16.msra.mxu0 %v2692
        %2760 = vmatprep.subr.bf16.mxu0 %v2750
        %2761 = vmatpush1.bf16.msra.mxu0 %v2747
        %2762 = vmatprep.subr.bf16.mxu0 0
        %2763 = vmatpush1.bf16.msra.mxu0 0
        %2764 = vmatprep.subr.bf16.mxu0 0
        %2765 = vmatpush1.bf16.msra.mxu0 0
        %2766 = vmatprep.subr.bf16.mxu0 0
        %2767 = vmatpush1.bf16.msra.mxu0 0
        %2768 = vmatprep.subr.bf16.mxu0 0
        %2769 = vmatpush1.bf16.msra.mxu0 0
        %2770 = vmatprep.subr.bf16.mxu0 0
        %2771 = vmatpush1.bf16.msra.mxu0 0
        %2772 = vmatprep.subr.bf16.mxu0 0
        %2773 = vmatpush1.bf16.msra.mxu0 0
        %2774 = vmatprep.subr.bf16.mxu0 0
        %2775 = vmatpush1.bf16.msra.mxu0 0
        %2776 = vmatprep.subr.bf16.mxu0 0
        %2777 = vmatpush1.bf16.msra.mxu0 0
        %2778 = vmatprep.subr.bf16.mxu0 0
        %2779 = vmatpush1.bf16.msra.mxu0 0
        %2780 = vmatprep.subr.bf16.mxu0 0
        %2781 = vmatpush1.bf16.msra.mxu0 0
        %2782 = vmatprep.subr.bf16.mxu0 0
        %2783 = vmatpush1.bf16.msra.mxu0 0
        %2784 = vmatprep.subr.bf16.mxu0 0
        %2785 = vmatpush1.bf16.msra.mxu0 0
        %2786 = vmatprep.subr.bf16.mxu0 0
        %2787 = vmatpush1.bf16.msra.mxu0 0
        %2788 = vmatprep.subr.bf16.mxu0 0
        %2789 = vmatpush1.bf16.msra.mxu0 0
        %2790 = vmatprep.mubr.bf16.mxu0 0
        %2791 = vmatmul.mubr.bf16.gmra.mrb[0].mxu0 %v2705
        %v2792 = vpop.f32.mrb[0].mxu0
        %v2793 = vadd.f32 0.0, %v2792
        %v2794 = vpop.f32.mrb[0].mxu0
        %v2795 = vadd.f32 0.0, %v2794
        %v2796 = vpop.f32.mrb[0].mxu0
        %v2797 = vadd.f32 0.0, %v2796
        %v2798 = vpop.f32.mrb[0].mxu0
        %v2799 = vadd.f32 0.0, %v2798
        %2800 = vmatprep.mubr.bf16.mxu0 0
        %2801 = vmatmul.mubr.bf16.gmra.mrb[0].mxu0 %v2708
        %v2802 = vpop.f32.mrb[0].mxu0
        %v2803 = vadd.f32 0.0, %v2802
        %v2804 = vpop.f32.mrb[0].mxu0
        %v2805 = vadd.f32 0.0, %v2804
        %v2806 = vpop.f32.mrb[0].mxu0
        %v2807 = vadd.f32 0.0, %v2806
        %v2808 = vpop.f32.mrb[0].mxu0
        %v2809 = vadd.f32 0.0, %v2808
        %2810 = vmatprep.mubr.bf16.mxu0 0
        %2811 = vmatmul.mubr.bf16.gmra.mrb[0].mxu0 %v2711
        %v2812 = vpop.f32.mrb[0].mxu0
        %v2813 = vadd.f32 0.0, %v2812
        %v2814 = vpop.f32.mrb[0].mxu0
        %v2815 = vadd.f32 0.0, %v2814
        %v2816 = vpop.f32.mrb[0].mxu0
        %v2817 = vadd.f32 0.0, %v2816
        %v2818 = vpop.f32.mrb[0].mxu0
        %v2819 = vadd.f32 0.0, %v2818
        %2820 = vmatprep.mubr.bf16.mxu0 0
        %2821 = vmatmul.mubr.bf16.gmra.mrb[0].mxu0 %v2714
        %v2822 = vpop.f32.mrb[0].mxu0
        %v2823 = vadd.f32 0.0, %v2822
        %v2824 = vpop.f32.mrb[0].mxu0
        %v2825 = vadd.f32 0.0, %v2824
        %v2826 = vpop.f32.mrb[0].mxu0
        %v2827 = vadd.f32 0.0, %v2826
        %v2828 = vpop.f32.mrb[0].mxu0
        %v2829 = vadd.f32 0.0, %v2828
        %2830 = vmatprep.mubr.bf16.mxu0 0
        %2831 = vmatmul.mubr.bf16.gmra.mrb[0].mxu0 %v2717
        %v2832 = vpop.f32.mrb[0].mxu0
        %v2833 = vadd.f32 0.0, %v2832
        %v2834 = vpop.f32.mrb[0].mxu0
        %v2835 = vadd.f32 0.0, %v2834
        %v2836 = vpop.f32.mrb[0].mxu0
        %v2837 = vadd.f32 0.0, %v2836
        %v2838 = vpop.f32.mrb[0].mxu0
        %v2839 = vadd.f32 0.0, %v2838
        %2840 = vmatprep.mubr.bf16.mxu0 0
        %2841 = vmatmul.mubr.bf16.gmra.mrb[0].mxu0 %v2720
        %v2842 = vpop.f32.mrb[0].mxu0
        %v2843 = vadd.f32 0.0, %v2842
        %v2844 = vpop.f32.mrb[0].mxu0
        %v2845 = vadd.f32 0.0, %v2844
        %v2846 = vpop.f32.mrb[0].mxu0
        %v2847 = vadd.f32 0.0, %v2846
        %v2848 = vpop.f32.mrb[0].mxu0
        %v2849 = vadd.f32 0.0, %v2848
        %2850 = vmatprep.mubr.bf16.mxu0 0
        %2851 = vmatmul.mubr.bf16.gmra.mrb[0].mxu0 %v2723
        %v2852 = vpop.f32.mrb[0].mxu0
        %v2853 = vadd.f32 0.0, %v2852
        %v2854 = vpop.f32.mrb[0].mxu0
        %v2855 = vadd.f32 0.0, %v2854
        %v2856 = vpop.f32.mrb[0].mxu0
        %v2857 = vadd.f32 0.0, %v2856
        %v2858 = vpop.f32.mrb[0].mxu0
        %v2859 = vadd.f32 0.0, %v2858
        %2860 = vmatprep.mubr.bf16.mxu0 0
        %2861 = vmatmul.mubr.bf16.gmra.mrb[0].mxu0 %v2726
        %v2862 = vpop.f32.mrb[0].mxu0
        %v2863 = vadd.f32 0.0, %v2862
        %v2864 = vpop.f32.mrb[0].mxu0
        %v2865 = vadd.f32 0.0, %v2864
        %v2866 = vpop.f32.mrb[0].mxu0
        %v2867 = vadd.f32 0.0, %v2866
        %v2868 = vpop.f32.mrb[0].mxu0
        %v2869 = vadd.f32 0.0, %v2868
        %2870 = vmatprep.mubr.bf16.mxu0 0
        %2871 = vmatmul.mubr.bf16.gmra.mrb[0].mxu0 %v2729
        %v2872 = vpop.f32.mrb[0].mxu0
        %v2873 = vadd.f32 0.0, %v2872
        %v2874 = vpop.f32.mrb[0].mxu0
        %v2875 = vadd.f32 0.0, %v2874
        %v2876 = vpop.f32.mrb[0].mxu0
        %v2877 = vadd.f32 0.0, %v2876
        %v2878 = vpop.f32.mrb[0].mxu0
        %v2879 = vadd.f32 0.0, %v2878
        %2880 = vmatprep.mubr.bf16.mxu0 0
        %2881 = vmatmul.mubr.bf16.gmra.mrb[0].mxu0 %v2732
        %v2882 = vpop.f32.mrb[0].mxu0
        %v2883 = vadd.f32 0.0, %v2882
        %v2884 = vpop.f32.mrb[0].mxu0
        %v2885 = vadd.f32 0.0, %v2884
        %v2886 = vpop.f32.mrb[0].mxu0
        %v2887 = vadd.f32 0.0, %v2886
        %v2888 = vpop.f32.mrb[0].mxu0
        %v2889 = vadd.f32 0.0, %v2888
        %2890 = vmatprep.mubr.bf16.mxu0 0
        %2891 = vmatmul.mubr.bf16.gmra.mrb[0].mxu0 %v2735
        %v2892 = vpop.f32.mrb[0].mxu0
        %v2893 = vadd.f32 0.0, %v2892
        %v2894 = vpop.f32.mrb[0].mxu0
        %v2895 = vadd.f32 0.0, %v2894
        %v2896 = vpop.f32.mrb[0].mxu0
        %v2897 = vadd.f32 0.0, %v2896
        %v2898 = vpop.f32.mrb[0].mxu0
        %v2899 = vadd.f32 0.0, %v2898
        %2900 = vmatprep.mubr.bf16.mxu0 0
        %2901 = vmatmul.mubr.bf16.gmra.mrb[0].mxu0 %v2738
        %v2902 = vpop.f32.mrb[0].mxu0
        %v2903 = vadd.f32 0.0, %v2902
        %v2904 = vpop.f32.mrb[0].mxu0
        %v2905 = vadd.f32 0.0, %v2904
        %v2906 = vpop.f32.mrb[0].mxu0
        %v2907 = vadd.f32 0.0, %v2906
        %v2908 = vpop.f32.mrb[0].mxu0
        %v2909 = vadd.f32 0.0, %v2908
        %2910 = vmatprep.mubr.bf16.mxu0 0
        %2911 = vmatmul.mubr.bf16.gmra.mrb[0].mxu0 %v2741
        %v2912 = vpop.f32.mrb[0].mxu0
        %v2913 = vadd.f32 0.0, %v2912
        %v2914 = vpop.f32.mrb[0].mxu0
        %v2915 = vadd.f32 0.0, %v2914
        %v2916 = vpop.f32.mrb[0].mxu0
        %v2917 = vadd.f32 0.0, %v2916
        %v2918 = vpop.f32.mrb[0].mxu0
        %v2919 = vadd.f32 0.0, %v2918
        %2920 = vmatprep.mubr.bf16.mxu0 0
        %2921 = vmatmul.mubr.bf16.gmra.mrb[0].mxu0 %v2744
        %v2922 = vpop.f32.mrb[0].mxu0
        %v2923 = vadd.f32 0.0, %v2922
        %v2924 = vpop.f32.mrb[0].mxu0
        %v2925 = vadd.f32 0.0, %v2924
        %v2926 = vpop.f32.mrb[0].mxu0
        %v2927 = vadd.f32 0.0, %v2926
        %v2928 = vpop.f32.mrb[0].mxu0
        %v2929 = vadd.f32 0.0, %v2928
        %2930 = vdwg.mxu0
        %2931 = vmatprep.subr.bf16.mxu0 %v2695
        %2932 = vmatpush1.bf16.msra.mxu0 %v2694
        %2933 = vmatprep.subr.bf16.mxu0 %v2756
        %2934 = vmatpush1.bf16.msra.mxu0 %v2753
        %2935 = vmatprep.subr.bf16.mxu0 0
        %2936 = vmatpush1.bf16.msra.mxu0 0
        %2937 = vmatprep.subr.bf16.mxu0 0
        %2938 = vmatpush1.bf16.msra.mxu0 0
        %2939 = vmatprep.subr.bf16.mxu0 0
        %2940 = vmatpush1.bf16.msra.mxu0 0
        %2941 = vmatprep.subr.bf16.mxu0 0
        %2942 = vmatpush1.bf16.msra.mxu0 0
        %2943 = vmatprep.subr.bf16.mxu0 0
        %2944 = vmatpush1.bf16.msra.mxu0 0
        %2945 = vmatprep.subr.bf16.mxu0 0
        %2946 = vmatpush1.bf16.msra.mxu0 0
        %2947 = vmatprep.subr.bf16.mxu0 0
        %2948 = vmatpush1.bf16.msra.mxu0 0
        %2949 = vmatprep.subr.bf16.mxu0 0
        %2950 = vmatpush1.bf16.msra.mxu0 0
        %2951 = vmatprep.subr.bf16.mxu0 0
        %2952 = vmatpush1.bf16.msra.mxu0 0
        %2953 = vmatprep.subr.bf16.mxu0 0
        %2954 = vmatpush1.bf16.msra.mxu0 0
        %2955 = vmatprep.subr.bf16.mxu0 0
        %2956 = vmatpush1.bf16.msra.mxu0 0
        %2957 = vmatprep.subr.bf16.mxu0 0
        %2958 = vmatpush1.bf16.msra.mxu0 0
        %2959 = vmatprep.subr.bf16.mxu0 0
        %2960 = vmatpush1.bf16.msra.mxu0 0
        %2961 = vmatprep.subr.bf16.mxu0 0
        %2962 = vmatpush1.bf16.msra.mxu0 0
        %2963 = vmatprep.mubr.bf16.mxu0 0
        %2964 = vmatmul.mubr.bf16.gmra.mrb[0].mxu0 %v2705
        %v2965 = vpop.f32.mrb[0].mxu0
        %v2966 = vadd.f32 0.0, %v2965
        %v2967 = vpop.f32.mrb[0].mxu0
        %v2968 = vadd.f32 0.0, %v2967
        %v2969 = vpop.f32.mrb[0].mxu0
        %v2970 = vadd.f32 0.0, %v2969
        %v2971 = vpop.f32.mrb[0].mxu0
        %v2972 = vadd.f32 0.0, %v2971
        %2973 = vmatprep.mubr.bf16.mxu0 0
        %2974 = vmatmul.mubr.bf16.gmra.mrb[0].mxu0 %v2708
        %v2975 = vpop.f32.mrb[0].mxu0
        %v2976 = vadd.f32 0.0, %v2975
        %v2977 = vpop.f32.mrb[0].mxu0
        %v2978 = vadd.f32 0.0, %v2977
        %v2979 = vpop.f32.mrb[0].mxu0
        %v2980 = vadd.f32 0.0, %v2979
        %v2981 = vpop.f32.mrb[0].mxu0
        %v2982 = vadd.f32 0.0, %v2981
        %2983 = vmatprep.mubr.bf16.mxu0 0
        %2984 = vmatmul.mubr.bf16.gmra.mrb[0].mxu0 %v2711
        %v2985 = vpop.f32.mrb[0].mxu0
        %v2986 = vadd.f32 0.0, %v2985
        %v2987 = vpop.f32.mrb[0].mxu0
        %v2988 = vadd.f32 0.0, %v2987
        %v2989 = vpop.f32.mrb[0].mxu0
        %v2990 = vadd.f32 0.0, %v2989
        %v2991 = vpop.f32.mrb[0].mxu0
        %v2992 = vadd.f32 0.0, %v2991
        %2993 = vmatprep.mubr.bf16.mxu0 0
        %2994 = vmatmul.mubr.bf16.gmra.mrb[0].mxu0 %v2714
        %v2995 = vpop.f32.mrb[0].mxu0
        %v2996 = vadd.f32 0.0, %v2995
        %v2997 = vpop.f32.mrb[0].mxu0
        %v2998 = vadd.f32 0.0, %v2997
        %v2999 = vpop.f32.mrb[0].mxu0
        %v3000 = vadd.f32 0.0, %v2999
        %v3001 = vpop.f32.mrb[0].mxu0
        %v3002 = vadd.f32 0.0, %v3001
        %3003 = vmatprep.mubr.bf16.mxu0 0
        %3004 = vmatmul.mubr.bf16.gmra.mrb[0].mxu0 %v2717
        %v3005 = vpop.f32.mrb[0].mxu0
        %v3006 = vadd.f32 0.0, %v3005
        %v3007 = vpop.f32.mrb[0].mxu0
        %v3008 = vadd.f32 0.0, %v3007
        %v3009 = vpop.f32.mrb[0].mxu0
        %v3010 = vadd.f32 0.0, %v3009
        %v3011 = vpop.f32.mrb[0].mxu0
        %v3012 = vadd.f32 0.0, %v3011
        %3013 = vmatprep.mubr.bf16.mxu0 0
        %3014 = vmatmul.mubr.bf16.gmra.mrb[0].mxu0 %v2720
        %v3015 = vpop.f32.mrb[0].mxu0
        %v3016 = vadd.f32 0.0, %v3015
        %v3017 = vpop.f32.mrb[0].mxu0
        %v3018 = vadd.f32 0.0, %v3017
        %v3019 = vpop.f32.mrb[0].mxu0
        %v3020 = vadd.f32 0.0, %v3019
        %v3021 = vpop.f32.mrb[0].mxu0
        %v3022 = vadd.f32 0.0, %v3021
        %3023 = vmatprep.mubr.bf16.mxu0 0
        %3024 = vmatmul.mubr.bf16.gmra.mrb[0].mxu0 %v2723
        %v3025 = vpop.f32.mrb[0].mxu0
        %v3026 = vadd.f32 0.0, %v3025
        %v3027 = vpop.f32.mrb[0].mxu0
        %v3028 = vadd.f32 0.0, %v3027
        %v3029 = vpop.f32.mrb[0].mxu0
        %v3030 = vadd.f32 0.0, %v3029
        %v3031 = vpop.f32.mrb[0].mxu0
        %v3032 = vadd.f32 0.0, %v3031
        %3033 = vmatprep.mubr.bf16.mxu0 0
        %3034 = vmatmul.mubr.bf16.gmra.mrb[0].mxu0 %v2726
        %v3035 = vpop.f32.mrb[0].mxu0
        %v3036 = vadd.f32 0.0, %v3035
        %v3037 = vpop.f32.mrb[0].mxu0
        %v3038 = vadd.f32 0.0, %v3037
        %v3039 = vpop.f32.mrb[0].mxu0
        %v3040 = vadd.f32 0.0, %v3039
        %v3041 = vpop.f32.mrb[0].mxu0
        %v3042 = vadd.f32 0.0, %v3041
        %3043 = vmatprep.mubr.bf16.mxu0 0
        %3044 = vmatmul.mubr.bf16.gmra.mrb[0].mxu0 %v2729
        %v3045 = vpop.f32.mrb[0].mxu0
        %v3046 = vadd.f32 0.0, %v3045
        %v3047 = vpop.f32.mrb[0].mxu0
        %v3048 = vadd.f32 0.0, %v3047
        %v3049 = vpop.f32.mrb[0].mxu0
        %v3050 = vadd.f32 0.0, %v3049
        %v3051 = vpop.f32.mrb[0].mxu0
        %v3052 = vadd.f32 0.0, %v3051
        %3053 = vmatprep.mubr.bf16.mxu0 0
        %3054 = vmatmul.mubr.bf16.gmra.mrb[0].mxu0 %v2732
        %v3055 = vpop.f32.mrb[0].mxu0
        %v3056 = vadd.f32 0.0, %v3055
        %v3057 = vpop.f32.mrb[0].mxu0
        %v3058 = vadd.f32 0.0, %v3057
        %v3059 = vpop.f32.mrb[0].mxu0
        %v3060 = vadd.f32 0.0, %v3059
        %v3061 = vpop.f32.mrb[0].mxu0
        %v3062 = vadd.f32 0.0, %v3061
        %3063 = vmatprep.mubr.bf16.mxu0 0
        %3064 = vmatmul.mubr.bf16.gmra.mrb[0].mxu0 %v2735
        %v3065 = vpop.f32.mrb[0].mxu0
        %v3066 = vadd.f32 0.0, %v3065
        %v3067 = vpop.f32.mrb[0].mxu0
        %v3068 = vadd.f32 0.0, %v3067
        %v3069 = vpop.f32.mrb[0].mxu0
        %v3070 = vadd.f32 0.0, %v3069
        %v3071 = vpop.f32.mrb[0].mxu0
        %v3072 = vadd.f32 0.0, %v3071
        %3073 = vmatprep.mubr.bf16.mxu0 0
        %3074 = vmatmul.mubr.bf16.gmra.mrb[0].mxu0 %v2738
        %v3075 = vpop.f32.mrb[0].mxu0
        %v3076 = vadd.f32 0.0, %v3075
        %v3077 = vpop.f32.mrb[0].mxu0
        %v3078 = vadd.f32 0.0, %v3077
        %v3079 = vpop.f32.mrb[0].mxu0
        %v3080 = vadd.f32 0.0, %v3079
        %v3081 = vpop.f32.mrb[0].mxu0
        %v3082 = vadd.f32 0.0, %v3081
        %3083 = vmatprep.mubr.bf16.mxu0 0
        %3084 = vmatmul.mubr.bf16.gmra.mrb[0].mxu0 %v2741
        %v3085 = vpop.f32.mrb[0].mxu0
        %v3086 = vadd.f32 0.0, %v3085
        %v3087 = vpop.f32.mrb[0].mxu0
        %v3088 = vadd.f32 0.0, %v3087
        %v3089 = vpop.f32.mrb[0].mxu0
        %v3090 = vadd.f32 0.0, %v3089
        %v3091 = vpop.f32.mrb[0].mxu0
        %v3092 = vadd.f32 0.0, %v3091
        %3093 = vmatprep.mubr.bf16.mxu0 0
        %3094 = vmatmul.mubr.bf16.gmra.mrb[0].mxu0 %v2744
        %v3095 = vpop.f32.mrb[0].mxu0
        %v3096 = vadd.f32 0.0, %v3095
        %v3097 = vpop.f32.mrb[0].mxu0
        %v3098 = vadd.f32 0.0, %v3097
        %v3099 = vpop.f32.mrb[0].mxu0
        %v3100 = vadd.f32 0.0, %v3099
        %v3101 = vpop.f32.mrb[0].mxu0
        %v3102 = vadd.f32 0.0, %v3101
        %3103 = vdwg.mxu0
        %v3104 = vadd.f32 %v2519, %v2793
        %v3105 = vadd.f32 %v2520, %v2795
        %v3106 = vadd.f32 %v2521, %v2966
        %v3107 = vadd.f32 %v2522, %v2968
        %v3108 = vadd.f32 %v2523, %v2797
        %v3109 = vadd.f32 %v2524, %v2799
        %v3110 = vadd.f32 %v2525, %v2970
        %v3111 = vadd.f32 %v2526, %v2972
        %v3112 = vadd.f32 %v2527, %v2803
        %v3113 = vadd.f32 %v2528, %v2805
        %v3114 = vadd.f32 %v2529, %v2976
        %v3115 = vadd.f32 %v2530, %v2978
        %v3116 = vadd.f32 %v2531, %v2807
        %v3117 = vadd.f32 %v2532, %v2809
        %v3118 = vadd.f32 %v2533, %v2980
        %v3119 = vadd.f32 %v2534, %v2982
        %v3120 = vadd.f32 %v2535, %v2813
        %v3121 = vadd.f32 %v2536, %v2815
        %v3122 = vadd.f32 %v2537, %v2986
        %v3123 = vadd.f32 %v2538, %v2988
        %v3124 = vadd.f32 %v2539, %v2817
        %v3125 = vadd.f32 %v2540, %v2819
        %v3126 = vadd.f32 %v2541, %v2990
        %v3127 = vadd.f32 %v2542, %v2992
        %v3128 = vadd.f32 %v2543, %v2823
        %v3129 = vadd.f32 %v2544, %v2825
        %v3130 = vadd.f32 %v2545, %v2996
        %v3131 = vadd.f32 %v2546, %v2998
        %v3132 = vadd.f32 %v2547, %v2827
        %v3133 = vadd.f32 %v2548, %v2829
        %v3134 = vadd.f32 %v2549, %v3000
        %v3135 = vadd.f32 %v2550, %v3002
        %v3136 = vadd.f32 %v2551, %v2833
        %v3137 = vadd.f32 %v2552, %v2835
        %v3138 = vadd.f32 %v2553, %v3006
        %v3139 = vadd.f32 %v2554, %v3008
        %v3140 = vadd.f32 %v2555, %v2837
        %v3141 = vadd.f32 %v2556, %v2839
        %v3142 = vadd.f32 %v2557, %v3010
        %v3143 = vadd.f32 %v2558, %v3012
        %v3144 = vadd.f32 %v2559, %v2843
        %v3145 = vadd.f32 %v2560, %v2845
        %v3146 = vadd.f32 %v2561, %v3016
        %v3147 = vadd.f32 %v2562, %v3018
        %v3148 = vadd.f32 %v2563, %v2847
        %v3149 = vadd.f32 %v2564, %v2849
        %v3150 = vadd.f32 %v2565, %v3020
        %v3151 = vadd.f32 %v2566, %v3022
        %v3152 = vadd.f32 %v2567, %v2853
        %v3153 = vadd.f32 %v2568, %v2855
        %v3154 = vadd.f32 %v2569, %v3026
        %v3155 = vadd.f32 %v2570, %v3028
        %v3156 = vadd.f32 %v2571, %v2857
        %v3157 = vadd.f32 %v2572, %v2859
        %v3158 = vadd.f32 %v2573, %v3030
        %v3159 = vadd.f32 %v2574, %v3032
        %v3160 = vadd.f32 %v2575, %v2863
        %v3161 = vadd.f32 %v2576, %v2865
        %v3162 = vadd.f32 %v2577, %v3036
        %v3163 = vadd.f32 %v2578, %v3038
        %v3164 = vadd.f32 %v2579, %v2867
        %v3165 = vadd.f32 %v2580, %v2869
        %v3166 = vadd.f32 %v2581, %v3040
        %v3167 = vadd.f32 %v2582, %v3042
        %v3168 = vadd.f32 %v2583, %v2873
        %v3169 = vadd.f32 %v2584, %v2875
        %v3170 = vadd.f32 %v2585, %v3046
        %v3171 = vadd.f32 %v2586, %v3048
        %v3172 = vadd.f32 %v2587, %v2877
        %v3173 = vadd.f32 %v2588, %v2879
        %v3174 = vadd.f32 %v2589, %v3050
        %v3175 = vadd.f32 %v2590, %v3052
        %v3176 = vadd.f32 %v2591, %v2883
        %v3177 = vadd.f32 %v2592, %v2885
        %v3178 = vadd.f32 %v2593, %v3056
        %v3179 = vadd.f32 %v2594, %v3058
        %v3180 = vadd.f32 %v2595, %v2887
        %v3181 = vadd.f32 %v2596, %v2889
        %v3182 = vadd.f32 %v2597, %v3060
        %v3183 = vadd.f32 %v2598, %v3062
        %v3184 = vadd.f32 %v2599, %v2893
        %v3185 = vadd.f32 %v2600, %v2895
        %v3186 = vadd.f32 %v2601, %v3066
        %v3187 = vadd.f32 %v2602, %v3068
        %v3188 = vadd.f32 %v2603, %v2897
        %v3189 = vadd.f32 %v2604, %v2899
        %v3190 = vadd.f32 %v2605, %v3070
        %v3191 = vadd.f32 %v2606, %v3072
        %v3192 = vadd.f32 %v2607, %v2903
        %v3193 = vadd.f32 %v2608, %v2905
        %v3194 = vadd.f32 %v2609, %v3076
        %v3195 = vadd.f32 %v2610, %v3078
        %v3196 = vadd.f32 %v2611, %v2907
        %v3197 = vadd.f32 %v2612, %v2909
        %v3198 = vadd.f32 %v2613, %v3080
        %v3199 = vadd.f32 %v2614, %v3082
        %v3200 = vadd.f32 %v2615, %v2913
        %v3201 = vadd.f32 %v2616, %v2915
        %v3202 = vadd.f32 %v2617, %v3086
        %v3203 = vadd.f32 %v2618, %v3088
        %v3204 = vadd.f32 %v2619, %v2917
        %v3205 = vadd.f32 %v2620, %v2919
        %v3206 = vadd.f32 %v2621, %v3090
        %v3207 = vadd.f32 %v2622, %v3092
        %v3208 = vadd.f32 %v2623, %v2923
        %v3209 = vadd.f32 %v2624, %v2925
        %v3210 = vadd.f32 %v2625, %v3096
        %v3211 = vadd.f32 %v2626, %v3098
        %v3212 = vadd.f32 %v2627, %v2927
        %v3213 = vadd.f32 %v2628, %v2929
        %v3214 = vadd.f32 %v2629, %v3100
        %v3215 = vadd.f32 %v2630, %v3102
        %v3216 = vld [vmem:[%s2] sm:$0xf]
        %v3218 = vlaneseq
        %v3219 = vshrl.u32 %v3218, 7
        %v3220 = vsub.s32 0, %v3219
        %v3221 = vrot.slane %v3216, %v3220
        %v3222 = vlaneseq
        %v3223 = vshrl.u32 %v3222, 7
        %v3224 = vsub.s32 1, %v3223
        %v3225 = vrot.slane %v3216, %v3224
        %v3226 = vlaneseq
        %v3227 = vshrl.u32 %v3226, 7
        %v3228 = vsub.s32 2, %v3227
        %v3229 = vrot.slane %v3216, %v3228
        %v3230 = vlaneseq
        %v3231 = vshrl.u32 %v3230, 7
        %v3232 = vsub.s32 3, %v3231
        %v3233 = vrot.slane %v3216, %v3232
        %v3238 = vadd.f32 %v3104, %v3221
        %v3239 = vadd.f32 %v3105, %v3225
        %v3240 = vadd.f32 %v3106, %v3229
        %v3241 = vadd.f32 %v3107, %v3233
        %v3242 = vadd.f32 %v3108, %v3221
        %v3243 = vadd.f32 %v3109, %v3225
        %v3244 = vadd.f32 %v3110, %v3229
        %v3245 = vadd.f32 %v3111, %v3233
        %v3246 = vadd.f32 %v3112, %v3221
        %v3247 = vadd.f32 %v3113, %v3225
        %v3248 = vadd.f32 %v3114, %v3229
        %v3249 = vadd.f32 %v3115, %v3233
        %v3250 = vadd.f32 %v3116, %v3221
        %v3251 = vadd.f32 %v3117, %v3225
        %v3252 = vadd.f32 %v3118, %v3229
        %v3253 = vadd.f32 %v3119, %v3233
        %v3254 = vadd.f32 %v3120, %v3221
        %v3255 = vadd.f32 %v3121, %v3225
        %v3256 = vadd.f32 %v3122, %v3229
        %v3257 = vadd.f32 %v3123, %v3233
        %v3258 = vadd.f32 %v3124, %v3221
        %v3259 = vadd.f32 %v3125, %v3225
        %v3260 = vadd.f32 %v3126, %v3229
        %v3261 = vadd.f32 %v3127, %v3233
        %v3262 = vadd.f32 %v3128, %v3221
        %v3263 = vadd.f32 %v3129, %v3225
        %v3264 = vadd.f32 %v3130, %v3229
        %v3265 = vadd.f32 %v3131, %v3233
        %v3266 = vadd.f32 %v3132, %v3221
        %v3267 = vadd.f32 %v3133, %v3225
        %v3268 = vadd.f32 %v3134, %v3229
        %v3269 = vadd.f32 %v3135, %v3233
        %v3270 = vadd.f32 %v3136, %v3221
        %v3271 = vadd.f32 %v3137, %v3225
        %v3272 = vadd.f32 %v3138, %v3229
        %v3273 = vadd.f32 %v3139, %v3233
        %v3274 = vadd.f32 %v3140, %v3221
        %v3275 = vadd.f32 %v3141, %v3225
        %v3276 = vadd.f32 %v3142, %v3229
        %v3277 = vadd.f32 %v3143, %v3233
        %v3278 = vadd.f32 %v3144, %v3221
        %v3279 = vadd.f32 %v3145, %v3225
        %v3280 = vadd.f32 %v3146, %v3229
        %v3281 = vadd.f32 %v3147, %v3233
        %v3282 = vadd.f32 %v3148, %v3221
        %v3283 = vadd.f32 %v3149, %v3225
        %v3284 = vadd.f32 %v3150, %v3229
        %v3285 = vadd.f32 %v3151, %v3233
        %v3286 = vadd.f32 %v3152, %v3221
        %v3287 = vadd.f32 %v3153, %v3225
        %v3288 = vadd.f32 %v3154, %v3229
        %v3289 = vadd.f32 %v3155, %v3233
        %v3290 = vadd.f32 %v3156, %v3221
        %v3291 = vadd.f32 %v3157, %v3225
        %v3292 = vadd.f32 %v3158, %v3229
        %v3293 = vadd.f32 %v3159, %v3233
        %v3294 = vadd.f32 %v3160, %v3221
        %v3295 = vadd.f32 %v3161, %v3225
        %v3296 = vadd.f32 %v3162, %v3229
        %v3297 = vadd.f32 %v3163, %v3233
        %v3298 = vadd.f32 %v3164, %v3221
        %v3299 = vadd.f32 %v3165, %v3225
        %v3300 = vadd.f32 %v3166, %v3229
        %v3301 = vadd.f32 %v3167, %v3233
        %v3302 = vadd.f32 %v3168, %v3221
        %v3303 = vadd.f32 %v3169, %v3225
        %v3304 = vadd.f32 %v3170, %v3229
        %v3305 = vadd.f32 %v3171, %v3233
        %v3306 = vadd.f32 %v3172, %v3221
        %v3307 = vadd.f32 %v3173, %v3225
        %v3308 = vadd.f32 %v3174, %v3229
        %v3309 = vadd.f32 %v3175, %v3233
        %v3310 = vadd.f32 %v3176, %v3221
        %v3311 = vadd.f32 %v3177, %v3225
        %v3312 = vadd.f32 %v3178, %v3229
        %v3313 = vadd.f32 %v3179, %v3233
        %v3314 = vadd.f32 %v3180, %v3221
        %v3315 = vadd.f32 %v3181, %v3225
        %v3316 = vadd.f32 %v3182, %v3229
        %v3317 = vadd.f32 %v3183, %v3233
        %v3318 = vadd.f32 %v3184, %v3221
        %v3319 = vadd.f32 %v3185, %v3225
        %v3320 = vadd.f32 %v3186, %v3229
        %v3321 = vadd.f32 %v3187, %v3233
        %v3322 = vadd.f32 %v3188, %v3221
        %v3323 = vadd.f32 %v3189, %v3225
        %v3324 = vadd.f32 %v3190, %v3229
        %v3325 = vadd.f32 %v3191, %v3233
        %v3326 = vadd.f32 %v3192, %v3221
        %v3327 = vadd.f32 %v3193, %v3225
        %v3328 = vadd.f32 %v3194, %v3229
        %v3329 = vadd.f32 %v3195, %v3233
        %v3330 = vadd.f32 %v3196, %v3221
        %v3331 = vadd.f32 %v3197, %v3225
        %v3332 = vadd.f32 %v3198, %v3229
        %v3333 = vadd.f32 %v3199, %v3233
        %v3334 = vadd.f32 %v3200, %v3221
        %v3335 = vadd.f32 %v3201, %v3225
        %v3336 = vadd.f32 %v3202, %v3229
        %v3337 = vadd.f32 %v3203, %v3233
        %v3338 = vadd.f32 %v3204, %v3221
        %v3339 = vadd.f32 %v3205, %v3225
        %v3340 = vadd.f32 %v3206, %v3229
        %v3341 = vadd.f32 %v3207, %v3233
        %v3342 = vadd.f32 %v3208, %v3221
        %v3343 = vadd.f32 %v3209, %v3225
        %v3344 = vadd.f32 %v3210, %v3229
        %v3345 = vadd.f32 %v3211, %v3233
        %v3346 = vadd.f32 %v3212, %v3221
        %v3347 = vadd.f32 %v3213, %v3225
        %v3348 = vadd.f32 %v3214, %v3229
        %v3349 = vadd.f32 %v3215, %v3233
        %v3350 = vmax.f32 %v3238, 0.0
        %v3351 = vmax.f32 %v3239, 0.0
        %v3352 = vmax.f32 %v3240, 0.0
        %v3353 = vmax.f32 %v3241, 0.0
        %v3354 = vmax.f32 %v3242, 0.0
        %v3355 = vmax.f32 %v3243, 0.0
        %v3356 = vmax.f32 %v3244, 0.0
        %v3357 = vmax.f32 %v3245, 0.0
        %v3358 = vmax.f32 %v3246, 0.0
        %v3359 = vmax.f32 %v3247, 0.0
        %v3360 = vmax.f32 %v3248, 0.0
        %v3361 = vmax.f32 %v3249, 0.0
        %v3362 = vmax.f32 %v3250, 0.0
        %v3363 = vmax.f32 %v3251, 0.0
        %v3364 = vmax.f32 %v3252, 0.0
        %v3365 = vmax.f32 %v3253, 0.0
        %v3366 = vmax.f32 %v3254, 0.0
        %v3367 = vmax.f32 %v3255, 0.0
        %v3368 = vmax.f32 %v3256, 0.0
        %v3369 = vmax.f32 %v3257, 0.0
        %v3370 = vmax.f32 %v3258, 0.0
        %v3371 = vmax.f32 %v3259, 0.0
        %v3372 = vmax.f32 %v3260, 0.0
        %v3373 = vmax.f32 %v3261, 0.0
        %v3374 = vmax.f32 %v3262, 0.0
        %v3375 = vmax.f32 %v3263, 0.0
        %v3376 = vmax.f32 %v3264, 0.0
        %v3377 = vmax.f32 %v3265, 0.0
        %v3378 = vmax.f32 %v3266, 0.0
        %v3379 = vmax.f32 %v3267, 0.0
        %v3380 = vmax.f32 %v3268, 0.0
        %v3381 = vmax.f32 %v3269, 0.0
        %v3382 = vmax.f32 %v3270, 0.0
        %v3383 = vmax.f32 %v3271, 0.0
        %v3384 = vmax.f32 %v3272, 0.0
        %v3385 = vmax.f32 %v3273, 0.0
        %v3386 = vmax.f32 %v3274, 0.0
        %v3387 = vmax.f32 %v3275, 0.0
        %v3388 = vmax.f32 %v3276, 0.0
        %v3389 = vmax.f32 %v3277, 0.0
        %v3390 = vmax.f32 %v3278, 0.0
        %v3391 = vmax.f32 %v3279, 0.0
        %v3392 = vmax.f32 %v3280, 0.0
        %v3393 = vmax.f32 %v3281, 0.0
        %v3394 = vmax.f32 %v3282, 0.0
        %v3395 = vmax.f32 %v3283, 0.0
        %v3396 = vmax.f32 %v3284, 0.0
        %v3397 = vmax.f32 %v3285, 0.0
        %v3398 = vmax.f32 %v3286, 0.0
        %v3399 = vmax.f32 %v3287, 0.0
        %v3400 = vmax.f32 %v3288, 0.0
        %v3401 = vmax.f32 %v3289, 0.0
        %v3402 = vmax.f32 %v3290, 0.0
        %v3403 = vmax.f32 %v3291, 0.0
        %v3404 = vmax.f32 %v3292, 0.0
        %v3405 = vmax.f32 %v3293, 0.0
        %v3406 = vmax.f32 %v3294, 0.0
        %v3407 = vmax.f32 %v3295, 0.0
        %v3408 = vmax.f32 %v3296, 0.0
        %v3409 = vmax.f32 %v3297, 0.0
        %v3410 = vmax.f32 %v3298, 0.0
        %v3411 = vmax.f32 %v3299, 0.0
        %v3412 = vmax.f32 %v3300, 0.0
        %v3413 = vmax.f32 %v3301, 0.0
        %v3414 = vmax.f32 %v3302, 0.0
        %v3415 = vmax.f32 %v3303, 0.0
        %v3416 = vmax.f32 %v3304, 0.0
        %v3417 = vmax.f32 %v3305, 0.0
        %v3418 = vmax.f32 %v3306, 0.0
        %v3419 = vmax.f32 %v3307, 0.0
        %v3420 = vmax.f32 %v3308, 0.0
        %v3421 = vmax.f32 %v3309, 0.0
        %v3422 = vmax.f32 %v3310, 0.0
        %v3423 = vmax.f32 %v3311, 0.0
        %v3424 = vmax.f32 %v3312, 0.0
        %v3425 = vmax.f32 %v3313, 0.0
        %v3426 = vmax.f32 %v3314, 0.0
        %v3427 = vmax.f32 %v3315, 0.0
        %v3428 = vmax.f32 %v3316, 0.0
        %v3429 = vmax.f32 %v3317, 0.0
        %v3430 = vmax.f32 %v3318, 0.0
        %v3431 = vmax.f32 %v3319, 0.0
        %v3432 = vmax.f32 %v3320, 0.0
        %v3433 = vmax.f32 %v3321, 0.0
        %v3434 = vmax.f32 %v3322, 0.0
        %v3435 = vmax.f32 %v3323, 0.0
        %v3436 = vmax.f32 %v3324, 0.0
        %v3437 = vmax.f32 %v3325, 0.0
        %v3438 = vmax.f32 %v3326, 0.0
        %v3439 = vmax.f32 %v3327, 0.0
        %v3440 = vmax.f32 %v3328, 0.0
        %v3441 = vmax.f32 %v3329, 0.0
        %v3442 = vmax.f32 %v3330, 0.0
        %v3443 = vmax.f32 %v3331, 0.0
        %v3444 = vmax.f32 %v3332, 0.0
        %v3445 = vmax.f32 %v3333, 0.0
        %v3446 = vmax.f32 %v3334, 0.0
        %v3447 = vmax.f32 %v3335, 0.0
        %v3448 = vmax.f32 %v3336, 0.0
        %v3449 = vmax.f32 %v3337, 0.0
        %v3450 = vmax.f32 %v3338, 0.0
        %v3451 = vmax.f32 %v3339, 0.0
        %v3452 = vmax.f32 %v3340, 0.0
        %v3453 = vmax.f32 %v3341, 0.0
        %v3454 = vmax.f32 %v3342, 0.0
        %v3455 = vmax.f32 %v3343, 0.0
        %v3456 = vmax.f32 %v3344, 0.0
        %v3457 = vmax.f32 %v3345, 0.0
        %v3458 = vmax.f32 %v3346, 0.0
        %v3459 = vmax.f32 %v3347, 0.0
        %v3460 = vmax.f32 %v3348, 0.0
        %v3461 = vmax.f32 %v3349, 0.0
        %3546 = vrot.lane.b32.xlu0 %v3351, 16
        %v3547 = vpop.permute.xlu0 %3546
        %3548 = vrot.lane.b32.xlu0 %v3352, 16
        %v3549 = vpop.permute.xlu0 %3548
        %3550 = vrot.lane.b32.xlu0 %v3353, 16
        %v3551 = vpop.permute.xlu0 %3550
        %3552 = vrot.lane.b32.xlu0 %v3355, 16
        %v3553 = vpop.permute.xlu0 %3552
        %3554 = vrot.lane.b32.xlu0 %v3356, 16
        %v3555 = vpop.permute.xlu0 %3554
        %3556 = vrot.lane.b32.xlu0 %v3357, 16
        %v3557 = vpop.permute.xlu0 %3556
        %3558 = vrot.lane.b32.xlu0 %v3359, 16
        %v3559 = vpop.permute.xlu0 %3558
        %3560 = vrot.lane.b32.xlu0 %v3360, 16
        %v3561 = vpop.permute.xlu0 %3560
        %3562 = vrot.lane.b32.xlu0 %v3361, 16
        %v3563 = vpop.permute.xlu0 %3562
        %3564 = vrot.lane.b32.xlu0 %v3363, 16
        %v3565 = vpop.permute.xlu0 %3564
        %3566 = vrot.lane.b32.xlu0 %v3364, 16
        %v3567 = vpop.permute.xlu0 %3566
        %3568 = vrot.lane.b32.xlu0 %v3365, 16
        %v3569 = vpop.permute.xlu0 %3568
        %3570 = vrot.lane.b32.xlu0 %v3367, 16
        %v3571 = vpop.permute.xlu0 %3570
        %3572 = vrot.lane.b32.xlu0 %v3368, 16
        %v3573 = vpop.permute.xlu0 %3572
        %3574 = vrot.lane.b32.xlu0 %v3369, 16
        %v3575 = vpop.permute.xlu0 %3574
        %3576 = vrot.lane.b32.xlu0 %v3371, 16
        %v3577 = vpop.permute.xlu0 %3576
        %3578 = vrot.lane.b32.xlu0 %v3372, 16
        %v3579 = vpop.permute.xlu0 %3578
        %3580 = vrot.lane.b32.xlu0 %v3373, 16
        %v3581 = vpop.permute.xlu0 %3580
        %3582 = vrot.lane.b32.xlu0 %v3375, 16
        %v3583 = vpop.permute.xlu0 %3582
        %3584 = vrot.lane.b32.xlu0 %v3376, 16
        %v3585 = vpop.permute.xlu0 %3584
        %3586 = vrot.lane.b32.xlu0 %v3377, 16
        %v3587 = vpop.permute.xlu0 %3586
        %3588 = vrot.lane.b32.xlu0 %v3379, 16
        %v3589 = vpop.permute.xlu0 %3588
        %3590 = vrot.lane.b32.xlu0 %v3380, 16
        %v3591 = vpop.permute.xlu0 %3590
        %3592 = vrot.lane.b32.xlu0 %v3381, 16
        %v3593 = vpop.permute.xlu0 %3592
        %3594 = vrot.lane.b32.xlu0 %v3383, 16
        %v3595 = vpop.permute.xlu0 %3594
        %3596 = vrot.lane.b32.xlu0 %v3384, 16
        %v3597 = vpop.permute.xlu0 %3596
        %3598 = vrot.lane.b32.xlu0 %v3385, 16
        %v3599 = vpop.permute.xlu0 %3598
        %3600 = vrot.lane.b32.xlu0 %v3387, 16
        %v3601 = vpop.permute.xlu0 %3600
        %3602 = vrot.lane.b32.xlu0 %v3388, 16
        %v3603 = vpop.permute.xlu0 %3602
        %3604 = vrot.lane.b32.xlu0 %v3389, 16
        %v3605 = vpop.permute.xlu0 %3604
        %3606 = vrot.lane.b32.xlu0 %v3391, 16
        %v3607 = vpop.permute.xlu0 %3606
        %3608 = vrot.lane.b32.xlu0 %v3392, 16
        %v3609 = vpop.permute.xlu0 %3608
        %3610 = vrot.lane.b32.xlu0 %v3393, 16
        %v3611 = vpop.permute.xlu0 %3610
        %3612 = vrot.lane.b32.xlu0 %v3395, 16
        %v3613 = vpop.permute.xlu0 %3612
        %3614 = vrot.lane.b32.xlu0 %v3396, 16
        %v3615 = vpop.permute.xlu0 %3614
        %3616 = vrot.lane.b32.xlu0 %v3397, 16
        %v3617 = vpop.permute.xlu0 %3616
        %3618 = vrot.lane.b32.xlu0 %v3399, 16
        %v3619 = vpop.permute.xlu0 %3618
        %3620 = vrot.lane.b32.xlu0 %v3400, 16
        %v3621 = vpop.permute.xlu0 %3620
        %3622 = vrot.lane.b32.xlu0 %v3401, 16
        %v3623 = vpop.permute.xlu0 %3622
        %3624 = vrot.lane.b32.xlu0 %v3403, 16
        %v3625 = vpop.permute.xlu0 %3624
        %3626 = vrot.lane.b32.xlu0 %v3404, 16
        %v3627 = vpop.permute.xlu0 %3626
        %3628 = vrot.lane.b32.xlu0 %v3405, 16
        %v3629 = vpop.permute.xlu0 %3628
        %3630 = vrot.lane.b32.xlu0 %v3407, 16
        %v3631 = vpop.permute.xlu0 %3630
        %3632 = vrot.lane.b32.xlu0 %v3408, 16
        %v3633 = vpop.permute.xlu0 %3632
        %3634 = vrot.lane.b32.xlu0 %v3409, 16
        %v3635 = vpop.permute.xlu0 %3634
        %3636 = vrot.lane.b32.xlu0 %v3411, 16
        %v3637 = vpop.permute.xlu0 %3636
        %3638 = vrot.lane.b32.xlu0 %v3412, 16
        %v3639 = vpop.permute.xlu0 %3638
        %3640 = vrot.lane.b32.xlu0 %v3413, 16
        %v3641 = vpop.permute.xlu0 %3640
        %3642 = vrot.lane.b32.xlu0 %v3415, 16
        %v3643 = vpop.permute.xlu0 %3642
        %3644 = vrot.lane.b32.xlu0 %v3416, 16
        %v3645 = vpop.permute.xlu0 %3644
        %3646 = vrot.lane.b32.xlu0 %v3417, 16
        %v3647 = vpop.permute.xlu0 %3646
        %3648 = vrot.lane.b32.xlu0 %v3419, 16
        %v3649 = vpop.permute.xlu0 %3648
        %3650 = vrot.lane.b32.xlu0 %v3420, 16
        %v3651 = vpop.permute.xlu0 %3650
        %3652 = vrot.lane.b32.xlu0 %v3421, 16
        %v3653 = vpop.permute.xlu0 %3652
        %3654 = vrot.lane.b32.xlu0 %v3423, 16
        %v3655 = vpop.permute.xlu0 %3654
        %3656 = vrot.lane.b32.xlu0 %v3424, 16
        %v3657 = vpop.permute.xlu0 %3656
        %3658 = vrot.lane.b32.xlu0 %v3425, 16
        %v3659 = vpop.permute.xlu0 %3658
        %3660 = vrot.lane.b32.xlu0 %v3427, 16
        %v3661 = vpop.permute.xlu0 %3660
        %3662 = vrot.lane.b32.xlu0 %v3428, 16
        %v3663 = vpop.permute.xlu0 %3662
        %3664 = vrot.lane.b32.xlu0 %v3429, 16
        %v3665 = vpop.permute.xlu0 %3664
        %3666 = vrot.lane.b32.xlu0 %v3431, 16
        %v3667 = vpop.permute.xlu0 %3666
        %3668 = vrot.lane.b32.xlu0 %v3432, 16
        %v3669 = vpop.permute.xlu0 %3668
        %3670 = vrot.lane.b32.xlu0 %v3433, 16
        %v3671 = vpop.permute.xlu0 %3670
        %3672 = vrot.lane.b32.xlu0 %v3435, 16
        %v3673 = vpop.permute.xlu0 %3672
        %3674 = vrot.lane.b32.xlu0 %v3436, 16
        %v3675 = vpop.permute.xlu0 %3674
        %3676 = vrot.lane.b32.xlu0 %v3437, 16
        %v3677 = vpop.permute.xlu0 %3676
        %3678 = vrot.lane.b32.xlu0 %v3439, 16
        %v3679 = vpop.permute.xlu0 %3678
        %3680 = vrot.lane.b32.xlu0 %v3440, 16
        %v3681 = vpop.permute.xlu0 %3680
        %3682 = vrot.lane.b32.xlu0 %v3441, 16
        %v3683 = vpop.permute.xlu0 %3682
        %3684 = vrot.lane.b32.xlu0 %v3443, 16
        %v3685 = vpop.permute.xlu0 %3684
        %3686 = vrot.lane.b32.xlu0 %v3444, 16
        %v3687 = vpop.permute.xlu0 %3686
        %3688 = vrot.lane.b32.xlu0 %v3445, 16
        %v3689 = vpop.permute.xlu0 %3688
        %3690 = vrot.lane.b32.xlu0 %v3447, 16
        %v3691 = vpop.permute.xlu0 %3690
        %3692 = vrot.lane.b32.xlu0 %v3448, 16
        %v3693 = vpop.permute.xlu0 %3692
        %3694 = vrot.lane.b32.xlu0 %v3449, 16
        %v3695 = vpop.permute.xlu0 %3694
        %3696 = vrot.lane.b32.xlu0 %v3451, 16
        %v3697 = vpop.permute.xlu0 %3696
        %3698 = vrot.lane.b32.xlu0 %v3452, 16
        %v3699 = vpop.permute.xlu0 %3698
        %3700 = vrot.lane.b32.xlu0 %v3453, 16
        %v3701 = vpop.permute.xlu0 %3700
        %3702 = vrot.lane.b32.xlu0 %v3455, 16
        %v3703 = vpop.permute.xlu0 %3702
        %3704 = vrot.lane.b32.xlu0 %v3456, 16
        %v3705 = vpop.permute.xlu0 %3704
        %3706 = vrot.lane.b32.xlu0 %v3457, 16
        %v3707 = vpop.permute.xlu0 %3706
        %3708 = vrot.lane.b32.xlu0 %v3459, 16
        %v3709 = vpop.permute.xlu0 %3708
        %3710 = vrot.lane.b32.xlu0 %v3460, 16
        %v3711 = vpop.permute.xlu0 %3710
        %3712 = vrot.lane.b32.xlu0 %v3461, 16
        %v3713 = vpop.permute.xlu0 %3712
        %vm3714 = vcmask 130048
        %v3715 = vsel %vm3714, %v3547, %v3549
        %v3716 = vsel %vm3714, %v3549, %v3551
        %v3717 = vsel %vm3714, %v3553, %v3555
        %v3718 = vsel %vm3714, %v3555, %v3557
        %v3719 = vsel %vm3714, %v3559, %v3561
        %v3720 = vsel %vm3714, %v3561, %v3563
        %v3721 = vsel %vm3714, %v3565, %v3567
        %v3722 = vsel %vm3714, %v3567, %v3569
        %v3723 = vsel %vm3714, %v3571, %v3573
        %v3724 = vsel %vm3714, %v3573, %v3575
        %v3725 = vsel %vm3714, %v3577, %v3579
        %v3726 = vsel %vm3714, %v3579, %v3581
        %v3727 = vsel %vm3714, %v3583, %v3585
        %v3728 = vsel %vm3714, %v3585, %v3587
        %v3729 = vsel %vm3714, %v3589, %v3591
        %v3730 = vsel %vm3714, %v3591, %v3593
        %v3731 = vsel %vm3714, %v3595, %v3597
        %v3732 = vsel %vm3714, %v3597, %v3599
        %v3733 = vsel %vm3714, %v3601, %v3603
        %v3734 = vsel %vm3714, %v3603, %v3605
        %v3735 = vsel %vm3714, %v3607, %v3609
        %v3736 = vsel %vm3714, %v3609, %v3611
        %v3737 = vsel %vm3714, %v3613, %v3615
        %v3738 = vsel %vm3714, %v3615, %v3617
        %v3739 = vsel %vm3714, %v3619, %v3621
        %v3740 = vsel %vm3714, %v3621, %v3623
        %v3741 = vsel %vm3714, %v3625, %v3627
        %v3742 = vsel %vm3714, %v3627, %v3629
        %v3743 = vsel %vm3714, %v3631, %v3633
        %v3744 = vsel %vm3714, %v3633, %v3635
        %v3745 = vsel %vm3714, %v3637, %v3639
        %v3746 = vsel %vm3714, %v3639, %v3641
        %v3747 = vsel %vm3714, %v3643, %v3645
        %v3748 = vsel %vm3714, %v3645, %v3647
        %v3749 = vsel %vm3714, %v3649, %v3651
        %v3750 = vsel %vm3714, %v3651, %v3653
        %v3751 = vsel %vm3714, %v3655, %v3657
        %v3752 = vsel %vm3714, %v3657, %v3659
        %v3753 = vsel %vm3714, %v3661, %v3663
        %v3754 = vsel %vm3714, %v3663, %v3665
        %v3755 = vsel %vm3714, %v3667, %v3669
        %v3756 = vsel %vm3714, %v3669, %v3671
        %v3757 = vsel %vm3714, %v3673, %v3675
        %v3758 = vsel %vm3714, %v3675, %v3677
        %v3759 = vsel %vm3714, %v3679, %v3681
        %v3760 = vsel %vm3714, %v3681, %v3683
        %v3761 = vsel %vm3714, %v3685, %v3687
        %v3762 = vsel %vm3714, %v3687, %v3689
        %v3763 = vsel %vm3714, %v3691, %v3693
        %v3764 = vsel %vm3714, %v3693, %v3695
        %v3765 = vsel %vm3714, %v3697, %v3699
        %v3766 = vsel %vm3714, %v3699, %v3701
        %v3767 = vsel %vm3714, %v3703, %v3705
        %v3768 = vsel %vm3714, %v3705, %v3707
        %v3769 = vsel %vm3714, %v3709, %v3711
        %v3770 = vsel %vm3714, %v3711, %v3713
        %v3827 = vmax.f32 %v3350, %v3715
        %v3828 = vmax.f32 %v3351, %v3716
        %v3829 = vmax.f32 %v3354, %v3717
        %v3830 = vmax.f32 %v3355, %v3718
        %v3831 = vmax.f32 %v3358, %v3719
        %v3832 = vmax.f32 %v3359, %v3720
        %v3833 = vmax.f32 %v3362, %v3721
        %v3834 = vmax.f32 %v3363, %v3722
        %v3835 = vmax.f32 %v3366, %v3723
        %v3836 = vmax.f32 %v3367, %v3724
        %v3837 = vmax.f32 %v3370, %v3725
        %v3838 = vmax.f32 %v3371, %v3726
        %v3839 = vmax.f32 %v3374, %v3727
        %v3840 = vmax.f32 %v3375, %v3728
        %v3841 = vmax.f32 %v3378, %v3729
        %v3842 = vmax.f32 %v3379, %v3730
        %v3843 = vmax.f32 %v3382, %v3731
        %v3844 = vmax.f32 %v3383, %v3732
        %v3845 = vmax.f32 %v3386, %v3733
        %v3846 = vmax.f32 %v3387, %v3734
        %v3847 = vmax.f32 %v3390, %v3735
        %v3848 = vmax.f32 %v3391, %v3736
        %v3849 = vmax.f32 %v3394, %v3737
        %v3850 = vmax.f32 %v3395, %v3738
        %v3851 = vmax.f32 %v3398, %v3739
        %v3852 = vmax.f32 %v3399, %v3740
        %v3853 = vmax.f32 %v3402, %v3741
        %v3854 = vmax.f32 %v3403, %v3742
        %v3855 = vmax.f32 %v3406, %v3743
        %v3856 = vmax.f32 %v3407, %v3744
        %v3857 = vmax.f32 %v3410, %v3745
        %v3858 = vmax.f32 %v3411, %v3746
        %v3859 = vmax.f32 %v3414, %v3747
        %v3860 = vmax.f32 %v3415, %v3748
        %v3861 = vmax.f32 %v3418, %v3749
        %v3862 = vmax.f32 %v3419, %v3750
        %v3863 = vmax.f32 %v3422, %v3751
        %v3864 = vmax.f32 %v3423, %v3752
        %v3865 = vmax.f32 %v3426, %v3753
        %v3866 = vmax.f32 %v3427, %v3754
        %v3867 = vmax.f32 %v3430, %v3755
        %v3868 = vmax.f32 %v3431, %v3756
        %v3869 = vmax.f32 %v3434, %v3757
        %v3870 = vmax.f32 %v3435, %v3758
        %v3871 = vmax.f32 %v3438, %v3759
        %v3872 = vmax.f32 %v3439, %v3760
        %v3873 = vmax.f32 %v3442, %v3761
        %v3874 = vmax.f32 %v3443, %v3762
        %v3875 = vmax.f32 %v3446, %v3763
        %v3876 = vmax.f32 %v3447, %v3764
        %v3877 = vmax.f32 %v3450, %v3765
        %v3878 = vmax.f32 %v3451, %v3766
        %v3879 = vmax.f32 %v3454, %v3767
        %v3880 = vmax.f32 %v3455, %v3768
        %v3881 = vmax.f32 %v3458, %v3769
        %v3882 = vmax.f32 %v3459, %v3770
        %vm3939 = vcmask 1046528
        %v3940 = vrot.slane %v3827, 1
        %v3941 = vrot.slane %v3829, 1
        %v3942 = vsel %vm3939, %v3940, %v3941
        %v3943 = vrot.slane %v3828, 1
        %v3944 = vrot.slane %v3830, 1
        %v3945 = vsel %vm3939, %v3943, %v3944
        %v3946 = vrot.slane %v3831, 1
        %v3947 = vsel %vm3939, %v3941, %v3946
        %v3948 = vrot.slane %v3832, 1
        %v3949 = vsel %vm3939, %v3944, %v3948
        %v3950 = vrot.slane %v3833, 1
        %v3951 = vsel %vm3939, %v3946, %v3950
        %v3952 = vrot.slane %v3834, 1
        %v3953 = vsel %vm3939, %v3948, %v3952
        %v3954 = vrot.slane %v3835, 1
        %v3955 = vsel %vm3939, %v3950, %v3954
        %v3956 = vrot.slane %v3836, 1
        %v3957 = vsel %vm3939, %v3952, %v3956
        %v3958 = vrot.slane %v3837, 1
        %v3959 = vsel %vm3939, %v3954, %v3958
        %v3960 = vrot.slane %v3838, 1
        %v3961 = vsel %vm3939, %v3956, %v3960
        %v3962 = vrot.slane %v3839, 1
        %v3963 = vsel %vm3939, %v3958, %v3962
        %v3964 = vrot.slane %v3840, 1
        %v3965 = vsel %vm3939, %v3960, %v3964
        %v3966 = vrot.slane %v3841, 1
        %v3967 = vsel %vm3939, %v3962, %v3966
        %v3968 = vrot.slane %v3842, 1
        %v3969 = vsel %vm3939, %v3964, %v3968
        %v3970 = vrot.slane %v3843, 1
        %v3971 = vsel %vm3939, %v3966, %v3970
        %v3972 = vrot.slane %v3844, 1
        %v3973 = vsel %vm3939, %v3968, %v3972
        %v3974 = vrot.slane %v3845, 1
        %v3975 = vsel %vm3939, %v3970, %v3974
        %v3976 = vrot.slane %v3846, 1
        %v3977 = vsel %vm3939, %v3972, %v3976
        %v3978 = vrot.slane %v3847, 1
        %v3979 = vsel %vm3939, %v3974, %v3978
        %v3980 = vrot.slane %v3848, 1
        %v3981 = vsel %vm3939, %v3976, %v3980
        %v3982 = vrot.slane %v3849, 1
        %v3983 = vsel %vm3939, %v3978, %v3982
        %v3984 = vrot.slane %v3850, 1
        %v3985 = vsel %vm3939, %v3980, %v3984
        %v3986 = vrot.slane %v3851, 1
        %v3987 = vsel %vm3939, %v3982, %v3986
        %v3988 = vrot.slane %v3852, 1
        %v3989 = vsel %vm3939, %v3984, %v3988
        %v3990 = vrot.slane %v3853, 1
        %v3991 = vsel %vm3939, %v3986, %v3990
        %v3992 = vrot.slane %v3854, 1
        %v3993 = vsel %vm3939, %v3988, %v3992
        %v3994 = vrot.slane %v3855, 1
        %v3995 = vsel %vm3939, %v3990, %v3994
        %v3996 = vrot.slane %v3856, 1
        %v3997 = vsel %vm3939, %v3992, %v3996
        %v3998 = vrot.slane %v3857, 1
        %v3999 = vsel %vm3939, %v3994, %v3998
        %v4000 = vrot.slane %v3858, 1
        %v4001 = vsel %vm3939, %v3996, %v4000
        %v4002 = vrot.slane %v3859, 1
        %v4003 = vsel %vm3939, %v3998, %v4002
        %v4004 = vrot.slane %v3860, 1
        %v4005 = vsel %vm3939, %v4000, %v4004
        %v4006 = vrot.slane %v3861, 1
        %v4007 = vsel %vm3939, %v4002, %v4006
        %v4008 = vrot.slane %v3862, 1
        %v4009 = vsel %vm3939, %v4004, %v4008
        %v4010 = vrot.slane %v3863, 1
        %v4011 = vsel %vm3939, %v4006, %v4010
        %v4012 = vrot.slane %v3864, 1
        %v4013 = vsel %vm3939, %v4008, %v4012
        %v4014 = vrot.slane %v3865, 1
        %v4015 = vsel %vm3939, %v4010, %v4014
        %v4016 = vrot.slane %v3866, 1
        %v4017 = vsel %vm3939, %v4012, %v4016
        %v4018 = vrot.slane %v3867, 1
        %v4019 = vsel %vm3939, %v4014, %v4018
        %v4020 = vrot.slane %v3868, 1
        %v4021 = vsel %vm3939, %v4016, %v4020
        %v4022 = vrot.slane %v3869, 1
        %v4023 = vsel %vm3939, %v4018, %v4022
        %v4024 = vrot.slane %v3870, 1
        %v4025 = vsel %vm3939, %v4020, %v4024
        %v4026 = vrot.slane %v3871, 1
        %v4027 = vsel %vm3939, %v4022, %v4026
        %v4028 = vrot.slane %v3872, 1
        %v4029 = vsel %vm3939, %v4024, %v4028
        %v4030 = vrot.slane %v3873, 1
        %v4031 = vsel %vm3939, %v4026, %v4030
        %v4032 = vrot.slane %v3874, 1
        %v4033 = vsel %vm3939, %v4028, %v4032
        %v4034 = vrot.slane %v3875, 1
        %v4035 = vsel %vm3939, %v4030, %v4034
        %v4036 = vrot.slane %v3876, 1
        %v4037 = vsel %vm3939, %v4032, %v4036
        %v4038 = vrot.slane %v3877, 1
        %v4039 = vsel %vm3939, %v4034, %v4038
        %v4040 = vrot.slane %v3878, 1
        %v4041 = vsel %vm3939, %v4036, %v4040
        %v4042 = vrot.slane %v3879, 1
        %v4043 = vsel %vm3939, %v4038, %v4042
        %v4044 = vrot.slane %v3880, 1
        %v4045 = vsel %vm3939, %v4040, %v4044
        %v4046 = vrot.slane %v3881, 1
        %v4047 = vsel %vm3939, %v4042, %v4046
        %v4048 = vrot.slane %v3882, 1
        %v4049 = vsel %vm3939, %v4044, %v4048
        %v4106 = vmax.f32 %v3827, %v3942
        %v4107 = vmax.f32 %v3828, %v3945
        %v4108 = vmax.f32 %v3829, %v3947
        %v4109 = vmax.f32 %v3830, %v3949
        %v4110 = vmax.f32 %v3831, %v3951
        %v4111 = vmax.f32 %v3832, %v3953
        %v4112 = vmax.f32 %v3833, %v3955
        %v4113 = vmax.f32 %v3834, %v3957
        %v4114 = vmax.f32 %v3835, %v3959
        %v4115 = vmax.f32 %v3836, %v3961
        %v4116 = vmax.f32 %v3837, %v3963
        %v4117 = vmax.f32 %v3838, %v3965
        %v4118 = vmax.f32 %v3839, %v3967
        %v4119 = vmax.f32 %v3840, %v3969
        %v4120 = vmax.f32 %v3841, %v3971
        %v4121 = vmax.f32 %v3842, %v3973
        %v4122 = vmax.f32 %v3843, %v3975
        %v4123 = vmax.f32 %v3844, %v3977
        %v4124 = vmax.f32 %v3845, %v3979
        %v4125 = vmax.f32 %v3846, %v3981
        %v4126 = vmax.f32 %v3847, %v3983
        %v4127 = vmax.f32 %v3848, %v3985
        %v4128 = vmax.f32 %v3849, %v3987
        %v4129 = vmax.f32 %v3850, %v3989
        %v4130 = vmax.f32 %v3851, %v3991
        %v4131 = vmax.f32 %v3852, %v3993
        %v4132 = vmax.f32 %v3853, %v3995
        %v4133 = vmax.f32 %v3854, %v3997
        %v4134 = vmax.f32 %v3855, %v3999
        %v4135 = vmax.f32 %v3856, %v4001
        %v4136 = vmax.f32 %v3857, %v4003
        %v4137 = vmax.f32 %v3858, %v4005
        %v4138 = vmax.f32 %v3859, %v4007
        %v4139 = vmax.f32 %v3860, %v4009
        %v4140 = vmax.f32 %v3861, %v4011
        %v4141 = vmax.f32 %v3862, %v4013
        %v4142 = vmax.f32 %v3863, %v4015
        %v4143 = vmax.f32 %v3864, %v4017
        %v4144 = vmax.f32 %v3865, %v4019
        %v4145 = vmax.f32 %v3866, %v4021
        %v4146 = vmax.f32 %v3867, %v4023
        %v4147 = vmax.f32 %v3868, %v4025
        %v4148 = vmax.f32 %v3869, %v4027
        %v4149 = vmax.f32 %v3870, %v4029
        %v4150 = vmax.f32 %v3871, %v4031
        %v4151 = vmax.f32 %v3872, %v4033
        %v4152 = vmax.f32 %v3873, %v4035
        %v4153 = vmax.f32 %v3874, %v4037
        %v4154 = vmax.f32 %v3875, %v4039
        %v4155 = vmax.f32 %v3876, %v4041
        %v4156 = vmax.f32 %v3877, %v4043
        %v4157 = vmax.f32 %v3878, %v4045
        %v4158 = vmax.f32 %v3879, %v4047
        %v4159 = vmax.f32 %v3880, %v4049
        %v4160 = vmax.f32 %v3881, %v4046
        %v4161 = vmax.f32 %v3882, %v4048
        %v4162 = vpack.c.bf16 %v4108, %v4106
        %v4163 = vpack.c.bf16 %v4109, %v4107
        %v4164 = vpack.c.bf16 %v4112, %v4110
        %v4165 = vpack.c.bf16 %v4113, %v4111
        %v4166 = vpack.c.bf16 %v4116, %v4114
        %v4167 = vpack.c.bf16 %v4117, %v4115
        %v4168 = vpack.c.bf16 %v4120, %v4118
        %v4169 = vpack.c.bf16 %v4121, %v4119
        %v4170 = vpack.c.bf16 %v4124, %v4122
        %v4171 = vpack.c.bf16 %v4125, %v4123
        %v4172 = vpack.c.bf16 %v4128, %v4126
        %v4173 = vpack.c.bf16 %v4129, %v4127
        %v4174 = vpack.c.bf16 %v4132, %v4130
        %v4175 = vpack.c.bf16 %v4133, %v4131
        %v4176 = vpack.c.bf16 %v4136, %v4134
        %v4177 = vpack.c.bf16 %v4137, %v4135
        %v4178 = vpack.c.bf16 %v4140, %v4138
        %v4179 = vpack.c.bf16 %v4141, %v4139
        %v4180 = vpack.c.bf16 %v4144, %v4142
        %v4181 = vpack.c.bf16 %v4145, %v4143
        %v4182 = vpack.c.bf16 %v4148, %v4146
        %v4183 = vpack.c.bf16 %v4149, %v4147
        %v4184 = vpack.c.bf16 %v4152, %v4150
        %v4185 = vpack.c.bf16 %v4153, %v4151
        %v4186 = vpack.c.bf16 %v4156, %v4154
        %v4187 = vpack.c.bf16 %v4157, %v4155
        %v4188 = vpack.c.bf16 %v4160, %v4158
        %v4189 = vpack.c.bf16 %v4161, %v4159
        %v4190 = vld [vmem:[%s3] sm:$0xff]
        %v4191 = vld [vmem:[%s3 + $0x8] sm:$0xff]
        %v4192 = vld [vmem:[%s3 + $0x10] sm:$0xff]
        %v4193 = vld [vmem:[%s3 + $0x18] sm:$0xff]
        %v4194 = vld [vmem:[%s3 + $0x20] sm:$0xff]
        %v4195 = vld [vmem:[%s3 + $0x28] sm:$0xff]
        %v4196 = vld [vmem:[%s3 + $0x30] sm:$0xff]
        %v4197 = vld [vmem:[%s3 + $0x38] sm:$0xff]
        %v4198 = vld [vmem:[%s3 + $0x40] sm:$0xff]
        %v4199 = vld [vmem:[%s3 + $0x48] sm:$0xff]
        %v4200 = vld [vmem:[%s3 + $0x50] sm:$0xff]
        %v4201 = vld [vmem:[%s3 + $0x58] sm:$0xff]
        %v4214 = vunpack.c.l.b16 %v4190
        %v4215 = vunpack.c.h.b16 %v4190
        %v4216 = vunpack.c.l.b16 %v4191
        %v4217 = vunpack.c.h.b16 %v4191
        %v4218 = vunpack.c.l.b16 %v4192
        %v4219 = vunpack.c.h.b16 %v4192
        %v4220 = vunpack.c.l.b16 %v4193
        %v4221 = vunpack.c.h.b16 %v4193
        %v4222 = vunpack.c.l.b16 %v4194
        %v4223 = vunpack.c.h.b16 %v4194
        %v4224 = vunpack.c.l.b16 %v4195
        %v4225 = vunpack.c.h.b16 %v4195
        %v4226 = vunpack.c.l.b16 %v4196
        %v4227 = vunpack.c.h.b16 %v4196
        %v4228 = vunpack.c.l.b16 %v4197
        %v4229 = vunpack.c.h.b16 %v4197
        %v4230 = vunpack.c.l.b16 %v4198
        %v4231 = vunpack.c.h.b16 %v4198
        %v4232 = vunpack.c.l.b16 %v4199
        %v4233 = vunpack.c.h.b16 %v4199
        %v4234 = vunpack.c.l.b16 %v4200
        %v4235 = vunpack.c.h.b16 %v4200
        %v4236 = vunpack.c.l.b16 %v4201
        %v4237 = vunpack.c.h.b16 %v4201
        %v4238 = vpack.c.b16 %v4216, %v4214
        %v4239 = vpack.c.b16 %v4217, %v4215
        %v4240 = vpack.c.b16 %v4220, %v4218
        %v4241 = vpack.c.b16 %v4221, %v4219
        %v4242 = vpack.c.b16 %v4224, %v4222
        %v4243 = vpack.c.b16 %v4225, %v4223
        %v4244 = vpack.c.b16 %v4228, %v4226
        %v4245 = vpack.c.b16 %v4229, %v4227
        %v4246 = vpack.c.b16 %v4232, %v4230
        %v4247 = vpack.c.b16 %v4233, %v4231
        %v4248 = vpack.c.b16 %v4236, %v4234
        %v4249 = vpack.c.b16 %v4237, %v4235
        %vm4256 = vcmask 744448
        %v4258 = vsel %vm4256, %v4239, 0
        %v4261 = vsel %vm4256, %v4241, 0
        %v4264 = vsel %vm4256, %v4243, 0
        %v4267 = vsel %vm4256, %v4245, 0
        %v4270 = vsel %vm4256, %v4247, 0
        %v4273 = vsel %vm4256, %v4249, 0
        %vm4275 = vcmask 1044480
        %v4276 = vsel %vm4275, 4294967295, 65535
        %v4277 = vsel %vm638, %v4276, 0
        %v4279 = vand.u32 %v4188, %v4277
        %v4282 = vand.u32 %v4189, %v4277
        %4284 = vmatprep.subr.bf16.mxu0 %v4163
        %4285 = vmatpush1.bf16.msra.mxu0 %v4162
        %4286 = vmatprep.subr.bf16.mxu0 %v4165
        %4287 = vmatpush1.bf16.msra.mxu0 %v4164
        %4288 = vmatprep.subr.bf16.mxu0 %v4167
        %4289 = vmatpush1.bf16.msra.mxu0 %v4166
        %4290 = vmatprep.subr.bf16.mxu0 %v4169
        %4291 = vmatpush1.bf16.msra.mxu0 %v4168
        %4292 = vmatprep.subr.bf16.mxu0 %v4171
        %4293 = vmatpush1.bf16.msra.mxu0 %v4170
        %4294 = vmatprep.subr.bf16.mxu0 %v4173
        %4295 = vmatpush1.bf16.msra.mxu0 %v4172
        %4296 = vmatprep.subr.bf16.mxu0 %v4175
        %4297 = vmatpush1.bf16.msra.mxu0 %v4174
        %4298 = vmatprep.subr.bf16.mxu0 %v4177
        %4299 = vmatpush1.bf16.msra.mxu0 %v4176
        %4300 = vmatprep.subr.bf16.mxu0 %v4179
        %4301 = vmatpush1.bf16.msra.mxu0 %v4178
        %4302 = vmatprep.subr.bf16.mxu0 %v4181
        %4303 = vmatpush1.bf16.msra.mxu0 %v4180
        %4304 = vmatprep.subr.bf16.mxu0 %v4183
        %4305 = vmatpush1.bf16.msra.mxu0 %v4182
        %4306 = vmatprep.subr.bf16.mxu0 %v4185
        %4307 = vmatpush1.bf16.msra.mxu0 %v4184
        %4308 = vmatprep.subr.bf16.mxu0 %v4187
        %4309 = vmatpush1.bf16.msra.mxu0 %v4186
        %4310 = vmatprep.subr.bf16.mxu0 %v4282
        %4311 = vmatpush1.bf16.msra.mxu0 %v4279
        %4312 = vmatprep.subr.bf16.mxu0 0
        %4313 = vmatpush1.bf16.msra.mxu0 0
        %4314 = vmatprep.subr.bf16.mxu0 0
        %4315 = vmatpush1.bf16.msra.mxu0 0
        %4316 = vmatprep.mubr.bf16.mxu0 %v4258
        %4317 = vmatmul.mubr.bf16.gmra.mrb[0].mxu0 %v4238
        %v4318 = vpop.f32.mrb[0].mxu0
        %v4319 = vadd.f32 0.0, %v4318
        %v4320 = vpop.f32.mrb[0].mxu0
        %v4321 = vadd.f32 0.0, %v4320
        %v4322 = vpop.f32.mrb[0].mxu0
        %v4323 = vadd.f32 0.0, %v4322
        %v4324 = vpop.f32.mrb[0].mxu0
        %v4325 = vadd.f32 0.0, %v4324
        %4326 = vmatprep.mubr.bf16.mxu0 %v4261
        %4327 = vmatmul.mubr.bf16.gmra.mrb[0].mxu0 %v4240
        %v4328 = vpop.f32.mrb[0].mxu0
        %v4329 = vadd.f32 0.0, %v4328
        %v4330 = vpop.f32.mrb[0].mxu0
        %v4331 = vadd.f32 0.0, %v4330
        %v4332 = vpop.f32.mrb[0].mxu0
        %v4333 = vadd.f32 0.0, %v4332
        %v4334 = vpop.f32.mrb[0].mxu0
        %v4335 = vadd.f32 0.0, %v4334
        %4336 = vmatprep.mubr.bf16.mxu0 %v4264
        %4337 = vmatmul.mubr.bf16.gmra.mrb[0].mxu0 %v4242
        %v4338 = vpop.f32.mrb[0].mxu0
        %v4339 = vadd.f32 0.0, %v4338
        %v4340 = vpop.f32.mrb[0].mxu0
        %v4341 = vadd.f32 0.0, %v4340
        %v4342 = vpop.f32.mrb[0].mxu0
        %v4343 = vadd.f32 0.0, %v4342
        %v4344 = vpop.f32.mrb[0].mxu0
        %v4345 = vadd.f32 0.0, %v4344
        %4346 = vmatprep.mubr.bf16.mxu0 %v4267
        %4347 = vmatmul.mubr.bf16.gmra.mrb[0].mxu0 %v4244
        %v4348 = vpop.f32.mrb[0].mxu0
        %v4349 = vadd.f32 0.0, %v4348
        %v4350 = vpop.f32.mrb[0].mxu0
        %v4351 = vadd.f32 0.0, %v4350
        %v4352 = vpop.f32.mrb[0].mxu0
        %v4353 = vadd.f32 0.0, %v4352
        %v4354 = vpop.f32.mrb[0].mxu0
        %v4355 = vadd.f32 0.0, %v4354
        %4356 = vmatprep.mubr.bf16.mxu0 %v4270
        %4357 = vmatmul.mubr.bf16.gmra.mrb[0].mxu0 %v4246
        %v4358 = vpop.f32.mrb[0].mxu0
        %v4359 = vadd.f32 0.0, %v4358
        %v4360 = vpop.f32.mrb[0].mxu0
        %v4361 = vadd.f32 0.0, %v4360
        %v4362 = vpop.f32.mrb[0].mxu0
        %v4363 = vadd.f32 0.0, %v4362
        %v4364 = vpop.f32.mrb[0].mxu0
        %v4365 = vadd.f32 0.0, %v4364
        %4366 = vmatprep.mubr.bf16.mxu0 %v4273
        %4367 = vmatmul.mubr.bf16.gmra.mrb[0].mxu0 %v4248
        %v4368 = vpop.f32.mrb[0].mxu0
        %v4369 = vadd.f32 0.0, %v4368
        %v4370 = vpop.f32.mrb[0].mxu0
        %v4371 = vadd.f32 0.0, %v4370
        %v4372 = vpop.f32.mrb[0].mxu0
        %v4373 = vadd.f32 0.0, %v4372
        %v4374 = vpop.f32.mrb[0].mxu0
        %v4375 = vadd.f32 0.0, %v4374
        %4376 = vdwg.mxu0
        %v4377 = vpack.c.bf16 %v4323, %v4319
        %v4378 = vpack.c.bf16 %v4325, %v4321
        %v4379 = vpack.c.bf16 %v4333, %v4329
        %v4380 = vpack.c.bf16 %v4335, %v4331
        %v4381 = vpack.c.bf16 %v4343, %v4339
        %v4382 = vpack.c.bf16 %v4345, %v4341
        %v4383 = vpack.c.bf16 %v4353, %v4349
        %v4384 = vpack.c.bf16 %v4355, %v4351
        %v4385 = vpack.c.bf16 %v4363, %v4359
        %v4386 = vpack.c.bf16 %v4365, %v4361
        %v4387 = vpack.c.bf16 %v4373, %v4369
        %v4388 = vpack.c.bf16 %v4375, %v4371
        %v4389 = vld [vmem:[%s4] sm:$0xff]
        %v4390 = vld [vmem:[%s4 + $0x8] sm:$0xff]
        %v4391 = vld [vmem:[%s4 + $0x10] sm:$0xff]
        %v4392 = vld [vmem:[%s4 + $0x18] sm:$0xff]
        %v4393 = vld [vmem:[%s4 + $0x20] sm:$0xff]
        %v4394 = vld [vmem:[%s4 + $0x28] sm:$0xff]
        %v4395 = vld [vmem:[%s4 + $0x30] sm:$0xff]
        %v4396 = vld [vmem:[%s4 + $0x38] sm:$0xff]
        %v4397 = vld [vmem:[%s4 + $0x40] sm:$0xff]
        %v4398 = vld [vmem:[%s4 + $0x48] sm:$0xff]
        %v4399 = vld [vmem:[%s4 + $0x50] sm:$0xff]
        %v4400 = vld [vmem:[%s4 + $0x58] sm:$0xff]
        %v4401 = vld [vmem:[%s4 + $0x60] sm:$0xff]
        %v4402 = vld [vmem:[%s4 + $0x68] sm:$0xff]
        %v4403 = vld [vmem:[%s4 + $0x70] sm:$0xff]
        %v4404 = vld [vmem:[%s4 + $0x78] sm:$0xff]
        %v4405 = vld [vmem:[%s4 + $0x80] sm:$0xff]
        %v4406 = vld [vmem:[%s4 + $0x88] sm:$0xff]
        %v4407 = vld [vmem:[%s4 + $0x90] sm:$0xff]
        %v4408 = vld [vmem:[%s4 + $0x98] sm:$0xff]
        %v4409 = vld [vmem:[%s4 + $0xa0] sm:$0xff]
        %v4410 = vld [vmem:[%s4 + $0xa8] sm:$0xff]
        %v4411 = vld [vmem:[%s4 + $0xb0] sm:$0xff]
        %v4412 = vld [vmem:[%s4 + $0xb8] sm:$0xff]
        %v4413 = vld [vmem:[%s4 + $0xc0] sm:$0xff]
        %v4414 = vld [vmem:[%s4 + $0xc8] sm:$0xff]
        %v4415 = vld [vmem:[%s4 + $0xd0] sm:$0xff]
        %v4416 = vld [vmem:[%s4 + $0xd8] sm:$0xff]
        %v4417 = vld [vmem:[%s4 + $0xe0] sm:$0xff]
        %v4418 = vld [vmem:[%s4 + $0xe8] sm:$0xff]
        %v4419 = vld [vmem:[%s4 + $0xf0] sm:$0xff]
        %v4420 = vld [vmem:[%s4 + $0xf8] sm:$0xff]
        %v4421 = vld [vmem:[%s4 + $0x100] sm:$0xff]
        %v4422 = vld [vmem:[%s4 + $0x108] sm:$0xff]
        %v4423 = vld [vmem:[%s4 + $0x110] sm:$0xff]
        %v4424 = vld [vmem:[%s4 + $0x118] sm:$0xff]
        %v4425 = vld [vmem:[%s4 + $0x120] sm:$0xff]
        %v4426 = vld [vmem:[%s4 + $0x128] sm:$0xff]
        %v4427 = vld [vmem:[%s4 + $0x130] sm:$0xff]
        %v4428 = vld [vmem:[%s4 + $0x138] sm:$0xff]
        %v4429 = vld [vmem:[%s4 + $0x140] sm:$0xff]
        %v4430 = vld [vmem:[%s4 + $0x148] sm:$0xff]
        %v4431 = vld [vmem:[%s4 + $0x150] sm:$0xff]
        %v4432 = vld [vmem:[%s4 + $0x158] sm:$0xff]
        %v4433 = vld [vmem:[%s4 + $0x160] sm:$0xff]
        %v4434 = vld [vmem:[%s4 + $0x168] sm:$0xff]
        %v4435 = vld [vmem:[%s4 + $0x170] sm:$0xff]
        %v4436 = vld [vmem:[%s4 + $0x178] sm:$0xff]
        %v4437 = vld [vmem:[%s4 + $0x180] sm:$0xff]
        %v4438 = vld [vmem:[%s4 + $0x188] sm:$0xff]
        %v4439 = vld [vmem:[%s4 + $0x190] sm:$0xff]
        %v4440 = vld [vmem:[%s4 + $0x198] sm:$0xff]
        %v4441 = vld [vmem:[%s4 + $0x1a0] sm:$0xff]
        %v4442 = vld [vmem:[%s4 + $0x1a8] sm:$0xff]
        %v4443 = vld [vmem:[%s4 + $0x1b0] sm:$0xff]
        %v4444 = vld [vmem:[%s4 + $0x1b8] sm:$0xff]
        %v4445 = vld [vmem:[%s4 + $0x1c0] sm:$0xff]
        %v4446 = vld [vmem:[%s4 + $0x1c8] sm:$0xff]
        %v4447 = vld [vmem:[%s4 + $0x1d0] sm:$0xff]
        %v4448 = vld [vmem:[%s4 + $0x1d8] sm:$0xff]
        %s4449 = scalar_lea.vmem %s4, 480
        %v4450 = vld [vmem:[%s4449] sm:$0xff]
        %v4451 = vld [vmem:[%s4449 + $0x8] sm:$0xff]
        %v4452 = vld [vmem:[%s4449 + $0x10] sm:$0xff]
        %v4453 = vld [vmem:[%s4449 + $0x18] sm:$0xff]
        %v4454 = vld [vmem:[%s4449 + $0x20] sm:$0xff]
        %v4455 = vld [vmem:[%s4449 + $0x28] sm:$0xff]
        %v4456 = vld [vmem:[%s4449 + $0x30] sm:$0xff]
        %v4457 = vld [vmem:[%s4449 + $0x38] sm:$0xff]
        %v4458 = vld [vmem:[%s4449 + $0x40] sm:$0xff]
        %v4459 = vld [vmem:[%s4449 + $0x48] sm:$0xff]
        %v4460 = vld [vmem:[%s4449 + $0x50] sm:$0xff]
        %v4461 = vld [vmem:[%s4449 + $0x58] sm:$0xff]
        %v4462 = vld [vmem:[%s4449 + $0x60] sm:$0xff]
        %v4463 = vld [vmem:[%s4449 + $0x68] sm:$0xff]
        %v4464 = vld [vmem:[%s4449 + $0x70] sm:$0xff]
        %v4465 = vld [vmem:[%s4449 + $0x78] sm:$0xff]
        %v4466 = vld [vmem:[%s4449 + $0x80] sm:$0xff]
        %v4467 = vld [vmem:[%s4449 + $0x88] sm:$0xff]
        %v4468 = vld [vmem:[%s4449 + $0x90] sm:$0xff]
        %v4469 = vld [vmem:[%s4449 + $0x98] sm:$0xff]
        %v4470 = vld [vmem:[%s4449 + $0xa0] sm:$0xff]
        %v4471 = vld [vmem:[%s4449 + $0xa8] sm:$0xff]
        %v4472 = vld [vmem:[%s4449 + $0xb0] sm:$0xff]
        %v4473 = vld [vmem:[%s4449 + $0xb8] sm:$0xff]
        %v4474 = vld [vmem:[%s4449 + $0xc0] sm:$0xff]
        %v4475 = vld [vmem:[%s4449 + $0xc8] sm:$0xff]
        %v4476 = vld [vmem:[%s4449 + $0xd0] sm:$0xff]
        %v4477 = vld [vmem:[%s4449 + $0xd8] sm:$0xff]
        %v4478 = vld [vmem:[%s4449 + $0xe0] sm:$0xff]
        %v4479 = vld [vmem:[%s4449 + $0xe8] sm:$0xff]
        %v4480 = vld [vmem:[%s4449 + $0xf0] sm:$0xff]
        %v4481 = vld [vmem:[%s4449 + $0xf8] sm:$0xff]
        %v4482 = vld [vmem:[%s4449 + $0x100] sm:$0xff]
        %v4483 = vld [vmem:[%s4449 + $0x108] sm:$0xff]
        %v4484 = vld [vmem:[%s4449 + $0x110] sm:$0xff]
        %v4485 = vld [vmem:[%s4449 + $0x118] sm:$0xff]
        %v4486 = vld [vmem:[%s4449 + $0x120] sm:$0xff]
        %v4487 = vld [vmem:[%s4449 + $0x128] sm:$0xff]
        %v4488 = vld [vmem:[%s4449 + $0x130] sm:$0xff]
        %v4489 = vld [vmem:[%s4449 + $0x138] sm:$0xff]
        %v4490 = vld [vmem:[%s4449 + $0x140] sm:$0xff]
        %v4491 = vld [vmem:[%s4449 + $0x148] sm:$0xff]
        %v4492 = vld [vmem:[%s4449 + $0x150] sm:$0xff]
        %v4493 = vld [vmem:[%s4449 + $0x158] sm:$0xff]
        %v4494 = vld [vmem:[%s4449 + $0x160] sm:$0xff]
        %v4495 = vld [vmem:[%s4449 + $0x168] sm:$0xff]
        %v4496 = vld [vmem:[%s4449 + $0x170] sm:$0xff]
        %v4497 = vld [vmem:[%s4449 + $0x178] sm:$0xff]
        %v4498 = vld [vmem:[%s4449 + $0x180] sm:$0xff]
        %v4499 = vld [vmem:[%s4449 + $0x188] sm:$0xff]
        %v4500 = vld [vmem:[%s4449 + $0x190] sm:$0xff]
        %v4501 = vld [vmem:[%s4449 + $0x198] sm:$0xff]
        %v4502 = vld [vmem:[%s4449 + $0x1a0] sm:$0xff]
        %v4503 = vld [vmem:[%s4449 + $0x1a8] sm:$0xff]
        %v4504 = vld [vmem:[%s4449 + $0x1b0] sm:$0xff]
        %v4505 = vld [vmem:[%s4449 + $0x1b8] sm:$0xff]
        %v4506 = vld [vmem:[%s4449 + $0x1c0] sm:$0xff]
        %v4507 = vld [vmem:[%s4449 + $0x1c8] sm:$0xff]
        %v4508 = vld [vmem:[%s4449 + $0x1d0] sm:$0xff]
        %v4509 = vld [vmem:[%s4449 + $0x1d8] sm:$0xff]
        %v4511 = vshrl.u32 %v4377, 16
        %v4513 = vshll.u32 %v4377, 16
        %v4515 = vrot.slane %v4513, 1
        %v4516 = vor.u32 %v4511, %v4515
        %v4518 = vshll.u32 %v4379, 16
        %v4520 = vrot.slane %v4518, 1
        %v4521 = vsel %vm447, %v4516, %v4520
        %v4523 = vshrl.u32 %v4378, 16
        %v4525 = vshll.u32 %v4378, 16
        %v4527 = vrot.slane %v4525, 1
        %v4528 = vor.u32 %v4523, %v4527
        %v4530 = vshll.u32 %v4380, 16
        %v4532 = vrot.slane %v4530, 1
        %v4533 = vsel %vm447, %v4528, %v4532
        %v4534 = vshrl.u32 %v4379, 16
        %v4536 = vor.u32 %v4534, %v4520
        %v4538 = vshll.u32 %v4381, 16
        %v4540 = vrot.slane %v4538, 1
        %v4541 = vsel %vm447, %v4536, %v4540
        %v4542 = vshrl.u32 %v4380, 16
        %v4544 = vor.u32 %v4542, %v4532
        %v4546 = vshll.u32 %v4382, 16
        %v4548 = vrot.slane %v4546, 1
        %v4549 = vsel %vm447, %v4544, %v4548
        %v4550 = vshrl.u32 %v4381, 16
        %v4552 = vor.u32 %v4550, %v4540
        %v4554 = vshll.u32 %v4383, 16
        %v4556 = vrot.slane %v4554, 1
        %v4557 = vsel %vm447, %v4552, %v4556
        %v4558 = vshrl.u32 %v4382, 16
        %v4560 = vor.u32 %v4558, %v4548
        %v4562 = vshll.u32 %v4384, 16
        %v4564 = vrot.slane %v4562, 1
        %v4565 = vsel %vm447, %v4560, %v4564
        %v4566 = vshrl.u32 %v4383, 16
        %v4568 = vor.u32 %v4566, %v4556
        %v4570 = vshll.u32 %v4385, 16
        %v4572 = vrot.slane %v4570, 1
        %v4573 = vsel %vm447, %v4568, %v4572
        %v4574 = vshrl.u32 %v4384, 16
        %v4576 = vor.u32 %v4574, %v4564
        %v4578 = vshll.u32 %v4386, 16
        %v4580 = vrot.slane %v4578, 1
        %v4581 = vsel %vm447, %v4576, %v4580
        %v4582 = vshrl.u32 %v4385, 16
        %v4584 = vor.u32 %v4582, %v4572
        %v4586 = vshll.u32 %v4387, 16
        %v4588 = vrot.slane %v4586, 1
        %v4589 = vsel %vm447, %v4584, %v4588
        %v4590 = vshrl.u32 %v4386, 16
        %v4592 = vor.u32 %v4590, %v4580
        %v4594 = vshll.u32 %v4388, 16
        %v4596 = vrot.slane %v4594, 1
        %v4597 = vsel %vm447, %v4592, %v4596
        %v4598 = vshrl.u32 %v4387, 16
        %v4600 = vor.u32 %v4598, %v4588
        %v4601 = vshrl.u32 %v4388, 16
        %v4603 = vor.u32 %v4601, %v4596
        %v4670 = vunpack.c.l.b16 %v4450
        %v4671 = vunpack.c.h.b16 %v4450
        %v4672 = vunpack.c.l.b16 %v4451
        %v4673 = vunpack.c.h.b16 %v4451
        %v4674 = vunpack.c.l.b16 %v4452
        %v4675 = vunpack.c.h.b16 %v4452
        %v4676 = vunpack.c.l.b16 %v4453
        %v4677 = vunpack.c.h.b16 %v4453
        %v4678 = vunpack.c.l.b16 %v4454
        %v4679 = vunpack.c.h.b16 %v4454
        %v4680 = vunpack.c.l.b16 %v4455
        %v4681 = vunpack.c.h.b16 %v4455
        %v4682 = vunpack.c.l.b16 %v4456
        %v4683 = vunpack.c.h.b16 %v4456
        %v4684 = vunpack.c.l.b16 %v4457
        %v4685 = vunpack.c.h.b16 %v4457
        %v4686 = vunpack.c.l.b16 %v4458
        %v4687 = vunpack.c.h.b16 %v4458
        %v4688 = vunpack.c.l.b16 %v4459
        %v4689 = vunpack.c.h.b16 %v4459
        %v4690 = vunpack.c.l.b16 %v4460
        %v4691 = vunpack.c.h.b16 %v4460
        %v4692 = vunpack.c.l.b16 %v4461
        %v4693 = vunpack.c.h.b16 %v4461
        %v4694 = vunpack.c.l.b16 %v4462
        %v4695 = vunpack.c.h.b16 %v4462
        %v4696 = vunpack.c.l.b16 %v4463
        %v4697 = vunpack.c.h.b16 %v4463
        %v4698 = vunpack.c.l.b16 %v4464
        %v4699 = vunpack.c.h.b16 %v4464
        %v4700 = vunpack.c.l.b16 %v4465
        %v4701 = vunpack.c.h.b16 %v4465
        %v4702 = vunpack.c.l.b16 %v4466
        %v4703 = vunpack.c.h.b16 %v4466
        %v4704 = vunpack.c.l.b16 %v4467
        %v4705 = vunpack.c.h.b16 %v4467
        %v4706 = vunpack.c.l.b16 %v4468
        %v4707 = vunpack.c.h.b16 %v4468
        %v4708 = vunpack.c.l.b16 %v4469
        %v4709 = vunpack.c.h.b16 %v4469
        %v4710 = vunpack.c.l.b16 %v4470
        %v4711 = vunpack.c.h.b16 %v4470
        %v4712 = vunpack.c.l.b16 %v4471
        %v4713 = vunpack.c.h.b16 %v4471
        %v4714 = vunpack.c.l.b16 %v4472
        %v4715 = vunpack.c.h.b16 %v4472
        %v4716 = vunpack.c.l.b16 %v4473
        %v4717 = vunpack.c.h.b16 %v4473
        %v4718 = vunpack.c.l.b16 %v4474
        %v4719 = vunpack.c.h.b16 %v4474
        %v4720 = vunpack.c.l.b16 %v4475
        %v4721 = vunpack.c.h.b16 %v4475
        %v4722 = vunpack.c.l.b16 %v4476
        %v4723 = vunpack.c.h.b16 %v4476
        %v4724 = vunpack.c.l.b16 %v4477
        %v4725 = vunpack.c.h.b16 %v4477
        %v4726 = vunpack.c.l.b16 %v4478
        %v4727 = vunpack.c.h.b16 %v4478
        %v4728 = vunpack.c.l.b16 %v4479
        %v4729 = vunpack.c.h.b16 %v4479
        %v4730 = vunpack.c.l.b16 %v4480
        %v4731 = vunpack.c.h.b16 %v4480
        %v4732 = vunpack.c.l.b16 %v4481
        %v4733 = vunpack.c.h.b16 %v4481
        %v4734 = vunpack.c.l.b16 %v4482
        %v4735 = vunpack.c.h.b16 %v4482
        %v4736 = vunpack.c.l.b16 %v4483
        %v4737 = vunpack.c.h.b16 %v4483
        %v4738 = vunpack.c.l.b16 %v4484
        %v4739 = vunpack.c.h.b16 %v4484
        %v4740 = vunpack.c.l.b16 %v4485
        %v4741 = vunpack.c.h.b16 %v4485
        %v4742 = vunpack.c.l.b16 %v4486
        %v4743 = vunpack.c.h.b16 %v4486
        %v4744 = vunpack.c.l.b16 %v4487
        %v4745 = vunpack.c.h.b16 %v4487
        %v4746 = vunpack.c.l.b16 %v4488
        %v4747 = vunpack.c.h.b16 %v4488
        %v4748 = vunpack.c.l.b16 %v4489
        %v4749 = vunpack.c.h.b16 %v4489
        %v4750 = vunpack.c.l.b16 %v4490
        %v4751 = vunpack.c.h.b16 %v4490
        %v4752 = vunpack.c.l.b16 %v4491
        %v4753 = vunpack.c.h.b16 %v4491
        %v4754 = vunpack.c.l.b16 %v4492
        %v4755 = vunpack.c.h.b16 %v4492
        %v4756 = vunpack.c.l.b16 %v4493
        %v4757 = vunpack.c.h.b16 %v4493
        %v4758 = vunpack.c.l.b16 %v4494
        %v4759 = vunpack.c.h.b16 %v4494
        %v4760 = vunpack.c.l.b16 %v4495
        %v4761 = vunpack.c.h.b16 %v4495
        %v4762 = vunpack.c.l.b16 %v4496
        %v4763 = vunpack.c.h.b16 %v4496
        %v4764 = vunpack.c.l.b16 %v4497
        %v4765 = vunpack.c.h.b16 %v4497
        %v4766 = vunpack.c.l.b16 %v4498
        %v4767 = vunpack.c.h.b16 %v4498
        %v4768 = vunpack.c.l.b16 %v4499
        %v4769 = vunpack.c.h.b16 %v4499
        %v4770 = vunpack.c.l.b16 %v4500
        %v4771 = vunpack.c.h.b16 %v4500
        %v4772 = vunpack.c.l.b16 %v4501
        %v4773 = vunpack.c.h.b16 %v4501
        %v4774 = vunpack.c.l.b16 %v4502
        %v4775 = vunpack.c.h.b16 %v4502
        %v4776 = vunpack.c.l.b16 %v4503
        %v4777 = vunpack.c.h.b16 %v4503
        %v4778 = vunpack.c.l.b16 %v4504
        %v4779 = vunpack.c.h.b16 %v4504
        %v4780 = vunpack.c.l.b16 %v4505
        %v4781 = vunpack.c.h.b16 %v4505
        %v4782 = vunpack.c.l.b16 %v4506
        %v4783 = vunpack.c.h.b16 %v4506
        %v4784 = vunpack.c.l.b16 %v4507
        %v4785 = vunpack.c.h.b16 %v4507
        %v4786 = vunpack.c.l.b16 %v4508
        %v4787 = vunpack.c.h.b16 %v4508
        %v4788 = vunpack.c.l.b16 %v4509
        %v4789 = vunpack.c.h.b16 %v4509
        %v4790 = vpack.c.b16 %v4674, %v4670
        %v4791 = vpack.c.b16 %v4675, %v4671
        %v4792 = vpack.c.b16 %v4676, %v4672
        %v4793 = vpack.c.b16 %v4677, %v4673
        %v4794 = vpack.c.b16 %v4682, %v4678
        %v4795 = vpack.c.b16 %v4683, %v4679
        %v4796 = vpack.c.b16 %v4684, %v4680
        %v4797 = vpack.c.b16 %v4685, %v4681
        %v4798 = vpack.c.b16 %v4690, %v4686
        %v4799 = vpack.c.b16 %v4691, %v4687
        %v4800 = vpack.c.b16 %v4692, %v4688
        %v4801 = vpack.c.b16 %v4693, %v4689
        %v4802 = vpack.c.b16 %v4698, %v4694
        %v4803 = vpack.c.b16 %v4699, %v4695
        %v4804 = vpack.c.b16 %v4700, %v4696
        %v4805 = vpack.c.b16 %v4701, %v4697
        %v4806 = vpack.c.b16 %v4706, %v4702
        %v4807 = vpack.c.b16 %v4707, %v4703
        %v4808 = vpack.c.b16 %v4708, %v4704
        %v4809 = vpack.c.b16 %v4709, %v4705
        %v4810 = vpack.c.b16 %v4714, %v4710
        %v4811 = vpack.c.b16 %v4715, %v4711
        %v4812 = vpack.c.b16 %v4716, %v4712
        %v4813 = vpack.c.b16 %v4717, %v4713
        %v4814 = vpack.c.b16 %v4722, %v4718
        %v4815 = vpack.c.b16 %v4723, %v4719
        %v4816 = vpack.c.b16 %v4724, %v4720
        %v4817 = vpack.c.b16 %v4725, %v4721
        %v4818 = vpack.c.b16 %v4730, %v4726
        %v4819 = vpack.c.b16 %v4731, %v4727
        %v4820 = vpack.c.b16 %v4732, %v4728
        %v4821 = vpack.c.b16 %v4733, %v4729
        %v4822 = vpack.c.b16 %v4738, %v4734
        %v4823 = vpack.c.b16 %v4739, %v4735
        %v4824 = vpack.c.b16 %v4740, %v4736
        %v4825 = vpack.c.b16 %v4741, %v4737
        %v4826 = vpack.c.b16 %v4746, %v4742
        %v4827 = vpack.c.b16 %v4747, %v4743
        %v4828 = vpack.c.b16 %v4748, %v4744
        %v4829 = vpack.c.b16 %v4749, %v4745
        %v4830 = vpack.c.b16 %v4754, %v4750
        %v4831 = vpack.c.b16 %v4755, %v4751
        %v4832 = vpack.c.b16 %v4756, %v4752
        %v4833 = vpack.c.b16 %v4757, %v4753
        %v4834 = vpack.c.b16 %v4762, %v4758
        %v4835 = vpack.c.b16 %v4763, %v4759
        %v4836 = vpack.c.b16 %v4764, %v4760
        %v4837 = vpack.c.b16 %v4765, %v4761
        %v4838 = vpack.c.b16 %v4770, %v4766
        %v4839 = vpack.c.b16 %v4771, %v4767
        %v4840 = vpack.c.b16 %v4772, %v4768
        %v4841 = vpack.c.b16 %v4773, %v4769
        %v4842 = vpack.c.b16 %v4778, %v4774
        %v4843 = vpack.c.b16 %v4779, %v4775
        %v4844 = vpack.c.b16 %v4780, %v4776
        %v4845 = vpack.c.b16 %v4781, %v4777
        %v4846 = vpack.c.b16 %v4786, %v4782
        %v4847 = vpack.c.b16 %v4787, %v4783
        %v4848 = vpack.c.b16 %v4788, %v4784
        %v4849 = vpack.c.b16 %v4789, %v4785
        %vm4910 = vcmask 916480
        %v4912 = vsel %vm4910, %v4533, 0
        %v4915 = vsel %vm4910, %v4549, 0
        %v4918 = vsel %vm4910, %v4565, 0
        %v4921 = vsel %vm4910, %v4581, 0
        %v4924 = vsel %vm4910, %v4597, 0
        %v4927 = vsel %vm4910, %v4603, 0
        %4929 = vmatprep.subr.bf16.mxu0 %v4791
        %4930 = vmatpush1.bf16.msra.mxu0 %v4790
        %4931 = vmatprep.subr.bf16.mxu0 %v4795
        %4932 = vmatpush1.bf16.msra.mxu0 %v4794
        %4933 = vmatprep.subr.bf16.mxu0 %v4799
        %4934 = vmatpush1.bf16.msra.mxu0 %v4798
        %4935 = vmatprep.subr.bf16.mxu0 %v4803
        %4936 = vmatpush1.bf16.msra.mxu0 %v4802
        %4937 = vmatprep.subr.bf16.mxu0 %v4807
        %4938 = vmatpush1.bf16.msra.mxu0 %v4806
        %4939 = vmatprep.subr.bf16.mxu0 %v4811
        %4940 = vmatpush1.bf16.msra.mxu0 %v4810
        %4941 = vmatprep.subr.bf16.mxu0 %v4815
        %4942 = vmatpush1.bf16.msra.mxu0 %v4814
        %4943 = vmatprep.subr.bf16.mxu0 %v4819
        %4944 = vmatpush1.bf16.msra.mxu0 %v4818
        %4945 = vmatprep.subr.bf16.mxu0 %v4823
        %4946 = vmatpush1.bf16.msra.mxu0 %v4822
        %4947 = vmatprep.subr.bf16.mxu0 %v4827
        %4948 = vmatpush1.bf16.msra.mxu0 %v4826
        %4949 = vmatprep.subr.bf16.mxu0 %v4831
        %4950 = vmatpush1.bf16.msra.mxu0 %v4830
        %4951 = vmatprep.subr.bf16.mxu0 %v4835
        %4952 = vmatpush1.bf16.msra.mxu0 %v4834
        %4953 = vmatprep.subr.bf16.mxu0 %v4839
        %4954 = vmatpush1.bf16.msra.mxu0 %v4838
        %4955 = vmatprep.subr.bf16.mxu0 %v4843
        %4956 = vmatpush1.bf16.msra.mxu0 %v4842
        %4957 = vmatprep.subr.bf16.mxu0 %v4847
        %4958 = vmatpush1.bf16.msra.mxu0 %v4846
        %4959 = vmatprep.subr.bf16.mxu0 0
        %4960 = vmatpush1.bf16.msra.mxu0 0
        %4961 = vmatprep.mubr.bf16.mxu0 %v4912
        %4962 = vmatmul.mubr.bf16.gmra.mrb[0].mxu0 %v4521
        %v4963 = vpop.f32.mrb[0].mxu0
        %v4964 = vadd.f32 0.0, %v4963
        %v4965 = vpop.f32.mrb[0].mxu0
        %v4966 = vadd.f32 0.0, %v4965
        %v4967 = vpop.f32.mrb[0].mxu0
        %v4968 = vadd.f32 0.0, %v4967
        %v4969 = vpop.f32.mrb[0].mxu0
        %v4970 = vadd.f32 0.0, %v4969
        %4971 = vmatprep.mubr.bf16.mxu0 %v4915
        %4972 = vmatmul.mubr.bf16.gmra.mrb[0].mxu0 %v4541
        %v4973 = vpop.f32.mrb[0].mxu0
        %v4974 = vadd.f32 0.0, %v4973
        %v4975 = vpop.f32.mrb[0].mxu0
        %v4976 = vadd.f32 0.0, %v4975
        %v4977 = vpop.f32.mrb[0].mxu0
        %v4978 = vadd.f32 0.0, %v4977
        %v4979 = vpop.f32.mrb[0].mxu0
        %v4980 = vadd.f32 0.0, %v4979
        %4981 = vmatprep.mubr.bf16.mxu0 %v4918
        %4982 = vmatmul.mubr.bf16.gmra.mrb[0].mxu0 %v4557
        %v4983 = vpop.f32.mrb[0].mxu0
        %v4984 = vadd.f32 0.0, %v4983
        %v4985 = vpop.f32.mrb[0].mxu0
        %v4986 = vadd.f32 0.0, %v4985
        %v4987 = vpop.f32.mrb[0].mxu0
        %v4988 = vadd.f32 0.0, %v4987
        %v4989 = vpop.f32.mrb[0].mxu0
        %v4990 = vadd.f32 0.0, %v4989
        %4991 = vmatprep.mubr.bf16.mxu0 %v4921
        %4992 = vmatmul.mubr.bf16.gmra.mrb[0].mxu0 %v4573
        %v4993 = vpop.f32.mrb[0].mxu0
        %v4994 = vadd.f32 0.0, %v4993
        %v4995 = vpop.f32.mrb[0].mxu0
        %v4996 = vadd.f32 0.0, %v4995
        %v4997 = vpop.f32.mrb[0].mxu0
        %v4998 = vadd.f32 0.0, %v4997
        %v4999 = vpop.f32.mrb[0].mxu0
        %v5000 = vadd.f32 0.0, %v4999
        %5001 = vmatprep.mubr.bf16.mxu0 %v4924
        %5002 = vmatmul.mubr.bf16.gmra.mrb[0].mxu0 %v4589
        %v5003 = vpop.f32.mrb[0].mxu0
        %v5004 = vadd.f32 0.0, %v5003
        %v5005 = vpop.f32.mrb[0].mxu0
        %v5006 = vadd.f32 0.0, %v5005
        %v5007 = vpop.f32.mrb[0].mxu0
        %v5008 = vadd.f32 0.0, %v5007
        %v5009 = vpop.f32.mrb[0].mxu0
        %v5010 = vadd.f32 0.0, %v5009
        %5011 = vmatprep.mubr.bf16.mxu0 %v4927
        %5012 = vmatmul.mubr.bf16.gmra.mrb[0].mxu0 %v4600
        %v5013 = vpop.f32.mrb[0].mxu0
        %v5014 = vadd.f32 0.0, %v5013
        %v5015 = vpop.f32.mrb[0].mxu0
        %v5016 = vadd.f32 0.0, %v5015
        %v5017 = vpop.f32.mrb[0].mxu0
        %v5018 = vadd.f32 0.0, %v5017
        %v5019 = vpop.f32.mrb[0].mxu0
        %v5020 = vadd.f32 0.0, %v5019
        %5021 = vdwg.mxu0
        %5022 = vmatprep.subr.bf16.mxu0 %v4793
        %5023 = vmatpush1.bf16.msra.mxu0 %v4792
        %5024 = vmatprep.subr.bf16.mxu0 %v4797
        %5025 = vmatpush1.bf16.msra.mxu0 %v4796
        %5026 = vmatprep.subr.bf16.mxu0 %v4801
        %5027 = vmatpush1.bf16.msra.mxu0 %v4800
        %5028 = vmatprep.subr.bf16.mxu0 %v4805
        %5029 = vmatpush1.bf16.msra.mxu0 %v4804
        %5030 = vmatprep.subr.bf16.mxu0 %v4809
        %5031 = vmatpush1.bf16.msra.mxu0 %v4808
        %5032 = vmatprep.subr.bf16.mxu0 %v4813
        %5033 = vmatpush1.bf16.msra.mxu0 %v4812
        %5034 = vmatprep.subr.bf16.mxu0 %v4817
        %5035 = vmatpush1.bf16.msra.mxu0 %v4816
        %5036 = vmatprep.subr.bf16.mxu0 %v4821
        %5037 = vmatpush1.bf16.msra.mxu0 %v4820
        %5038 = vmatprep.subr.bf16.mxu0 %v4825
        %5039 = vmatpush1.bf16.msra.mxu0 %v4824
        %5040 = vmatprep.subr.bf16.mxu0 %v4829
        %5041 = vmatpush1.bf16.msra.mxu0 %v4828
        %5042 = vmatprep.subr.bf16.mxu0 %v4833
        %5043 = vmatpush1.bf16.msra.mxu0 %v4832
        %5044 = vmatprep.subr.bf16.mxu0 %v4837
        %5045 = vmatpush1.bf16.msra.mxu0 %v4836
        %5046 = vmatprep.subr.bf16.mxu0 %v4841
        %5047 = vmatpush1.bf16.msra.mxu0 %v4840
        %5048 = vmatprep.subr.bf16.mxu0 %v4845
        %5049 = vmatpush1.bf16.msra.mxu0 %v4844
        %5050 = vmatprep.subr.bf16.mxu0 %v4849
        %5051 = vmatpush1.bf16.msra.mxu0 %v4848
        %5052 = vmatprep.subr.bf16.mxu0 0
        %5053 = vmatpush1.bf16.msra.mxu0 0
        %5054 = vmatprep.mubr.bf16.mxu0 %v4912
        %5055 = vmatmul.mubr.bf16.gmra.mrb[0].mxu0 %v4521
        %v5056 = vpop.f32.mrb[0].mxu0
        %v5057 = vadd.f32 0.0, %v5056
        %v5058 = vpop.f32.mrb[0].mxu0
        %v5059 = vadd.f32 0.0, %v5058
        %v5060 = vpop.f32.mrb[0].mxu0
        %v5061 = vadd.f32 0.0, %v5060
        %v5062 = vpop.f32.mrb[0].mxu0
        %v5063 = vadd.f32 0.0, %v5062
        %5064 = vmatprep.mubr.bf16.mxu0 %v4915
        %5065 = vmatmul.mubr.bf16.gmra.mrb[0].mxu0 %v4541
        %v5066 = vpop.f32.mrb[0].mxu0
        %v5067 = vadd.f32 0.0, %v5066
        %v5068 = vpop.f32.mrb[0].mxu0
        %v5069 = vadd.f32 0.0, %v5068
        %v5070 = vpop.f32.mrb[0].mxu0
        %v5071 = vadd.f32 0.0, %v5070
        %v5072 = vpop.f32.mrb[0].mxu0
        %v5073 = vadd.f32 0.0, %v5072
        %5074 = vmatprep.mubr.bf16.mxu0 %v4918
        %5075 = vmatmul.mubr.bf16.gmra.mrb[0].mxu0 %v4557
        %v5076 = vpop.f32.mrb[0].mxu0
        %v5077 = vadd.f32 0.0, %v5076
        %v5078 = vpop.f32.mrb[0].mxu0
        %v5079 = vadd.f32 0.0, %v5078
        %v5080 = vpop.f32.mrb[0].mxu0
        %v5081 = vadd.f32 0.0, %v5080
        %v5082 = vpop.f32.mrb[0].mxu0
        %v5083 = vadd.f32 0.0, %v5082
        %5084 = vmatprep.mubr.bf16.mxu0 %v4921
        %5085 = vmatmul.mubr.bf16.gmra.mrb[0].mxu0 %v4573
        %v5086 = vpop.f32.mrb[0].mxu0
        %v5087 = vadd.f32 0.0, %v5086
        %v5088 = vpop.f32.mrb[0].mxu0
        %v5089 = vadd.f32 0.0, %v5088
        %v5090 = vpop.f32.mrb[0].mxu0
        %v5091 = vadd.f32 0.0, %v5090
        %v5092 = vpop.f32.mrb[0].mxu0
        %v5093 = vadd.f32 0.0, %v5092
        %5094 = vmatprep.mubr.bf16.mxu0 %v4924
        %5095 = vmatmul.mubr.bf16.gmra.mrb[0].mxu0 %v4589
        %v5096 = vpop.f32.mrb[0].mxu0
        %v5097 = vadd.f32 0.0, %v5096
        %v5098 = vpop.f32.mrb[0].mxu0
        %v5099 = vadd.f32 0.0, %v5098
        %v5100 = vpop.f32.mrb[0].mxu0
        %v5101 = vadd.f32 0.0, %v5100
        %v5102 = vpop.f32.mrb[0].mxu0
        %v5103 = vadd.f32 0.0, %v5102
        %5104 = vmatprep.mubr.bf16.mxu0 %v4927
        %5105 = vmatmul.mubr.bf16.gmra.mrb[0].mxu0 %v4600
        %v5106 = vpop.f32.mrb[0].mxu0
        %v5107 = vadd.f32 0.0, %v5106
        %v5108 = vpop.f32.mrb[0].mxu0
        %v5109 = vadd.f32 0.0, %v5108
        %v5110 = vpop.f32.mrb[0].mxu0
        %v5111 = vadd.f32 0.0, %v5110
        %v5112 = vpop.f32.mrb[0].mxu0
        %v5113 = vadd.f32 0.0, %v5112
        %5114 = vdwg.mxu0
        %v5175 = vunpack.c.l.b16 %v4389
        %v5176 = vunpack.c.h.b16 %v4389
        %v5177 = vunpack.c.l.b16 %v4390
        %v5178 = vunpack.c.h.b16 %v4390
        %v5179 = vunpack.c.l.b16 %v4391
        %v5180 = vunpack.c.h.b16 %v4391
        %v5181 = vunpack.c.l.b16 %v4392
        %v5182 = vunpack.c.h.b16 %v4392
        %v5183 = vunpack.c.l.b16 %v4393
        %v5184 = vunpack.c.h.b16 %v4393
        %v5185 = vunpack.c.l.b16 %v4394
        %v5186 = vunpack.c.h.b16 %v4394
        %v5187 = vunpack.c.l.b16 %v4395
        %v5188 = vunpack.c.h.b16 %v4395
        %v5189 = vunpack.c.l.b16 %v4396
        %v5190 = vunpack.c.h.b16 %v4396
        %v5191 = vunpack.c.l.b16 %v4397
        %v5192 = vunpack.c.h.b16 %v4397
        %v5193 = vunpack.c.l.b16 %v4398
        %v5194 = vunpack.c.h.b16 %v4398
        %v5195 = vunpack.c.l.b16 %v4399
        %v5196 = vunpack.c.h.b16 %v4399
        %v5197 = vunpack.c.l.b16 %v4400
        %v5198 = vunpack.c.h.b16 %v4400
        %v5199 = vunpack.c.l.b16 %v4401
        %v5200 = vunpack.c.h.b16 %v4401
        %v5201 = vunpack.c.l.b16 %v4402
        %v5202 = vunpack.c.h.b16 %v4402
        %v5203 = vunpack.c.l.b16 %v4403
        %v5204 = vunpack.c.h.b16 %v4403
        %v5205 = vunpack.c.l.b16 %v4404
        %v5206 = vunpack.c.h.b16 %v4404
        %v5207 = vunpack.c.l.b16 %v4405
        %v5208 = vunpack.c.h.b16 %v4405
        %v5209 = vunpack.c.l.b16 %v4406
        %v5210 = vunpack.c.h.b16 %v4406
        %v5211 = vunpack.c.l.b16 %v4407
        %v5212 = vunpack.c.h.b16 %v4407
        %v5213 = vunpack.c.l.b16 %v4408
        %v5214 = vunpack.c.h.b16 %v4408
        %v5215 = vunpack.c.l.b16 %v4409
        %v5216 = vunpack.c.h.b16 %v4409
        %v5217 = vunpack.c.l.b16 %v4410
        %v5218 = vunpack.c.h.b16 %v4410
        %v5219 = vunpack.c.l.b16 %v4411
        %v5220 = vunpack.c.h.b16 %v4411
        %v5221 = vunpack.c.l.b16 %v4412
        %v5222 = vunpack.c.h.b16 %v4412
        %v5223 = vunpack.c.l.b16 %v4413
        %v5224 = vunpack.c.h.b16 %v4413
        %v5225 = vunpack.c.l.b16 %v4414
        %v5226 = vunpack.c.h.b16 %v4414
        %v5227 = vunpack.c.l.b16 %v4415
        %v5228 = vunpack.c.h.b16 %v4415
        %v5229 = vunpack.c.l.b16 %v4416
        %v5230 = vunpack.c.h.b16 %v4416
        %v5231 = vunpack.c.l.b16 %v4417
        %v5232 = vunpack.c.h.b16 %v4417
        %v5233 = vunpack.c.l.b16 %v4418
        %v5234 = vunpack.c.h.b16 %v4418
        %v5235 = vunpack.c.l.b16 %v4419
        %v5236 = vunpack.c.h.b16 %v4419
        %v5237 = vunpack.c.l.b16 %v4420
        %v5238 = vunpack.c.h.b16 %v4420
        %v5239 = vunpack.c.l.b16 %v4421
        %v5240 = vunpack.c.h.b16 %v4421
        %v5241 = vunpack.c.l.b16 %v4422
        %v5242 = vunpack.c.h.b16 %v4422
        %v5243 = vunpack.c.l.b16 %v4423
        %v5244 = vunpack.c.h.b16 %v4423
        %v5245 = vunpack.c.l.b16 %v4424
        %v5246 = vunpack.c.h.b16 %v4424
        %v5247 = vunpack.c.l.b16 %v4425
        %v5248 = vunpack.c.h.b16 %v4425
        %v5249 = vunpack.c.l.b16 %v4426
        %v5250 = vunpack.c.h.b16 %v4426
        %v5251 = vunpack.c.l.b16 %v4427
        %v5252 = vunpack.c.h.b16 %v4427
        %v5253 = vunpack.c.l.b16 %v4428
        %v5254 = vunpack.c.h.b16 %v4428
        %v5255 = vunpack.c.l.b16 %v4429
        %v5256 = vunpack.c.h.b16 %v4429
        %v5257 = vunpack.c.l.b16 %v4430
        %v5258 = vunpack.c.h.b16 %v4430
        %v5259 = vunpack.c.l.b16 %v4431
        %v5260 = vunpack.c.h.b16 %v4431
        %v5261 = vunpack.c.l.b16 %v4432
        %v5262 = vunpack.c.h.b16 %v4432
        %v5263 = vunpack.c.l.b16 %v4433
        %v5264 = vunpack.c.h.b16 %v4433
        %v5265 = vunpack.c.l.b16 %v4434
        %v5266 = vunpack.c.h.b16 %v4434
        %v5267 = vunpack.c.l.b16 %v4435
        %v5268 = vunpack.c.h.b16 %v4435
        %v5269 = vunpack.c.l.b16 %v4436
        %v5270 = vunpack.c.h.b16 %v4436
        %v5271 = vunpack.c.l.b16 %v4437
        %v5272 = vunpack.c.h.b16 %v4437
        %v5273 = vunpack.c.l.b16 %v4438
        %v5274 = vunpack.c.h.b16 %v4438
        %v5275 = vunpack.c.l.b16 %v4439
        %v5276 = vunpack.c.h.b16 %v4439
        %v5277 = vunpack.c.l.b16 %v4440
        %v5278 = vunpack.c.h.b16 %v4440
        %v5279 = vunpack.c.l.b16 %v4441
        %v5280 = vunpack.c.h.b16 %v4441
        %v5281 = vunpack.c.l.b16 %v4442
        %v5282 = vunpack.c.h.b16 %v4442
        %v5283 = vunpack.c.l.b16 %v4443
        %v5284 = vunpack.c.h.b16 %v4443
        %v5285 = vunpack.c.l.b16 %v4444
        %v5286 = vunpack.c.h.b16 %v4444
        %v5287 = vunpack.c.l.b16 %v4445
        %v5288 = vunpack.c.h.b16 %v4445
        %v5289 = vunpack.c.l.b16 %v4446
        %v5290 = vunpack.c.h.b16 %v4446
        %v5291 = vunpack.c.l.b16 %v4447
        %v5292 = vunpack.c.h.b16 %v4447
        %v5293 = vunpack.c.l.b16 %v4448
        %v5294 = vunpack.c.h.b16 %v4448
        %v5295 = vpack.c.b16 %v5179, %v5175
        %v5296 = vpack.c.b16 %v5180, %v5176
        %v5297 = vpack.c.b16 %v5181, %v5177
        %v5298 = vpack.c.b16 %v5182, %v5178
        %v5299 = vpack.c.b16 %v5187, %v5183
        %v5300 = vpack.c.b16 %v5188, %v5184
        %v5301 = vpack.c.b16 %v5189, %v5185
        %v5302 = vpack.c.b16 %v5190, %v5186
        %v5303 = vpack.c.b16 %v5195, %v5191
        %v5304 = vpack.c.b16 %v5196, %v5192
        %v5305 = vpack.c.b16 %v5197, %v5193
        %v5306 = vpack.c.b16 %v5198, %v5194
        %v5307 = vpack.c.b16 %v5203, %v5199
        %v5308 = vpack.c.b16 %v5204, %v5200
        %v5309 = vpack.c.b16 %v5205, %v5201
        %v5310 = vpack.c.b16 %v5206, %v5202
        %v5311 = vpack.c.b16 %v5211, %v5207
        %v5312 = vpack.c.b16 %v5212, %v5208
        %v5313 = vpack.c.b16 %v5213, %v5209
        %v5314 = vpack.c.b16 %v5214, %v5210
        %v5315 = vpack.c.b16 %v5219, %v5215
        %v5316 = vpack.c.b16 %v5220, %v5216
        %v5317 = vpack.c.b16 %v5221, %v5217
        %v5318 = vpack.c.b16 %v5222, %v5218
        %v5319 = vpack.c.b16 %v5227, %v5223
        %v5320 = vpack.c.b16 %v5228, %v5224
        %v5321 = vpack.c.b16 %v5229, %v5225
        %v5322 = vpack.c.b16 %v5230, %v5226
        %v5323 = vpack.c.b16 %v5235, %v5231
        %v5324 = vpack.c.b16 %v5236, %v5232
        %v5325 = vpack.c.b16 %v5237, %v5233
        %v5326 = vpack.c.b16 %v5238, %v5234
        %v5327 = vpack.c.b16 %v5243, %v5239
        %v5328 = vpack.c.b16 %v5244, %v5240
        %v5329 = vpack.c.b16 %v5245, %v5241
        %v5330 = vpack.c.b16 %v5246, %v5242
        %v5331 = vpack.c.b16 %v5251, %v5247
        %v5332 = vpack.c.b16 %v5252, %v5248
        %v5333 = vpack.c.b16 %v5253, %v5249
        %v5334 = vpack.c.b16 %v5254, %v5250
        %v5335 = vpack.c.b16 %v5259, %v5255
        %v5336 = vpack.c.b16 %v5260, %v5256
        %v5337 = vpack.c.b16 %v5261, %v5257
        %v5338 = vpack.c.b16 %v5262, %v5258
        %v5339 = vpack.c.b16 %v5267, %v5263
        %v5340 = vpack.c.b16 %v5268, %v5264
        %v5341 = vpack.c.b16 %v5269, %v5265
        %v5342 = vpack.c.b16 %v5270, %v5266
        %v5343 = vpack.c.b16 %v5275, %v5271
        %v5344 = vpack.c.b16 %v5276, %v5272
        %v5345 = vpack.c.b16 %v5277, %v5273
        %v5346 = vpack.c.b16 %v5278, %v5274
        %v5347 = vpack.c.b16 %v5283, %v5279
        %v5348 = vpack.c.b16 %v5284, %v5280
        %v5349 = vpack.c.b16 %v5285, %v5281
        %v5350 = vpack.c.b16 %v5286, %v5282
        %v5351 = vpack.c.b16 %v5291, %v5287
        %v5352 = vpack.c.b16 %v5292, %v5288
        %v5353 = vpack.c.b16 %v5293, %v5289
        %v5354 = vpack.c.b16 %v5294, %v5290
        %v5415 = vsel %vm4910, %v4378, 0
        %v5417 = vsel %vm4910, %v4380, 0
        %v5419 = vsel %vm4910, %v4382, 0
        %v5421 = vsel %vm4910, %v4384, 0
        %v5423 = vsel %vm4910, %v4386, 0
        %v5425 = vsel %vm4910, %v4388, 0
        %5427 = vmatprep.subr.bf16.mxu0 %v5296
        %5428 = vmatpush1.bf16.msra.mxu0 %v5295
        %5429 = vmatprep.subr.bf16.mxu0 %v5300
        %5430 = vmatpush1.bf16.msra.mxu0 %v5299
        %5431 = vmatprep.subr.bf16.mxu0 %v5304
        %5432 = vmatpush1.bf16.msra.mxu0 %v5303
        %5433 = vmatprep.subr.bf16.mxu0 %v5308
        %5434 = vmatpush1.bf16.msra.mxu0 %v5307
        %5435 = vmatprep.subr.bf16.mxu0 %v5312
        %5436 = vmatpush1.bf16.msra.mxu0 %v5311
        %5437 = vmatprep.subr.bf16.mxu0 %v5316
        %5438 = vmatpush1.bf16.msra.mxu0 %v5315
        %5439 = vmatprep.subr.bf16.mxu0 %v5320
        %5440 = vmatpush1.bf16.msra.mxu0 %v5319
        %5441 = vmatprep.subr.bf16.mxu0 %v5324
        %5442 = vmatpush1.bf16.msra.mxu0 %v5323
        %5443 = vmatprep.subr.bf16.mxu0 %v5328
        %5444 = vmatpush1.bf16.msra.mxu0 %v5327
        %5445 = vmatprep.subr.bf16.mxu0 %v5332
        %5446 = vmatpush1.bf16.msra.mxu0 %v5331
        %5447 = vmatprep.subr.bf16.mxu0 %v5336
        %5448 = vmatpush1.bf16.msra.mxu0 %v5335
        %5449 = vmatprep.subr.bf16.mxu0 %v5340
        %5450 = vmatpush1.bf16.msra.mxu0 %v5339
        %5451 = vmatprep.subr.bf16.mxu0 %v5344
        %5452 = vmatpush1.bf16.msra.mxu0 %v5343
        %5453 = vmatprep.subr.bf16.mxu0 %v5348
        %5454 = vmatpush1.bf16.msra.mxu0 %v5347
        %5455 = vmatprep.subr.bf16.mxu0 %v5352
        %5456 = vmatpush1.bf16.msra.mxu0 %v5351
        %5457 = vmatprep.subr.bf16.mxu0 0
        %5458 = vmatpush1.bf16.msra.mxu0 0
        %5459 = vmatprep.mubr.bf16.mxu0 %v5415
        %5460 = vmatmul.mubr.bf16.gmra.mrb[0].mxu0 %v4377
        %v5461 = vpop.f32.mrb[0].mxu0
        %v5462 = vadd.f32 %v4964, %v5461
        %v5463 = vpop.f32.mrb[0].mxu0
        %v5464 = vadd.f32 %v4966, %v5463
        %v5465 = vpop.f32.mrb[0].mxu0
        %v5466 = vadd.f32 %v4968, %v5465
        %v5467 = vpop.f32.mrb[0].mxu0
        %v5468 = vadd.f32 %v4970, %v5467
        %5469 = vmatprep.mubr.bf16.mxu0 %v5417
        %5470 = vmatmul.mubr.bf16.gmra.mrb[0].mxu0 %v4379
        %v5471 = vpop.f32.mrb[0].mxu0
        %v5472 = vadd.f32 %v4974, %v5471
        %v5473 = vpop.f32.mrb[0].mxu0
        %v5474 = vadd.f32 %v4976, %v5473
        %v5475 = vpop.f32.mrb[0].mxu0
        %v5476 = vadd.f32 %v4978, %v5475
        %v5477 = vpop.f32.mrb[0].mxu0
        %v5478 = vadd.f32 %v4980, %v5477
        %5479 = vmatprep.mubr.bf16.mxu0 %v5419
        %5480 = vmatmul.mubr.bf16.gmra.mrb[0].mxu0 %v4381
        %v5481 = vpop.f32.mrb[0].mxu0
        %v5482 = vadd.f32 %v4984, %v5481
        %v5483 = vpop.f32.mrb[0].mxu0
        %v5484 = vadd.f32 %v4986, %v5483
        %v5485 = vpop.f32.mrb[0].mxu0
        %v5486 = vadd.f32 %v4988, %v5485
        %v5487 = vpop.f32.mrb[0].mxu0
        %v5488 = vadd.f32 %v4990, %v5487
        %5489 = vmatprep.mubr.bf16.mxu0 %v5421
        %5490 = vmatmul.mubr.bf16.gmra.mrb[0].mxu0 %v4383
        %v5491 = vpop.f32.mrb[0].mxu0
        %v5492 = vadd.f32 %v4994, %v5491
        %v5493 = vpop.f32.mrb[0].mxu0
        %v5494 = vadd.f32 %v4996, %v5493
        %v5495 = vpop.f32.mrb[0].mxu0
        %v5496 = vadd.f32 %v4998, %v5495
        %v5497 = vpop.f32.mrb[0].mxu0
        %v5498 = vadd.f32 %v5000, %v5497
        %5499 = vmatprep.mubr.bf16.mxu0 %v5423
        %5500 = vmatmul.mubr.bf16.gmra.mrb[0].mxu0 %v4385
        %v5501 = vpop.f32.mrb[0].mxu0
        %v5502 = vadd.f32 %v5004, %v5501
        %v5503 = vpop.f32.mrb[0].mxu0
        %v5504 = vadd.f32 %v5006, %v5503
        %v5505 = vpop.f32.mrb[0].mxu0
        %v5506 = vadd.f32 %v5008, %v5505
        %v5507 = vpop.f32.mrb[0].mxu0
        %v5508 = vadd.f32 %v5010, %v5507
        %5509 = vmatprep.mubr.bf16.mxu0 %v5425
        %5510 = vmatmul.mubr.bf16.gmra.mrb[0].mxu0 %v4387
        %v5511 = vpop.f32.mrb[0].mxu0
        %v5512 = vadd.f32 %v5014, %v5511
        %v5513 = vpop.f32.mrb[0].mxu0
        %v5514 = vadd.f32 %v5016, %v5513
        %v5515 = vpop.f32.mrb[0].mxu0
        %v5516 = vadd.f32 %v5018, %v5515
        %v5517 = vpop.f32.mrb[0].mxu0
        %v5518 = vadd.f32 %v5020, %v5517
        %5519 = vdwg.mxu0
        %5520 = vmatprep.subr.bf16.mxu0 %v5298
        %5521 = vmatpush1.bf16.msra.mxu0 %v5297
        %5522 = vmatprep.subr.bf16.mxu0 %v5302
        %5523 = vmatpush1.bf16.msra.mxu0 %v5301
        %5524 = vmatprep.subr.bf16.mxu0 %v5306
        %5525 = vmatpush1.bf16.msra.mxu0 %v5305
        %5526 = vmatprep.subr.bf16.mxu0 %v5310
        %5527 = vmatpush1.bf16.msra.mxu0 %v5309
        %5528 = vmatprep.subr.bf16.mxu0 %v5314
        %5529 = vmatpush1.bf16.msra.mxu0 %v5313
        %5530 = vmatprep.subr.bf16.mxu0 %v5318
        %5531 = vmatpush1.bf16.msra.mxu0 %v5317
        %5532 = vmatprep.subr.bf16.mxu0 %v5322
        %5533 = vmatpush1.bf16.msra.mxu0 %v5321
        %5534 = vmatprep.subr.bf16.mxu0 %v5326
        %5535 = vmatpush1.bf16.msra.mxu0 %v5325
        %5536 = vmatprep.subr.bf16.mxu0 %v5330
        %5537 = vmatpush1.bf16.msra.mxu0 %v5329
        %5538 = vmatprep.subr.bf16.mxu0 %v5334
        %5539 = vmatpush1.bf16.msra.mxu0 %v5333
        %5540 = vmatprep.subr.bf16.mxu0 %v5338
        %5541 = vmatpush1.bf16.msra.mxu0 %v5337
        %5542 = vmatprep.subr.bf16.mxu0 %v5342
        %5543 = vmatpush1.bf16.msra.mxu0 %v5341
        %5544 = vmatprep.subr.bf16.mxu0 %v5346
        %5545 = vmatpush1.bf16.msra.mxu0 %v5345
        %5546 = vmatprep.subr.bf16.mxu0 %v5350
        %5547 = vmatpush1.bf16.msra.mxu0 %v5349
        %5548 = vmatprep.subr.bf16.mxu0 %v5354
        %5549 = vmatpush1.bf16.msra.mxu0 %v5353
        %5550 = vmatprep.subr.bf16.mxu0 0
        %5551 = vmatpush1.bf16.msra.mxu0 0
        %5552 = vmatprep.mubr.bf16.mxu0 %v5415
        %5553 = vmatmul.mubr.bf16.gmra.mrb[0].mxu0 %v4377
        %v5554 = vpop.f32.mrb[0].mxu0
        %v5555 = vadd.f32 %v5057, %v5554
        %v5556 = vpop.f32.mrb[0].mxu0
        %v5557 = vadd.f32 %v5059, %v5556
        %v5558 = vpop.f32.mrb[0].mxu0
        %v5559 = vadd.f32 %v5061, %v5558
        %v5560 = vpop.f32.mrb[0].mxu0
        %v5561 = vadd.f32 %v5063, %v5560
        %5562 = vmatprep.mubr.bf16.mxu0 %v5417
        %5563 = vmatmul.mubr.bf16.gmra.mrb[0].mxu0 %v4379
        %v5564 = vpop.f32.mrb[0].mxu0
        %v5565 = vadd.f32 %v5067, %v5564
        %v5566 = vpop.f32.mrb[0].mxu0
        %v5567 = vadd.f32 %v5069, %v5566
        %v5568 = vpop.f32.mrb[0].mxu0
        %v5569 = vadd.f32 %v5071, %v5568
        %v5570 = vpop.f32.mrb[0].mxu0
        %v5571 = vadd.f32 %v5073, %v5570
        %5572 = vmatprep.mubr.bf16.mxu0 %v5419
        %5573 = vmatmul.mubr.bf16.gmra.mrb[0].mxu0 %v4381
        %v5574 = vpop.f32.mrb[0].mxu0
        %v5575 = vadd.f32 %v5077, %v5574
        %v5576 = vpop.f32.mrb[0].mxu0
        %v5577 = vadd.f32 %v5079, %v5576
        %v5578 = vpop.f32.mrb[0].mxu0
        %v5579 = vadd.f32 %v5081, %v5578
        %v5580 = vpop.f32.mrb[0].mxu0
        %v5581 = vadd.f32 %v5083, %v5580
        %5582 = vmatprep.mubr.bf16.mxu0 %v5421
        %5583 = vmatmul.mubr.bf16.gmra.mrb[0].mxu0 %v4383
        %v5584 = vpop.f32.mrb[0].mxu0
        %v5585 = vadd.f32 %v5087, %v5584
        %v5586 = vpop.f32.mrb[0].mxu0
        %v5587 = vadd.f32 %v5089, %v5586
        %v5588 = vpop.f32.mrb[0].mxu0
        %v5589 = vadd.f32 %v5091, %v5588
        %v5590 = vpop.f32.mrb[0].mxu0
        %v5591 = vadd.f32 %v5093, %v5590
        %5592 = vmatprep.mubr.bf16.mxu0 %v5423
        %5593 = vmatmul.mubr.bf16.gmra.mrb[0].mxu0 %v4385
        %v5594 = vpop.f32.mrb[0].mxu0
        %v5595 = vadd.f32 %v5097, %v5594
        %v5596 = vpop.f32.mrb[0].mxu0
        %v5597 = vadd.f32 %v5099, %v5596
        %v5598 = vpop.f32.mrb[0].mxu0
        %v5599 = vadd.f32 %v5101, %v5598
        %v5600 = vpop.f32.mrb[0].mxu0
        %v5601 = vadd.f32 %v5103, %v5600
        %5602 = vmatprep.mubr.bf16.mxu0 %v5425
        %5603 = vmatmul.mubr.bf16.gmra.mrb[0].mxu0 %v4387
        %v5604 = vpop.f32.mrb[0].mxu0
        %v5605 = vadd.f32 %v5107, %v5604
        %v5606 = vpop.f32.mrb[0].mxu0
        %v5607 = vadd.f32 %v5109, %v5606
        %v5608 = vpop.f32.mrb[0].mxu0
        %v5609 = vadd.f32 %v5111, %v5608
        %v5610 = vpop.f32.mrb[0].mxu0
        %v5611 = vadd.f32 %v5113, %v5610
        %5612 = vdwg.mxu0
        %s5613 = scalar_lea.vmem %s4, 960
        %v5614 = vld [vmem:[%s5613] sm:$0xff]
        %v5615 = vld [vmem:[%s5613 + $0x8] sm:$0xff]
        %v5616 = vld [vmem:[%s5613 + $0x10] sm:$0xff]
        %v5617 = vld [vmem:[%s5613 + $0x18] sm:$0xff]
        %v5618 = vld [vmem:[%s5613 + $0x20] sm:$0xff]
        %v5619 = vld [vmem:[%s5613 + $0x28] sm:$0xff]
        %v5620 = vld [vmem:[%s5613 + $0x30] sm:$0xff]
        %v5621 = vld [vmem:[%s5613 + $0x38] sm:$0xff]
        %v5622 = vld [vmem:[%s5613 + $0x40] sm:$0xff]
        %v5623 = vld [vmem:[%s5613 + $0x48] sm:$0xff]
        %v5624 = vld [vmem:[%s5613 + $0x50] sm:$0xff]
        %v5625 = vld [vmem:[%s5613 + $0x58] sm:$0xff]
        %v5626 = vld [vmem:[%s5613 + $0x60] sm:$0xff]
        %v5627 = vld [vmem:[%s5613 + $0x68] sm:$0xff]
        %v5628 = vld [vmem:[%s5613 + $0x70] sm:$0xff]
        %v5629 = vld [vmem:[%s5613 + $0x78] sm:$0xff]
        %v5630 = vld [vmem:[%s5613 + $0x80] sm:$0xff]
        %v5631 = vld [vmem:[%s5613 + $0x88] sm:$0xff]
        %v5632 = vld [vmem:[%s5613 + $0x90] sm:$0xff]
        %v5633 = vld [vmem:[%s5613 + $0x98] sm:$0xff]
        %v5634 = vld [vmem:[%s5613 + $0xa0] sm:$0xff]
        %v5635 = vld [vmem:[%s5613 + $0xa8] sm:$0xff]
        %v5636 = vld [vmem:[%s5613 + $0xb0] sm:$0xff]
        %v5637 = vld [vmem:[%s5613 + $0xb8] sm:$0xff]
        %v5638 = vld [vmem:[%s5613 + $0xc0] sm:$0xff]
        %v5639 = vld [vmem:[%s5613 + $0xc8] sm:$0xff]
        %v5640 = vld [vmem:[%s5613 + $0xd0] sm:$0xff]
        %v5641 = vld [vmem:[%s5613 + $0xd8] sm:$0xff]
        %v5642 = vld [vmem:[%s5613 + $0xe0] sm:$0xff]
        %v5643 = vld [vmem:[%s5613 + $0xe8] sm:$0xff]
        %v5644 = vld [vmem:[%s5613 + $0xf0] sm:$0xff]
        %v5645 = vld [vmem:[%s5613 + $0xf8] sm:$0xff]
        %v5646 = vld [vmem:[%s5613 + $0x100] sm:$0xff]
        %v5647 = vld [vmem:[%s5613 + $0x108] sm:$0xff]
        %v5648 = vld [vmem:[%s5613 + $0x110] sm:$0xff]
        %v5649 = vld [vmem:[%s5613 + $0x118] sm:$0xff]
        %v5650 = vld [vmem:[%s5613 + $0x120] sm:$0xff]
        %v5651 = vld [vmem:[%s5613 + $0x128] sm:$0xff]
        %v5652 = vld [vmem:[%s5613 + $0x130] sm:$0xff]
        %v5653 = vld [vmem:[%s5613 + $0x138] sm:$0xff]
        %v5654 = vld [vmem:[%s5613 + $0x140] sm:$0xff]
        %v5655 = vld [vmem:[%s5613 + $0x148] sm:$0xff]
        %v5656 = vld [vmem:[%s5613 + $0x150] sm:$0xff]
        %v5657 = vld [vmem:[%s5613 + $0x158] sm:$0xff]
        %v5658 = vld [vmem:[%s5613 + $0x160] sm:$0xff]
        %v5659 = vld [vmem:[%s5613 + $0x168] sm:$0xff]
        %v5660 = vld [vmem:[%s5613 + $0x170] sm:$0xff]
        %v5661 = vld [vmem:[%s5613 + $0x178] sm:$0xff]
        %v5662 = vld [vmem:[%s5613 + $0x180] sm:$0xff]
        %v5663 = vld [vmem:[%s5613 + $0x188] sm:$0xff]
        %v5664 = vld [vmem:[%s5613 + $0x190] sm:$0xff]
        %v5665 = vld [vmem:[%s5613 + $0x198] sm:$0xff]
        %v5666 = vld [vmem:[%s5613 + $0x1a0] sm:$0xff]
        %v5667 = vld [vmem:[%s5613 + $0x1a8] sm:$0xff]
        %v5668 = vld [vmem:[%s5613 + $0x1b0] sm:$0xff]
        %v5669 = vld [vmem:[%s5613 + $0x1b8] sm:$0xff]
        %v5670 = vld [vmem:[%s5613 + $0x1c0] sm:$0xff]
        %v5671 = vld [vmem:[%s5613 + $0x1c8] sm:$0xff]
        %v5672 = vld [vmem:[%s5613 + $0x1d0] sm:$0xff]
        %v5673 = vld [vmem:[%s5613 + $0x1d8] sm:$0xff]
        %v5686 = vrot.slane %v4377, 1
        %v5687 = vrot.slane %v4379, 1
        %v5688 = vsel %vm1442, %v5686, %v5687
        %v5689 = vrot.slane %v4378, 1
        %v5690 = vrot.slane %v4380, 1
        %v5691 = vsel %vm1442, %v5689, %v5690
        %v5692 = vrot.slane %v4381, 1
        %v5693 = vsel %vm1442, %v5687, %v5692
        %v5694 = vrot.slane %v4382, 1
        %v5695 = vsel %vm1442, %v5690, %v5694
        %v5696 = vrot.slane %v4383, 1
        %v5697 = vsel %vm1442, %v5692, %v5696
        %v5698 = vrot.slane %v4384, 1
        %v5699 = vsel %vm1442, %v5694, %v5698
        %v5700 = vrot.slane %v4385, 1
        %v5701 = vsel %vm1442, %v5696, %v5700
        %v5702 = vrot.slane %v4386, 1
        %v5703 = vsel %vm1442, %v5698, %v5702
        %v5704 = vrot.slane %v4387, 1
        %v5705 = vsel %vm1442, %v5700, %v5704
        %v5706 = vrot.slane %v4388, 1
        %v5707 = vsel %vm1442, %v5702, %v5706
        %v5774 = vunpack.c.l.b16 %v5614
        %v5775 = vunpack.c.h.b16 %v5614
        %v5776 = vunpack.c.l.b16 %v5615
        %v5777 = vunpack.c.h.b16 %v5615
        %v5778 = vunpack.c.l.b16 %v5616
        %v5779 = vunpack.c.h.b16 %v5616
        %v5780 = vunpack.c.l.b16 %v5617
        %v5781 = vunpack.c.h.b16 %v5617
        %v5782 = vunpack.c.l.b16 %v5618
        %v5783 = vunpack.c.h.b16 %v5618
        %v5784 = vunpack.c.l.b16 %v5619
        %v5785 = vunpack.c.h.b16 %v5619
        %v5786 = vunpack.c.l.b16 %v5620
        %v5787 = vunpack.c.h.b16 %v5620
        %v5788 = vunpack.c.l.b16 %v5621
        %v5789 = vunpack.c.h.b16 %v5621
        %v5790 = vunpack.c.l.b16 %v5622
        %v5791 = vunpack.c.h.b16 %v5622
        %v5792 = vunpack.c.l.b16 %v5623
        %v5793 = vunpack.c.h.b16 %v5623
        %v5794 = vunpack.c.l.b16 %v5624
        %v5795 = vunpack.c.h.b16 %v5624
        %v5796 = vunpack.c.l.b16 %v5625
        %v5797 = vunpack.c.h.b16 %v5625
        %v5798 = vunpack.c.l.b16 %v5626
        %v5799 = vunpack.c.h.b16 %v5626
        %v5800 = vunpack.c.l.b16 %v5627
        %v5801 = vunpack.c.h.b16 %v5627
        %v5802 = vunpack.c.l.b16 %v5628
        %v5803 = vunpack.c.h.b16 %v5628
        %v5804 = vunpack.c.l.b16 %v5629
        %v5805 = vunpack.c.h.b16 %v5629
        %v5806 = vunpack.c.l.b16 %v5630
        %v5807 = vunpack.c.h.b16 %v5630
        %v5808 = vunpack.c.l.b16 %v5631
        %v5809 = vunpack.c.h.b16 %v5631
        %v5810 = vunpack.c.l.b16 %v5632
        %v5811 = vunpack.c.h.b16 %v5632
        %v5812 = vunpack.c.l.b16 %v5633
        %v5813 = vunpack.c.h.b16 %v5633
        %v5814 = vunpack.c.l.b16 %v5634
        %v5815 = vunpack.c.h.b16 %v5634
        %v5816 = vunpack.c.l.b16 %v5635
        %v5817 = vunpack.c.h.b16 %v5635
        %v5818 = vunpack.c.l.b16 %v5636
        %v5819 = vunpack.c.h.b16 %v5636
        %v5820 = vunpack.c.l.b16 %v5637
        %v5821 = vunpack.c.h.b16 %v5637
        %v5822 = vunpack.c.l.b16 %v5638
        %v5823 = vunpack.c.h.b16 %v5638
        %v5824 = vunpack.c.l.b16 %v5639
        %v5825 = vunpack.c.h.b16 %v5639
        %v5826 = vunpack.c.l.b16 %v5640
        %v5827 = vunpack.c.h.b16 %v5640
        %v5828 = vunpack.c.l.b16 %v5641
        %v5829 = vunpack.c.h.b16 %v5641
        %v5830 = vunpack.c.l.b16 %v5642
        %v5831 = vunpack.c.h.b16 %v5642
        %v5832 = vunpack.c.l.b16 %v5643
        %v5833 = vunpack.c.h.b16 %v5643
        %v5834 = vunpack.c.l.b16 %v5644
        %v5835 = vunpack.c.h.b16 %v5644
        %v5836 = vunpack.c.l.b16 %v5645
        %v5837 = vunpack.c.h.b16 %v5645
        %v5838 = vunpack.c.l.b16 %v5646
        %v5839 = vunpack.c.h.b16 %v5646
        %v5840 = vunpack.c.l.b16 %v5647
        %v5841 = vunpack.c.h.b16 %v5647
        %v5842 = vunpack.c.l.b16 %v5648
        %v5843 = vunpack.c.h.b16 %v5648
        %v5844 = vunpack.c.l.b16 %v5649
        %v5845 = vunpack.c.h.b16 %v5649
        %v5846 = vunpack.c.l.b16 %v5650
        %v5847 = vunpack.c.h.b16 %v5650
        %v5848 = vunpack.c.l.b16 %v5651
        %v5849 = vunpack.c.h.b16 %v5651
        %v5850 = vunpack.c.l.b16 %v5652
        %v5851 = vunpack.c.h.b16 %v5652
        %v5852 = vunpack.c.l.b16 %v5653
        %v5853 = vunpack.c.h.b16 %v5653
        %v5854 = vunpack.c.l.b16 %v5654
        %v5855 = vunpack.c.h.b16 %v5654
        %v5856 = vunpack.c.l.b16 %v5655
        %v5857 = vunpack.c.h.b16 %v5655
        %v5858 = vunpack.c.l.b16 %v5656
        %v5859 = vunpack.c.h.b16 %v5656
        %v5860 = vunpack.c.l.b16 %v5657
        %v5861 = vunpack.c.h.b16 %v5657
        %v5862 = vunpack.c.l.b16 %v5658
        %v5863 = vunpack.c.h.b16 %v5658
        %v5864 = vunpack.c.l.b16 %v5659
        %v5865 = vunpack.c.h.b16 %v5659
        %v5866 = vunpack.c.l.b16 %v5660
        %v5867 = vunpack.c.h.b16 %v5660
        %v5868 = vunpack.c.l.b16 %v5661
        %v5869 = vunpack.c.h.b16 %v5661
        %v5870 = vunpack.c.l.b16 %v5662
        %v5871 = vunpack.c.h.b16 %v5662
        %v5872 = vunpack.c.l.b16 %v5663
        %v5873 = vunpack.c.h.b16 %v5663
        %v5874 = vunpack.c.l.b16 %v5664
        %v5875 = vunpack.c.h.b16 %v5664
        %v5876 = vunpack.c.l.b16 %v5665
        %v5877 = vunpack.c.h.b16 %v5665
        %v5878 = vunpack.c.l.b16 %v5666
        %v5879 = vunpack.c.h.b16 %v5666
        %v5880 = vunpack.c.l.b16 %v5667
        %v5881 = vunpack.c.h.b16 %v5667
        %v5882 = vunpack.c.l.b16 %v5668
        %v5883 = vunpack.c.h.b16 %v5668
        %v5884 = vunpack.c.l.b16 %v5669
        %v5885 = vunpack.c.h.b16 %v5669
        %v5886 = vunpack.c.l.b16 %v5670
        %v5887 = vunpack.c.h.b16 %v5670
        %v5888 = vunpack.c.l.b16 %v5671
        %v5889 = vunpack.c.h.b16 %v5671
        %v5890 = vunpack.c.l.b16 %v5672
        %v5891 = vunpack.c.h.b16 %v5672
        %v5892 = vunpack.c.l.b16 %v5673
        %v5893 = vunpack.c.h.b16 %v5673
        %v5894 = vpack.c.b16 %v5778, %v5774
        %v5895 = vpack.c.b16 %v5779, %v5775
        %v5896 = vpack.c.b16 %v5780, %v5776
        %v5897 = vpack.c.b16 %v5781, %v5777
        %v5898 = vpack.c.b16 %v5786, %v5782
        %v5899 = vpack.c.b16 %v5787, %v5783
        %v5900 = vpack.c.b16 %v5788, %v5784
        %v5901 = vpack.c.b16 %v5789, %v5785
        %v5902 = vpack.c.b16 %v5794, %v5790
        %v5903 = vpack.c.b16 %v5795, %v5791
        %v5904 = vpack.c.b16 %v5796, %v5792
        %v5905 = vpack.c.b16 %v5797, %v5793
        %v5906 = vpack.c.b16 %v5802, %v5798
        %v5907 = vpack.c.b16 %v5803, %v5799
        %v5908 = vpack.c.b16 %v5804, %v5800
        %v5909 = vpack.c.b16 %v5805, %v5801
        %v5910 = vpack.c.b16 %v5810, %v5806
        %v5911 = vpack.c.b16 %v5811, %v5807
        %v5912 = vpack.c.b16 %v5812, %v5808
        %v5913 = vpack.c.b16 %v5813, %v5809
        %v5914 = vpack.c.b16 %v5818, %v5814
        %v5915 = vpack.c.b16 %v5819, %v5815
        %v5916 = vpack.c.b16 %v5820, %v5816
        %v5917 = vpack.c.b16 %v5821, %v5817
        %v5918 = vpack.c.b16 %v5826, %v5822
        %v5919 = vpack.c.b16 %v5827, %v5823
        %v5920 = vpack.c.b16 %v5828, %v5824
        %v5921 = vpack.c.b16 %v5829, %v5825
        %v5922 = vpack.c.b16 %v5834, %v5830
        %v5923 = vpack.c.b16 %v5835, %v5831
        %v5924 = vpack.c.b16 %v5836, %v5832
        %v5925 = vpack.c.b16 %v5837, %v5833
        %v5926 = vpack.c.b16 %v5842, %v5838
        %v5927 = vpack.c.b16 %v5843, %v5839
        %v5928 = vpack.c.b16 %v5844, %v5840
        %v5929 = vpack.c.b16 %v5845, %v5841
        %v5930 = vpack.c.b16 %v5850, %v5846
        %v5931 = vpack.c.b16 %v5851, %v5847
        %v5932 = vpack.c.b16 %v5852, %v5848
        %v5933 = vpack.c.b16 %v5853, %v5849
        %v5934 = vpack.c.b16 %v5858, %v5854
        %v5935 = vpack.c.b16 %v5859, %v5855
        %v5936 = vpack.c.b16 %v5860, %v5856
        %v5937 = vpack.c.b16 %v5861, %v5857
        %v5938 = vpack.c.b16 %v5866, %v5862
        %v5939 = vpack.c.b16 %v5867, %v5863
        %v5940 = vpack.c.b16 %v5868, %v5864
        %v5941 = vpack.c.b16 %v5869, %v5865
        %v5942 = vpack.c.b16 %v5874, %v5870
        %v5943 = vpack.c.b16 %v5875, %v5871
        %v5944 = vpack.c.b16 %v5876, %v5872
        %v5945 = vpack.c.b16 %v5877, %v5873
        %v5946 = vpack.c.b16 %v5882, %v5878
        %v5947 = vpack.c.b16 %v5883, %v5879
        %v5948 = vpack.c.b16 %v5884, %v5880
        %v5949 = vpack.c.b16 %v5885, %v5881
        %v5950 = vpack.c.b16 %v5890, %v5886
        %v5951 = vpack.c.b16 %v5891, %v5887
        %v5952 = vpack.c.b16 %v5892, %v5888
        %v5953 = vpack.c.b16 %v5893, %v5889
        %v6015 = vsel %vm4910, %v5691, 0
        %v6018 = vsel %vm4910, %v5695, 0
        %v6021 = vsel %vm4910, %v5699, 0
        %v6024 = vsel %vm4910, %v5703, 0
        %v6027 = vsel %vm4910, %v5707, 0
        %v6030 = vsel %vm4910, %v5706, 0
        %6032 = vmatprep.subr.bf16.mxu0 %v5895
        %6033 = vmatpush1.bf16.msra.mxu0 %v5894
        %6034 = vmatprep.subr.bf16.mxu0 %v5899
        %6035 = vmatpush1.bf16.msra.mxu0 %v5898
        %6036 = vmatprep.subr.bf16.mxu0 %v5903
        %6037 = vmatpush1.bf16.msra.mxu0 %v5902
        %6038 = vmatprep.subr.bf16.mxu0 %v5907
        %6039 = vmatpush1.bf16.msra.mxu0 %v5906
        %6040 = vmatprep.subr.bf16.mxu0 %v5911
        %6041 = vmatpush1.bf16.msra.mxu0 %v5910
        %6042 = vmatprep.subr.bf16.mxu0 %v5915
        %6043 = vmatpush1.bf16.msra.mxu0 %v5914
        %6044 = vmatprep.subr.bf16.mxu0 %v5919
        %6045 = vmatpush1.bf16.msra.mxu0 %v5918
        %6046 = vmatprep.subr.bf16.mxu0 %v5923
        %6047 = vmatpush1.bf16.msra.mxu0 %v5922
        %6048 = vmatprep.subr.bf16.mxu0 %v5927
        %6049 = vmatpush1.bf16.msra.mxu0 %v5926
        %6050 = vmatprep.subr.bf16.mxu0 %v5931
        %6051 = vmatpush1.bf16.msra.mxu0 %v5930
        %6052 = vmatprep.subr.bf16.mxu0 %v5935
        %6053 = vmatpush1.bf16.msra.mxu0 %v5934
        %6054 = vmatprep.subr.bf16.mxu0 %v5939
        %6055 = vmatpush1.bf16.msra.mxu0 %v5938
        %6056 = vmatprep.subr.bf16.mxu0 %v5943
        %6057 = vmatpush1.bf16.msra.mxu0 %v5942
        %6058 = vmatprep.subr.bf16.mxu0 %v5947
        %6059 = vmatpush1.bf16.msra.mxu0 %v5946
        %6060 = vmatprep.subr.bf16.mxu0 %v5951
        %6061 = vmatpush1.bf16.msra.mxu0 %v5950
        %6062 = vmatprep.subr.bf16.mxu0 0
        %6063 = vmatpush1.bf16.msra.mxu0 0
        %6064 = vmatprep.mubr.bf16.mxu0 %v6015
        %6065 = vmatmul.mubr.bf16.gmra.mrb[0].mxu0 %v5688
        %v6066 = vpop.f32.mrb[0].mxu0
        %v6067 = vadd.f32 0.0, %v6066
        %v6068 = vpop.f32.mrb[0].mxu0
        %v6069 = vadd.f32 0.0, %v6068
        %v6070 = vpop.f32.mrb[0].mxu0
        %v6071 = vadd.f32 0.0, %v6070
        %v6072 = vpop.f32.mrb[0].mxu0
        %v6073 = vadd.f32 0.0, %v6072
        %6074 = vmatprep.mubr.bf16.mxu0 %v6018
        %6075 = vmatmul.mubr.bf16.gmra.mrb[0].mxu0 %v5693
        %v6076 = vpop.f32.mrb[0].mxu0
        %v6077 = vadd.f32 0.0, %v6076
        %v6078 = vpop.f32.mrb[0].mxu0
        %v6079 = vadd.f32 0.0, %v6078
        %v6080 = vpop.f32.mrb[0].mxu0
        %v6081 = vadd.f32 0.0, %v6080
        %v6082 = vpop.f32.mrb[0].mxu0
        %v6083 = vadd.f32 0.0, %v6082
        %6084 = vmatprep.mubr.bf16.mxu0 %v6021
        %6085 = vmatmul.mubr.bf16.gmra.mrb[0].mxu0 %v5697
        %v6086 = vpop.f32.mrb[0].mxu0
        %v6087 = vadd.f32 0.0, %v6086
        %v6088 = vpop.f32.mrb[0].mxu0
        %v6089 = vadd.f32 0.0, %v6088
        %v6090 = vpop.f32.mrb[0].mxu0
        %v6091 = vadd.f32 0.0, %v6090
        %v6092 = vpop.f32.mrb[0].mxu0
        %v6093 = vadd.f32 0.0, %v6092
        %6094 = vmatprep.mubr.bf16.mxu0 %v6024
        %6095 = vmatmul.mubr.bf16.gmra.mrb[0].mxu0 %v5701
        %v6096 = vpop.f32.mrb[0].mxu0
        %v6097 = vadd.f32 0.0, %v6096
        %v6098 = vpop.f32.mrb[0].mxu0
        %v6099 = vadd.f32 0.0, %v6098
        %v6100 = vpop.f32.mrb[0].mxu0
        %v6101 = vadd.f32 0.0, %v6100
        %v6102 = vpop.f32.mrb[0].mxu0
        %v6103 = vadd.f32 0.0, %v6102
        %6104 = vmatprep.mubr.bf16.mxu0 %v6027
        %6105 = vmatmul.mubr.bf16.gmra.mrb[0].mxu0 %v5705
        %v6106 = vpop.f32.mrb[0].mxu0
        %v6107 = vadd.f32 0.0, %v6106
        %v6108 = vpop.f32.mrb[0].mxu0
        %v6109 = vadd.f32 0.0, %v6108
        %v6110 = vpop.f32.mrb[0].mxu0
        %v6111 = vadd.f32 0.0, %v6110
        %v6112 = vpop.f32.mrb[0].mxu0
        %v6113 = vadd.f32 0.0, %v6112
        %6114 = vmatprep.mubr.bf16.mxu0 %v6030
        %6115 = vmatmul.mubr.bf16.gmra.mrb[0].mxu0 %v5704
        %v6116 = vpop.f32.mrb[0].mxu0
        %v6117 = vadd.f32 0.0, %v6116
        %v6118 = vpop.f32.mrb[0].mxu0
        %v6119 = vadd.f32 0.0, %v6118
        %v6120 = vpop.f32.mrb[0].mxu0
        %v6121 = vadd.f32 0.0, %v6120
        %v6122 = vpop.f32.mrb[0].mxu0
        %v6123 = vadd.f32 0.0, %v6122
        %6124 = vdwg.mxu0
        %6125 = vmatprep.subr.bf16.mxu0 %v5897
        %6126 = vmatpush1.bf16.msra.mxu0 %v5896
        %6127 = vmatprep.subr.bf16.mxu0 %v5901
        %6128 = vmatpush1.bf16.msra.mxu0 %v5900
        %6129 = vmatprep.subr.bf16.mxu0 %v5905
        %6130 = vmatpush1.bf16.msra.mxu0 %v5904
        %6131 = vmatprep.subr.bf16.mxu0 %v5909
        %6132 = vmatpush1.bf16.msra.mxu0 %v5908
        %6133 = vmatprep.subr.bf16.mxu0 %v5913
        %6134 = vmatpush1.bf16.msra.mxu0 %v5912
        %6135 = vmatprep.subr.bf16.mxu0 %v5917
        %6136 = vmatpush1.bf16.msra.mxu0 %v5916
        %6137 = vmatprep.subr.bf16.mxu0 %v5921
        %6138 = vmatpush1.bf16.msra.mxu0 %v5920
        %6139 = vmatprep.subr.bf16.mxu0 %v5925
        %6140 = vmatpush1.bf16.msra.mxu0 %v5924
        %6141 = vmatprep.subr.bf16.mxu0 %v5929
        %6142 = vmatpush1.bf16.msra.mxu0 %v5928
        %6143 = vmatprep.subr.bf16.mxu0 %v5933
        %6144 = vmatpush1.bf16.msra.mxu0 %v5932
        %6145 = vmatprep.subr.bf16.mxu0 %v5937
        %6146 = vmatpush1.bf16.msra.mxu0 %v5936
        %6147 = vmatprep.subr.bf16.mxu0 %v5941
        %6148 = vmatpush1.bf16.msra.mxu0 %v5940
        %6149 = vmatprep.subr.bf16.mxu0 %v5945
        %6150 = vmatpush1.bf16.msra.mxu0 %v5944
        %6151 = vmatprep.subr.bf16.mxu0 %v5949
        %6152 = vmatpush1.bf16.msra.mxu0 %v5948
        %6153 = vmatprep.subr.bf16.mxu0 %v5953
        %6154 = vmatpush1.bf16.msra.mxu0 %v5952
        %6155 = vmatprep.subr.bf16.mxu0 0
        %6156 = vmatpush1.bf16.msra.mxu0 0
        %6157 = vmatprep.mubr.bf16.mxu0 %v6015
        %6158 = vmatmul.mubr.bf16.gmra.mrb[0].mxu0 %v5688
        %v6159 = vpop.f32.mrb[0].mxu0
        %v6160 = vadd.f32 0.0, %v6159
        %v6161 = vpop.f32.mrb[0].mxu0
        %v6162 = vadd.f32 0.0, %v6161
        %v6163 = vpop.f32.mrb[0].mxu0
        %v6164 = vadd.f32 0.0, %v6163
        %v6165 = vpop.f32.mrb[0].mxu0
        %v6166 = vadd.f32 0.0, %v6165
        %6167 = vmatprep.mubr.bf16.mxu0 %v6018
        %6168 = vmatmul.mubr.bf16.gmra.mrb[0].mxu0 %v5693
        %v6169 = vpop.f32.mrb[0].mxu0
        %v6170 = vadd.f32 0.0, %v6169
        %v6171 = vpop.f32.mrb[0].mxu0
        %v6172 = vadd.f32 0.0, %v6171
        %v6173 = vpop.f32.mrb[0].mxu0
        %v6174 = vadd.f32 0.0, %v6173
        %v6175 = vpop.f32.mrb[0].mxu0
        %v6176 = vadd.f32 0.0, %v6175
        %6177 = vmatprep.mubr.bf16.mxu0 %v6021
        %6178 = vmatmul.mubr.bf16.gmra.mrb[0].mxu0 %v5697
        %v6179 = vpop.f32.mrb[0].mxu0
        %v6180 = vadd.f32 0.0, %v6179
        %v6181 = vpop.f32.mrb[0].mxu0
        %v6182 = vadd.f32 0.0, %v6181
        %v6183 = vpop.f32.mrb[0].mxu0
        %v6184 = vadd.f32 0.0, %v6183
        %v6185 = vpop.f32.mrb[0].mxu0
        %v6186 = vadd.f32 0.0, %v6185
        %6187 = vmatprep.mubr.bf16.mxu0 %v6024
        %6188 = vmatmul.mubr.bf16.gmra.mrb[0].mxu0 %v5701
        %v6189 = vpop.f32.mrb[0].mxu0
        %v6190 = vadd.f32 0.0, %v6189
        %v6191 = vpop.f32.mrb[0].mxu0
        %v6192 = vadd.f32 0.0, %v6191
        %v6193 = vpop.f32.mrb[0].mxu0
        %v6194 = vadd.f32 0.0, %v6193
        %v6195 = vpop.f32.mrb[0].mxu0
        %v6196 = vadd.f32 0.0, %v6195
        %6197 = vmatprep.mubr.bf16.mxu0 %v6027
        %6198 = vmatmul.mubr.bf16.gmra.mrb[0].mxu0 %v5705
        %v6199 = vpop.f32.mrb[0].mxu0
        %v6200 = vadd.f32 0.0, %v6199
        %v6201 = vpop.f32.mrb[0].mxu0
        %v6202 = vadd.f32 0.0, %v6201
        %v6203 = vpop.f32.mrb[0].mxu0
        %v6204 = vadd.f32 0.0, %v6203
        %v6205 = vpop.f32.mrb[0].mxu0
        %v6206 = vadd.f32 0.0, %v6205
        %6207 = vmatprep.mubr.bf16.mxu0 %v6030
        %6208 = vmatmul.mubr.bf16.gmra.mrb[0].mxu0 %v5704
        %v6209 = vpop.f32.mrb[0].mxu0
        %v6210 = vadd.f32 0.0, %v6209
        %v6211 = vpop.f32.mrb[0].mxu0
        %v6212 = vadd.f32 0.0, %v6211
        %v6213 = vpop.f32.mrb[0].mxu0
        %v6214 = vadd.f32 0.0, %v6213
        %v6215 = vpop.f32.mrb[0].mxu0
        %v6216 = vadd.f32 0.0, %v6215
        %6217 = vdwg.mxu0
        %v6218 = vadd.f32 %v5462, %v6067
        %v6219 = vadd.f32 %v5464, %v6069
        %v6220 = vadd.f32 %v5555, %v6160
        %v6221 = vadd.f32 %v5557, %v6162
        %v6222 = vadd.f32 %v5466, %v6071
        %v6223 = vadd.f32 %v5468, %v6073
        %v6224 = vadd.f32 %v5559, %v6164
        %v6225 = vadd.f32 %v5561, %v6166
        %v6226 = vadd.f32 %v5472, %v6077
        %v6227 = vadd.f32 %v5474, %v6079
        %v6228 = vadd.f32 %v5565, %v6170
        %v6229 = vadd.f32 %v5567, %v6172
        %v6230 = vadd.f32 %v5476, %v6081
        %v6231 = vadd.f32 %v5478, %v6083
        %v6232 = vadd.f32 %v5569, %v6174
        %v6233 = vadd.f32 %v5571, %v6176
        %v6234 = vadd.f32 %v5482, %v6087
        %v6235 = vadd.f32 %v5484, %v6089
        %v6236 = vadd.f32 %v5575, %v6180
        %v6237 = vadd.f32 %v5577, %v6182
        %v6238 = vadd.f32 %v5486, %v6091
        %v6239 = vadd.f32 %v5488, %v6093
        %v6240 = vadd.f32 %v5579, %v6184
        %v6241 = vadd.f32 %v5581, %v6186
        %v6242 = vadd.f32 %v5492, %v6097
        %v6243 = vadd.f32 %v5494, %v6099
        %v6244 = vadd.f32 %v5585, %v6190
        %v6245 = vadd.f32 %v5587, %v6192
        %v6246 = vadd.f32 %v5496, %v6101
        %v6247 = vadd.f32 %v5498, %v6103
        %v6248 = vadd.f32 %v5589, %v6194
        %v6249 = vadd.f32 %v5591, %v6196
        %v6250 = vadd.f32 %v5502, %v6107
        %v6251 = vadd.f32 %v5504, %v6109
        %v6252 = vadd.f32 %v5595, %v6200
        %v6253 = vadd.f32 %v5597, %v6202
        %v6254 = vadd.f32 %v5506, %v6111
        %v6255 = vadd.f32 %v5508, %v6113
        %v6256 = vadd.f32 %v5599, %v6204
        %v6257 = vadd.f32 %v5601, %v6206
        %v6258 = vadd.f32 %v5512, %v6117
        %v6259 = vadd.f32 %v5514, %v6119
        %v6260 = vadd.f32 %v5605, %v6210
        %v6261 = vadd.f32 %v5607, %v6212
        %v6262 = vadd.f32 %v5516, %v6121
        %v6263 = vadd.f32 %v5518, %v6123
        %v6264 = vadd.f32 %v5609, %v6214
        %v6265 = vadd.f32 %v5611, %v6216
        %s6266 = scalar_lea.vmem %s4, 1440
        %v6267 = vld [vmem:[%s6266] sm:$0xff]
        %v6268 = vld [vmem:[%s6266 + $0x8] sm:$0xff]
        %v6269 = vld [vmem:[%s6266 + $0x10] sm:$0xff]
        %v6270 = vld [vmem:[%s6266 + $0x18] sm:$0xff]
        %v6271 = vld [vmem:[%s6266 + $0x20] sm:$0xff]
        %v6272 = vld [vmem:[%s6266 + $0x28] sm:$0xff]
        %v6273 = vld [vmem:[%s6266 + $0x30] sm:$0xff]
        %v6274 = vld [vmem:[%s6266 + $0x38] sm:$0xff]
        %v6275 = vld [vmem:[%s6266 + $0x40] sm:$0xff]
        %v6276 = vld [vmem:[%s6266 + $0x48] sm:$0xff]
        %v6277 = vld [vmem:[%s6266 + $0x50] sm:$0xff]
        %v6278 = vld [vmem:[%s6266 + $0x58] sm:$0xff]
        %v6279 = vld [vmem:[%s6266 + $0x60] sm:$0xff]
        %v6280 = vld [vmem:[%s6266 + $0x68] sm:$0xff]
        %v6281 = vld [vmem:[%s6266 + $0x70] sm:$0xff]
        %v6282 = vld [vmem:[%s6266 + $0x78] sm:$0xff]
        %v6283 = vld [vmem:[%s6266 + $0x80] sm:$0xff]
        %v6284 = vld [vmem:[%s6266 + $0x88] sm:$0xff]
        %v6285 = vld [vmem:[%s6266 + $0x90] sm:$0xff]
        %v6286 = vld [vmem:[%s6266 + $0x98] sm:$0xff]
        %v6287 = vld [vmem:[%s6266 + $0xa0] sm:$0xff]
        %v6288 = vld [vmem:[%s6266 + $0xa8] sm:$0xff]
        %v6289 = vld [vmem:[%s6266 + $0xb0] sm:$0xff]
        %v6290 = vld [vmem:[%s6266 + $0xb8] sm:$0xff]
        %v6291 = vld [vmem:[%s6266 + $0xc0] sm:$0xff]
        %v6292 = vld [vmem:[%s6266 + $0xc8] sm:$0xff]
        %v6293 = vld [vmem:[%s6266 + $0xd0] sm:$0xff]
        %v6294 = vld [vmem:[%s6266 + $0xd8] sm:$0xff]
        %v6295 = vld [vmem:[%s6266 + $0xe0] sm:$0xff]
        %v6296 = vld [vmem:[%s6266 + $0xe8] sm:$0xff]
        %v6297 = vld [vmem:[%s6266 + $0xf0] sm:$0xff]
        %v6298 = vld [vmem:[%s6266 + $0xf8] sm:$0xff]
        %v6299 = vld [vmem:[%s6266 + $0x100] sm:$0xff]
        %v6300 = vld [vmem:[%s6266 + $0x108] sm:$0xff]
        %v6301 = vld [vmem:[%s6266 + $0x110] sm:$0xff]
        %v6302 = vld [vmem:[%s6266 + $0x118] sm:$0xff]
        %v6303 = vld [vmem:[%s6266 + $0x120] sm:$0xff]
        %v6304 = vld [vmem:[%s6266 + $0x128] sm:$0xff]
        %v6305 = vld [vmem:[%s6266 + $0x130] sm:$0xff]
        %v6306 = vld [vmem:[%s6266 + $0x138] sm:$0xff]
        %v6307 = vld [vmem:[%s6266 + $0x140] sm:$0xff]
        %v6308 = vld [vmem:[%s6266 + $0x148] sm:$0xff]
        %v6309 = vld [vmem:[%s6266 + $0x150] sm:$0xff]
        %v6310 = vld [vmem:[%s6266 + $0x158] sm:$0xff]
        %v6311 = vld [vmem:[%s6266 + $0x160] sm:$0xff]
        %v6312 = vld [vmem:[%s6266 + $0x168] sm:$0xff]
        %v6313 = vld [vmem:[%s6266 + $0x170] sm:$0xff]
        %v6314 = vld [vmem:[%s6266 + $0x178] sm:$0xff]
        %v6315 = vld [vmem:[%s6266 + $0x180] sm:$0xff]
        %v6316 = vld [vmem:[%s6266 + $0x188] sm:$0xff]
        %v6317 = vld [vmem:[%s6266 + $0x190] sm:$0xff]
        %v6318 = vld [vmem:[%s6266 + $0x198] sm:$0xff]
        %v6319 = vld [vmem:[%s6266 + $0x1a0] sm:$0xff]
        %v6320 = vld [vmem:[%s6266 + $0x1a8] sm:$0xff]
        %v6321 = vld [vmem:[%s6266 + $0x1b0] sm:$0xff]
        %v6322 = vld [vmem:[%s6266 + $0x1b8] sm:$0xff]
        %v6323 = vld [vmem:[%s6266 + $0x1c0] sm:$0xff]
        %v6324 = vld [vmem:[%s6266 + $0x1c8] sm:$0xff]
        %v6325 = vld [vmem:[%s6266 + $0x1d0] sm:$0xff]
        %v6326 = vld [vmem:[%s6266 + $0x1d8] sm:$0xff]
        %v6327 = vrot.slane %v4511, 1
        %v6328 = vrot.slane %v4513, 2
        %v6329 = vor.u32 %v6327, %v6328
        %v6330 = vrot.slane %v4534, 1
        %v6331 = vrot.slane %v4518, 2
        %v6332 = vor.u32 %v6330, %v6331
        %v6333 = vsel %vm2027, %v6329, %v6332
        %v6334 = vrot.slane %v4523, 1
        %v6335 = vrot.slane %v4525, 2
        %v6336 = vor.u32 %v6334, %v6335
        %v6337 = vrot.slane %v4542, 1
        %v6338 = vrot.slane %v4530, 2
        %v6339 = vor.u32 %v6337, %v6338
        %v6340 = vsel %vm2027, %v6336, %v6339
        %v6341 = vrot.slane %v4550, 1
        %v6342 = vrot.slane %v4538, 2
        %v6343 = vor.u32 %v6341, %v6342
        %v6344 = vsel %vm2027, %v6332, %v6343
        %v6345 = vrot.slane %v4558, 1
        %v6346 = vrot.slane %v4546, 2
        %v6347 = vor.u32 %v6345, %v6346
        %v6348 = vsel %vm2027, %v6339, %v6347
        %v6349 = vrot.slane %v4566, 1
        %v6350 = vrot.slane %v4554, 2
        %v6351 = vor.u32 %v6349, %v6350
        %v6352 = vsel %vm2027, %v6343, %v6351
        %v6353 = vrot.slane %v4574, 1
        %v6354 = vrot.slane %v4562, 2
        %v6355 = vor.u32 %v6353, %v6354
        %v6356 = vsel %vm2027, %v6347, %v6355
        %v6357 = vrot.slane %v4582, 1
        %v6358 = vrot.slane %v4570, 2
        %v6359 = vor.u32 %v6357, %v6358
        %v6360 = vsel %vm2027, %v6351, %v6359
        %v6361 = vrot.slane %v4590, 1
        %v6362 = vrot.slane %v4578, 2
        %v6363 = vor.u32 %v6361, %v6362
        %v6364 = vsel %vm2027, %v6355, %v6363
        %v6365 = vrot.slane %v4598, 1
        %v6366 = vrot.slane %v4586, 2
        %v6367 = vor.u32 %v6365, %v6366
        %v6368 = vsel %vm2027, %v6359, %v6367
        %v6369 = vrot.slane %v4601, 1
        %v6370 = vrot.slane %v4594, 2
        %v6371 = vor.u32 %v6369, %v6370
        %v6372 = vsel %vm2027, %v6363, %v6371
        %v6439 = vunpack.c.l.b16 %v6267
        %v6440 = vunpack.c.h.b16 %v6267
        %v6441 = vunpack.c.l.b16 %v6268
        %v6442 = vunpack.c.h.b16 %v6268
        %v6443 = vunpack.c.l.b16 %v6269
        %v6444 = vunpack.c.h.b16 %v6269
        %v6445 = vunpack.c.l.b16 %v6270
        %v6446 = vunpack.c.h.b16 %v6270
        %v6447 = vunpack.c.l.b16 %v6271
        %v6448 = vunpack.c.h.b16 %v6271
        %v6449 = vunpack.c.l.b16 %v6272
        %v6450 = vunpack.c.h.b16 %v6272
        %v6451 = vunpack.c.l.b16 %v6273
        %v6452 = vunpack.c.h.b16 %v6273
        %v6453 = vunpack.c.l.b16 %v6274
        %v6454 = vunpack.c.h.b16 %v6274
        %v6455 = vunpack.c.l.b16 %v6275
        %v6456 = vunpack.c.h.b16 %v6275
        %v6457 = vunpack.c.l.b16 %v6276
        %v6458 = vunpack.c.h.b16 %v6276
        %v6459 = vunpack.c.l.b16 %v6277
        %v6460 = vunpack.c.h.b16 %v6277
        %v6461 = vunpack.c.l.b16 %v6278
        %v6462 = vunpack.c.h.b16 %v6278
        %v6463 = vunpack.c.l.b16 %v6279
        %v6464 = vunpack.c.h.b16 %v6279
        %v6465 = vunpack.c.l.b16 %v6280
        %v6466 = vunpack.c.h.b16 %v6280
        %v6467 = vunpack.c.l.b16 %v6281
        %v6468 = vunpack.c.h.b16 %v6281
        %v6469 = vunpack.c.l.b16 %v6282
        %v6470 = vunpack.c.h.b16 %v6282
        %v6471 = vunpack.c.l.b16 %v6283
        %v6472 = vunpack.c.h.b16 %v6283
        %v6473 = vunpack.c.l.b16 %v6284
        %v6474 = vunpack.c.h.b16 %v6284
        %v6475 = vunpack.c.l.b16 %v6285
        %v6476 = vunpack.c.h.b16 %v6285
        %v6477 = vunpack.c.l.b16 %v6286
        %v6478 = vunpack.c.h.b16 %v6286
        %v6479 = vunpack.c.l.b16 %v6287
        %v6480 = vunpack.c.h.b16 %v6287
        %v6481 = vunpack.c.l.b16 %v6288
        %v6482 = vunpack.c.h.b16 %v6288
        %v6483 = vunpack.c.l.b16 %v6289
        %v6484 = vunpack.c.h.b16 %v6289
        %v6485 = vunpack.c.l.b16 %v6290
        %v6486 = vunpack.c.h.b16 %v6290
        %v6487 = vunpack.c.l.b16 %v6291
        %v6488 = vunpack.c.h.b16 %v6291
        %v6489 = vunpack.c.l.b16 %v6292
        %v6490 = vunpack.c.h.b16 %v6292
        %v6491 = vunpack.c.l.b16 %v6293
        %v6492 = vunpack.c.h.b16 %v6293
        %v6493 = vunpack.c.l.b16 %v6294
        %v6494 = vunpack.c.h.b16 %v6294
        %v6495 = vunpack.c.l.b16 %v6295
        %v6496 = vunpack.c.h.b16 %v6295
        %v6497 = vunpack.c.l.b16 %v6296
        %v6498 = vunpack.c.h.b16 %v6296
        %v6499 = vunpack.c.l.b16 %v6297
        %v6500 = vunpack.c.h.b16 %v6297
        %v6501 = vunpack.c.l.b16 %v6298
        %v6502 = vunpack.c.h.b16 %v6298
        %v6503 = vunpack.c.l.b16 %v6299
        %v6504 = vunpack.c.h.b16 %v6299
        %v6505 = vunpack.c.l.b16 %v6300
        %v6506 = vunpack.c.h.b16 %v6300
        %v6507 = vunpack.c.l.b16 %v6301
        %v6508 = vunpack.c.h.b16 %v6301
        %v6509 = vunpack.c.l.b16 %v6302
        %v6510 = vunpack.c.h.b16 %v6302
        %v6511 = vunpack.c.l.b16 %v6303
        %v6512 = vunpack.c.h.b16 %v6303
        %v6513 = vunpack.c.l.b16 %v6304
        %v6514 = vunpack.c.h.b16 %v6304
        %v6515 = vunpack.c.l.b16 %v6305
        %v6516 = vunpack.c.h.b16 %v6305
        %v6517 = vunpack.c.l.b16 %v6306
        %v6518 = vunpack.c.h.b16 %v6306
        %v6519 = vunpack.c.l.b16 %v6307
        %v6520 = vunpack.c.h.b16 %v6307
        %v6521 = vunpack.c.l.b16 %v6308
        %v6522 = vunpack.c.h.b16 %v6308
        %v6523 = vunpack.c.l.b16 %v6309
        %v6524 = vunpack.c.h.b16 %v6309
        %v6525 = vunpack.c.l.b16 %v6310
        %v6526 = vunpack.c.h.b16 %v6310
        %v6527 = vunpack.c.l.b16 %v6311
        %v6528 = vunpack.c.h.b16 %v6311
        %v6529 = vunpack.c.l.b16 %v6312
        %v6530 = vunpack.c.h.b16 %v6312
        %v6531 = vunpack.c.l.b16 %v6313
        %v6532 = vunpack.c.h.b16 %v6313
        %v6533 = vunpack.c.l.b16 %v6314
        %v6534 = vunpack.c.h.b16 %v6314
        %v6535 = vunpack.c.l.b16 %v6315
        %v6536 = vunpack.c.h.b16 %v6315
        %v6537 = vunpack.c.l.b16 %v6316
        %v6538 = vunpack.c.h.b16 %v6316
        %v6539 = vunpack.c.l.b16 %v6317
        %v6540 = vunpack.c.h.b16 %v6317
        %v6541 = vunpack.c.l.b16 %v6318
        %v6542 = vunpack.c.h.b16 %v6318
        %v6543 = vunpack.c.l.b16 %v6319
        %v6544 = vunpack.c.h.b16 %v6319
        %v6545 = vunpack.c.l.b16 %v6320
        %v6546 = vunpack.c.h.b16 %v6320
        %v6547 = vunpack.c.l.b16 %v6321
        %v6548 = vunpack.c.h.b16 %v6321
        %v6549 = vunpack.c.l.b16 %v6322
        %v6550 = vunpack.c.h.b16 %v6322
        %v6551 = vunpack.c.l.b16 %v6323
        %v6552 = vunpack.c.h.b16 %v6323
        %v6553 = vunpack.c.l.b16 %v6324
        %v6554 = vunpack.c.h.b16 %v6324
        %v6555 = vunpack.c.l.b16 %v6325
        %v6556 = vunpack.c.h.b16 %v6325
        %v6557 = vunpack.c.l.b16 %v6326
        %v6558 = vunpack.c.h.b16 %v6326
        %v6559 = vpack.c.b16 %v6443, %v6439
        %v6560 = vpack.c.b16 %v6444, %v6440
        %v6561 = vpack.c.b16 %v6445, %v6441
        %v6562 = vpack.c.b16 %v6446, %v6442
        %v6563 = vpack.c.b16 %v6451, %v6447
        %v6564 = vpack.c.b16 %v6452, %v6448
        %v6565 = vpack.c.b16 %v6453, %v6449
        %v6566 = vpack.c.b16 %v6454, %v6450
        %v6567 = vpack.c.b16 %v6459, %v6455
        %v6568 = vpack.c.b16 %v6460, %v6456
        %v6569 = vpack.c.b16 %v6461, %v6457
        %v6570 = vpack.c.b16 %v6462, %v6458
        %v6571 = vpack.c.b16 %v6467, %v6463
        %v6572 = vpack.c.b16 %v6468, %v6464
        %v6573 = vpack.c.b16 %v6469, %v6465
        %v6574 = vpack.c.b16 %v6470, %v6466
        %v6575 = vpack.c.b16 %v6475, %v6471
        %v6576 = vpack.c.b16 %v6476, %v6472
        %v6577 = vpack.c.b16 %v6477, %v6473
        %v6578 = vpack.c.b16 %v6478, %v6474
        %v6579 = vpack.c.b16 %v6483, %v6479
        %v6580 = vpack.c.b16 %v6484, %v6480
        %v6581 = vpack.c.b16 %v6485, %v6481
        %v6582 = vpack.c.b16 %v6486, %v6482
        %v6583 = vpack.c.b16 %v6491, %v6487
        %v6584 = vpack.c.b16 %v6492, %v6488
        %v6585 = vpack.c.b16 %v6493, %v6489
        %v6586 = vpack.c.b16 %v6494, %v6490
        %v6587 = vpack.c.b16 %v6499, %v6495
        %v6588 = vpack.c.b16 %v6500, %v6496
        %v6589 = vpack.c.b16 %v6501, %v6497
        %v6590 = vpack.c.b16 %v6502, %v6498
        %v6591 = vpack.c.b16 %v6507, %v6503
        %v6592 = vpack.c.b16 %v6508, %v6504
        %v6593 = vpack.c.b16 %v6509, %v6505
        %v6594 = vpack.c.b16 %v6510, %v6506
        %v6595 = vpack.c.b16 %v6515, %v6511
        %v6596 = vpack.c.b16 %v6516, %v6512
        %v6597 = vpack.c.b16 %v6517, %v6513
        %v6598 = vpack.c.b16 %v6518, %v6514
        %v6599 = vpack.c.b16 %v6523, %v6519
        %v6600 = vpack.c.b16 %v6524, %v6520
        %v6601 = vpack.c.b16 %v6525, %v6521
        %v6602 = vpack.c.b16 %v6526, %v6522
        %v6603 = vpack.c.b16 %v6531, %v6527
        %v6604 = vpack.c.b16 %v6532, %v6528
        %v6605 = vpack.c.b16 %v6533, %v6529
        %v6606 = vpack.c.b16 %v6534, %v6530
        %v6607 = vpack.c.b16 %v6539, %v6535
        %v6608 = vpack.c.b16 %v6540, %v6536
        %v6609 = vpack.c.b16 %v6541, %v6537
        %v6610 = vpack.c.b16 %v6542, %v6538
        %v6611 = vpack.c.b16 %v6547, %v6543
        %v6612 = vpack.c.b16 %v6548, %v6544
        %v6613 = vpack.c.b16 %v6549, %v6545
        %v6614 = vpack.c.b16 %v6550, %v6546
        %v6615 = vpack.c.b16 %v6555, %v6551
        %v6616 = vpack.c.b16 %v6556, %v6552
        %v6617 = vpack.c.b16 %v6557, %v6553
        %v6618 = vpack.c.b16 %v6558, %v6554
        %v6680 = vsel %vm4910, %v6340, 0
        %v6683 = vsel %vm4910, %v6348, 0
        %v6686 = vsel %vm4910, %v6356, 0
        %v6689 = vsel %vm4910, %v6364, 0
        %v6692 = vsel %vm4910, %v6372, 0
        %v6695 = vsel %vm4910, %v6371, 0
        %6697 = vmatprep.subr.bf16.mxu0 %v6560
        %6698 = vmatpush1.bf16.msra.mxu0 %v6559
        %6699 = vmatprep.subr.bf16.mxu0 %v6564
        %6700 = vmatpush1.bf16.msra.mxu0 %v6563
        %6701 = vmatprep.subr.bf16.mxu0 %v6568
        %6702 = vmatpush1.bf16.msra.mxu0 %v6567
        %6703 = vmatprep.subr.bf16.mxu0 %v6572
        %6704 = vmatpush1.bf16.msra.mxu0 %v6571
        %6705 = vmatprep.subr.bf16.mxu0 %v6576
        %6706 = vmatpush1.bf16.msra.mxu0 %v6575
        %6707 = vmatprep.subr.bf16.mxu0 %v6580
        %6708 = vmatpush1.bf16.msra.mxu0 %v6579
        %6709 = vmatprep.subr.bf16.mxu0 %v6584
        %6710 = vmatpush1.bf16.msra.mxu0 %v6583
        %6711 = vmatprep.subr.bf16.mxu0 %v6588
        %6712 = vmatpush1.bf16.msra.mxu0 %v6587
        %6713 = vmatprep.subr.bf16.mxu0 %v6592
        %6714 = vmatpush1.bf16.msra.mxu0 %v6591
        %6715 = vmatprep.subr.bf16.mxu0 %v6596
        %6716 = vmatpush1.bf16.msra.mxu0 %v6595
        %6717 = vmatprep.subr.bf16.mxu0 %v6600
        %6718 = vmatpush1.bf16.msra.mxu0 %v6599
        %6719 = vmatprep.subr.bf16.mxu0 %v6604
        %6720 = vmatpush1.bf16.msra.mxu0 %v6603
        %6721 = vmatprep.subr.bf16.mxu0 %v6608
        %6722 = vmatpush1.bf16.msra.mxu0 %v6607
        %6723 = vmatprep.subr.bf16.mxu0 %v6612
        %6724 = vmatpush1.bf16.msra.mxu0 %v6611
        %6725 = vmatprep.subr.bf16.mxu0 %v6616
        %6726 = vmatpush1.bf16.msra.mxu0 %v6615
        %6727 = vmatprep.subr.bf16.mxu0 0
        %6728 = vmatpush1.bf16.msra.mxu0 0
        %6729 = vmatprep.mubr.bf16.mxu0 %v6680
        %6730 = vmatmul.mubr.bf16.gmra.mrb[0].mxu0 %v6333
        %v6731 = vpop.f32.mrb[0].mxu0
        %v6732 = vadd.f32 0.0, %v6731
        %v6733 = vpop.f32.mrb[0].mxu0
        %v6734 = vadd.f32 0.0, %v6733
        %v6735 = vpop.f32.mrb[0].mxu0
        %v6736 = vadd.f32 0.0, %v6735
        %v6737 = vpop.f32.mrb[0].mxu0
        %v6738 = vadd.f32 0.0, %v6737
        %6739 = vmatprep.mubr.bf16.mxu0 %v6683
        %6740 = vmatmul.mubr.bf16.gmra.mrb[0].mxu0 %v6344
        %v6741 = vpop.f32.mrb[0].mxu0
        %v6742 = vadd.f32 0.0, %v6741
        %v6743 = vpop.f32.mrb[0].mxu0
        %v6744 = vadd.f32 0.0, %v6743
        %v6745 = vpop.f32.mrb[0].mxu0
        %v6746 = vadd.f32 0.0, %v6745
        %v6747 = vpop.f32.mrb[0].mxu0
        %v6748 = vadd.f32 0.0, %v6747
        %6749 = vmatprep.mubr.bf16.mxu0 %v6686
        %6750 = vmatmul.mubr.bf16.gmra.mrb[0].mxu0 %v6352
        %v6751 = vpop.f32.mrb[0].mxu0
        %v6752 = vadd.f32 0.0, %v6751
        %v6753 = vpop.f32.mrb[0].mxu0
        %v6754 = vadd.f32 0.0, %v6753
        %v6755 = vpop.f32.mrb[0].mxu0
        %v6756 = vadd.f32 0.0, %v6755
        %v6757 = vpop.f32.mrb[0].mxu0
        %v6758 = vadd.f32 0.0, %v6757
        %6759 = vmatprep.mubr.bf16.mxu0 %v6689
        %6760 = vmatmul.mubr.bf16.gmra.mrb[0].mxu0 %v6360
        %v6761 = vpop.f32.mrb[0].mxu0
        %v6762 = vadd.f32 0.0, %v6761
        %v6763 = vpop.f32.mrb[0].mxu0
        %v6764 = vadd.f32 0.0, %v6763
        %v6765 = vpop.f32.mrb[0].mxu0
        %v6766 = vadd.f32 0.0, %v6765
        %v6767 = vpop.f32.mrb[0].mxu0
        %v6768 = vadd.f32 0.0, %v6767
        %6769 = vmatprep.mubr.bf16.mxu0 %v6692
        %6770 = vmatmul.mubr.bf16.gmra.mrb[0].mxu0 %v6368
        %v6771 = vpop.f32.mrb[0].mxu0
        %v6772 = vadd.f32 0.0, %v6771
        %v6773 = vpop.f32.mrb[0].mxu0
        %v6774 = vadd.f32 0.0, %v6773
        %v6775 = vpop.f32.mrb[0].mxu0
        %v6776 = vadd.f32 0.0, %v6775
        %v6777 = vpop.f32.mrb[0].mxu0
        %v6778 = vadd.f32 0.0, %v6777
        %6779 = vmatprep.mubr.bf16.mxu0 %v6695
        %6780 = vmatmul.mubr.bf16.gmra.mrb[0].mxu0 %v6367
        %v6781 = vpop.f32.mrb[0].mxu0
        %v6782 = vadd.f32 0.0, %v6781
        %v6783 = vpop.f32.mrb[0].mxu0
        %v6784 = vadd.f32 0.0, %v6783
        %v6785 = vpop.f32.mrb[0].mxu0
        %v6786 = vadd.f32 0.0, %v6785
        %v6787 = vpop.f32.mrb[0].mxu0
        %v6788 = vadd.f32 0.0, %v6787
        %6789 = vdwg.mxu0
        %6790 = vmatprep.subr.bf16.mxu0 %v6562
        %6791 = vmatpush1.bf16.msra.mxu0 %v6561
        %6792 = vmatprep.subr.bf16.mxu0 %v6566
        %6793 = vmatpush1.bf16.msra.mxu0 %v6565
        %6794 = vmatprep.subr.bf16.mxu0 %v6570
        %6795 = vmatpush1.bf16.msra.mxu0 %v6569
        %6796 = vmatprep.subr.bf16.mxu0 %v6574
        %6797 = vmatpush1.bf16.msra.mxu0 %v6573
        %6798 = vmatprep.subr.bf16.mxu0 %v6578
        %6799 = vmatpush1.bf16.msra.mxu0 %v6577
        %6800 = vmatprep.subr.bf16.mxu0 %v6582
        %6801 = vmatpush1.bf16.msra.mxu0 %v6581
        %6802 = vmatprep.subr.bf16.mxu0 %v6586
        %6803 = vmatpush1.bf16.msra.mxu0 %v6585
        %6804 = vmatprep.subr.bf16.mxu0 %v6590
        %6805 = vmatpush1.bf16.msra.mxu0 %v6589
        %6806 = vmatprep.subr.bf16.mxu0 %v6594
        %6807 = vmatpush1.bf16.msra.mxu0 %v6593
        %6808 = vmatprep.subr.bf16.mxu0 %v6598
        %6809 = vmatpush1.bf16.msra.mxu0 %v6597
        %6810 = vmatprep.subr.bf16.mxu0 %v6602
        %6811 = vmatpush1.bf16.msra.mxu0 %v6601
        %6812 = vmatprep.subr.bf16.mxu0 %v6606
        %6813 = vmatpush1.bf16.msra.mxu0 %v6605
        %6814 = vmatprep.subr.bf16.mxu0 %v6610
        %6815 = vmatpush1.bf16.msra.mxu0 %v6609
        %6816 = vmatprep.subr.bf16.mxu0 %v6614
        %6817 = vmatpush1.bf16.msra.mxu0 %v6613
        %6818 = vmatprep.subr.bf16.mxu0 %v6618
        %6819 = vmatpush1.bf16.msra.mxu0 %v6617
        %6820 = vmatprep.subr.bf16.mxu0 0
        %6821 = vmatpush1.bf16.msra.mxu0 0
        %6822 = vmatprep.mubr.bf16.mxu0 %v6680
        %6823 = vmatmul.mubr.bf16.gmra.mrb[0].mxu0 %v6333
        %v6824 = vpop.f32.mrb[0].mxu0
        %v6825 = vadd.f32 0.0, %v6824
        %v6826 = vpop.f32.mrb[0].mxu0
        %v6827 = vadd.f32 0.0, %v6826
        %v6828 = vpop.f32.mrb[0].mxu0
        %v6829 = vadd.f32 0.0, %v6828
        %v6830 = vpop.f32.mrb[0].mxu0
        %v6831 = vadd.f32 0.0, %v6830
        %6832 = vmatprep.mubr.bf16.mxu0 %v6683
        %6833 = vmatmul.mubr.bf16.gmra.mrb[0].mxu0 %v6344
        %v6834 = vpop.f32.mrb[0].mxu0
        %v6835 = vadd.f32 0.0, %v6834
        %v6836 = vpop.f32.mrb[0].mxu0
        %v6837 = vadd.f32 0.0, %v6836
        %v6838 = vpop.f32.mrb[0].mxu0
        %v6839 = vadd.f32 0.0, %v6838
        %v6840 = vpop.f32.mrb[0].mxu0
        %v6841 = vadd.f32 0.0, %v6840
        %6842 = vmatprep.mubr.bf16.mxu0 %v6686
        %6843 = vmatmul.mubr.bf16.gmra.mrb[0].mxu0 %v6352
        %v6844 = vpop.f32.mrb[0].mxu0
        %v6845 = vadd.f32 0.0, %v6844
        %v6846 = vpop.f32.mrb[0].mxu0
        %v6847 = vadd.f32 0.0, %v6846
        %v6848 = vpop.f32.mrb[0].mxu0
        %v6849 = vadd.f32 0.0, %v6848
        %v6850 = vpop.f32.mrb[0].mxu0
        %v6851 = vadd.f32 0.0, %v6850
        %6852 = vmatprep.mubr.bf16.mxu0 %v6689
        %6853 = vmatmul.mubr.bf16.gmra.mrb[0].mxu0 %v6360
        %v6854 = vpop.f32.mrb[0].mxu0
        %v6855 = vadd.f32 0.0, %v6854
        %v6856 = vpop.f32.mrb[0].mxu0
        %v6857 = vadd.f32 0.0, %v6856
        %v6858 = vpop.f32.mrb[0].mxu0
        %v6859 = vadd.f32 0.0, %v6858
        %v6860 = vpop.f32.mrb[0].mxu0
        %v6861 = vadd.f32 0.0, %v6860
        %6862 = vmatprep.mubr.bf16.mxu0 %v6692
        %6863 = vmatmul.mubr.bf16.gmra.mrb[0].mxu0 %v6368
        %v6864 = vpop.f32.mrb[0].mxu0
        %v6865 = vadd.f32 0.0, %v6864
        %v6866 = vpop.f32.mrb[0].mxu0
        %v6867 = vadd.f32 0.0, %v6866
        %v6868 = vpop.f32.mrb[0].mxu0
        %v6869 = vadd.f32 0.0, %v6868
        %v6870 = vpop.f32.mrb[0].mxu0
        %v6871 = vadd.f32 0.0, %v6870
        %6872 = vmatprep.mubr.bf16.mxu0 %v6695
        %6873 = vmatmul.mubr.bf16.gmra.mrb[0].mxu0 %v6367
        %v6874 = vpop.f32.mrb[0].mxu0
        %v6875 = vadd.f32 0.0, %v6874
        %v6876 = vpop.f32.mrb[0].mxu0
        %v6877 = vadd.f32 0.0, %v6876
        %v6878 = vpop.f32.mrb[0].mxu0
        %v6879 = vadd.f32 0.0, %v6878
        %v6880 = vpop.f32.mrb[0].mxu0
        %v6881 = vadd.f32 0.0, %v6880
        %6882 = vdwg.mxu0
        %v6883 = vadd.f32 %v6218, %v6732
        %v6884 = vadd.f32 %v6219, %v6734
        %v6885 = vadd.f32 %v6220, %v6825
        %v6886 = vadd.f32 %v6221, %v6827
        %v6887 = vadd.f32 %v6222, %v6736
        %v6888 = vadd.f32 %v6223, %v6738
        %v6889 = vadd.f32 %v6224, %v6829
        %v6890 = vadd.f32 %v6225, %v6831
        %v6891 = vadd.f32 %v6226, %v6742
        %v6892 = vadd.f32 %v6227, %v6744
        %v6893 = vadd.f32 %v6228, %v6835
        %v6894 = vadd.f32 %v6229, %v6837
        %v6895 = vadd.f32 %v6230, %v6746
        %v6896 = vadd.f32 %v6231, %v6748
        %v6897 = vadd.f32 %v6232, %v6839
        %v6898 = vadd.f32 %v6233, %v6841
        %v6899 = vadd.f32 %v6234, %v6752
        %v6900 = vadd.f32 %v6235, %v6754
        %v6901 = vadd.f32 %v6236, %v6845
        %v6902 = vadd.f32 %v6237, %v6847
        %v6903 = vadd.f32 %v6238, %v6756
        %v6904 = vadd.f32 %v6239, %v6758
        %v6905 = vadd.f32 %v6240, %v6849
        %v6906 = vadd.f32 %v6241, %v6851
        %v6907 = vadd.f32 %v6242, %v6762
        %v6908 = vadd.f32 %v6243, %v6764
        %v6909 = vadd.f32 %v6244, %v6855
        %v6910 = vadd.f32 %v6245, %v6857
        %v6911 = vadd.f32 %v6246, %v6766
        %v6912 = vadd.f32 %v6247, %v6768
        %v6913 = vadd.f32 %v6248, %v6859
        %v6914 = vadd.f32 %v6249, %v6861
        %v6915 = vadd.f32 %v6250, %v6772
        %v6916 = vadd.f32 %v6251, %v6774
        %v6917 = vadd.f32 %v6252, %v6865
        %v6918 = vadd.f32 %v6253, %v6867
        %v6919 = vadd.f32 %v6254, %v6776
        %v6920 = vadd.f32 %v6255, %v6778
        %v6921 = vadd.f32 %v6256, %v6869
        %v6922 = vadd.f32 %v6257, %v6871
        %v6923 = vadd.f32 %v6258, %v6782
        %v6924 = vadd.f32 %v6259, %v6784
        %v6925 = vadd.f32 %v6260, %v6875
        %v6926 = vadd.f32 %v6261, %v6877
        %v6927 = vadd.f32 %v6262, %v6786
        %v6928 = vadd.f32 %v6263, %v6788
        %v6929 = vadd.f32 %v6264, %v6879
        %v6930 = vadd.f32 %v6265, %v6881
        %s6931 = scalar_lea.vmem %s4, 1920
        %v6932 = vld [vmem:[%s6931] sm:$0xff]
        %v6933 = vld [vmem:[%s6931 + $0x8] sm:$0xff]
        %v6934 = vld [vmem:[%s6931 + $0x10] sm:$0xff]
        %v6935 = vld [vmem:[%s6931 + $0x18] sm:$0xff]
        %v6936 = vld [vmem:[%s6931 + $0x20] sm:$0xff]
        %v6937 = vld [vmem:[%s6931 + $0x28] sm:$0xff]
        %v6938 = vld [vmem:[%s6931 + $0x30] sm:$0xff]
        %v6939 = vld [vmem:[%s6931 + $0x38] sm:$0xff]
        %v6940 = vld [vmem:[%s6931 + $0x40] sm:$0xff]
        %v6941 = vld [vmem:[%s6931 + $0x48] sm:$0xff]
        %v6942 = vld [vmem:[%s6931 + $0x50] sm:$0xff]
        %v6943 = vld [vmem:[%s6931 + $0x58] sm:$0xff]
        %v6944 = vld [vmem:[%s6931 + $0x60] sm:$0xff]
        %v6945 = vld [vmem:[%s6931 + $0x68] sm:$0xff]
        %v6946 = vld [vmem:[%s6931 + $0x70] sm:$0xff]
        %v6947 = vld [vmem:[%s6931 + $0x78] sm:$0xff]
        %v6948 = vld [vmem:[%s6931 + $0x80] sm:$0xff]
        %v6949 = vld [vmem:[%s6931 + $0x88] sm:$0xff]
        %v6950 = vld [vmem:[%s6931 + $0x90] sm:$0xff]
        %v6951 = vld [vmem:[%s6931 + $0x98] sm:$0xff]
        %v6952 = vld [vmem:[%s6931 + $0xa0] sm:$0xff]
        %v6953 = vld [vmem:[%s6931 + $0xa8] sm:$0xff]
        %v6954 = vld [vmem:[%s6931 + $0xb0] sm:$0xff]
        %v6955 = vld [vmem:[%s6931 + $0xb8] sm:$0xff]
        %v6956 = vld [vmem:[%s6931 + $0xc0] sm:$0xff]
        %v6957 = vld [vmem:[%s6931 + $0xc8] sm:$0xff]
        %v6958 = vld [vmem:[%s6931 + $0xd0] sm:$0xff]
        %v6959 = vld [vmem:[%s6931 + $0xd8] sm:$0xff]
        %v6960 = vld [vmem:[%s6931 + $0xe0] sm:$0xff]
        %v6961 = vld [vmem:[%s6931 + $0xe8] sm:$0xff]
        %v6962 = vld [vmem:[%s6931 + $0xf0] sm:$0xff]
        %v6963 = vld [vmem:[%s6931 + $0xf8] sm:$0xff]
        %v6964 = vld [vmem:[%s6931 + $0x100] sm:$0xff]
        %v6965 = vld [vmem:[%s6931 + $0x108] sm:$0xff]
        %v6966 = vld [vmem:[%s6931 + $0x110] sm:$0xff]
        %v6967 = vld [vmem:[%s6931 + $0x118] sm:$0xff]
        %v6968 = vld [vmem:[%s6931 + $0x120] sm:$0xff]
        %v6969 = vld [vmem:[%s6931 + $0x128] sm:$0xff]
        %v6970 = vld [vmem:[%s6931 + $0x130] sm:$0xff]
        %v6971 = vld [vmem:[%s6931 + $0x138] sm:$0xff]
        %v6972 = vld [vmem:[%s6931 + $0x140] sm:$0xff]
        %v6973 = vld [vmem:[%s6931 + $0x148] sm:$0xff]
        %v6974 = vld [vmem:[%s6931 + $0x150] sm:$0xff]
        %v6975 = vld [vmem:[%s6931 + $0x158] sm:$0xff]
        %v6976 = vld [vmem:[%s6931 + $0x160] sm:$0xff]
        %v6977 = vld [vmem:[%s6931 + $0x168] sm:$0xff]
        %v6978 = vld [vmem:[%s6931 + $0x170] sm:$0xff]
        %v6979 = vld [vmem:[%s6931 + $0x178] sm:$0xff]
        %v6980 = vld [vmem:[%s6931 + $0x180] sm:$0xff]
        %v6981 = vld [vmem:[%s6931 + $0x188] sm:$0xff]
        %v6982 = vld [vmem:[%s6931 + $0x190] sm:$0xff]
        %v6983 = vld [vmem:[%s6931 + $0x198] sm:$0xff]
        %v6984 = vld [vmem:[%s6931 + $0x1a0] sm:$0xff]
        %v6985 = vld [vmem:[%s6931 + $0x1a8] sm:$0xff]
        %v6986 = vld [vmem:[%s6931 + $0x1b0] sm:$0xff]
        %v6987 = vld [vmem:[%s6931 + $0x1b8] sm:$0xff]
        %v6988 = vld [vmem:[%s6931 + $0x1c0] sm:$0xff]
        %v6989 = vld [vmem:[%s6931 + $0x1c8] sm:$0xff]
        %v6990 = vld [vmem:[%s6931 + $0x1d0] sm:$0xff]
        %v6991 = vld [vmem:[%s6931 + $0x1d8] sm:$0xff]
        %v6992 = vrot.slane %v4377, 2
        %v6993 = vrot.slane %v4379, 2
        %v6994 = vsel %vm2640, %v6992, %v6993
        %v6995 = vrot.slane %v4378, 2
        %v6996 = vrot.slane %v4380, 2
        %v6997 = vsel %vm2640, %v6995, %v6996
        %v6998 = vrot.slane %v4381, 2
        %v6999 = vsel %vm2640, %v6993, %v6998
        %v7000 = vrot.slane %v4382, 2
        %v7001 = vsel %vm2640, %v6996, %v7000
        %v7002 = vrot.slane %v4383, 2
        %v7003 = vsel %vm2640, %v6998, %v7002
        %v7004 = vrot.slane %v4384, 2
        %v7005 = vsel %vm2640, %v7000, %v7004
        %v7006 = vrot.slane %v4385, 2
        %v7007 = vsel %vm2640, %v7002, %v7006
        %v7008 = vrot.slane %v4386, 2
        %v7009 = vsel %vm2640, %v7004, %v7008
        %v7010 = vrot.slane %v4387, 2
        %v7011 = vsel %vm2640, %v7006, %v7010
        %v7012 = vrot.slane %v4388, 2
        %v7013 = vsel %vm2640, %v7008, %v7012
        %v7080 = vunpack.c.l.b16 %v6932
        %v7081 = vunpack.c.h.b16 %v6932
        %v7082 = vunpack.c.l.b16 %v6933
        %v7083 = vunpack.c.h.b16 %v6933
        %v7084 = vunpack.c.l.b16 %v6934
        %v7085 = vunpack.c.h.b16 %v6934
        %v7086 = vunpack.c.l.b16 %v6935
        %v7087 = vunpack.c.h.b16 %v6935
        %v7088 = vunpack.c.l.b16 %v6936
        %v7089 = vunpack.c.h.b16 %v6936
        %v7090 = vunpack.c.l.b16 %v6937
        %v7091 = vunpack.c.h.b16 %v6937
        %v7092 = vunpack.c.l.b16 %v6938
        %v7093 = vunpack.c.h.b16 %v6938
        %v7094 = vunpack.c.l.b16 %v6939
        %v7095 = vunpack.c.h.b16 %v6939
        %v7096 = vunpack.c.l.b16 %v6940
        %v7097 = vunpack.c.h.b16 %v6940
        %v7098 = vunpack.c.l.b16 %v6941
        %v7099 = vunpack.c.h.b16 %v6941
        %v7100 = vunpack.c.l.b16 %v6942
        %v7101 = vunpack.c.h.b16 %v6942
        %v7102 = vunpack.c.l.b16 %v6943
        %v7103 = vunpack.c.h.b16 %v6943
        %v7104 = vunpack.c.l.b16 %v6944
        %v7105 = vunpack.c.h.b16 %v6944
        %v7106 = vunpack.c.l.b16 %v6945
        %v7107 = vunpack.c.h.b16 %v6945
        %v7108 = vunpack.c.l.b16 %v6946
        %v7109 = vunpack.c.h.b16 %v6946
        %v7110 = vunpack.c.l.b16 %v6947
        %v7111 = vunpack.c.h.b16 %v6947
        %v7112 = vunpack.c.l.b16 %v6948
        %v7113 = vunpack.c.h.b16 %v6948
        %v7114 = vunpack.c.l.b16 %v6949
        %v7115 = vunpack.c.h.b16 %v6949
        %v7116 = vunpack.c.l.b16 %v6950
        %v7117 = vunpack.c.h.b16 %v6950
        %v7118 = vunpack.c.l.b16 %v6951
        %v7119 = vunpack.c.h.b16 %v6951
        %v7120 = vunpack.c.l.b16 %v6952
        %v7121 = vunpack.c.h.b16 %v6952
        %v7122 = vunpack.c.l.b16 %v6953
        %v7123 = vunpack.c.h.b16 %v6953
        %v7124 = vunpack.c.l.b16 %v6954
        %v7125 = vunpack.c.h.b16 %v6954
        %v7126 = vunpack.c.l.b16 %v6955
        %v7127 = vunpack.c.h.b16 %v6955
        %v7128 = vunpack.c.l.b16 %v6956
        %v7129 = vunpack.c.h.b16 %v6956
        %v7130 = vunpack.c.l.b16 %v6957
        %v7131 = vunpack.c.h.b16 %v6957
        %v7132 = vunpack.c.l.b16 %v6958
        %v7133 = vunpack.c.h.b16 %v6958
        %v7134 = vunpack.c.l.b16 %v6959
        %v7135 = vunpack.c.h.b16 %v6959
        %v7136 = vunpack.c.l.b16 %v6960
        %v7137 = vunpack.c.h.b16 %v6960
        %v7138 = vunpack.c.l.b16 %v6961
        %v7139 = vunpack.c.h.b16 %v6961
        %v7140 = vunpack.c.l.b16 %v6962
        %v7141 = vunpack.c.h.b16 %v6962
        %v7142 = vunpack.c.l.b16 %v6963
        %v7143 = vunpack.c.h.b16 %v6963
        %v7144 = vunpack.c.l.b16 %v6964
        %v7145 = vunpack.c.h.b16 %v6964
        %v7146 = vunpack.c.l.b16 %v6965
        %v7147 = vunpack.c.h.b16 %v6965
        %v7148 = vunpack.c.l.b16 %v6966
        %v7149 = vunpack.c.h.b16 %v6966
        %v7150 = vunpack.c.l.b16 %v6967
        %v7151 = vunpack.c.h.b16 %v6967
        %v7152 = vunpack.c.l.b16 %v6968
        %v7153 = vunpack.c.h.b16 %v6968
        %v7154 = vunpack.c.l.b16 %v6969
        %v7155 = vunpack.c.h.b16 %v6969
        %v7156 = vunpack.c.l.b16 %v6970
        %v7157 = vunpack.c.h.b16 %v6970
        %v7158 = vunpack.c.l.b16 %v6971
        %v7159 = vunpack.c.h.b16 %v6971
        %v7160 = vunpack.c.l.b16 %v6972
        %v7161 = vunpack.c.h.b16 %v6972
        %v7162 = vunpack.c.l.b16 %v6973
        %v7163 = vunpack.c.h.b16 %v6973
        %v7164 = vunpack.c.l.b16 %v6974
        %v7165 = vunpack.c.h.b16 %v6974
        %v7166 = vunpack.c.l.b16 %v6975
        %v7167 = vunpack.c.h.b16 %v6975
        %v7168 = vunpack.c.l.b16 %v6976
        %v7169 = vunpack.c.h.b16 %v6976
        %v7170 = vunpack.c.l.b16 %v6977
        %v7171 = vunpack.c.h.b16 %v6977
        %v7172 = vunpack.c.l.b16 %v6978
        %v7173 = vunpack.c.h.b16 %v6978
        %v7174 = vunpack.c.l.b16 %v6979
        %v7175 = vunpack.c.h.b16 %v6979
        %v7176 = vunpack.c.l.b16 %v6980
        %v7177 = vunpack.c.h.b16 %v6980
        %v7178 = vunpack.c.l.b16 %v6981
        %v7179 = vunpack.c.h.b16 %v6981
        %v7180 = vunpack.c.l.b16 %v6982
        %v7181 = vunpack.c.h.b16 %v6982
        %v7182 = vunpack.c.l.b16 %v6983
        %v7183 = vunpack.c.h.b16 %v6983
        %v7184 = vunpack.c.l.b16 %v6984
        %v7185 = vunpack.c.h.b16 %v6984
        %v7186 = vunpack.c.l.b16 %v6985
        %v7187 = vunpack.c.h.b16 %v6985
        %v7188 = vunpack.c.l.b16 %v6986
        %v7189 = vunpack.c.h.b16 %v6986
        %v7190 = vunpack.c.l.b16 %v6987
        %v7191 = vunpack.c.h.b16 %v6987
        %v7192 = vunpack.c.l.b16 %v6988
        %v7193 = vunpack.c.h.b16 %v6988
        %v7194 = vunpack.c.l.b16 %v6989
        %v7195 = vunpack.c.h.b16 %v6989
        %v7196 = vunpack.c.l.b16 %v6990
        %v7197 = vunpack.c.h.b16 %v6990
        %v7198 = vunpack.c.l.b16 %v6991
        %v7199 = vunpack.c.h.b16 %v6991
        %v7200 = vpack.c.b16 %v7084, %v7080
        %v7201 = vpack.c.b16 %v7085, %v7081
        %v7202 = vpack.c.b16 %v7086, %v7082
        %v7203 = vpack.c.b16 %v7087, %v7083
        %v7204 = vpack.c.b16 %v7092, %v7088
        %v7205 = vpack.c.b16 %v7093, %v7089
        %v7206 = vpack.c.b16 %v7094, %v7090
        %v7207 = vpack.c.b16 %v7095, %v7091
        %v7208 = vpack.c.b16 %v7100, %v7096
        %v7209 = vpack.c.b16 %v7101, %v7097
        %v7210 = vpack.c.b16 %v7102, %v7098
        %v7211 = vpack.c.b16 %v7103, %v7099
        %v7212 = vpack.c.b16 %v7108, %v7104
        %v7213 = vpack.c.b16 %v7109, %v7105
        %v7214 = vpack.c.b16 %v7110, %v7106
        %v7215 = vpack.c.b16 %v7111, %v7107
        %v7216 = vpack.c.b16 %v7116, %v7112
        %v7217 = vpack.c.b16 %v7117, %v7113
        %v7218 = vpack.c.b16 %v7118, %v7114
        %v7219 = vpack.c.b16 %v7119, %v7115
        %v7220 = vpack.c.b16 %v7124, %v7120
        %v7221 = vpack.c.b16 %v7125, %v7121
        %v7222 = vpack.c.b16 %v7126, %v7122
        %v7223 = vpack.c.b16 %v7127, %v7123
        %v7224 = vpack.c.b16 %v7132, %v7128
        %v7225 = vpack.c.b16 %v7133, %v7129
        %v7226 = vpack.c.b16 %v7134, %v7130
        %v7227 = vpack.c.b16 %v7135, %v7131
        %v7228 = vpack.c.b16 %v7140, %v7136
        %v7229 = vpack.c.b16 %v7141, %v7137
        %v7230 = vpack.c.b16 %v7142, %v7138
        %v7231 = vpack.c.b16 %v7143, %v7139
        %v7232 = vpack.c.b16 %v7148, %v7144
        %v7233 = vpack.c.b16 %v7149, %v7145
        %v7234 = vpack.c.b16 %v7150, %v7146
        %v7235 = vpack.c.b16 %v7151, %v7147
        %v7236 = vpack.c.b16 %v7156, %v7152
        %v7237 = vpack.c.b16 %v7157, %v7153
        %v7238 = vpack.c.b16 %v7158, %v7154
        %v7239 = vpack.c.b16 %v7159, %v7155
        %v7240 = vpack.c.b16 %v7164, %v7160
        %v7241 = vpack.c.b16 %v7165, %v7161
        %v7242 = vpack.c.b16 %v7166, %v7162
        %v7243 = vpack.c.b16 %v7167, %v7163
        %v7244 = vpack.c.b16 %v7172, %v7168
        %v7245 = vpack.c.b16 %v7173, %v7169
        %v7246 = vpack.c.b16 %v7174, %v7170
        %v7247 = vpack.c.b16 %v7175, %v7171
        %v7248 = vpack.c.b16 %v7180, %v7176
        %v7249 = vpack.c.b16 %v7181, %v7177
        %v7250 = vpack.c.b16 %v7182, %v7178
        %v7251 = vpack.c.b16 %v7183, %v7179
        %v7252 = vpack.c.b16 %v7188, %v7184
        %v7253 = vpack.c.b16 %v7189, %v7185
        %v7254 = vpack.c.b16 %v7190, %v7186
        %v7255 = vpack.c.b16 %v7191, %v7187
        %v7256 = vpack.c.b16 %v7196, %v7192
        %v7257 = vpack.c.b16 %v7197, %v7193
        %v7258 = vpack.c.b16 %v7198, %v7194
        %v7259 = vpack.c.b16 %v7199, %v7195
        %v7321 = vsel %vm4910, %v6997, 0
        %v7324 = vsel %vm4910, %v7001, 0
        %v7327 = vsel %vm4910, %v7005, 0
        %v7330 = vsel %vm4910, %v7009, 0
        %v7333 = vsel %vm4910, %v7013, 0
        %v7336 = vsel %vm4910, %v7012, 0
        %7338 = vmatprep.subr.bf16.mxu0 %v7201
        %7339 = vmatpush1.bf16.msra.mxu0 %v7200
        %7340 = vmatprep.subr.bf16.mxu0 %v7205
        %7341 = vmatpush1.bf16.msra.mxu0 %v7204
        %7342 = vmatprep.subr.bf16.mxu0 %v7209
        %7343 = vmatpush1.bf16.msra.mxu0 %v7208
        %7344 = vmatprep.subr.bf16.mxu0 %v7213
        %7345 = vmatpush1.bf16.msra.mxu0 %v7212
        %7346 = vmatprep.subr.bf16.mxu0 %v7217
        %7347 = vmatpush1.bf16.msra.mxu0 %v7216
        %7348 = vmatprep.subr.bf16.mxu0 %v7221
        %7349 = vmatpush1.bf16.msra.mxu0 %v7220
        %7350 = vmatprep.subr.bf16.mxu0 %v7225
        %7351 = vmatpush1.bf16.msra.mxu0 %v7224
        %7352 = vmatprep.subr.bf16.mxu0 %v7229
        %7353 = vmatpush1.bf16.msra.mxu0 %v7228
        %7354 = vmatprep.subr.bf16.mxu0 %v7233
        %7355 = vmatpush1.bf16.msra.mxu0 %v7232
        %7356 = vmatprep.subr.bf16.mxu0 %v7237
        %7357 = vmatpush1.bf16.msra.mxu0 %v7236
        %7358 = vmatprep.subr.bf16.mxu0 %v7241
        %7359 = vmatpush1.bf16.msra.mxu0 %v7240
        %7360 = vmatprep.subr.bf16.mxu0 %v7245
        %7361 = vmatpush1.bf16.msra.mxu0 %v7244
        %7362 = vmatprep.subr.bf16.mxu0 %v7249
        %7363 = vmatpush1.bf16.msra.mxu0 %v7248
        %7364 = vmatprep.subr.bf16.mxu0 %v7253
        %7365 = vmatpush1.bf16.msra.mxu0 %v7252
        %7366 = vmatprep.subr.bf16.mxu0 %v7257
        %7367 = vmatpush1.bf16.msra.mxu0 %v7256
        %7368 = vmatprep.subr.bf16.mxu0 0
        %7369 = vmatpush1.bf16.msra.mxu0 0
        %7370 = vmatprep.mubr.bf16.mxu0 %v7321
        %7371 = vmatmul.mubr.bf16.gmra.mrb[0].mxu0 %v6994
        %v7372 = vpop.f32.mrb[0].mxu0
        %v7373 = vadd.f32 0.0, %v7372
        %v7374 = vpop.f32.mrb[0].mxu0
        %v7375 = vadd.f32 0.0, %v7374
        %v7376 = vpop.f32.mrb[0].mxu0
        %v7377 = vadd.f32 0.0, %v7376
        %v7378 = vpop.f32.mrb[0].mxu0
        %v7379 = vadd.f32 0.0, %v7378
        %7380 = vmatprep.mubr.bf16.mxu0 %v7324
        %7381 = vmatmul.mubr.bf16.gmra.mrb[0].mxu0 %v6999
        %v7382 = vpop.f32.mrb[0].mxu0
        %v7383 = vadd.f32 0.0, %v7382
        %v7384 = vpop.f32.mrb[0].mxu0
        %v7385 = vadd.f32 0.0, %v7384
        %v7386 = vpop.f32.mrb[0].mxu0
        %v7387 = vadd.f32 0.0, %v7386
        %v7388 = vpop.f32.mrb[0].mxu0
        %v7389 = vadd.f32 0.0, %v7388
        %7390 = vmatprep.mubr.bf16.mxu0 %v7327
        %7391 = vmatmul.mubr.bf16.gmra.mrb[0].mxu0 %v7003
        %v7392 = vpop.f32.mrb[0].mxu0
        %v7393 = vadd.f32 0.0, %v7392
        %v7394 = vpop.f32.mrb[0].mxu0
        %v7395 = vadd.f32 0.0, %v7394
        %v7396 = vpop.f32.mrb[0].mxu0
        %v7397 = vadd.f32 0.0, %v7396
        %v7398 = vpop.f32.mrb[0].mxu0
        %v7399 = vadd.f32 0.0, %v7398
        %7400 = vmatprep.mubr.bf16.mxu0 %v7330
        %7401 = vmatmul.mubr.bf16.gmra.mrb[0].mxu0 %v7007
        %v7402 = vpop.f32.mrb[0].mxu0
        %v7403 = vadd.f32 0.0, %v7402
        %v7404 = vpop.f32.mrb[0].mxu0
        %v7405 = vadd.f32 0.0, %v7404
        %v7406 = vpop.f32.mrb[0].mxu0
        %v7407 = vadd.f32 0.0, %v7406
        %v7408 = vpop.f32.mrb[0].mxu0
        %v7409 = vadd.f32 0.0, %v7408
        %7410 = vmatprep.mubr.bf16.mxu0 %v7333
        %7411 = vmatmul.mubr.bf16.gmra.mrb[0].mxu0 %v7011
        %v7412 = vpop.f32.mrb[0].mxu0
        %v7413 = vadd.f32 0.0, %v7412
        %v7414 = vpop.f32.mrb[0].mxu0
        %v7415 = vadd.f32 0.0, %v7414
        %v7416 = vpop.f32.mrb[0].mxu0
        %v7417 = vadd.f32 0.0, %v7416
        %v7418 = vpop.f32.mrb[0].mxu0
        %v7419 = vadd.f32 0.0, %v7418
        %7420 = vmatprep.mubr.bf16.mxu0 %v7336
        %7421 = vmatmul.mubr.bf16.gmra.mrb[0].mxu0 %v7010
        %v7422 = vpop.f32.mrb[0].mxu0
        %v7423 = vadd.f32 0.0, %v7422
        %v7424 = vpop.f32.mrb[0].mxu0
        %v7425 = vadd.f32 0.0, %v7424
        %v7426 = vpop.f32.mrb[0].mxu0
        %v7427 = vadd.f32 0.0, %v7426
        %v7428 = vpop.f32.mrb[0].mxu0
        %v7429 = vadd.f32 0.0, %v7428
        %7430 = vdwg.mxu0
        %7431 = vmatprep.subr.bf16.mxu0 %v7203
        %7432 = vmatpush1.bf16.msra.mxu0 %v7202
        %7433 = vmatprep.subr.bf16.mxu0 %v7207
        %7434 = vmatpush1.bf16.msra.mxu0 %v7206
        %7435 = vmatprep.subr.bf16.mxu0 %v7211
        %7436 = vmatpush1.bf16.msra.mxu0 %v7210
        %7437 = vmatprep.subr.bf16.mxu0 %v7215
        %7438 = vmatpush1.bf16.msra.mxu0 %v7214
        %7439 = vmatprep.subr.bf16.mxu0 %v7219
        %7440 = vmatpush1.bf16.msra.mxu0 %v7218
        %7441 = vmatprep.subr.bf16.mxu0 %v7223
        %7442 = vmatpush1.bf16.msra.mxu0 %v7222
        %7443 = vmatprep.subr.bf16.mxu0 %v7227
        %7444 = vmatpush1.bf16.msra.mxu0 %v7226
        %7445 = vmatprep.subr.bf16.mxu0 %v7231
        %7446 = vmatpush1.bf16.msra.mxu0 %v7230
        %7447 = vmatprep.subr.bf16.mxu0 %v7235
        %7448 = vmatpush1.bf16.msra.mxu0 %v7234
        %7449 = vmatprep.subr.bf16.mxu0 %v7239
        %7450 = vmatpush1.bf16.msra.mxu0 %v7238
        %7451 = vmatprep.subr.bf16.mxu0 %v7243
        %7452 = vmatpush1.bf16.msra.mxu0 %v7242
        %7453 = vmatprep.subr.bf16.mxu0 %v7247
        %7454 = vmatpush1.bf16.msra.mxu0 %v7246
        %7455 = vmatprep.subr.bf16.mxu0 %v7251
        %7456 = vmatpush1.bf16.msra.mxu0 %v7250
        %7457 = vmatprep.subr.bf16.mxu0 %v7255
        %7458 = vmatpush1.bf16.msra.mxu0 %v7254
        %7459 = vmatprep.subr.bf16.mxu0 %v7259
        %7460 = vmatpush1.bf16.msra.mxu0 %v7258
        %7461 = vmatprep.subr.bf16.mxu0 0
        %7462 = vmatpush1.bf16.msra.mxu0 0
        %7463 = vmatprep.mubr.bf16.mxu0 %v7321
        %7464 = vmatmul.mubr.bf16.gmra.mrb[0].mxu0 %v6994
        %v7465 = vpop.f32.mrb[0].mxu0
        %v7466 = vadd.f32 0.0, %v7465
        %v7467 = vpop.f32.mrb[0].mxu0
        %v7468 = vadd.f32 0.0, %v7467
        %v7469 = vpop.f32.mrb[0].mxu0
        %v7470 = vadd.f32 0.0, %v7469
        %v7471 = vpop.f32.mrb[0].mxu0
        %v7472 = vadd.f32 0.0, %v7471
        %7473 = vmatprep.mubr.bf16.mxu0 %v7324
        %7474 = vmatmul.mubr.bf16.gmra.mrb[0].mxu0 %v6999
        %v7475 = vpop.f32.mrb[0].mxu0
        %v7476 = vadd.f32 0.0, %v7475
        %v7477 = vpop.f32.mrb[0].mxu0
        %v7478 = vadd.f32 0.0, %v7477
        %v7479 = vpop.f32.mrb[0].mxu0
        %v7480 = vadd.f32 0.0, %v7479
        %v7481 = vpop.f32.mrb[0].mxu0
        %v7482 = vadd.f32 0.0, %v7481
        %7483 = vmatprep.mubr.bf16.mxu0 %v7327
        %7484 = vmatmul.mubr.bf16.gmra.mrb[0].mxu0 %v7003
        %v7485 = vpop.f32.mrb[0].mxu0
        %v7486 = vadd.f32 0.0, %v7485
        %v7487 = vpop.f32.mrb[0].mxu0
        %v7488 = vadd.f32 0.0, %v7487
        %v7489 = vpop.f32.mrb[0].mxu0
        %v7490 = vadd.f32 0.0, %v7489
        %v7491 = vpop.f32.mrb[0].mxu0
        %v7492 = vadd.f32 0.0, %v7491
        %7493 = vmatprep.mubr.bf16.mxu0 %v7330
        %7494 = vmatmul.mubr.bf16.gmra.mrb[0].mxu0 %v7007
        %v7495 = vpop.f32.mrb[0].mxu0
        %v7496 = vadd.f32 0.0, %v7495
        %v7497 = vpop.f32.mrb[0].mxu0
        %v7498 = vadd.f32 0.0, %v7497
        %v7499 = vpop.f32.mrb[0].mxu0
        %v7500 = vadd.f32 0.0, %v7499
        %v7501 = vpop.f32.mrb[0].mxu0
        %v7502 = vadd.f32 0.0, %v7501
        %7503 = vmatprep.mubr.bf16.mxu0 %v7333
        %7504 = vmatmul.mubr.bf16.gmra.mrb[0].mxu0 %v7011
        %v7505 = vpop.f32.mrb[0].mxu0
        %v7506 = vadd.f32 0.0, %v7505
        %v7507 = vpop.f32.mrb[0].mxu0
        %v7508 = vadd.f32 0.0, %v7507
        %v7509 = vpop.f32.mrb[0].mxu0
        %v7510 = vadd.f32 0.0, %v7509
        %v7511 = vpop.f32.mrb[0].mxu0
        %v7512 = vadd.f32 0.0, %v7511
        %7513 = vmatprep.mubr.bf16.mxu0 %v7336
        %7514 = vmatmul.mubr.bf16.gmra.mrb[0].mxu0 %v7010
        %v7515 = vpop.f32.mrb[0].mxu0
        %v7516 = vadd.f32 0.0, %v7515
        %v7517 = vpop.f32.mrb[0].mxu0
        %v7518 = vadd.f32 0.0, %v7517
        %v7519 = vpop.f32.mrb[0].mxu0
        %v7520 = vadd.f32 0.0, %v7519
        %v7521 = vpop.f32.mrb[0].mxu0
        %v7522 = vadd.f32 0.0, %v7521
        %7523 = vdwg.mxu0
        %v7524 = vadd.f32 %v6883, %v7373
        %v7525 = vadd.f32 %v6884, %v7375
        %v7526 = vadd.f32 %v6885, %v7466
        %v7527 = vadd.f32 %v6886, %v7468
        %v7528 = vadd.f32 %v6887, %v7377
        %v7529 = vadd.f32 %v6888, %v7379
        %v7530 = vadd.f32 %v6889, %v7470
        %v7531 = vadd.f32 %v6890, %v7472
        %v7532 = vadd.f32 %v6891, %v7383
        %v7533 = vadd.f32 %v6892, %v7385
        %v7534 = vadd.f32 %v6893, %v7476
        %v7535 = vadd.f32 %v6894, %v7478
        %v7536 = vadd.f32 %v6895, %v7387
        %v7537 = vadd.f32 %v6896, %v7389
        %v7538 = vadd.f32 %v6897, %v7480
        %v7539 = vadd.f32 %v6898, %v7482
        %v7540 = vadd.f32 %v6899, %v7393
        %v7541 = vadd.f32 %v6900, %v7395
        %v7542 = vadd.f32 %v6901, %v7486
        %v7543 = vadd.f32 %v6902, %v7488
        %v7544 = vadd.f32 %v6903, %v7397
        %v7545 = vadd.f32 %v6904, %v7399
        %v7546 = vadd.f32 %v6905, %v7490
        %v7547 = vadd.f32 %v6906, %v7492
        %v7548 = vadd.f32 %v6907, %v7403
        %v7549 = vadd.f32 %v6908, %v7405
        %v7550 = vadd.f32 %v6909, %v7496
        %v7551 = vadd.f32 %v6910, %v7498
        %v7552 = vadd.f32 %v6911, %v7407
        %v7553 = vadd.f32 %v6912, %v7409
        %v7554 = vadd.f32 %v6913, %v7500
        %v7555 = vadd.f32 %v6914, %v7502
        %v7556 = vadd.f32 %v6915, %v7413
        %v7557 = vadd.f32 %v6916, %v7415
        %v7558 = vadd.f32 %v6917, %v7506
        %v7559 = vadd.f32 %v6918, %v7508
        %v7560 = vadd.f32 %v6919, %v7417
        %v7561 = vadd.f32 %v6920, %v7419
        %v7562 = vadd.f32 %v6921, %v7510
        %v7563 = vadd.f32 %v6922, %v7512
        %v7564 = vadd.f32 %v6923, %v7423
        %v7565 = vadd.f32 %v6924, %v7425
        %v7566 = vadd.f32 %v6925, %v7516
        %v7567 = vadd.f32 %v6926, %v7518
        %v7568 = vadd.f32 %v6927, %v7427
        %v7569 = vadd.f32 %v6928, %v7429
        %v7570 = vadd.f32 %v6929, %v7520
        %v7571 = vadd.f32 %v6930, %v7522
        %v7572 = vld [vmem:[%s5] sm:$0xf]
        %v7574 = vlaneseq
        %v7575 = vshrl.u32 %v7574, 7
        %v7576 = vsub.s32 0, %v7575
        %v7577 = vrot.slane %v7572, %v7576
        %v7578 = vlaneseq
        %v7579 = vshrl.u32 %v7578, 7
        %v7580 = vsub.s32 1, %v7579
        %v7581 = vrot.slane %v7572, %v7580
        %v7582 = vlaneseq
        %v7583 = vshrl.u32 %v7582, 7
        %v7584 = vsub.s32 2, %v7583
        %v7585 = vrot.slane %v7572, %v7584
        %v7586 = vlaneseq
        %v7587 = vshrl.u32 %v7586, 7
        %v7588 = vsub.s32 3, %v7587
        %v7589 = vrot.slane %v7572, %v7588
        %v7594 = vadd.f32 %v7524, %v7577
        %v7595 = vadd.f32 %v7525, %v7581
        %v7596 = vadd.f32 %v7526, %v7585
        %v7597 = vadd.f32 %v7527, %v7589
        %v7598 = vadd.f32 %v7528, %v7577
        %v7599 = vadd.f32 %v7529, %v7581
        %v7600 = vadd.f32 %v7530, %v7585
        %v7601 = vadd.f32 %v7531, %v7589
        %v7602 = vadd.f32 %v7532, %v7577
        %v7603 = vadd.f32 %v7533, %v7581
        %v7604 = vadd.f32 %v7534, %v7585
        %v7605 = vadd.f32 %v7535, %v7589
        %v7606 = vadd.f32 %v7536, %v7577
        %v7607 = vadd.f32 %v7537, %v7581
        %v7608 = vadd.f32 %v7538, %v7585
        %v7609 = vadd.f32 %v7539, %v7589
        %v7610 = vadd.f32 %v7540, %v7577
        %v7611 = vadd.f32 %v7541, %v7581
        %v7612 = vadd.f32 %v7542, %v7585
        %v7613 = vadd.f32 %v7543, %v7589
        %v7614 = vadd.f32 %v7544, %v7577
        %v7615 = vadd.f32 %v7545, %v7581
        %v7616 = vadd.f32 %v7546, %v7585
        %v7617 = vadd.f32 %v7547, %v7589
        %v7618 = vadd.f32 %v7548, %v7577
        %v7619 = vadd.f32 %v7549, %v7581
        %v7620 = vadd.f32 %v7550, %v7585
        %v7621 = vadd.f32 %v7551, %v7589
        %v7622 = vadd.f32 %v7552, %v7577
        %v7623 = vadd.f32 %v7553, %v7581
        %v7624 = vadd.f32 %v7554, %v7585
        %v7625 = vadd.f32 %v7555, %v7589
        %v7626 = vadd.f32 %v7556, %v7577
        %v7627 = vadd.f32 %v7557, %v7581
        %v7628 = vadd.f32 %v7558, %v7585
        %v7629 = vadd.f32 %v7559, %v7589
        %v7630 = vadd.f32 %v7560, %v7577
        %v7631 = vadd.f32 %v7561, %v7581
        %v7632 = vadd.f32 %v7562, %v7585
        %v7633 = vadd.f32 %v7563, %v7589
        %v7634 = vadd.f32 %v7564, %v7577
        %v7635 = vadd.f32 %v7565, %v7581
        %v7636 = vadd.f32 %v7566, %v7585
        %v7637 = vadd.f32 %v7567, %v7589
        %v7638 = vadd.f32 %v7568, %v7577
        %v7639 = vadd.f32 %v7569, %v7581
        %v7640 = vadd.f32 %v7570, %v7585
        %v7641 = vadd.f32 %v7571, %v7589
        %v7642 = vmax.f32 %v7594, 0.0
        %v7643 = vmax.f32 %v7595, 0.0
        %v7644 = vmax.f32 %v7596, 0.0
        %v7645 = vmax.f32 %v7597, 0.0
        %v7646 = vmax.f32 %v7598, 0.0
        %v7647 = vmax.f32 %v7599, 0.0
        %v7648 = vmax.f32 %v7600, 0.0
        %v7649 = vmax.f32 %v7601, 0.0
        %v7650 = vmax.f32 %v7602, 0.0
        %v7651 = vmax.f32 %v7603, 0.0
        %v7652 = vmax.f32 %v7604, 0.0
        %v7653 = vmax.f32 %v7605, 0.0
        %v7654 = vmax.f32 %v7606, 0.0
        %v7655 = vmax.f32 %v7607, 0.0
        %v7656 = vmax.f32 %v7608, 0.0
        %v7657 = vmax.f32 %v7609, 0.0
        %v7658 = vmax.f32 %v7610, 0.0
        %v7659 = vmax.f32 %v7611, 0.0
        %v7660 = vmax.f32 %v7612, 0.0
        %v7661 = vmax.f32 %v7613, 0.0
        %v7662 = vmax.f32 %v7614, 0.0
        %v7663 = vmax.f32 %v7615, 0.0
        %v7664 = vmax.f32 %v7616, 0.0
        %v7665 = vmax.f32 %v7617, 0.0
        %v7666 = vmax.f32 %v7618, 0.0
        %v7667 = vmax.f32 %v7619, 0.0
        %v7668 = vmax.f32 %v7620, 0.0
        %v7669 = vmax.f32 %v7621, 0.0
        %v7670 = vmax.f32 %v7622, 0.0
        %v7671 = vmax.f32 %v7623, 0.0
        %v7672 = vmax.f32 %v7624, 0.0
        %v7673 = vmax.f32 %v7625, 0.0
        %v7674 = vmax.f32 %v7626, 0.0
        %v7675 = vmax.f32 %v7627, 0.0
        %v7676 = vmax.f32 %v7628, 0.0
        %v7677 = vmax.f32 %v7629, 0.0
        %v7678 = vmax.f32 %v7630, 0.0
        %v7679 = vmax.f32 %v7631, 0.0
        %v7680 = vmax.f32 %v7632, 0.0
        %v7681 = vmax.f32 %v7633, 0.0
        %v7682 = vmax.f32 %v7634, 0.0
        %v7683 = vmax.f32 %v7635, 0.0
        %v7684 = vmax.f32 %v7636, 0.0
        %v7685 = vmax.f32 %v7637, 0.0
        %v7686 = vmax.f32 %v7638, 0.0
        %v7687 = vmax.f32 %v7639, 0.0
        %v7688 = vmax.f32 %v7640, 0.0
        %v7689 = vmax.f32 %v7641, 0.0
        %7726 = vrot.lane.b32.xlu0 %v7643, 56
        %v7727 = vpop.permute.xlu0 %7726
        %7728 = vrot.lane.b32.xlu0 %v7644, 56
        %v7729 = vpop.permute.xlu0 %7728
        %7730 = vrot.lane.b32.xlu0 %v7645, 56
        %v7731 = vpop.permute.xlu0 %7730
        %7732 = vrot.lane.b32.xlu0 %v7647, 56
        %v7733 = vpop.permute.xlu0 %7732
        %7734 = vrot.lane.b32.xlu0 %v7648, 56
        %v7735 = vpop.permute.xlu0 %7734
        %7736 = vrot.lane.b32.xlu0 %v7649, 56
        %v7737 = vpop.permute.xlu0 %7736
        %7738 = vrot.lane.b32.xlu0 %v7651, 56
        %v7739 = vpop.permute.xlu0 %7738
        %7740 = vrot.lane.b32.xlu0 %v7652, 56
        %v7741 = vpop.permute.xlu0 %7740
        %7742 = vrot.lane.b32.xlu0 %v7653, 56
        %v7743 = vpop.permute.xlu0 %7742
        %7744 = vrot.lane.b32.xlu0 %v7655, 56
        %v7745 = vpop.permute.xlu0 %7744
        %7746 = vrot.lane.b32.xlu0 %v7656, 56
        %v7747 = vpop.permute.xlu0 %7746
        %7748 = vrot.lane.b32.xlu0 %v7657, 56
        %v7749 = vpop.permute.xlu0 %7748
        %7750 = vrot.lane.b32.xlu0 %v7659, 56
        %v7751 = vpop.permute.xlu0 %7750
        %7752 = vrot.lane.b32.xlu0 %v7660, 56
        %v7753 = vpop.permute.xlu0 %7752
        %7754 = vrot.lane.b32.xlu0 %v7661, 56
        %v7755 = vpop.permute.xlu0 %7754
        %7756 = vrot.lane.b32.xlu0 %v7663, 56
        %v7757 = vpop.permute.xlu0 %7756
        %7758 = vrot.lane.b32.xlu0 %v7664, 56
        %v7759 = vpop.permute.xlu0 %7758
        %7760 = vrot.lane.b32.xlu0 %v7665, 56
        %v7761 = vpop.permute.xlu0 %7760
        %7762 = vrot.lane.b32.xlu0 %v7667, 56
        %v7763 = vpop.permute.xlu0 %7762
        %7764 = vrot.lane.b32.xlu0 %v7668, 56
        %v7765 = vpop.permute.xlu0 %7764
        %7766 = vrot.lane.b32.xlu0 %v7669, 56
        %v7767 = vpop.permute.xlu0 %7766
        %7768 = vrot.lane.b32.xlu0 %v7671, 56
        %v7769 = vpop.permute.xlu0 %7768
        %7770 = vrot.lane.b32.xlu0 %v7672, 56
        %v7771 = vpop.permute.xlu0 %7770
        %7772 = vrot.lane.b32.xlu0 %v7673, 56
        %v7773 = vpop.permute.xlu0 %7772
        %7774 = vrot.lane.b32.xlu0 %v7675, 56
        %v7775 = vpop.permute.xlu0 %7774
        %7776 = vrot.lane.b32.xlu0 %v7676, 56
        %v7777 = vpop.permute.xlu0 %7776
        %7778 = vrot.lane.b32.xlu0 %v7677, 56
        %v7779 = vpop.permute.xlu0 %7778
        %7780 = vrot.lane.b32.xlu0 %v7679, 56
        %v7781 = vpop.permute.xlu0 %7780
        %7782 = vrot.lane.b32.xlu0 %v7680, 56
        %v7783 = vpop.permute.xlu0 %7782
        %7784 = vrot.lane.b32.xlu0 %v7681, 56
        %v7785 = vpop.permute.xlu0 %7784
        %7786 = vrot.lane.b32.xlu0 %v7683, 56
        %v7787 = vpop.permute.xlu0 %7786
        %7788 = vrot.lane.b32.xlu0 %v7684, 56
        %v7789 = vpop.permute.xlu0 %7788
        %7790 = vrot.lane.b32.xlu0 %v7685, 56
        %v7791 = vpop.permute.xlu0 %7790
        %7792 = vrot.lane.b32.xlu0 %v7687, 56
        %v7793 = vpop.permute.xlu0 %7792
        %7794 = vrot.lane.b32.xlu0 %v7688, 56
        %v7795 = vpop.permute.xlu0 %7794
        %7796 = vrot.lane.b32.xlu0 %v7689, 56
        %v7797 = vpop.permute.xlu0 %7796
        %vm7798 = vcmask 457728
        %v7799 = vsel %vm7798, %v7727, %v7729
        %v7800 = vsel %vm7798, %v7729, %v7731
        %v7801 = vsel %vm7798, %v7733, %v7735
        %v7802 = vsel %vm7798, %v7735, %v7737
        %v7803 = vsel %vm7798, %v7739, %v7741
        %v7804 = vsel %vm7798, %v7741, %v7743
        %v7805 = vsel %vm7798, %v7745, %v7747
        %v7806 = vsel %vm7798, %v7747, %v7749
        %v7807 = vsel %vm7798, %v7751, %v7753
        %v7808 = vsel %vm7798, %v7753, %v7755
        %v7809 = vsel %vm7798, %v7757, %v7759
        %v7810 = vsel %vm7798, %v7759, %v7761
        %v7811 = vsel %vm7798, %v7763, %v7765
        %v7812 = vsel %vm7798, %v7765, %v7767
        %v7813 = vsel %vm7798, %v7769, %v7771
        %v7814 = vsel %vm7798, %v7771, %v7773
        %v7815 = vsel %vm7798, %v7775, %v7777
        %v7816 = vsel %vm7798, %v7777, %v7779
        %v7817 = vsel %vm7798, %v7781, %v7783
        %v7818 = vsel %vm7798, %v7783, %v7785
        %v7819 = vsel %vm7798, %v7787, %v7789
        %v7820 = vsel %vm7798, %v7789, %v7791
        %v7821 = vsel %vm7798, %v7793, %v7795
        %v7822 = vsel %vm7798, %v7795, %v7797
        %v7847 = vmax.f32 %v7642, %v7799
        %v7848 = vmax.f32 %v7643, %v7800
        %v7849 = vmax.f32 %v7646, %v7801
        %v7850 = vmax.f32 %v7647, %v7802
        %v7851 = vmax.f32 %v7650, %v7803
        %v7852 = vmax.f32 %v7651, %v7804
        %v7853 = vmax.f32 %v7654, %v7805
        %v7854 = vmax.f32 %v7655, %v7806
        %v7855 = vmax.f32 %v7658, %v7807
        %v7856 = vmax.f32 %v7659, %v7808
        %v7857 = vmax.f32 %v7662, %v7809
        %v7858 = vmax.f32 %v7663, %v7810
        %v7859 = vmax.f32 %v7666, %v7811
        %v7860 = vmax.f32 %v7667, %v7812
        %v7861 = vmax.f32 %v7670, %v7813
        %v7862 = vmax.f32 %v7671, %v7814
        %v7863 = vmax.f32 %v7674, %v7815
        %v7864 = vmax.f32 %v7675, %v7816
        %v7865 = vmax.f32 %v7678, %v7817
        %v7866 = vmax.f32 %v7679, %v7818
        %v7867 = vmax.f32 %v7682, %v7819
        %v7868 = vmax.f32 %v7683, %v7820
        %v7869 = vmax.f32 %v7686, %v7821
        %v7870 = vmax.f32 %v7687, %v7822
        %v7895 = vrot.slane %v7847, 1
        %v7896 = vrot.slane %v7849, 1
        %v7897 = vsel %vm3939, %v7895, %v7896
        %v7898 = vrot.slane %v7848, 1
        %v7899 = vrot.slane %v7850, 1
        %v7900 = vsel %vm3939, %v7898, %v7899
        %v7901 = vrot.slane %v7851, 1
        %v7902 = vsel %vm3939, %v7896, %v7901
        %v7903 = vrot.slane %v7852, 1
        %v7904 = vsel %vm3939, %v7899, %v7903
        %v7905 = vrot.slane %v7853, 1
        %v7906 = vsel %vm3939, %v7901, %v7905
        %v7907 = vrot.slane %v7854, 1
        %v7908 = vsel %vm3939, %v7903, %v7907
        %v7909 = vrot.slane %v7855, 1
        %v7910 = vsel %vm3939, %v7905, %v7909
        %v7911 = vrot.slane %v7856, 1
        %v7912 = vsel %vm3939, %v7907, %v7911
        %v7913 = vrot.slane %v7857, 1
        %v7914 = vsel %vm3939, %v7909, %v7913
        %v7915 = vrot.slane %v7858, 1
        %v7916 = vsel %vm3939, %v7911, %v7915
        %v7917 = vrot.slane %v7859, 1
        %v7918 = vsel %vm3939, %v7913, %v7917
        %v7919 = vrot.slane %v7860, 1
        %v7920 = vsel %vm3939, %v7915, %v7919
        %v7921 = vrot.slane %v7861, 1
        %v7922 = vsel %vm3939, %v7917, %v7921
        %v7923 = vrot.slane %v7862, 1
        %v7924 = vsel %vm3939, %v7919, %v7923
        %v7925 = vrot.slane %v7863, 1
        %v7926 = vsel %vm3939, %v7921, %v7925
        %v7927 = vrot.slane %v7864, 1
        %v7928 = vsel %vm3939, %v7923, %v7927
        %v7929 = vrot.slane %v7865, 1
        %v7930 = vsel %vm3939, %v7925, %v7929
        %v7931 = vrot.slane %v7866, 1
        %v7932 = vsel %vm3939, %v7927, %v7931
        %v7933 = vrot.slane %v7867, 1
        %v7934 = vsel %vm3939, %v7929, %v7933
        %v7935 = vrot.slane %v7868, 1
        %v7936 = vsel %vm3939, %v7931, %v7935
        %v7937 = vrot.slane %v7869, 1
        %v7938 = vsel %vm3939, %v7933, %v7937
        %v7939 = vrot.slane %v7870, 1
        %v7940 = vsel %vm3939, %v7935, %v7939
        %v7965 = vmax.f32 %v7847, %v7897
        %v7966 = vmax.f32 %v7848, %v7900
        %v7967 = vmax.f32 %v7849, %v7902
        %v7968 = vmax.f32 %v7850, %v7904
        %v7969 = vmax.f32 %v7851, %v7906
        %v7970 = vmax.f32 %v7852, %v7908
        %v7971 = vmax.f32 %v7853, %v7910
        %v7972 = vmax.f32 %v7854, %v7912
        %v7973 = vmax.f32 %v7855, %v7914
        %v7974 = vmax.f32 %v7856, %v7916
        %v7975 = vmax.f32 %v7857, %v7918
        %v7976 = vmax.f32 %v7858, %v7920
        %v7977 = vmax.f32 %v7859, %v7922
        %v7978 = vmax.f32 %v7860, %v7924
        %v7979 = vmax.f32 %v7861, %v7926
        %v7980 = vmax.f32 %v7862, %v7928
        %v7981 = vmax.f32 %v7863, %v7930
        %v7982 = vmax.f32 %v7864, %v7932
        %v7983 = vmax.f32 %v7865, %v7934
        %v7984 = vmax.f32 %v7866, %v7936
        %v7985 = vmax.f32 %v7867, %v7938
        %v7986 = vmax.f32 %v7868, %v7940
        %v7987 = vmax.f32 %v7869, %v7937
        %v7988 = vmax.f32 %v7870, %v7939
        %v7989 = vpack.c.bf16 %v7967, %v7965
        %v7990 = vpack.c.bf16 %v7968, %v7966
        %v7991 = vpack.c.bf16 %v7971, %v7969
        %v7992 = vpack.c.bf16 %v7972, %v7970
        %v7993 = vpack.c.bf16 %v7975, %v7973
        %v7994 = vpack.c.bf16 %v7976, %v7974
        %v7995 = vpack.c.bf16 %v7979, %v7977
        %v7996 = vpack.c.bf16 %v7980, %v7978
        %v7997 = vpack.c.bf16 %v7983, %v7981
        %v7998 = vpack.c.bf16 %v7984, %v7982
        %v7999 = vpack.c.bf16 %v7987, %v7985
        %v8000 = vpack.c.bf16 %v7988, %v7986
        %v8001 = vld [vmem:[%s6] sm:$0xf]
        %v8002 = vld [vmem:[%s6 + $0x4] sm:$0xf]
        %v8003 = vld [vmem:[%s6 + $0x8] sm:$0xf]
        %v8004 = vld [vmem:[%s6 + $0xc] sm:$0xf]
        %v8009 = vunpack.c.l.b16 %v8001
        %v8010 = vunpack.c.l.b16 %v8002
        %v8011 = vunpack.c.l.b16 %v8003
        %v8012 = vunpack.c.l.b16 %v8004
        %v8013 = vpack.c.b16 %v8010, %v8009
        %v8014 = vpack.c.b16 %v8012, %v8011
        %v8016 = vsel %vm4256, %v8013, 0
        %v8019 = vsel %vm4256, %v8014, 0
        %v8022 = vand.u32 %v7999, %v4277
        %v8025 = vand.u32 %v8000, %v4277
        %8027 = vmatprep.subr.bf16.mxu0 %v7990
        %8028 = vmatpush1.bf16.msra.mxu0 %v7989
        %8029 = vmatprep.subr.bf16.mxu0 %v7992
        %8030 = vmatpush1.bf16.msra.mxu0 %v7991
        %8031 = vmatprep.subr.bf16.mxu0 %v7994
        %8032 = vmatpush1.bf16.msra.mxu0 %v7993
        %8033 = vmatprep.subr.bf16.mxu0 %v7996
        %8034 = vmatpush1.bf16.msra.mxu0 %v7995
        %8035 = vmatprep.subr.bf16.mxu0 %v7998
        %8036 = vmatpush1.bf16.msra.mxu0 %v7997
        %8037 = vmatprep.subr.bf16.mxu0 %v8025
        %8038 = vmatpush1.bf16.msra.mxu0 %v8022
        %8039 = vmatprep.subr.bf16.mxu0 0
        %8040 = vmatpush1.bf16.msra.mxu0 0
        %8041 = vmatprep.subr.bf16.mxu0 0
        %8042 = vmatpush1.bf16.msra.mxu0 0
        %8043 = vmatprep.subr.bf16.mxu0 0
        %8044 = vmatpush1.bf16.msra.mxu0 0
        %8045 = vmatprep.subr.bf16.mxu0 0
        %8046 = vmatpush1.bf16.msra.mxu0 0
        %8047 = vmatprep.subr.bf16.mxu0 0
        %8048 = vmatpush1.bf16.msra.mxu0 0
        %8049 = vmatprep.subr.bf16.mxu0 0
        %8050 = vmatpush1.bf16.msra.mxu0 0
        %8051 = vmatprep.subr.bf16.mxu0 0
        %8052 = vmatpush1.bf16.msra.mxu0 0
        %8053 = vmatprep.subr.bf16.mxu0 0
        %8054 = vmatpush1.bf16.msra.mxu0 0
        %8055 = vmatprep.subr.bf16.mxu0 0
        %8056 = vmatpush1.bf16.msra.mxu0 0
        %8057 = vmatprep.subr.bf16.mxu0 0
        %8058 = vmatpush1.bf16.msra.mxu0 0
        %8059 = vmatprep.mubr.bf16.mxu0 0
        %8060 = vmatmul.mubr.bf16.gmra.mrb[0].mxu0 %v8016
        %v8061 = vpop.f32.mrb[0].mxu0
        %v8062 = vadd.f32 0.0, %v8061
        %v8063 = vpop.f32.mrb[0].mxu0
        %v8064 = vadd.f32 0.0, %v8063
        %v8065 = vpop.f32.mrb[0].mxu0
        %v8066 = vadd.f32 0.0, %v8065
        %v8067 = vpop.f32.mrb[0].mxu0
        %v8068 = vadd.f32 0.0, %v8067
        %8069 = vmatprep.mubr.bf16.mxu0 0
        %8070 = vmatmul.mubr.bf16.gmra.mrb[0].mxu0 %v8019
        %v8071 = vpop.f32.mrb[0].mxu0
        %v8072 = vadd.f32 0.0, %v8071
        %v8073 = vpop.f32.mrb[0].mxu0
        %v8074 = vadd.f32 0.0, %v8073
        %v8075 = vpop.f32.mrb[0].mxu0
        %v8076 = vadd.f32 0.0, %v8075
        %v8077 = vpop.f32.mrb[0].mxu0
        %v8078 = vadd.f32 0.0, %v8077
        %8079 = vdwg.mxu0
        %v8080 = vpack.c.bf16 %v8062, %v8062
        %v8081 = vpack.c.bf16 %v8064, %v8064
        %v8082 = vld [vmem:[%s7] sm:$0xff]
        %v8083 = vld [vmem:[%s7 + $0x8] sm:$0xff]
        %v8084 = vld [vmem:[%s7 + $0x10] sm:$0xff]
        %v8085 = vld [vmem:[%s7 + $0x18] sm:$0xff]
        %v8086 = vld [vmem:[%s7 + $0x20] sm:$0xff]
        %v8087 = vld [vmem:[%s7 + $0x28] sm:$0xff]
        %v8088 = vld [vmem:[%s7 + $0x30] sm:$0xff]
        %v8089 = vld [vmem:[%s7 + $0x38] sm:$0xff]
        %v8090 = vld [vmem:[%s7 + $0x40] sm:$0xff]
        %v8091 = vld [vmem:[%s7 + $0x48] sm:$0xff]
        %v8092 = vld [vmem:[%s7 + $0x50] sm:$0xff]
        %v8093 = vld [vmem:[%s7 + $0x58] sm:$0xff]
        %v8094 = vld [vmem:[%s7 + $0x60] sm:$0xff]
        %v8095 = vld [vmem:[%s7 + $0x68] sm:$0xff]
        %v8096 = vld [vmem:[%s7 + $0x70] sm:$0xff]
        %v8097 = vld [vmem:[%s7 + $0x78] sm:$0xff]
        %v8098 = vld [vmem:[%s7 + $0x80] sm:$0xff]
        %v8099 = vld [vmem:[%s7 + $0x88] sm:$0xff]
        %v8100 = vld [vmem:[%s7 + $0x90] sm:$0xff]
        %v8101 = vld [vmem:[%s7 + $0x98] sm:$0xff]
        %v8102 = vld [vmem:[%s7 + $0xa0] sm:$0xff]
        %v8103 = vld [vmem:[%s7 + $0xa8] sm:$0xff]
        %v8104 = vld [vmem:[%s7 + $0xb0] sm:$0xff]
        %v8105 = vld [vmem:[%s7 + $0xb8] sm:$0xff]
        %v8106 = vld [vmem:[%s7 + $0xc0] sm:$0xff]
        %v8107 = vld [vmem:[%s7 + $0xc8] sm:$0xff]
        %v8108 = vld [vmem:[%s7 + $0xd0] sm:$0xff]
        %v8109 = vld [vmem:[%s7 + $0xd8] sm:$0xff]
        %v8110 = vld [vmem:[%s7 + $0xe0] sm:$0xff]
        %v8111 = vld [vmem:[%s7 + $0xe8] sm:$0xff]
        %v8112 = vld [vmem:[%s7 + $0xf0] sm:$0xff]
        %v8113 = vld [vmem:[%s7 + $0xf8] sm:$0xff]
        %v8114 = vld [vmem:[%s7 + $0x100] sm:$0xff]
        %v8115 = vld [vmem:[%s7 + $0x108] sm:$0xff]
        %v8116 = vld [vmem:[%s7 + $0x110] sm:$0xff]
        %v8117 = vld [vmem:[%s7 + $0x118] sm:$0xff]
        %v8118 = vld [vmem:[%s7 + $0x120] sm:$0xff]
        %v8119 = vld [vmem:[%s7 + $0x128] sm:$0xff]
        %v8120 = vld [vmem:[%s7 + $0x130] sm:$0xff]
        %v8121 = vld [vmem:[%s7 + $0x138] sm:$0xff]
        %v8122 = vld [vmem:[%s7 + $0x140] sm:$0xff]
        %v8123 = vld [vmem:[%s7 + $0x148] sm:$0xff]
        %v8124 = vld [vmem:[%s7 + $0x150] sm:$0xff]
        %v8125 = vld [vmem:[%s7 + $0x158] sm:$0xff]
        %v8126 = vld [vmem:[%s7 + $0x160] sm:$0xff]
        %v8127 = vld [vmem:[%s7 + $0x168] sm:$0xff]
        %v8128 = vld [vmem:[%s7 + $0x170] sm:$0xff]
        %v8129 = vld [vmem:[%s7 + $0x178] sm:$0xff]
        %v8130 = vld [vmem:[%s7 + $0x180] sm:$0xff]
        %v8131 = vld [vmem:[%s7 + $0x188] sm:$0xff]
        %v8132 = vpack.c.bf16 %v8066, %v8066
        %v8133 = vpack.c.bf16 %v8068, %v8068
        %s8134 = scalar_lea.vmem %s7, 400
        %v8135 = vld [vmem:[%s8134] sm:$0xff]
        %v8136 = vld [vmem:[%s8134 + $0x8] sm:$0xff]
        %v8137 = vld [vmem:[%s8134 + $0x10] sm:$0xff]
        %v8138 = vld [vmem:[%s8134 + $0x18] sm:$0xff]
        %v8139 = vld [vmem:[%s8134 + $0x20] sm:$0xff]
        %v8140 = vld [vmem:[%s8134 + $0x28] sm:$0xff]
        %v8141 = vld [vmem:[%s8134 + $0x30] sm:$0xff]
        %v8142 = vld [vmem:[%s8134 + $0x38] sm:$0xff]
        %v8143 = vld [vmem:[%s8134 + $0x40] sm:$0xff]
        %v8144 = vld [vmem:[%s8134 + $0x48] sm:$0xff]
        %v8145 = vld [vmem:[%s8134 + $0x50] sm:$0xff]
        %v8146 = vld [vmem:[%s8134 + $0x58] sm:$0xff]
        %v8147 = vld [vmem:[%s8134 + $0x60] sm:$0xff]
        %v8148 = vld [vmem:[%s8134 + $0x68] sm:$0xff]
        %v8149 = vld [vmem:[%s8134 + $0x70] sm:$0xff]
        %v8150 = vld [vmem:[%s8134 + $0x78] sm:$0xff]
        %v8151 = vld [vmem:[%s8134 + $0x80] sm:$0xff]
        %v8152 = vld [vmem:[%s8134 + $0x88] sm:$0xff]
        %v8153 = vld [vmem:[%s8134 + $0x90] sm:$0xff]
        %v8154 = vld [vmem:[%s8134 + $0x98] sm:$0xff]
        %v8155 = vld [vmem:[%s8134 + $0xa0] sm:$0xff]
        %v8156 = vld [vmem:[%s8134 + $0xa8] sm:$0xff]
        %v8157 = vld [vmem:[%s8134 + $0xb0] sm:$0xff]
        %v8158 = vld [vmem:[%s8134 + $0xb8] sm:$0xff]
        %v8159 = vld [vmem:[%s8134 + $0xc0] sm:$0xff]
        %v8160 = vld [vmem:[%s8134 + $0xc8] sm:$0xff]
        %v8161 = vld [vmem:[%s8134 + $0xd0] sm:$0xff]
        %v8162 = vld [vmem:[%s8134 + $0xd8] sm:$0xff]
        %v8163 = vld [vmem:[%s8134 + $0xe0] sm:$0xff]
        %v8164 = vld [vmem:[%s8134 + $0xe8] sm:$0xff]
        %v8165 = vld [vmem:[%s8134 + $0xf0] sm:$0xff]
        %v8166 = vld [vmem:[%s8134 + $0xf8] sm:$0xff]
        %v8167 = vld [vmem:[%s8134 + $0x100] sm:$0xff]
        %v8168 = vld [vmem:[%s8134 + $0x108] sm:$0xff]
        %v8169 = vld [vmem:[%s8134 + $0x110] sm:$0xff]
        %v8170 = vld [vmem:[%s8134 + $0x118] sm:$0xff]
        %v8171 = vld [vmem:[%s8134 + $0x120] sm:$0xff]
        %v8172 = vld [vmem:[%s8134 + $0x128] sm:$0xff]
        %v8173 = vld [vmem:[%s8134 + $0x130] sm:$0xff]
        %v8174 = vld [vmem:[%s8134 + $0x138] sm:$0xff]
        %v8175 = vld [vmem:[%s8134 + $0x140] sm:$0xff]
        %v8176 = vld [vmem:[%s8134 + $0x148] sm:$0xff]
        %v8177 = vld [vmem:[%s8134 + $0x150] sm:$0xff]
        %v8178 = vld [vmem:[%s8134 + $0x158] sm:$0xff]
        %v8179 = vld [vmem:[%s8134 + $0x160] sm:$0xff]
        %v8180 = vld [vmem:[%s8134 + $0x168] sm:$0xff]
        %v8181 = vld [vmem:[%s8134 + $0x170] sm:$0xff]
        %v8182 = vld [vmem:[%s8134 + $0x178] sm:$0xff]
        %v8183 = vld [vmem:[%s8134 + $0x180] sm:$0xff]
        %v8184 = vld [vmem:[%s8134 + $0x188] sm:$0xff]
        %v8235 = vunpack.c.l.b16 %v8135
        %v8236 = vunpack.c.h.b16 %v8135
        %v8237 = vunpack.c.l.b16 %v8136
        %v8238 = vunpack.c.h.b16 %v8136
        %v8239 = vunpack.c.l.b16 %v8137
        %v8240 = vunpack.c.h.b16 %v8137
        %v8241 = vunpack.c.l.b16 %v8138
        %v8242 = vunpack.c.h.b16 %v8138
        %v8243 = vunpack.c.l.b16 %v8139
        %v8244 = vunpack.c.h.b16 %v8139
        %v8245 = vunpack.c.l.b16 %v8140
        %v8246 = vunpack.c.h.b16 %v8140
        %v8247 = vunpack.c.l.b16 %v8141
        %v8248 = vunpack.c.h.b16 %v8141
        %v8249 = vunpack.c.l.b16 %v8142
        %v8250 = vunpack.c.h.b16 %v8142
        %v8251 = vunpack.c.l.b16 %v8143
        %v8252 = vunpack.c.h.b16 %v8143
        %v8253 = vunpack.c.l.b16 %v8144
        %v8254 = vunpack.c.h.b16 %v8144
        %v8255 = vunpack.c.l.b16 %v8145
        %v8256 = vunpack.c.h.b16 %v8145
        %v8257 = vunpack.c.l.b16 %v8146
        %v8258 = vunpack.c.h.b16 %v8146
        %v8259 = vunpack.c.l.b16 %v8147
        %v8260 = vunpack.c.h.b16 %v8147
        %v8261 = vunpack.c.l.b16 %v8148
        %v8262 = vunpack.c.h.b16 %v8148
        %v8263 = vunpack.c.l.b16 %v8149
        %v8264 = vunpack.c.h.b16 %v8149
        %v8265 = vunpack.c.l.b16 %v8150
        %v8266 = vunpack.c.h.b16 %v8150
        %v8267 = vunpack.c.l.b16 %v8151
        %v8268 = vunpack.c.h.b16 %v8151
        %v8269 = vunpack.c.l.b16 %v8152
        %v8270 = vunpack.c.h.b16 %v8152
        %v8271 = vunpack.c.l.b16 %v8153
        %v8272 = vunpack.c.h.b16 %v8153
        %v8273 = vunpack.c.l.b16 %v8154
        %v8274 = vunpack.c.h.b16 %v8154
        %v8275 = vunpack.c.l.b16 %v8155
        %v8276 = vunpack.c.h.b16 %v8155
        %v8277 = vunpack.c.l.b16 %v8156
        %v8278 = vunpack.c.h.b16 %v8156
        %v8279 = vunpack.c.l.b16 %v8157
        %v8280 = vunpack.c.h.b16 %v8157
        %v8281 = vunpack.c.l.b16 %v8158
        %v8282 = vunpack.c.h.b16 %v8158
        %v8283 = vunpack.c.l.b16 %v8159
        %v8284 = vunpack.c.h.b16 %v8159
        %v8285 = vunpack.c.l.b16 %v8160
        %v8286 = vunpack.c.h.b16 %v8160
        %v8287 = vunpack.c.l.b16 %v8161
        %v8288 = vunpack.c.h.b16 %v8161
        %v8289 = vunpack.c.l.b16 %v8162
        %v8290 = vunpack.c.h.b16 %v8162
        %v8291 = vunpack.c.l.b16 %v8163
        %v8292 = vunpack.c.h.b16 %v8163
        %v8293 = vunpack.c.l.b16 %v8164
        %v8294 = vunpack.c.h.b16 %v8164
        %v8295 = vunpack.c.l.b16 %v8165
        %v8296 = vunpack.c.h.b16 %v8165
        %v8297 = vunpack.c.l.b16 %v8166
        %v8298 = vunpack.c.h.b16 %v8166
        %v8299 = vunpack.c.l.b16 %v8167
        %v8300 = vunpack.c.h.b16 %v8167
        %v8301 = vunpack.c.l.b16 %v8168
        %v8302 = vunpack.c.h.b16 %v8168
        %v8303 = vunpack.c.l.b16 %v8169
        %v8304 = vunpack.c.h.b16 %v8169
        %v8305 = vunpack.c.l.b16 %v8170
        %v8306 = vunpack.c.h.b16 %v8170
        %v8307 = vunpack.c.l.b16 %v8171
        %v8308 = vunpack.c.h.b16 %v8171
        %v8309 = vunpack.c.l.b16 %v8172
        %v8310 = vunpack.c.h.b16 %v8172
        %v8311 = vunpack.c.l.b16 %v8173
        %v8312 = vunpack.c.h.b16 %v8173
        %v8313 = vunpack.c.l.b16 %v8174
        %v8314 = vunpack.c.h.b16 %v8174
        %v8315 = vunpack.c.l.b16 %v8175
        %v8316 = vunpack.c.h.b16 %v8175
        %v8317 = vunpack.c.l.b16 %v8176
        %v8318 = vunpack.c.h.b16 %v8176
        %v8319 = vunpack.c.l.b16 %v8177
        %v8320 = vunpack.c.h.b16 %v8177
        %v8321 = vunpack.c.l.b16 %v8178
        %v8322 = vunpack.c.h.b16 %v8178
        %v8323 = vunpack.c.l.b16 %v8179
        %v8324 = vunpack.c.h.b16 %v8179
        %v8325 = vunpack.c.l.b16 %v8180
        %v8326 = vunpack.c.h.b16 %v8180
        %v8327 = vunpack.c.l.b16 %v8181
        %v8328 = vunpack.c.h.b16 %v8181
        %v8329 = vunpack.c.l.b16 %v8182
        %v8330 = vunpack.c.h.b16 %v8182
        %v8331 = vunpack.c.l.b16 %v8183
        %v8332 = vunpack.c.h.b16 %v8183
        %v8333 = vunpack.c.l.b16 %v8184
        %v8334 = vunpack.c.h.b16 %v8184
        %v8335 = vpack.c.b16 %v8239, %v8235
        %v8336 = vpack.c.b16 %v8240, %v8236
        %v8337 = vpack.c.b16 %v8241, %v8237
        %v8338 = vpack.c.b16 %v8242, %v8238
        %v8339 = vpack.c.b16 %v8247, %v8243
        %v8340 = vpack.c.b16 %v8248, %v8244
        %v8341 = vpack.c.b16 %v8249, %v8245
        %v8342 = vpack.c.b16 %v8250, %v8246
        %v8343 = vpack.c.b16 %v8255, %v8251
        %v8344 = vpack.c.b16 %v8256, %v8252
        %v8345 = vpack.c.b16 %v8257, %v8253
        %v8346 = vpack.c.b16 %v8258, %v8254
        %v8347 = vpack.c.b16 %v8263, %v8259
        %v8348 = vpack.c.b16 %v8264, %v8260
        %v8349 = vpack.c.b16 %v8265, %v8261
        %v8350 = vpack.c.b16 %v8266, %v8262
        %v8351 = vpack.c.b16 %v8271, %v8267
        %v8352 = vpack.c.b16 %v8272, %v8268
        %v8353 = vpack.c.b16 %v8273, %v8269
        %v8354 = vpack.c.b16 %v8274, %v8270
        %v8355 = vpack.c.b16 %v8279, %v8275
        %v8356 = vpack.c.b16 %v8280, %v8276
        %v8357 = vpack.c.b16 %v8281, %v8277
        %v8358 = vpack.c.b16 %v8282, %v8278
        %v8359 = vpack.c.b16 %v8287, %v8283
        %v8360 = vpack.c.b16 %v8288, %v8284
        %v8361 = vpack.c.b16 %v8289, %v8285
        %v8362 = vpack.c.b16 %v8290, %v8286
        %v8363 = vpack.c.b16 %v8295, %v8291
        %v8364 = vpack.c.b16 %v8296, %v8292
        %v8365 = vpack.c.b16 %v8297, %v8293
        %v8366 = vpack.c.b16 %v8298, %v8294
        %v8367 = vpack.c.b16 %v8303, %v8299
        %v8368 = vpack.c.b16 %v8304, %v8300
        %v8369 = vpack.c.b16 %v8305, %v8301
        %v8370 = vpack.c.b16 %v8306, %v8302
        %v8371 = vpack.c.b16 %v8311, %v8307
        %v8372 = vpack.c.b16 %v8312, %v8308
        %v8373 = vpack.c.b16 %v8313, %v8309
        %v8374 = vpack.c.b16 %v8314, %v8310
        %v8375 = vpack.c.b16 %v8319, %v8315
        %v8376 = vpack.c.b16 %v8320, %v8316
        %v8377 = vpack.c.b16 %v8321, %v8317
        %v8378 = vpack.c.b16 %v8322, %v8318
        %v8379 = vpack.c.b16 %v8327, %v8323
        %v8380 = vpack.c.b16 %v8328, %v8324
        %v8381 = vpack.c.b16 %v8329, %v8325
        %v8382 = vpack.c.b16 %v8330, %v8326
        %v8383 = vpack.c.b16 %v8331, %v8331
        %v8384 = vpack.c.b16 %v8332, %v8332
        %v8385 = vpack.c.b16 %v8333, %v8333
        %v8386 = vpack.c.b16 %v8334, %v8334
        %vm8435 = vcmask 588800
        %v8437 = vsel %vm8435, %v8133, 0
        %vm8439 = vcmask 1043456
        %v8441 = vsel %vm8439, %v8383, 0
        %v8444 = vsel %vm8439, %v8384, 0
        %v8447 = vsel %vm8439, %v8385, 0
        %v8450 = vsel %vm8439, %v8386, 0
        %8452 = vmatprep.subr.bf16.mxu0 %v8336
        %8453 = vmatpush1.bf16.msra.mxu0 %v8335
        %8454 = vmatprep.subr.bf16.mxu0 %v8340
        %8455 = vmatpush1.bf16.msra.mxu0 %v8339
        %8456 = vmatprep.subr.bf16.mxu0 %v8344
        %8457 = vmatpush1.bf16.msra.mxu0 %v8343
        %8458 = vmatprep.subr.bf16.mxu0 %v8348
        %8459 = vmatpush1.bf16.msra.mxu0 %v8347
        %8460 = vmatprep.subr.bf16.mxu0 %v8352
        %8461 = vmatpush1.bf16.msra.mxu0 %v8351
        %8462 = vmatprep.subr.bf16.mxu0 %v8356
        %8463 = vmatpush1.bf16.msra.mxu0 %v8355
        %8464 = vmatprep.subr.bf16.mxu0 %v8360
        %8465 = vmatpush1.bf16.msra.mxu0 %v8359
        %8466 = vmatprep.subr.bf16.mxu0 %v8364
        %8467 = vmatpush1.bf16.msra.mxu0 %v8363
        %8468 = vmatprep.subr.bf16.mxu0 %v8368
        %8469 = vmatpush1.bf16.msra.mxu0 %v8367
        %8470 = vmatprep.subr.bf16.mxu0 %v8372
        %8471 = vmatpush1.bf16.msra.mxu0 %v8371
        %8472 = vmatprep.subr.bf16.mxu0 %v8376
        %8473 = vmatpush1.bf16.msra.mxu0 %v8375
        %8474 = vmatprep.subr.bf16.mxu0 %v8380
        %8475 = vmatpush1.bf16.msra.mxu0 %v8379
        %8476 = vmatprep.subr.bf16.mxu0 %v8444
        %8477 = vmatpush1.bf16.msra.mxu0 %v8441
        %8478 = vmatprep.subr.bf16.mxu0 0
        %8479 = vmatpush1.bf16.msra.mxu0 0
        %8480 = vmatprep.subr.bf16.mxu0 0
        %8481 = vmatpush1.bf16.msra.mxu0 0
        %8482 = vmatprep.subr.bf16.mxu0 0
        %8483 = vmatpush1.bf16.msra.mxu0 0
        %8484 = vmatprep.mubr.bf16.mxu0 %v8437
        %8485 = vmatmul.mubr.bf16.gmra.mrb[0].mxu0 %v8132
        %v8486 = vpop.f32.mrb[0].mxu0
        %v8487 = vadd.f32 0.0, %v8486
        %v8488 = vpop.f32.mrb[0].mxu0
        %v8489 = vadd.f32 0.0, %v8488
        %v8490 = vpop.f32.mrb[0].mxu0
        %v8491 = vpop.f32.mrb[0].mxu0
        %8492 = vdwg.mxu0
        %8493 = vmatprep.subr.bf16.mxu0 %v8338
        %8494 = vmatpush1.bf16.msra.mxu0 %v8337
        %8495 = vmatprep.subr.bf16.mxu0 %v8342
        %8496 = vmatpush1.bf16.msra.mxu0 %v8341
        %8497 = vmatprep.subr.bf16.mxu0 %v8346
        %8498 = vmatpush1.bf16.msra.mxu0 %v8345
        %8499 = vmatprep.subr.bf16.mxu0 %v8350
        %8500 = vmatpush1.bf16.msra.mxu0 %v8349
        %8501 = vmatprep.subr.bf16.mxu0 %v8354
        %8502 = vmatpush1.bf16.msra.mxu0 %v8353
        %8503 = vmatprep.subr.bf16.mxu0 %v8358
        %8504 = vmatpush1.bf16.msra.mxu0 %v8357
        %8505 = vmatprep.subr.bf16.mxu0 %v8362
        %8506 = vmatpush1.bf16.msra.mxu0 %v8361
        %8507 = vmatprep.subr.bf16.mxu0 %v8366
        %8508 = vmatpush1.bf16.msra.mxu0 %v8365
        %8509 = vmatprep.subr.bf16.mxu0 %v8370
        %8510 = vmatpush1.bf16.msra.mxu0 %v8369
        %8511 = vmatprep.subr.bf16.mxu0 %v8374
        %8512 = vmatpush1.bf16.msra.mxu0 %v8373
        %8513 = vmatprep.subr.bf16.mxu0 %v8378
        %8514 = vmatpush1.bf16.msra.mxu0 %v8377
        %8515 = vmatprep.subr.bf16.mxu0 %v8382
        %8516 = vmatpush1.bf16.msra.mxu0 %v8381
        %8517 = vmatprep.subr.bf16.mxu0 %v8450
        %8518 = vmatpush1.bf16.msra.mxu0 %v8447
        %8519 = vmatprep.subr.bf16.mxu0 0
        %8520 = vmatpush1.bf16.msra.mxu0 0
        %8521 = vmatprep.subr.bf16.mxu0 0
        %8522 = vmatpush1.bf16.msra.mxu0 0
        %8523 = vmatprep.subr.bf16.mxu0 0
        %8524 = vmatpush1.bf16.msra.mxu0 0
        %8525 = vmatprep.mubr.bf16.mxu0 %v8437
        %8526 = vmatmul.mubr.bf16.gmra.mrb[0].mxu0 %v8132
        %v8527 = vpop.f32.mrb[0].mxu0
        %v8528 = vadd.f32 0.0, %v8527
        %v8529 = vpop.f32.mrb[0].mxu0
        %v8530 = vadd.f32 0.0, %v8529
        %v8531 = vpop.f32.mrb[0].mxu0
        %v8532 = vpop.f32.mrb[0].mxu0
        %8533 = vdwg.mxu0
        %v8584 = vunpack.c.l.b16 %v8082
        %v8585 = vunpack.c.h.b16 %v8082
        %v8586 = vunpack.c.l.b16 %v8083
        %v8587 = vunpack.c.h.b16 %v8083
        %v8588 = vunpack.c.l.b16 %v8084
        %v8589 = vunpack.c.h.b16 %v8084
        %v8590 = vunpack.c.l.b16 %v8085
        %v8591 = vunpack.c.h.b16 %v8085
        %v8592 = vunpack.c.l.b16 %v8086
        %v8593 = vunpack.c.h.b16 %v8086
        %v8594 = vunpack.c.l.b16 %v8087
        %v8595 = vunpack.c.h.b16 %v8087
        %v8596 = vunpack.c.l.b16 %v8088
        %v8597 = vunpack.c.h.b16 %v8088
        %v8598 = vunpack.c.l.b16 %v8089
        %v8599 = vunpack.c.h.b16 %v8089
        %v8600 = vunpack.c.l.b16 %v8090
        %v8601 = vunpack.c.h.b16 %v8090
        %v8602 = vunpack.c.l.b16 %v8091
        %v8603 = vunpack.c.h.b16 %v8091
        %v8604 = vunpack.c.l.b16 %v8092
        %v8605 = vunpack.c.h.b16 %v8092
        %v8606 = vunpack.c.l.b16 %v8093
        %v8607 = vunpack.c.h.b16 %v8093
        %v8608 = vunpack.c.l.b16 %v8094
        %v8609 = vunpack.c.h.b16 %v8094
        %v8610 = vunpack.c.l.b16 %v8095
        %v8611 = vunpack.c.h.b16 %v8095
        %v8612 = vunpack.c.l.b16 %v8096
        %v8613 = vunpack.c.h.b16 %v8096
        %v8614 = vunpack.c.l.b16 %v8097
        %v8615 = vunpack.c.h.b16 %v8097
        %v8616 = vunpack.c.l.b16 %v8098
        %v8617 = vunpack.c.h.b16 %v8098
        %v8618 = vunpack.c.l.b16 %v8099
        %v8619 = vunpack.c.h.b16 %v8099
        %v8620 = vunpack.c.l.b16 %v8100
        %v8621 = vunpack.c.h.b16 %v8100
        %v8622 = vunpack.c.l.b16 %v8101
        %v8623 = vunpack.c.h.b16 %v8101
        %v8624 = vunpack.c.l.b16 %v8102
        %v8625 = vunpack.c.h.b16 %v8102
        %v8626 = vunpack.c.l.b16 %v8103
        %v8627 = vunpack.c.h.b16 %v8103
        %v8628 = vunpack.c.l.b16 %v8104
        %v8629 = vunpack.c.h.b16 %v8104
        %v8630 = vunpack.c.l.b16 %v8105
        %v8631 = vunpack.c.h.b16 %v8105
        %v8632 = vunpack.c.l.b16 %v8106
        %v8633 = vunpack.c.h.b16 %v8106
        %v8634 = vunpack.c.l.b16 %v8107
        %v8635 = vunpack.c.h.b16 %v8107
        %v8636 = vunpack.c.l.b16 %v8108
        %v8637 = vunpack.c.h.b16 %v8108
        %v8638 = vunpack.c.l.b16 %v8109
        %v8639 = vunpack.c.h.b16 %v8109
        %v8640 = vunpack.c.l.b16 %v8110
        %v8641 = vunpack.c.h.b16 %v8110
        %v8642 = vunpack.c.l.b16 %v8111
        %v8643 = vunpack.c.h.b16 %v8111
        %v8644 = vunpack.c.l.b16 %v8112
        %v8645 = vunpack.c.h.b16 %v8112
        %v8646 = vunpack.c.l.b16 %v8113
        %v8647 = vunpack.c.h.b16 %v8113
        %v8648 = vunpack.c.l.b16 %v8114
        %v8649 = vunpack.c.h.b16 %v8114
        %v8650 = vunpack.c.l.b16 %v8115
        %v8651 = vunpack.c.h.b16 %v8115
        %v8652 = vunpack.c.l.b16 %v8116
        %v8653 = vunpack.c.h.b16 %v8116
        %v8654 = vunpack.c.l.b16 %v8117
        %v8655 = vunpack.c.h.b16 %v8117
        %v8656 = vunpack.c.l.b16 %v8118
        %v8657 = vunpack.c.h.b16 %v8118
        %v8658 = vunpack.c.l.b16 %v8119
        %v8659 = vunpack.c.h.b16 %v8119
        %v8660 = vunpack.c.l.b16 %v8120
        %v8661 = vunpack.c.h.b16 %v8120
        %v8662 = vunpack.c.l.b16 %v8121
        %v8663 = vunpack.c.h.b16 %v8121
        %v8664 = vunpack.c.l.b16 %v8122
        %v8665 = vunpack.c.h.b16 %v8122
        %v8666 = vunpack.c.l.b16 %v8123
        %v8667 = vunpack.c.h.b16 %v8123
        %v8668 = vunpack.c.l.b16 %v8124
        %v8669 = vunpack.c.h.b16 %v8124
        %v8670 = vunpack.c.l.b16 %v8125
        %v8671 = vunpack.c.h.b16 %v8125
        %v8672 = vunpack.c.l.b16 %v8126
        %v8673 = vunpack.c.h.b16 %v8126
        %v8674 = vunpack.c.l.b16 %v8127
        %v8675 = vunpack.c.h.b16 %v8127
        %v8676 = vunpack.c.l.b16 %v8128
        %v8677 = vunpack.c.h.b16 %v8128
        %v8678 = vunpack.c.l.b16 %v8129
        %v8679 = vunpack.c.h.b16 %v8129
        %v8680 = vunpack.c.l.b16 %v8130
        %v8681 = vunpack.c.h.b16 %v8130
        %v8682 = vunpack.c.l.b16 %v8131
        %v8683 = vunpack.c.h.b16 %v8131
        %v8684 = vpack.c.b16 %v8588, %v8584
        %v8685 = vpack.c.b16 %v8589, %v8585
        %v8686 = vpack.c.b16 %v8590, %v8586
        %v8687 = vpack.c.b16 %v8591, %v8587
        %v8688 = vpack.c.b16 %v8596, %v8592
        %v8689 = vpack.c.b16 %v8597, %v8593
        %v8690 = vpack.c.b16 %v8598, %v8594
        %v8691 = vpack.c.b16 %v8599, %v8595
        %v8692 = vpack.c.b16 %v8604, %v8600
        %v8693 = vpack.c.b16 %v8605, %v8601
        %v8694 = vpack.c.b16 %v8606, %v8602
        %v8695 = vpack.c.b16 %v8607, %v8603
        %v8696 = vpack.c.b16 %v8612, %v8608
        %v8697 = vpack.c.b16 %v8613, %v8609
        %v8698 = vpack.c.b16 %v8614, %v8610
        %v8699 = vpack.c.b16 %v8615, %v8611
        %v8700 = vpack.c.b16 %v8620, %v8616
        %v8701 = vpack.c.b16 %v8621, %v8617
        %v8702 = vpack.c.b16 %v8622, %v8618
        %v8703 = vpack.c.b16 %v8623, %v8619
        %v8704 = vpack.c.b16 %v8628, %v8624
        %v8705 = vpack.c.b16 %v8629, %v8625
        %v8706 = vpack.c.b16 %v8630, %v8626
        %v8707 = vpack.c.b16 %v8631, %v8627
        %v8708 = vpack.c.b16 %v8636, %v8632
        %v8709 = vpack.c.b16 %v8637, %v8633
        %v8710 = vpack.c.b16 %v8638, %v8634
        %v8711 = vpack.c.b16 %v8639, %v8635
        %v8712 = vpack.c.b16 %v8644, %v8640
        %v8713 = vpack.c.b16 %v8645, %v8641
        %v8714 = vpack.c.b16 %v8646, %v8642
        %v8715 = vpack.c.b16 %v8647, %v8643
        %v8716 = vpack.c.b16 %v8652, %v8648
        %v8717 = vpack.c.b16 %v8653, %v8649
        %v8718 = vpack.c.b16 %v8654, %v8650
        %v8719 = vpack.c.b16 %v8655, %v8651
        %v8720 = vpack.c.b16 %v8660, %v8656
        %v8721 = vpack.c.b16 %v8661, %v8657
        %v8722 = vpack.c.b16 %v8662, %v8658
        %v8723 = vpack.c.b16 %v8663, %v8659
        %v8724 = vpack.c.b16 %v8668, %v8664
        %v8725 = vpack.c.b16 %v8669, %v8665
        %v8726 = vpack.c.b16 %v8670, %v8666
        %v8727 = vpack.c.b16 %v8671, %v8667
        %v8728 = vpack.c.b16 %v8676, %v8672
        %v8729 = vpack.c.b16 %v8677, %v8673
        %v8730 = vpack.c.b16 %v8678, %v8674
        %v8731 = vpack.c.b16 %v8679, %v8675
        %v8732 = vpack.c.b16 %v8680, %v8680
        %v8733 = vpack.c.b16 %v8681, %v8681
        %v8734 = vpack.c.b16 %v8682, %v8682
        %v8735 = vpack.c.b16 %v8683, %v8683
        %v8785 = vsel %vm8435, %v8081, 0
        %v8788 = vsel %vm8439, %v8732, 0
        %v8791 = vsel %vm8439, %v8733, 0
        %v8794 = vsel %vm8439, %v8734, 0
        %v8797 = vsel %vm8439, %v8735, 0
        %8799 = vmatprep.subr.bf16.mxu0 %v8685
        %8800 = vmatpush1.bf16.msra.mxu0 %v8684
        %8801 = vmatprep.subr.bf16.mxu0 %v8689
        %8802 = vmatpush1.bf16.msra.mxu0 %v8688
        %8803 = vmatprep.subr.bf16.mxu0 %v8693
        %8804 = vmatpush1.bf16.msra.mxu0 %v8692
        %8805 = vmatprep.subr.bf16.mxu0 %v8697
        %8806 = vmatpush1.bf16.msra.mxu0 %v8696
        %8807 = vmatprep.subr.bf16.mxu0 %v8701
        %8808 = vmatpush1.bf16.msra.mxu0 %v8700
        %8809 = vmatprep.subr.bf16.mxu0 %v8705
        %8810 = vmatpush1.bf16.msra.mxu0 %v8704
        %8811 = vmatprep.subr.bf16.mxu0 %v8709
        %8812 = vmatpush1.bf16.msra.mxu0 %v8708
        %8813 = vmatprep.subr.bf16.mxu0 %v8713
        %8814 = vmatpush1.bf16.msra.mxu0 %v8712
        %8815 = vmatprep.subr.bf16.mxu0 %v8717
        %8816 = vmatpush1.bf16.msra.mxu0 %v8716
        %8817 = vmatprep.subr.bf16.mxu0 %v8721
        %8818 = vmatpush1.bf16.msra.mxu0 %v8720
        %8819 = vmatprep.subr.bf16.mxu0 %v8725
        %8820 = vmatpush1.bf16.msra.mxu0 %v8724
        %8821 = vmatprep.subr.bf16.mxu0 %v8729
        %8822 = vmatpush1.bf16.msra.mxu0 %v8728
        %8823 = vmatprep.subr.bf16.mxu0 %v8791
        %8824 = vmatpush1.bf16.msra.mxu0 %v8788
        %8825 = vmatprep.subr.bf16.mxu0 0
        %8826 = vmatpush1.bf16.msra.mxu0 0
        %8827 = vmatprep.subr.bf16.mxu0 0
        %8828 = vmatpush1.bf16.msra.mxu0 0
        %8829 = vmatprep.subr.bf16.mxu0 0
        %8830 = vmatpush1.bf16.msra.mxu0 0
        %8831 = vmatprep.mubr.bf16.mxu0 %v8785
        %8832 = vmatmul.mubr.bf16.gmra.mrb[0].mxu0 %v8080
        %v8833 = vpop.f32.mrb[0].mxu0
        %v8834 = vadd.f32 %v8487, %v8833
        %v8835 = vpop.f32.mrb[0].mxu0
        %v8836 = vadd.f32 %v8489, %v8835
        %v8837 = vpop.f32.mrb[0].mxu0
        %v8838 = vpop.f32.mrb[0].mxu0
        %8839 = vdwg.mxu0
        %8840 = vmatprep.subr.bf16.mxu0 %v8687
        %8841 = vmatpush1.bf16.msra.mxu0 %v8686
        %8842 = vmatprep.subr.bf16.mxu0 %v8691
        %8843 = vmatpush1.bf16.msra.mxu0 %v8690
        %8844 = vmatprep.subr.bf16.mxu0 %v8695
        %8845 = vmatpush1.bf16.msra.mxu0 %v8694
        %8846 = vmatprep.subr.bf16.mxu0 %v8699
        %8847 = vmatpush1.bf16.msra.mxu0 %v8698
        %8848 = vmatprep.subr.bf16.mxu0 %v8703
        %8849 = vmatpush1.bf16.msra.mxu0 %v8702
        %8850 = vmatprep.subr.bf16.mxu0 %v8707
        %8851 = vmatpush1.bf16.msra.mxu0 %v8706
        %8852 = vmatprep.subr.bf16.mxu0 %v8711
        %8853 = vmatpush1.bf16.msra.mxu0 %v8710
        %8854 = vmatprep.subr.bf16.mxu0 %v8715
        %8855 = vmatpush1.bf16.msra.mxu0 %v8714
        %8856 = vmatprep.subr.bf16.mxu0 %v8719
        %8857 = vmatpush1.bf16.msra.mxu0 %v8718
        %8858 = vmatprep.subr.bf16.mxu0 %v8723
        %8859 = vmatpush1.bf16.msra.mxu0 %v8722
        %8860 = vmatprep.subr.bf16.mxu0 %v8727
        %8861 = vmatpush1.bf16.msra.mxu0 %v8726
        %8862 = vmatprep.subr.bf16.mxu0 %v8731
        %8863 = vmatpush1.bf16.msra.mxu0 %v8730
        %8864 = vmatprep.subr.bf16.mxu0 %v8797
        %8865 = vmatpush1.bf16.msra.mxu0 %v8794
        %8866 = vmatprep.subr.bf16.mxu0 0
        %8867 = vmatpush1.bf16.msra.mxu0 0
        %8868 = vmatprep.subr.bf16.mxu0 0
        %8869 = vmatpush1.bf16.msra.mxu0 0
        %8870 = vmatprep.subr.bf16.mxu0 0
        %8871 = vmatpush1.bf16.msra.mxu0 0
        %8872 = vmatprep.mubr.bf16.mxu0 %v8785
        %8873 = vmatmul.mubr.bf16.gmra.mrb[0].mxu0 %v8080
        %v8874 = vpop.f32.mrb[0].mxu0
        %v8875 = vadd.f32 %v8528, %v8874
        %v8876 = vpop.f32.mrb[0].mxu0
        %v8877 = vadd.f32 %v8530, %v8876
        %v8878 = vpop.f32.mrb[0].mxu0
        %v8879 = vpop.f32.mrb[0].mxu0
        %8880 = vdwg.mxu0
        %v8881 = vpack.c.bf16 %v8072, %v8072
        %v8882 = vpack.c.bf16 %v8074, %v8074
        %s8883 = scalar_lea.vmem %s7, 800
        %v8884 = vld [vmem:[%s8883] sm:$0xff]
        %v8885 = vld [vmem:[%s8883 + $0x8] sm:$0xff]
        %v8886 = vld [vmem:[%s8883 + $0x10] sm:$0xff]
        %v8887 = vld [vmem:[%s8883 + $0x18] sm:$0xff]
        %v8888 = vld [vmem:[%s8883 + $0x20] sm:$0xff]
        %v8889 = vld [vmem:[%s8883 + $0x28] sm:$0xff]
        %v8890 = vld [vmem:[%s8883 + $0x30] sm:$0xff]
        %v8891 = vld [vmem:[%s8883 + $0x38] sm:$0xff]
        %v8892 = vld [vmem:[%s8883 + $0x40] sm:$0xff]
        %v8893 = vld [vmem:[%s8883 + $0x48] sm:$0xff]
        %v8894 = vld [vmem:[%s8883 + $0x50] sm:$0xff]
        %v8895 = vld [vmem:[%s8883 + $0x58] sm:$0xff]
        %v8896 = vld [vmem:[%s8883 + $0x60] sm:$0xff]
        %v8897 = vld [vmem:[%s8883 + $0x68] sm:$0xff]
        %v8898 = vld [vmem:[%s8883 + $0x70] sm:$0xff]
        %v8899 = vld [vmem:[%s8883 + $0x78] sm:$0xff]
        %v8900 = vld [vmem:[%s8883 + $0x80] sm:$0xff]
        %v8901 = vld [vmem:[%s8883 + $0x88] sm:$0xff]
        %v8902 = vld [vmem:[%s8883 + $0x90] sm:$0xff]
        %v8903 = vld [vmem:[%s8883 + $0x98] sm:$0xff]
        %v8904 = vld [vmem:[%s8883 + $0xa0] sm:$0xff]
        %v8905 = vld [vmem:[%s8883 + $0xa8] sm:$0xff]
        %v8906 = vld [vmem:[%s8883 + $0xb0] sm:$0xff]
        %v8907 = vld [vmem:[%s8883 + $0xb8] sm:$0xff]
        %v8908 = vld [vmem:[%s8883 + $0xc0] sm:$0xff]
        %v8909 = vld [vmem:[%s8883 + $0xc8] sm:$0xff]
        %v8910 = vld [vmem:[%s8883 + $0xd0] sm:$0xff]
        %v8911 = vld [vmem:[%s8883 + $0xd8] sm:$0xff]
        %v8912 = vld [vmem:[%s8883 + $0xe0] sm:$0xff]
        %v8913 = vld [vmem:[%s8883 + $0xe8] sm:$0xff]
        %v8914 = vld [vmem:[%s8883 + $0xf0] sm:$0xff]
        %v8915 = vld [vmem:[%s8883 + $0xf8] sm:$0xff]
        %v8916 = vld [vmem:[%s8883 + $0x100] sm:$0xff]
        %v8917 = vld [vmem:[%s8883 + $0x108] sm:$0xff]
        %v8918 = vld [vmem:[%s8883 + $0x110] sm:$0xff]
        %v8919 = vld [vmem:[%s8883 + $0x118] sm:$0xff]
        %v8920 = vld [vmem:[%s8883 + $0x120] sm:$0xff]
        %v8921 = vld [vmem:[%s8883 + $0x128] sm:$0xff]
        %v8922 = vld [vmem:[%s8883 + $0x130] sm:$0xff]
        %v8923 = vld [vmem:[%s8883 + $0x138] sm:$0xff]
        %v8924 = vld [vmem:[%s8883 + $0x140] sm:$0xff]
        %v8925 = vld [vmem:[%s8883 + $0x148] sm:$0xff]
        %v8926 = vld [vmem:[%s8883 + $0x150] sm:$0xff]
        %v8927 = vld [vmem:[%s8883 + $0x158] sm:$0xff]
        %v8928 = vld [vmem:[%s8883 + $0x160] sm:$0xff]
        %v8929 = vld [vmem:[%s8883 + $0x168] sm:$0xff]
        %v8930 = vld [vmem:[%s8883 + $0x170] sm:$0xff]
        %v8931 = vld [vmem:[%s8883 + $0x178] sm:$0xff]
        %v8932 = vld [vmem:[%s8883 + $0x180] sm:$0xff]
        %v8933 = vld [vmem:[%s8883 + $0x188] sm:$0xff]
        %v8984 = vunpack.c.l.b16 %v8884
        %v8985 = vunpack.c.h.b16 %v8884
        %v8986 = vunpack.c.l.b16 %v8885
        %v8987 = vunpack.c.h.b16 %v8885
        %v8988 = vunpack.c.l.b16 %v8886
        %v8989 = vunpack.c.h.b16 %v8886
        %v8990 = vunpack.c.l.b16 %v8887
        %v8991 = vunpack.c.h.b16 %v8887
        %v8992 = vunpack.c.l.b16 %v8888
        %v8993 = vunpack.c.h.b16 %v8888
        %v8994 = vunpack.c.l.b16 %v8889
        %v8995 = vunpack.c.h.b16 %v8889
        %v8996 = vunpack.c.l.b16 %v8890
        %v8997 = vunpack.c.h.b16 %v8890
        %v8998 = vunpack.c.l.b16 %v8891
        %v8999 = vunpack.c.h.b16 %v8891
        %v9000 = vunpack.c.l.b16 %v8892
        %v9001 = vunpack.c.h.b16 %v8892
        %v9002 = vunpack.c.l.b16 %v8893
        %v9003 = vunpack.c.h.b16 %v8893
        %v9004 = vunpack.c.l.b16 %v8894
        %v9005 = vunpack.c.h.b16 %v8894
        %v9006 = vunpack.c.l.b16 %v8895
        %v9007 = vunpack.c.h.b16 %v8895
        %v9008 = vunpack.c.l.b16 %v8896
        %v9009 = vunpack.c.h.b16 %v8896
        %v9010 = vunpack.c.l.b16 %v8897
        %v9011 = vunpack.c.h.b16 %v8897
        %v9012 = vunpack.c.l.b16 %v8898
        %v9013 = vunpack.c.h.b16 %v8898
        %v9014 = vunpack.c.l.b16 %v8899
        %v9015 = vunpack.c.h.b16 %v8899
        %v9016 = vunpack.c.l.b16 %v8900
        %v9017 = vunpack.c.h.b16 %v8900
        %v9018 = vunpack.c.l.b16 %v8901
        %v9019 = vunpack.c.h.b16 %v8901
        %v9020 = vunpack.c.l.b16 %v8902
        %v9021 = vunpack.c.h.b16 %v8902
        %v9022 = vunpack.c.l.b16 %v8903
        %v9023 = vunpack.c.h.b16 %v8903
        %v9024 = vunpack.c.l.b16 %v8904
        %v9025 = vunpack.c.h.b16 %v8904
        %v9026 = vunpack.c.l.b16 %v8905
        %v9027 = vunpack.c.h.b16 %v8905
        %v9028 = vunpack.c.l.b16 %v8906
        %v9029 = vunpack.c.h.b16 %v8906
        %v9030 = vunpack.c.l.b16 %v8907
        %v9031 = vunpack.c.h.b16 %v8907
        %v9032 = vunpack.c.l.b16 %v8908
        %v9033 = vunpack.c.h.b16 %v8908
        %v9034 = vunpack.c.l.b16 %v8909
        %v9035 = vunpack.c.h.b16 %v8909
        %v9036 = vunpack.c.l.b16 %v8910
        %v9037 = vunpack.c.h.b16 %v8910
        %v9038 = vunpack.c.l.b16 %v8911
        %v9039 = vunpack.c.h.b16 %v8911
        %v9040 = vunpack.c.l.b16 %v8912
        %v9041 = vunpack.c.h.b16 %v8912
        %v9042 = vunpack.c.l.b16 %v8913
        %v9043 = vunpack.c.h.b16 %v8913
        %v9044 = vunpack.c.l.b16 %v8914
        %v9045 = vunpack.c.h.b16 %v8914
        %v9046 = vunpack.c.l.b16 %v8915
        %v9047 = vunpack.c.h.b16 %v8915
        %v9048 = vunpack.c.l.b16 %v8916
        %v9049 = vunpack.c.h.b16 %v8916
        %v9050 = vunpack.c.l.b16 %v8917
        %v9051 = vunpack.c.h.b16 %v8917
        %v9052 = vunpack.c.l.b16 %v8918
        %v9053 = vunpack.c.h.b16 %v8918
        %v9054 = vunpack.c.l.b16 %v8919
        %v9055 = vunpack.c.h.b16 %v8919
        %v9056 = vunpack.c.l.b16 %v8920
        %v9057 = vunpack.c.h.b16 %v8920
        %v9058 = vunpack.c.l.b16 %v8921
        %v9059 = vunpack.c.h.b16 %v8921
        %v9060 = vunpack.c.l.b16 %v8922
        %v9061 = vunpack.c.h.b16 %v8922
        %v9062 = vunpack.c.l.b16 %v8923
        %v9063 = vunpack.c.h.b16 %v8923
        %v9064 = vunpack.c.l.b16 %v8924
        %v9065 = vunpack.c.h.b16 %v8924
        %v9066 = vunpack.c.l.b16 %v8925
        %v9067 = vunpack.c.h.b16 %v8925
        %v9068 = vunpack.c.l.b16 %v8926
        %v9069 = vunpack.c.h.b16 %v8926
        %v9070 = vunpack.c.l.b16 %v8927
        %v9071 = vunpack.c.h.b16 %v8927
        %v9072 = vunpack.c.l.b16 %v8928
        %v9073 = vunpack.c.h.b16 %v8928
        %v9074 = vunpack.c.l.b16 %v8929
        %v9075 = vunpack.c.h.b16 %v8929
        %v9076 = vunpack.c.l.b16 %v8930
        %v9077 = vunpack.c.h.b16 %v8930
        %v9078 = vunpack.c.l.b16 %v8931
        %v9079 = vunpack.c.h.b16 %v8931
        %v9080 = vunpack.c.l.b16 %v8932
        %v9081 = vunpack.c.h.b16 %v8932
        %v9082 = vunpack.c.l.b16 %v8933
        %v9083 = vunpack.c.h.b16 %v8933
        %v9084 = vpack.c.b16 %v8988, %v8984
        %v9085 = vpack.c.b16 %v8989, %v8985
        %v9086 = vpack.c.b16 %v8990, %v8986
        %v9087 = vpack.c.b16 %v8991, %v8987
        %v9088 = vpack.c.b16 %v8996, %v8992
        %v9089 = vpack.c.b16 %v8997, %v8993
        %v9090 = vpack.c.b16 %v8998, %v8994
        %v9091 = vpack.c.b16 %v8999, %v8995
        %v9092 = vpack.c.b16 %v9004, %v9000
        %v9093 = vpack.c.b16 %v9005, %v9001
        %v9094 = vpack.c.b16 %v9006, %v9002
        %v9095 = vpack.c.b16 %v9007, %v9003
        %v9096 = vpack.c.b16 %v9012, %v9008
        %v9097 = vpack.c.b16 %v9013, %v9009
        %v9098 = vpack.c.b16 %v9014, %v9010
        %v9099 = vpack.c.b16 %v9015, %v9011
        %v9100 = vpack.c.b16 %v9020, %v9016
        %v9101 = vpack.c.b16 %v9021, %v9017
        %v9102 = vpack.c.b16 %v9022, %v9018
        %v9103 = vpack.c.b16 %v9023, %v9019
        %v9104 = vpack.c.b16 %v9028, %v9024
        %v9105 = vpack.c.b16 %v9029, %v9025
        %v9106 = vpack.c.b16 %v9030, %v9026
        %v9107 = vpack.c.b16 %v9031, %v9027
        %v9108 = vpack.c.b16 %v9036, %v9032
        %v9109 = vpack.c.b16 %v9037, %v9033
        %v9110 = vpack.c.b16 %v9038, %v9034
        %v9111 = vpack.c.b16 %v9039, %v9035
        %v9112 = vpack.c.b16 %v9044, %v9040
        %v9113 = vpack.c.b16 %v9045, %v9041
        %v9114 = vpack.c.b16 %v9046, %v9042
        %v9115 = vpack.c.b16 %v9047, %v9043
        %v9116 = vpack.c.b16 %v9052, %v9048
        %v9117 = vpack.c.b16 %v9053, %v9049
        %v9118 = vpack.c.b16 %v9054, %v9050
        %v9119 = vpack.c.b16 %v9055, %v9051
        %v9120 = vpack.c.b16 %v9060, %v9056
        %v9121 = vpack.c.b16 %v9061, %v9057
        %v9122 = vpack.c.b16 %v9062, %v9058
        %v9123 = vpack.c.b16 %v9063, %v9059
        %v9124 = vpack.c.b16 %v9068, %v9064
        %v9125 = vpack.c.b16 %v9069, %v9065
        %v9126 = vpack.c.b16 %v9070, %v9066
        %v9127 = vpack.c.b16 %v9071, %v9067
        %v9128 = vpack.c.b16 %v9076, %v9072
        %v9129 = vpack.c.b16 %v9077, %v9073
        %v9130 = vpack.c.b16 %v9078, %v9074
        %v9131 = vpack.c.b16 %v9079, %v9075
        %v9132 = vpack.c.b16 %v9080, %v9080
        %v9133 = vpack.c.b16 %v9081, %v9081
        %v9134 = vpack.c.b16 %v9082, %v9082
        %v9135 = vpack.c.b16 %v9083, %v9083
        %v9185 = vsel %vm8435, %v8882, 0
        %v9188 = vsel %vm8439, %v9132, 0
        %v9191 = vsel %vm8439, %v9133, 0
        %v9194 = vsel %vm8439, %v9134, 0
        %v9197 = vsel %vm8439, %v9135, 0
        %9199 = vmatprep.subr.bf16.mxu0 %v9085
        %9200 = vmatpush1.bf16.msra.mxu0 %v9084
        %9201 = vmatprep.subr.bf16.mxu0 %v9089
        %9202 = vmatpush1.bf16.msra.mxu0 %v9088
        %9203 = vmatprep.subr.bf16.mxu0 %v9093
        %9204 = vmatpush1.bf16.msra.mxu0 %v9092
        %9205 = vmatprep.subr.bf16.mxu0 %v9097
        %9206 = vmatpush1.bf16.msra.mxu0 %v9096
        %9207 = vmatprep.subr.bf16.mxu0 %v9101
        %9208 = vmatpush1.bf16.msra.mxu0 %v9100
        %9209 = vmatprep.subr.bf16.mxu0 %v9105
        %9210 = vmatpush1.bf16.msra.mxu0 %v9104
        %9211 = vmatprep.subr.bf16.mxu0 %v9109
        %9212 = vmatpush1.bf16.msra.mxu0 %v9108
        %9213 = vmatprep.subr.bf16.mxu0 %v9113
        %9214 = vmatpush1.bf16.msra.mxu0 %v9112
        %9215 = vmatprep.subr.bf16.mxu0 %v9117
        %9216 = vmatpush1.bf16.msra.mxu0 %v9116
        %9217 = vmatprep.subr.bf16.mxu0 %v9121
        %9218 = vmatpush1.bf16.msra.mxu0 %v9120
        %9219 = vmatprep.subr.bf16.mxu0 %v9125
        %9220 = vmatpush1.bf16.msra.mxu0 %v9124
        %9221 = vmatprep.subr.bf16.mxu0 %v9129
        %9222 = vmatpush1.bf16.msra.mxu0 %v9128
        %9223 = vmatprep.subr.bf16.mxu0 %v9191
        %9224 = vmatpush1.bf16.msra.mxu0 %v9188
        %9225 = vmatprep.subr.bf16.mxu0 0
        %9226 = vmatpush1.bf16.msra.mxu0 0
        %9227 = vmatprep.subr.bf16.mxu0 0
        %9228 = vmatpush1.bf16.msra.mxu0 0
        %9229 = vmatprep.subr.bf16.mxu0 0
        %9230 = vmatpush1.bf16.msra.mxu0 0
        %9231 = vmatprep.mubr.bf16.mxu0 %v9185
        %9232 = vmatmul.mubr.bf16.gmra.mrb[0].mxu0 %v8881
        %v9233 = vpop.f32.mrb[0].mxu0
        %v9234 = vadd.f32 0.0, %v9233
        %v9235 = vpop.f32.mrb[0].mxu0
        %v9236 = vadd.f32 0.0, %v9235
        %v9237 = vpop.f32.mrb[0].mxu0
        %v9238 = vpop.f32.mrb[0].mxu0
        %9239 = vdwg.mxu0
        %9240 = vmatprep.subr.bf16.mxu0 %v9087
        %9241 = vmatpush1.bf16.msra.mxu0 %v9086
        %9242 = vmatprep.subr.bf16.mxu0 %v9091
        %9243 = vmatpush1.bf16.msra.mxu0 %v9090
        %9244 = vmatprep.subr.bf16.mxu0 %v9095
        %9245 = vmatpush1.bf16.msra.mxu0 %v9094
        %9246 = vmatprep.subr.bf16.mxu0 %v9099
        %9247 = vmatpush1.bf16.msra.mxu0 %v9098
        %9248 = vmatprep.subr.bf16.mxu0 %v9103
        %9249 = vmatpush1.bf16.msra.mxu0 %v9102
        %9250 = vmatprep.subr.bf16.mxu0 %v9107
        %9251 = vmatpush1.bf16.msra.mxu0 %v9106
        %9252 = vmatprep.subr.bf16.mxu0 %v9111
        %9253 = vmatpush1.bf16.msra.mxu0 %v9110
        %9254 = vmatprep.subr.bf16.mxu0 %v9115
        %9255 = vmatpush1.bf16.msra.mxu0 %v9114
        %9256 = vmatprep.subr.bf16.mxu0 %v9119
        %9257 = vmatpush1.bf16.msra.mxu0 %v9118
        %9258 = vmatprep.subr.bf16.mxu0 %v9123
        %9259 = vmatpush1.bf16.msra.mxu0 %v9122
        %9260 = vmatprep.subr.bf16.mxu0 %v9127
        %9261 = vmatpush1.bf16.msra.mxu0 %v9126
        %9262 = vmatprep.subr.bf16.mxu0 %v9131
        %9263 = vmatpush1.bf16.msra.mxu0 %v9130
        %9264 = vmatprep.subr.bf16.mxu0 %v9197
        %9265 = vmatpush1.bf16.msra.mxu0 %v9194
        %9266 = vmatprep.subr.bf16.mxu0 0
        %9267 = vmatpush1.bf16.msra.mxu0 0
        %9268 = vmatprep.subr.bf16.mxu0 0
        %9269 = vmatpush1.bf16.msra.mxu0 0
        %9270 = vmatprep.subr.bf16.mxu0 0
        %9271 = vmatpush1.bf16.msra.mxu0 0
        %9272 = vmatprep.mubr.bf16.mxu0 %v9185
        %9273 = vmatmul.mubr.bf16.gmra.mrb[0].mxu0 %v8881
        %v9274 = vpop.f32.mrb[0].mxu0
        %v9275 = vadd.f32 0.0, %v9274
        %v9276 = vpop.f32.mrb[0].mxu0
        %v9277 = vadd.f32 0.0, %v9276
        %v9278 = vpop.f32.mrb[0].mxu0
        %v9279 = vpop.f32.mrb[0].mxu0
        %9280 = vdwg.mxu0
        %v9281 = vadd.f32 %v8834, %v9234
        %v9282 = vadd.f32 %v8836, %v9236
        %v9283 = vadd.f32 %v8875, %v9275
        %v9284 = vadd.f32 %v8877, %v9277
        %v9285 = vpack.c.bf16 %v8076, %v8076
        %v9286 = vpack.c.bf16 %v8078, %v8078
        %s9287 = scalar_lea.vmem %s7, 1200
        %v9288 = vld [vmem:[%s9287] sm:$0xff]
        %v9289 = vld [vmem:[%s9287 + $0x8] sm:$0xff]
        %v9290 = vld [vmem:[%s9287 + $0x10] sm:$0xff]
        %v9291 = vld [vmem:[%s9287 + $0x18] sm:$0xff]
        %v9292 = vld [vmem:[%s9287 + $0x20] sm:$0xff]
        %v9293 = vld [vmem:[%s9287 + $0x28] sm:$0xff]
        %v9294 = vld [vmem:[%s9287 + $0x30] sm:$0xff]
        %v9295 = vld [vmem:[%s9287 + $0x38] sm:$0xff]
        %v9296 = vld [vmem:[%s9287 + $0x40] sm:$0xff]
        %v9297 = vld [vmem:[%s9287 + $0x48] sm:$0xff]
        %v9298 = vld [vmem:[%s9287 + $0x50] sm:$0xff]
        %v9299 = vld [vmem:[%s9287 + $0x58] sm:$0xff]
        %v9300 = vld [vmem:[%s9287 + $0x60] sm:$0xff]
        %v9301 = vld [vmem:[%s9287 + $0x68] sm:$0xff]
        %v9302 = vld [vmem:[%s9287 + $0x70] sm:$0xff]
        %v9303 = vld [vmem:[%s9287 + $0x78] sm:$0xff]
        %v9304 = vld [vmem:[%s9287 + $0x80] sm:$0xff]
        %v9305 = vld [vmem:[%s9287 + $0x88] sm:$0xff]
        %v9306 = vld [vmem:[%s9287 + $0x90] sm:$0xff]
        %v9307 = vld [vmem:[%s9287 + $0x98] sm:$0xff]
        %v9308 = vld [vmem:[%s9287 + $0xa0] sm:$0xff]
        %v9309 = vld [vmem:[%s9287 + $0xa8] sm:$0xff]
        %v9310 = vld [vmem:[%s9287 + $0xb0] sm:$0xff]
        %v9311 = vld [vmem:[%s9287 + $0xb8] sm:$0xff]
        %v9312 = vld [vmem:[%s9287 + $0xc0] sm:$0xff]
        %v9313 = vld [vmem:[%s9287 + $0xc8] sm:$0xff]
        %v9314 = vld [vmem:[%s9287 + $0xd0] sm:$0xff]
        %v9315 = vld [vmem:[%s9287 + $0xd8] sm:$0xff]
        %v9316 = vld [vmem:[%s9287 + $0xe0] sm:$0xff]
        %v9317 = vld [vmem:[%s9287 + $0xe8] sm:$0xff]
        %v9318 = vld [vmem:[%s9287 + $0xf0] sm:$0xff]
        %v9319 = vld [vmem:[%s9287 + $0xf8] sm:$0xff]
        %v9320 = vld [vmem:[%s9287 + $0x100] sm:$0xff]
        %v9321 = vld [vmem:[%s9287 + $0x108] sm:$0xff]
        %v9322 = vld [vmem:[%s9287 + $0x110] sm:$0xff]
        %v9323 = vld [vmem:[%s9287 + $0x118] sm:$0xff]
        %v9324 = vld [vmem:[%s9287 + $0x120] sm:$0xff]
        %v9325 = vld [vmem:[%s9287 + $0x128] sm:$0xff]
        %v9326 = vld [vmem:[%s9287 + $0x130] sm:$0xff]
        %v9327 = vld [vmem:[%s9287 + $0x138] sm:$0xff]
        %v9328 = vld [vmem:[%s9287 + $0x140] sm:$0xff]
        %v9329 = vld [vmem:[%s9287 + $0x148] sm:$0xff]
        %v9330 = vld [vmem:[%s9287 + $0x150] sm:$0xff]
        %v9331 = vld [vmem:[%s9287 + $0x158] sm:$0xff]
        %v9332 = vld [vmem:[%s9287 + $0x160] sm:$0xff]
        %v9333 = vld [vmem:[%s9287 + $0x168] sm:$0xff]
        %v9334 = vld [vmem:[%s9287 + $0x170] sm:$0xff]
        %v9335 = vld [vmem:[%s9287 + $0x178] sm:$0xff]
        %v9336 = vld [vmem:[%s9287 + $0x180] sm:$0xff]
        %v9337 = vld [vmem:[%s9287 + $0x188] sm:$0xff]
        %v9388 = vunpack.c.l.b16 %v9288
        %v9389 = vunpack.c.h.b16 %v9288
        %v9390 = vunpack.c.l.b16 %v9289
        %v9391 = vunpack.c.h.b16 %v9289
        %v9392 = vunpack.c.l.b16 %v9290
        %v9393 = vunpack.c.h.b16 %v9290
        %v9394 = vunpack.c.l.b16 %v9291
        %v9395 = vunpack.c.h.b16 %v9291
        %v9396 = vunpack.c.l.b16 %v9292
        %v9397 = vunpack.c.h.b16 %v9292
        %v9398 = vunpack.c.l.b16 %v9293
        %v9399 = vunpack.c.h.b16 %v9293
        %v9400 = vunpack.c.l.b16 %v9294
        %v9401 = vunpack.c.h.b16 %v9294
        %v9402 = vunpack.c.l.b16 %v9295
        %v9403 = vunpack.c.h.b16 %v9295
        %v9404 = vunpack.c.l.b16 %v9296
        %v9405 = vunpack.c.h.b16 %v9296
        %v9406 = vunpack.c.l.b16 %v9297
        %v9407 = vunpack.c.h.b16 %v9297
        %v9408 = vunpack.c.l.b16 %v9298
        %v9409 = vunpack.c.h.b16 %v9298
        %v9410 = vunpack.c.l.b16 %v9299
        %v9411 = vunpack.c.h.b16 %v9299
        %v9412 = vunpack.c.l.b16 %v9300
        %v9413 = vunpack.c.h.b16 %v9300
        %v9414 = vunpack.c.l.b16 %v9301
        %v9415 = vunpack.c.h.b16 %v9301
        %v9416 = vunpack.c.l.b16 %v9302
        %v9417 = vunpack.c.h.b16 %v9302
        %v9418 = vunpack.c.l.b16 %v9303
        %v9419 = vunpack.c.h.b16 %v9303
        %v9420 = vunpack.c.l.b16 %v9304
        %v9421 = vunpack.c.h.b16 %v9304
        %v9422 = vunpack.c.l.b16 %v9305
        %v9423 = vunpack.c.h.b16 %v9305
        %v9424 = vunpack.c.l.b16 %v9306
        %v9425 = vunpack.c.h.b16 %v9306
        %v9426 = vunpack.c.l.b16 %v9307
        %v9427 = vunpack.c.h.b16 %v9307
        %v9428 = vunpack.c.l.b16 %v9308
        %v9429 = vunpack.c.h.b16 %v9308
        %v9430 = vunpack.c.l.b16 %v9309
        %v9431 = vunpack.c.h.b16 %v9309
        %v9432 = vunpack.c.l.b16 %v9310
        %v9433 = vunpack.c.h.b16 %v9310
        %v9434 = vunpack.c.l.b16 %v9311
        %v9435 = vunpack.c.h.b16 %v9311
        %v9436 = vunpack.c.l.b16 %v9312
        %v9437 = vunpack.c.h.b16 %v9312
        %v9438 = vunpack.c.l.b16 %v9313
        %v9439 = vunpack.c.h.b16 %v9313
        %v9440 = vunpack.c.l.b16 %v9314
        %v9441 = vunpack.c.h.b16 %v9314
        %v9442 = vunpack.c.l.b16 %v9315
        %v9443 = vunpack.c.h.b16 %v9315
        %v9444 = vunpack.c.l.b16 %v9316
        %v9445 = vunpack.c.h.b16 %v9316
        %v9446 = vunpack.c.l.b16 %v9317
        %v9447 = vunpack.c.h.b16 %v9317
        %v9448 = vunpack.c.l.b16 %v9318
        %v9449 = vunpack.c.h.b16 %v9318
        %v9450 = vunpack.c.l.b16 %v9319
        %v9451 = vunpack.c.h.b16 %v9319
        %v9452 = vunpack.c.l.b16 %v9320
        %v9453 = vunpack.c.h.b16 %v9320
        %v9454 = vunpack.c.l.b16 %v9321
        %v9455 = vunpack.c.h.b16 %v9321
        %v9456 = vunpack.c.l.b16 %v9322
        %v9457 = vunpack.c.h.b16 %v9322
        %v9458 = vunpack.c.l.b16 %v9323
        %v9459 = vunpack.c.h.b16 %v9323
        %v9460 = vunpack.c.l.b16 %v9324
        %v9461 = vunpack.c.h.b16 %v9324
        %v9462 = vunpack.c.l.b16 %v9325
        %v9463 = vunpack.c.h.b16 %v9325
        %v9464 = vunpack.c.l.b16 %v9326
        %v9465 = vunpack.c.h.b16 %v9326
        %v9466 = vunpack.c.l.b16 %v9327
        %v9467 = vunpack.c.h.b16 %v9327
        %v9468 = vunpack.c.l.b16 %v9328
        %v9469 = vunpack.c.h.b16 %v9328
        %v9470 = vunpack.c.l.b16 %v9329
        %v9471 = vunpack.c.h.b16 %v9329
        %v9472 = vunpack.c.l.b16 %v9330
        %v9473 = vunpack.c.h.b16 %v9330
        %v9474 = vunpack.c.l.b16 %v9331
        %v9475 = vunpack.c.h.b16 %v9331
        %v9476 = vunpack.c.l.b16 %v9332
        %v9477 = vunpack.c.h.b16 %v9332
        %v9478 = vunpack.c.l.b16 %v9333
        %v9479 = vunpack.c.h.b16 %v9333
        %v9480 = vunpack.c.l.b16 %v9334
        %v9481 = vunpack.c.h.b16 %v9334
        %v9482 = vunpack.c.l.b16 %v9335
        %v9483 = vunpack.c.h.b16 %v9335
        %v9484 = vunpack.c.l.b16 %v9336
        %v9485 = vunpack.c.h.b16 %v9336
        %v9486 = vunpack.c.l.b16 %v9337
        %v9487 = vunpack.c.h.b16 %v9337
        %v9488 = vpack.c.b16 %v9392, %v9388
        %v9489 = vpack.c.b16 %v9393, %v9389
        %v9490 = vpack.c.b16 %v9394, %v9390
        %v9491 = vpack.c.b16 %v9395, %v9391
        %v9492 = vpack.c.b16 %v9400, %v9396
        %v9493 = vpack.c.b16 %v9401, %v9397
        %v9494 = vpack.c.b16 %v9402, %v9398
        %v9495 = vpack.c.b16 %v9403, %v9399
        %v9496 = vpack.c.b16 %v9408, %v9404
        %v9497 = vpack.c.b16 %v9409, %v9405
        %v9498 = vpack.c.b16 %v9410, %v9406
        %v9499 = vpack.c.b16 %v9411, %v9407
        %v9500 = vpack.c.b16 %v9416, %v9412
        %v9501 = vpack.c.b16 %v9417, %v9413
        %v9502 = vpack.c.b16 %v9418, %v9414
        %v9503 = vpack.c.b16 %v9419, %v9415
        %v9504 = vpack.c.b16 %v9424, %v9420
        %v9505 = vpack.c.b16 %v9425, %v9421
        %v9506 = vpack.c.b16 %v9426, %v9422
        %v9507 = vpack.c.b16 %v9427, %v9423
        %v9508 = vpack.c.b16 %v9432, %v9428
        %v9509 = vpack.c.b16 %v9433, %v9429
        %v9510 = vpack.c.b16 %v9434, %v9430
        %v9511 = vpack.c.b16 %v9435, %v9431
        %v9512 = vpack.c.b16 %v9440, %v9436
        %v9513 = vpack.c.b16 %v9441, %v9437
        %v9514 = vpack.c.b16 %v9442, %v9438
        %v9515 = vpack.c.b16 %v9443, %v9439
        %v9516 = vpack.c.b16 %v9448, %v9444
        %v9517 = vpack.c.b16 %v9449, %v9445
        %v9518 = vpack.c.b16 %v9450, %v9446
        %v9519 = vpack.c.b16 %v9451, %v9447
        %v9520 = vpack.c.b16 %v9456, %v9452
        %v9521 = vpack.c.b16 %v9457, %v9453
        %v9522 = vpack.c.b16 %v9458, %v9454
        %v9523 = vpack.c.b16 %v9459, %v9455
        %v9524 = vpack.c.b16 %v9464, %v9460
        %v9525 = vpack.c.b16 %v9465, %v9461
        %v9526 = vpack.c.b16 %v9466, %v9462
        %v9527 = vpack.c.b16 %v9467, %v9463
        %v9528 = vpack.c.b16 %v9472, %v9468
        %v9529 = vpack.c.b16 %v9473, %v9469
        %v9530 = vpack.c.b16 %v9474, %v9470
        %v9531 = vpack.c.b16 %v9475, %v9471
        %v9532 = vpack.c.b16 %v9480, %v9476
        %v9533 = vpack.c.b16 %v9481, %v9477
        %v9534 = vpack.c.b16 %v9482, %v9478
        %v9535 = vpack.c.b16 %v9483, %v9479
        %v9536 = vpack.c.b16 %v9484, %v9484
        %v9537 = vpack.c.b16 %v9485, %v9485
        %v9538 = vpack.c.b16 %v9486, %v9486
        %v9539 = vpack.c.b16 %v9487, %v9487
        %v9589 = vsel %vm8435, %v9286, 0
        %v9592 = vsel %vm8439, %v9536, 0
        %v9595 = vsel %vm8439, %v9537, 0
        %v9598 = vsel %vm8439, %v9538, 0
        %v9601 = vsel %vm8439, %v9539, 0
        %9603 = vmatprep.subr.bf16.mxu0 %v9489
        %9604 = vmatpush1.bf16.msra.mxu0 %v9488
        %9605 = vmatprep.subr.bf16.mxu0 %v9493
        %9606 = vmatpush1.bf16.msra.mxu0 %v9492
        %9607 = vmatprep.subr.bf16.mxu0 %v9497
        %9608 = vmatpush1.bf16.msra.mxu0 %v9496
        %9609 = vmatprep.subr.bf16.mxu0 %v9501
        %9610 = vmatpush1.bf16.msra.mxu0 %v9500
        %9611 = vmatprep.subr.bf16.mxu0 %v9505
        %9612 = vmatpush1.bf16.msra.mxu0 %v9504
        %9613 = vmatprep.subr.bf16.mxu0 %v9509
        %9614 = vmatpush1.bf16.msra.mxu0 %v9508
        %9615 = vmatprep.subr.bf16.mxu0 %v9513
        %9616 = vmatpush1.bf16.msra.mxu0 %v9512
        %9617 = vmatprep.subr.bf16.mxu0 %v9517
        %9618 = vmatpush1.bf16.msra.mxu0 %v9516
        %9619 = vmatprep.subr.bf16.mxu0 %v9521
        %9620 = vmatpush1.bf16.msra.mxu0 %v9520
        %9621 = vmatprep.subr.bf16.mxu0 %v9525
        %9622 = vmatpush1.bf16.msra.mxu0 %v9524
        %9623 = vmatprep.subr.bf16.mxu0 %v9529
        %9624 = vmatpush1.bf16.msra.mxu0 %v9528
        %9625 = vmatprep.subr.bf16.mxu0 %v9533
        %9626 = vmatpush1.bf16.msra.mxu0 %v9532
        %9627 = vmatprep.subr.bf16.mxu0 %v9595
        %9628 = vmatpush1.bf16.msra.mxu0 %v9592
        %9629 = vmatprep.subr.bf16.mxu0 0
        %9630 = vmatpush1.bf16.msra.mxu0 0
        %9631 = vmatprep.subr.bf16.mxu0 0
        %9632 = vmatpush1.bf16.msra.mxu0 0
        %9633 = vmatprep.subr.bf16.mxu0 0
        %9634 = vmatpush1.bf16.msra.mxu0 0
        %9635 = vmatprep.mubr.bf16.mxu0 %v9589
        %9636 = vmatmul.mubr.bf16.gmra.mrb[0].mxu0 %v9285
        %v9637 = vpop.f32.mrb[0].mxu0
        %v9638 = vadd.f32 0.0, %v9637
        %v9639 = vpop.f32.mrb[0].mxu0
        %v9640 = vadd.f32 0.0, %v9639
        %v9641 = vpop.f32.mrb[0].mxu0
        %v9642 = vpop.f32.mrb[0].mxu0
        %9643 = vdwg.mxu0
        %9644 = vmatprep.subr.bf16.mxu0 %v9491
        %9645 = vmatpush1.bf16.msra.mxu0 %v9490
        %9646 = vmatprep.subr.bf16.mxu0 %v9495
        %9647 = vmatpush1.bf16.msra.mxu0 %v9494
        %9648 = vmatprep.subr.bf16.mxu0 %v9499
        %9649 = vmatpush1.bf16.msra.mxu0 %v9498
        %9650 = vmatprep.subr.bf16.mxu0 %v9503
        %9651 = vmatpush1.bf16.msra.mxu0 %v9502
        %9652 = vmatprep.subr.bf16.mxu0 %v9507
        %9653 = vmatpush1.bf16.msra.mxu0 %v9506
        %9654 = vmatprep.subr.bf16.mxu0 %v9511
        %9655 = vmatpush1.bf16.msra.mxu0 %v9510
        %9656 = vmatprep.subr.bf16.mxu0 %v9515
        %9657 = vmatpush1.bf16.msra.mxu0 %v9514
        %9658 = vmatprep.subr.bf16.mxu0 %v9519
        %9659 = vmatpush1.bf16.msra.mxu0 %v9518
        %9660 = vmatprep.subr.bf16.mxu0 %v9523
        %9661 = vmatpush1.bf16.msra.mxu0 %v9522
        %9662 = vmatprep.subr.bf16.mxu0 %v9527
        %9663 = vmatpush1.bf16.msra.mxu0 %v9526
        %9664 = vmatprep.subr.bf16.mxu0 %v9531
        %9665 = vmatpush1.bf16.msra.mxu0 %v9530
        %9666 = vmatprep.subr.bf16.mxu0 %v9535
        %9667 = vmatpush1.bf16.msra.mxu0 %v9534
        %9668 = vmatprep.subr.bf16.mxu0 %v9601
        %9669 = vmatpush1.bf16.msra.mxu0 %v9598
        %9670 = vmatprep.subr.bf16.mxu0 0
        %9671 = vmatpush1.bf16.msra.mxu0 0
        %9672 = vmatprep.subr.bf16.mxu0 0
        %9673 = vmatpush1.bf16.msra.mxu0 0
        %9674 = vmatprep.subr.bf16.mxu0 0
        %9675 = vmatpush1.bf16.msra.mxu0 0
        %9676 = vmatprep.mubr.bf16.mxu0 %v9589
        %9677 = vmatmul.mubr.bf16.gmra.mrb[0].mxu0 %v9285
        %v9678 = vpop.f32.mrb[0].mxu0
        %v9679 = vadd.f32 0.0, %v9678
        %v9680 = vpop.f32.mrb[0].mxu0
        %v9681 = vadd.f32 0.0, %v9680
        %v9682 = vpop.f32.mrb[0].mxu0
        %v9683 = vpop.f32.mrb[0].mxu0
        %9684 = vdwg.mxu0
        %v9685 = vadd.f32 %v9281, %v9638
        %v9686 = vadd.f32 %v9282, %v9640
        %v9687 = vadd.f32 %v9283, %v9679
        %v9688 = vadd.f32 %v9284, %v9681
        %v9689 = vld [vmem:[%s8] sm:$0xf]
        %v9691 = vlaneseq
        %v9692 = vshrl.u32 %v9691, 7
        %v9693 = vsub.s32 0, %v9692
        %v9694 = vrot.slane %v9689, %v9693
        %v9695 = vlaneseq
        %v9696 = vshrl.u32 %v9695, 7
        %v9697 = vsub.s32 1, %v9696
        %v9698 = vrot.slane %v9689, %v9697
        %v9699 = vlaneseq
        %v9700 = vshrl.u32 %v9699, 7
        %v9701 = vsub.s32 2, %v9700
        %v9702 = vrot.slane %v9689, %v9701
        %v9703 = vlaneseq
        %v9704 = vshrl.u32 %v9703, 7
        %v9705 = vsub.s32 3, %v9704
        %v9706 = vrot.slane %v9689, %v9705
        %v9711 = vadd.f32 %v9685, %v9694
        %v9712 = vadd.f32 %v9686, %v9698
        %v9713 = vadd.f32 %v9687, %v9702
        %v9714 = vadd.f32 %v9688, %v9706
        %v9715 = vmax.f32 %v9711, 0.0
        %v9716 = vmax.f32 %v9712, 0.0
        %v9717 = vmax.f32 %v9713, 0.0
        %v9718 = vmax.f32 %v9714, 0.0
        %v9719 = vpack.c.bf16 %v9715, %v9715
        %v9720 = vpack.c.bf16 %v9716, %v9716
        %v9721 = vpack.c.bf16 %v9717, %v9717
        %v9722 = vpack.c.bf16 %v9718, %v9718
        %v9723 = vld [vmem:[%s9] sm:$0xf]
        %v9724 = vld [vmem:[%s9 + $0x4] sm:$0xf]
        %v9725 = vld [vmem:[%s9 + $0x8] sm:$0xf]
        %v9726 = vld [vmem:[%s9 + $0xc] sm:$0xf]
        %v9727 = vld [vmem:[%s9 + $0x10] sm:$0xf]
        %v9728 = vld [vmem:[%s9 + $0x14] sm:$0xf]
        %v9729 = vld [vmem:[%s9 + $0x18] sm:$0xf]
        %v9730 = vld [vmem:[%s9 + $0x1c] sm:$0xf]
        %v9731 = vld [vmem:[%s9 + $0x20] sm:$0xf]
        %v9732 = vld [vmem:[%s9 + $0x24] sm:$0xf]
        %v9733 = vld [vmem:[%s9 + $0x28] sm:$0xf]
        %v9734 = vld [vmem:[%s9 + $0x2c] sm:$0xf]
        %v9735 = vld [vmem:[%s9 + $0x30] sm:$0xf]
        %v9736 = vld [vmem:[%s9 + $0x34] sm:$0xf]
        %v9737 = vld [vmem:[%s9 + $0x38] sm:$0xf]
        %v9738 = vld [vmem:[%s9 + $0x3c] sm:$0xf]
        %v9739 = vld [vmem:[%s9 + $0x40] sm:$0xf]
        %v9740 = vld [vmem:[%s9 + $0x44] sm:$0xf]
        %v9741 = vld [vmem:[%s9 + $0x48] sm:$0xf]
        %v9742 = vld [vmem:[%s9 + $0x4c] sm:$0xf]
        %v9743 = vld [vmem:[%s9 + $0x50] sm:$0xf]
        %v9744 = vld [vmem:[%s9 + $0x54] sm:$0xf]
        %v9745 = vld [vmem:[%s9 + $0x58] sm:$0xf]
        %v9746 = vld [vmem:[%s9 + $0x5c] sm:$0xf]
        %v9747 = vld [vmem:[%s9 + $0x60] sm:$0xf]
        %v9748 = vld [vmem:[%s9 + $0x64] sm:$0xf]
        %v9749 = vld [vmem:[%s9 + $0x68] sm:$0xf]
        %v9750 = vld [vmem:[%s9 + $0x6c] sm:$0xf]
        %v9751 = vld [vmem:[%s9 + $0x70] sm:$0xf]
        %v9752 = vld [vmem:[%s9 + $0x74] sm:$0xf]
        %v9753 = vld [vmem:[%s9 + $0x78] sm:$0xf]
        %v9754 = vld [vmem:[%s9 + $0x7c] sm:$0xf]
        %v9755 = vld [vmem:[%s9 + $0x80] sm:$0xf]
        %v9756 = vld [vmem:[%s9 + $0x84] sm:$0xf]
        %v9757 = vld [vmem:[%s9 + $0x88] sm:$0xf]
        %v9758 = vld [vmem:[%s9 + $0x8c] sm:$0xf]
        %v9759 = vld [vmem:[%s9 + $0x90] sm:$0xf]
        %v9760 = vld [vmem:[%s9 + $0x94] sm:$0xf]
        %v9761 = vld [vmem:[%s9 + $0x98] sm:$0xf]
        %v9762 = vld [vmem:[%s9 + $0x9c] sm:$0xf]
        %v9763 = vld [vmem:[%s9 + $0xa0] sm:$0xf]
        %v9764 = vld [vmem:[%s9 + $0xa4] sm:$0xf]
        %v9765 = vld [vmem:[%s9 + $0xa8] sm:$0xf]
        %v9766 = vld [vmem:[%s9 + $0xac] sm:$0xf]
        %v9767 = vld [vmem:[%s9 + $0xb0] sm:$0xf]
        %v9768 = vld [vmem:[%s9 + $0xb4] sm:$0xf]
        %v9769 = vld [vmem:[%s9 + $0xb8] sm:$0xf]
        %v9770 = vld [vmem:[%s9 + $0xbc] sm:$0xf]
        %v9771 = vld [vmem:[%s9 + $0xc0] sm:$0xf]
        %v9772 = vld [vmem:[%s9 + $0xc4] sm:$0xf]
        %v9773 = vld [vmem:[%s9 + $0xc8] sm:$0xf]
        %v9774 = vld [vmem:[%s9 + $0xcc] sm:$0xf]
        %v9775 = vld [vmem:[%s9 + $0xd0] sm:$0xf]
        %v9776 = vld [vmem:[%s9 + $0xd4] sm:$0xf]
        %v9777 = vld [vmem:[%s9 + $0xd8] sm:$0xf]
        %v9778 = vld [vmem:[%s9 + $0xdc] sm:$0xf]
        %v9779 = vld [vmem:[%s9 + $0xe0] sm:$0xf]
        %v9780 = vld [vmem:[%s9 + $0xe4] sm:$0xf]
        %v9781 = vld [vmem:[%s9 + $0xe8] sm:$0xf]
        %v9782 = vld [vmem:[%s9 + $0xec] sm:$0xf]
        %v9783 = vld [vmem:[%s9 + $0xf0] sm:$0xf]
        %v9784 = vld [vmem:[%s9 + $0xf4] sm:$0xf]
        %v9785 = vld [vmem:[%s9 + $0xf8] sm:$0x3]
        %v9786 = vld [vmem:[%s10] sm:$0x1]
        %v9788 = vlaneseq
        %v9789 = vshrl.u32 %v9788, 7
        %v9790 = vsub.s32 0, %v9789
        %v9791 = vrot.slane %v9786, %v9790
        %v9856 = vunpack.c.l.b16 %v9723
        %v9857 = vunpack.c.l.b16 %v9724
        %v9858 = vunpack.c.l.b16 %v9725
        %v9859 = vunpack.c.l.b16 %v9726
        %v9860 = vunpack.c.l.b16 %v9727
        %v9861 = vunpack.c.l.b16 %v9728
        %v9862 = vunpack.c.l.b16 %v9729
        %v9863 = vunpack.c.l.b16 %v9730
        %v9864 = vunpack.c.l.b16 %v9731
        %v9865 = vunpack.c.l.b16 %v9732
        %v9866 = vunpack.c.l.b16 %v9733
        %v9867 = vunpack.c.l.b16 %v9734
        %v9868 = vunpack.c.l.b16 %v9735
        %v9869 = vunpack.c.l.b16 %v9736
        %v9870 = vunpack.c.l.b16 %v9737
        %v9871 = vunpack.c.l.b16 %v9738
        %v9872 = vunpack.c.l.b16 %v9739
        %v9873 = vunpack.c.l.b16 %v9740
        %v9874 = vunpack.c.l.b16 %v9741
        %v9875 = vunpack.c.l.b16 %v9742
        %v9876 = vunpack.c.l.b16 %v9743
        %v9877 = vunpack.c.l.b16 %v9744
        %v9878 = vunpack.c.l.b16 %v9745
        %v9879 = vunpack.c.l.b16 %v9746
        %v9880 = vunpack.c.l.b16 %v9747
        %v9881 = vunpack.c.l.b16 %v9748
        %v9882 = vunpack.c.l.b16 %v9749
        %v9883 = vunpack.c.l.b16 %v9750
        %v9884 = vunpack.c.l.b16 %v9751
        %v9885 = vunpack.c.l.b16 %v9752
        %v9886 = vunpack.c.l.b16 %v9753
        %v9887 = vunpack.c.l.b16 %v9754
        %v9888 = vunpack.c.l.b16 %v9755
        %v9889 = vunpack.c.l.b16 %v9756
        %v9890 = vunpack.c.l.b16 %v9757
        %v9891 = vunpack.c.l.b16 %v9758
        %v9892 = vunpack.c.l.b16 %v9759
        %v9893 = vunpack.c.l.b16 %v9760
        %v9894 = vunpack.c.l.b16 %v9761
        %v9895 = vunpack.c.l.b16 %v9762
        %v9896 = vunpack.c.l.b16 %v9763
        %v9897 = vunpack.c.l.b16 %v9764
        %v9898 = vunpack.c.l.b16 %v9765
        %v9899 = vunpack.c.l.b16 %v9766
        %v9900 = vunpack.c.l.b16 %v9767
        %v9901 = vunpack.c.l.b16 %v9768
        %v9902 = vunpack.c.l.b16 %v9769
        %v9903 = vunpack.c.l.b16 %v9770
        %v9904 = vunpack.c.l.b16 %v9771
        %v9905 = vunpack.c.l.b16 %v9772
        %v9906 = vunpack.c.l.b16 %v9773
        %v9907 = vunpack.c.l.b16 %v9774
        %v9908 = vunpack.c.l.b16 %v9775
        %v9909 = vunpack.c.l.b16 %v9776
        %v9910 = vunpack.c.l.b16 %v9777
        %v9911 = vunpack.c.l.b16 %v9778
        %v9912 = vunpack.c.l.b16 %v9779
        %v9913 = vunpack.c.l.b16 %v9780
        %v9914 = vunpack.c.l.b16 %v9781
        %v9915 = vunpack.c.l.b16 %v9782
        %v9916 = vunpack.c.l.b16 %v9783
        %v9917 = vunpack.c.l.b16 %v9784
        %v9918 = vunpack.c.l.b16 %v9785
        %v9919 = vpack.c.b16 %v9857, %v9856
        %v9920 = vpack.c.b16 %v9859, %v9858
        %v9921 = vpack.c.b16 %v9861, %v9860
        %v9922 = vpack.c.b16 %v9863, %v9862
        %v9923 = vpack.c.b16 %v9865, %v9864
        %v9924 = vpack.c.b16 %v9867, %v9866
        %v9925 = vpack.c.b16 %v9869, %v9868
        %v9926 = vpack.c.b16 %v9871, %v9870
        %v9927 = vpack.c.b16 %v9873, %v9872
        %v9928 = vpack.c.b16 %v9875, %v9874
        %v9929 = vpack.c.b16 %v9877, %v9876
        %v9930 = vpack.c.b16 %v9879, %v9878
        %v9931 = vpack.c.b16 %v9881, %v9880
        %v9932 = vpack.c.b16 %v9883, %v9882
        %v9933 = vpack.c.b16 %v9885, %v9884
        %v9934 = vpack.c.b16 %v9887, %v9886
        %v9935 = vpack.c.b16 %v9889, %v9888
        %v9936 = vpack.c.b16 %v9891, %v9890
        %v9937 = vpack.c.b16 %v9893, %v9892
        %v9938 = vpack.c.b16 %v9895, %v9894
        %v9939 = vpack.c.b16 %v9897, %v9896
        %v9940 = vpack.c.b16 %v9899, %v9898
        %v9941 = vpack.c.b16 %v9901, %v9900
        %v9942 = vpack.c.b16 %v9903, %v9902
        %v9943 = vpack.c.b16 %v9905, %v9904
        %v9944 = vpack.c.b16 %v9907, %v9906
        %v9945 = vpack.c.b16 %v9909, %v9908
        %v9946 = vpack.c.b16 %v9911, %v9910
        %v9947 = vpack.c.b16 %v9913, %v9912
        %v9948 = vpack.c.b16 %v9915, %v9914
        %v9949 = vpack.c.b16 %v9917, %v9916
        %v9950 = vpack.c.b16 %v9918, %v9918
        %vm9982 = vcmask 949248
        %v9984 = vsel %vm9982, %v9722, 0
        %vm9986 = vcmask 1041408
        %v9988 = vsel %vm9986, %v9950, 0
        %9990 = vmatprep.subr.bf16.mxu0 0
        %9991 = vmatpush1.bf16.msra.mxu0 %v9919
        %9992 = vmatprep.subr.bf16.mxu0 0
        %9993 = vmatpush1.bf16.msra.mxu0 %v9920
        %9994 = vmatprep.subr.bf16.mxu0 0
        %9995 = vmatpush1.bf16.msra.mxu0 %v9921
        %9996 = vmatprep.subr.bf16.mxu0 0
        %9997 = vmatpush1.bf16.msra.mxu0 %v9922
        %9998 = vmatprep.subr.bf16.mxu0 0
        %9999 = vmatpush1.bf16.msra.mxu0 %v9923
        %10000 = vmatprep.subr.bf16.mxu0 0
        %10001 = vmatpush1.bf16.msra.mxu0 %v9924
        %10002 = vmatprep.subr.bf16.mxu0 0
        %10003 = vmatpush1.bf16.msra.mxu0 %v9925
        %10004 = vmatprep.subr.bf16.mxu0 0
        %10005 = vmatpush1.bf16.msra.mxu0 %v9926
        %10006 = vmatprep.subr.bf16.mxu0 0
        %10007 = vmatpush1.bf16.msra.mxu0 %v9927
        %10008 = vmatprep.subr.bf16.mxu0 0
        %10009 = vmatpush1.bf16.msra.mxu0 %v9928
        %10010 = vmatprep.subr.bf16.mxu0 0
        %10011 = vmatpush1.bf16.msra.mxu0 %v9929
        %10012 = vmatprep.subr.bf16.mxu0 0
        %10013 = vmatpush1.bf16.msra.mxu0 %v9930
        %10014 = vmatprep.subr.bf16.mxu0 0
        %10015 = vmatpush1.bf16.msra.mxu0 %v9931
        %10016 = vmatprep.subr.bf16.mxu0 0
        %10017 = vmatpush1.bf16.msra.mxu0 %v9932
        %10018 = vmatprep.subr.bf16.mxu0 0
        %10019 = vmatpush1.bf16.msra.mxu0 %v9933
        %10020 = vmatprep.subr.bf16.mxu0 0
        %10021 = vmatpush1.bf16.msra.mxu0 %v9934
        %10022 = vmatprep.mubr.bf16.mxu0 %v9720
        %10023 = vmatmul.mubr.bf16.gmra.mrb[0].mxu0 %v9719
        %v10024 = vpop.f32.mrb[0].mxu0
        %v10025 = vadd.f32 %v9791, %v10024
        %v10026 = vpop.f32.mrb[0].mxu0
        %v10027 = vpop.f32.mrb[0].mxu0
        %v10028 = vpop.f32.mrb[0].mxu0
        %10029 = vdwg.mxu0
        %10030 = vmatprep.subr.bf16.mxu0 0
        %10031 = vmatpush1.bf16.msra.mxu0 %v9935
        %10032 = vmatprep.subr.bf16.mxu0 0
        %10033 = vmatpush1.bf16.msra.mxu0 %v9936
        %10034 = vmatprep.subr.bf16.mxu0 0
        %10035 = vmatpush1.bf16.msra.mxu0 %v9937
        %10036 = vmatprep.subr.bf16.mxu0 0
        %10037 = vmatpush1.bf16.msra.mxu0 %v9938
        %10038 = vmatprep.subr.bf16.mxu0 0
        %10039 = vmatpush1.bf16.msra.mxu0 %v9939
        %10040 = vmatprep.subr.bf16.mxu0 0
        %10041 = vmatpush1.bf16.msra.mxu0 %v9940
        %10042 = vmatprep.subr.bf16.mxu0 0
        %10043 = vmatpush1.bf16.msra.mxu0 %v9941
        %10044 = vmatprep.subr.bf16.mxu0 0
        %10045 = vmatpush1.bf16.msra.mxu0 %v9942
        %10046 = vmatprep.subr.bf16.mxu0 0
        %10047 = vmatpush1.bf16.msra.mxu0 %v9943
        %10048 = vmatprep.subr.bf16.mxu0 0
        %10049 = vmatpush1.bf16.msra.mxu0 %v9944
        %10050 = vmatprep.subr.bf16.mxu0 0
        %10051 = vmatpush1.bf16.msra.mxu0 %v9945
        %10052 = vmatprep.subr.bf16.mxu0 0
        %10053 = vmatpush1.bf16.msra.mxu0 %v9946
        %10054 = vmatprep.subr.bf16.mxu0 0
        %10055 = vmatpush1.bf16.msra.mxu0 %v9947
        %10056 = vmatprep.subr.bf16.mxu0 0
        %10057 = vmatpush1.bf16.msra.mxu0 %v9948
        %10058 = vmatprep.subr.bf16.mxu0 0
        %10059 = vmatpush1.bf16.msra.mxu0 %v9949
        %10060 = vmatprep.subr.bf16.mxu0 0
        %10061 = vmatpush1.bf16.msra.mxu0 %v9988
        %10062 = vmatprep.mubr.bf16.mxu0 %v9984
        %10063 = vmatmul.mubr.bf16.gmra.mrb[0].mxu0 %v9721
        %v10064 = vpop.f32.mrb[0].mxu0
        %v10065 = vadd.f32 %v10025, %v10064
        %v10066 = vpop.f32.mrb[0].mxu0
        %v10067 = vpop.f32.mrb[0].mxu0
        %v10068 = vpop.f32.mrb[0].mxu0
        %10069 = vdwg.mxu0
        %10070 = vst [vmem:[%s380] sm:$0xff] %v10065
        %s10071 = sand.u32 %s269, 1
        %s10072 = scalar_lea.sflag [#allocation3], %s10071
        %s10073 = sand.u32 %s269, 1
        %s10074 = smul.addr %s10073, 8
        %s10075 = scalar_lea.vmem [#allocation2], %s10074
        // Predicated region
        $region65: #{net_forward.1} parent=63 // pred_check
          %p10076 = pneg %p279
        $region66: #{net_forward.1} parent=63 // pred_check_branch
          %10078 = sbr.rel (%p10076) target = $region68
        $region67: #{net_forward.1} parent=63 // pred_region
          %s10080 = ssub.s32 128, 128
          %10081 = vsyncadd %s10072, %s10080
          %s10082 = smul.addr %s25, 128
          %s10083 = scalar_lea.hbm %s11, %s10082
          %s10085 = sshll.u32 %s10075, 4
          %s10086 = int_to_ptr.vmem [resolvable:$true] %s10085
          %10088 = dma.vmem_to_hbm [thread:$0]  %s10086, 128, %s10083, %s10072
        $region68: #{net_forward.1} parent=63 // pred_fallthru
          _
      $region64: #{net_forward.1} parent=5 // pred_fallthru
        _
      %p10089 = scmp.le.s32.totalorder 2, %s20
      // Predicated region
      $region69: #{net_forward.1} parent=5 // pred_check
        %p10090 = pneg %p10089
      $region70: #{net_forward.1} parent=5 // pred_check_branch
        %10092 = sbr.rel (%p10090) target = $region72
      $region71: #{net_forward.1} parent=5 // pred_region
        %s10093 = ssub.s32 %s20, 2
        // Predicated region
        $region73: #{net_forward.1} parent=71 // pred_check
          %p10094 = pneg %p285
        $region74: #{net_forward.1} parent=71 // pred_check_branch
          %10096 = sbr.rel (%p10094) target = $region76
        $region75: #{net_forward.1} parent=71 // pred_region
          %s10097 = sand.u32 %s270, 1
          %s10098 = scalar_lea.sflag [#allocation3], %s10097
          %s10099 = sand.u32 %s270, 1
          %s10100 = smul.addr %s10099, 8
          %s10101 = scalar_lea.vmem [#allocation2], %s10100
          %10102 = dma.done %s10098, 128
        $region76: #{net_forward.1} parent=71 // pred_fallthru
          _
      $region72: #{net_forward.1} parent=5 // pred_fallthru
        _
    $region6: #{net_forward.1} parent=1 // loop_footer
      %s24 = sadd.s32 1, %s20
    $region7: #{net_forward.1} parent=1 // loop_footer_branch
      %19 = sbr.rel target = $region3
    $region8: #{net_forward.1} parent=1 // loop_exit
      _
    %10103 = vsyncpa [#allocation3], 1
    %s10104 = scalar_lea.sflag [#allocation3], 1
    %10105 = vsyncpa %s10104, 1

</llo_original>
